<compile_context>
chip_gen: v7x
topology: tpu7x:2x2x1
jax: 0.10.0
libtpu: 0.0.40
codegen_flags: <defaults>
</compile_context>

<pallas_src>
import numpy as np
import jax
import jax.numpy as jnp
from jax.experimental import pallas as pl
from jax.experimental.pallas import tpu as pltpu

USE_BF16 = True

# Fixed geometry of the module (MNIST 28x28 input).
_C1 = 16          # conv1 output channels
_C2 = 8           # conv2 output channels
_H1 = 14          # spatial size after pool1
_P1 = _H1 * _H1   # 196 pixels per image after pool1 (lane dim of activations)
_H2 = 7           # spatial size after pool2
_P2 = _H2 * _H2   # 49
_FC = _C2 * _P2   # 392


# ----------------------------------------------------------------------------
# Host-side constant matrices (built once, with numpy)
# ----------------------------------------------------------------------------
def _conv2_tap_matrices():
    """S[k]: (196,196) 0/1 matrix so that (a1 @ S[k])[ci, 14*i+j] equals the
    zero-padded pool1 value at (i + dy - 1, j + dx - 1), k = dy*3 + dx."""
    s = np.zeros((9, _P1, _P1), np.float32)
    for k in range(9):
        dy, dx = k // 3, k % 3
        for i in range(_H1):
            for j in range(_H1):
                ii, jj = i + dy - 1, j + dx - 1
                if 0 <= ii < _H1 and 0 <= jj < _H1:
                    s[k, ii * _H1 + jj, i * _H1 + j] = 1.0
    return s


def _pool2_shift_matrices():
    """T[t]: (196,196) 0/1 matrices shifting the flat 14x14 grid by {1,14,15}
    pixels: (c2 @ T[t])[c, r] = c2[c, r + shift]."""
    t = np.zeros((3, _P1, _P1), np.float32)
    for idx, shift in enumerate((1, _H1, _H1 + 1)):
        for r in range(_P1 - shift):
            t[idx, r + shift, r] = 1.0
    return t


def _pool2_select_matrix():
    """Csel: (196,49) 0/1 matrix compacting the even-row/even-col pixels of the
    14x14 grid into the 7x7 pooled grid."""
    c = np.zeros((_P1, _P2), np.float32)
    for i2 in range(_H2):
        for j2 in range(_H2):
            c[(2 * i2) * _H1 + (2 * j2), i2 * _H2 + j2] = 1.0
    return c


# ----------------------------------------------------------------------------
# Per-call host glue (raw input only): conv1 patches for the 4 pool1 subgrids
# ----------------------------------------------------------------------------
def _build_pool_subgrid_patches(x):
    """x: (B, 1, 28, 28) -> (B, 4, 9, 196) float32.

    P[b, g, k, 14*i2+j2] = xpad[b, 2*i2 + di + dy, 2*j2 + dj + dx]
    with g = di*2+dj (pool1 window position), k = dy*3+dx (conv1 tap)."""
    B = x.shape[0]
    xp = jnp.pad(x[:, 0], ((0, 0), (1, 1), (1, 1)))          # (B, 30, 30)
    pieces = []
    for di in range(2):
        for dj in range(2):
            for dy in range(3):
                for dx in range(3):
                    sl = xp[:, di + dy: di + dy + 2 * _H1: 2,
                               dj + dx: dj + dx + 2 * _H1: 2]  # (B, 14, 14)
                    pieces.append(sl.reshape(B, _P1))
    return jnp.stack(pieces, axis=1).reshape(B, 4, 9, _P1)


# ----------------------------------------------------------------------------
# The fused Pallas kernel
# ----------------------------------------------------------------------------
def _encoder_kernel(p1_ref, w1_ref, b1_ref, s2_ref, w2_ref, b2_ref,
                    tpool_ref, csel_ref, wfc1_ref, bfc1_ref, wfc2_ref,
                    bfc2_ref, out_ref):
    B = p1_ref.shape[0]
    cdt = w1_ref.dtype                     # MXU operand dtype (bf16 or f32)
    b1 = b1_ref[...]                       # (16, 1)  f32
    b2 = b2_ref[...]                       # (8, 1)   f32

    ucomp = []                             # per-image pooled features (8, 49)
    for b in range(B):
        # ---- conv1 + ReLU + maxpool1: max of 4 pool-subgrid matmuls --------
        z = None
        for g in range(4):
            y = jnp.dot(w1_ref[...], p1_ref[b, g],
                        preferred_element_type=jnp.float32)   # (16, 196)
            z = y if z is None else jnp.maximum(z, y)
        a1 = jnp.maximum(z + b1, 0.0).astype(cdt)              # (16, 196)

        # ---- conv2 (3x3, pad 1) + ReLU: 9 taps, shift+mask via S matmuls ---
        acc = None
        for k in range(9):
            mixed = jnp.dot(w2_ref[k], a1,
                            preferred_element_type=jnp.float32)  # (8, 196)
            shifted = jnp.dot(mixed.astype(cdt), s2_ref[k],
                              preferred_element_type=jnp.float32)
            acc = shifted if acc is None else acc + shifted
        c2 = jnp.maximum(acc + b2, 0.0)                        # (8, 196) f32

        # ---- maxpool2: max over shifts {0,1,14,15}, then compaction --------
        c2c = c2.astype(cdt)
        u = c2
        for t in range(3):
            u = jnp.maximum(u, jnp.dot(c2c, tpool_ref[t],
                                       preferred_element_type=jnp.float32))
        ucomp.append(jnp.dot(u.astype(cdt), csel_ref[...],
                             preferred_element_type=jnp.float32))  # (8, 49)

    # ---- fc1 + ReLU (torch flatten order folded into the weight layout) ----
    h = None
    for c in range(_C2):
        xc = jnp.concatenate([ucomp[b][c:c + 1, :] for b in range(B)],
                             axis=0)                            # (B, 49)
        part = jnp.dot(xc.astype(cdt), wfc1_ref[c],
                       preferred_element_type=jnp.float32)      # (B, 392)
        h = part if h is None else h + part
    h = jnp.maximum(h + bfc1_ref[...], 0.0)                     # (B, 392) f32

    # ---- fc2 + ReLU ---------------------------------------------------------
    out = jnp.dot(h.astype(cdt), wfc2_ref[...],
                  preferred_element_type=jnp.float32) + bfc2_ref[...]
    out_ref[...] = jnp.maximum(out, 0.0).astype(out_ref.dtype)


def _whole_array_spec(a):
    nd = a.ndim
    return pl.BlockSpec(a.shape, lambda i, _nd=nd: (0,) * _nd)


# ----------------------------------------------------------------------------
# Parameter init (PyTorch-default-style), one-time packing, and the forward
# ----------------------------------------------------------------------------
def init_params(key, lambda_value):
    def uniform(key, shape, fan_in):
        bound = 1.0 / jnp.sqrt(jnp.float32(fan_in))
        return jax.random.uniform(key, shape, jnp.float32, -bound, bound)

    ks = jax.random.split(key, 8)
    p = {}
    p["conv1_w"] = uniform(ks[0], (16, 1, 3, 3), 1 * 9)
    p["conv1_b"] = uniform(ks[1], (16,), 1 * 9)
    p["conv2_w"] = uniform(ks[2], (8, 16, 3, 3), 16 * 9)
    p["conv2_b"] = uniform(ks[3], (8,), 16 * 9)
    p["fc1_w"] = uniform(ks[4], (392, 392), 392)      # torch Linear: (out, in)
    p["fc1_b"] = uniform(ks[5], (392,), 392)
    p["fc2_w"] = uniform(ks[6], (lambda_value, 392), 392)
    p["fc2_b"] = uniform(ks[7], (lambda_value,), 392)   # FIX: was (392,)
    return p


def pack_params(params, dtype=jnp.bfloat16):
    """One-time (not per-call) re-layout of the torch-style parameters into the
    kernel-ready, pre-transposed / pre-reordered form."""
    f32 = jnp.float32
    lam = params["fc2_w"].shape[0]
    return {
        "w1": jnp.asarray(params["conv1_w"].reshape(_C1, 9), dtype),
        "b1": jnp.asarray(params["conv1_b"].reshape(_C1, 1), f32),
        "s2": jnp.asarray(_conv2_tap_matrices(), dtype),
        "w2": jnp.asarray(jnp.transpose(params["conv2_w"], (2, 3, 0, 1))
                          .reshape(9, _C2, _C1), dtype),
        "b2": jnp.asarray(params["conv2_b"].reshape(_C2, 1), f32),
        "tpool": jnp.asarray(_pool2_shift_matrices(), dtype),
        "csel": jnp.asarray(_pool2_select_matrix(), dtype),
        # fc1: (out,in) -> (in,out) -> (c, p, out); in-index = c*49 + p matches
        # the PyTorch flatten order of the (B, 8, 7, 7) pooled activation.
        "wfc1": jnp.asarray(params["fc1_w"].T.reshape(_C2, _P2, _FC), dtype),
        "bfc1": jnp.asarray(params["fc1_b"].reshape(1, _FC), f32),
        "wfc2": jnp.asarray(params["fc2_w"].T, dtype),          # (392, lam)
        "bfc2": jnp.asarray(params["fc2_b"].reshape(1, lam), f32),
    }


@jax.jit
def cnn_encoder_forward(packed, x):
    """x: (B, 1, 28, 28) float32 NCHW -> (B, lambda) latent features."""
    B = x.shape[0]
    lam = packed["wfc2"].shape[1]
    p1 = _build_pool_subgrid_patches(x).astype(packed["w1"].dtype)
    inputs = (p1, packed["w1"], packed["b1"], packed["s2"], packed["w2"],
              packed["b2"], packed["tpool"], packed["csel"], packed["wfc1"],
              packed["bfc1"], packed["wfc2"], packed["bfc2"])

    flops = 2 * B * (4 * _C1 * 9 * _P1                       # conv1 subgrids
                     + 9 * (_C2 * _C1 * _P1 + _C2 * _P1 * _P1)  # conv2 taps
                     + 3 * _C2 * _P1 * _P1                   # pool2 shifts
                     + _C2 * _P1 * _P2                       # pool2 compaction
                     + _FC * _FC + _FC * lam)                # fc1 + fc2
    bytes_accessed = sum(int(a.size) * a.dtype.itemsize for a in inputs)
    bytes_accessed += B * lam * 4

    return pl.pallas_call(
        _encoder_kernel,
        out_shape=jax.ShapeDtypeStruct((B, lam), jnp.float32),
        grid=(1,),
        in_specs=[_whole_array_spec(a) for a in inputs],
        out_specs=pl.BlockSpec((B, lam), lambda i: (0, 0)),
        compiler_params=pltpu.CompilerParams(
            dimension_semantics=("arbitrary",)),
        cost_estimate=pl.CostEstimate(flops=flops, transcendentals=0,
                                      bytes_accessed=bytes_accessed),
    )(*inputs)


# ----------------------------------------------------------------------------
# Pure-JAX f32 reference (matches the PyTorch module)
# ----------------------------------------------------------------------------
def cnn_encoder_reference(params, x):
    def conv(x, w, b):
        y = jax.lax.conv_general_dilated(
            x, w, window_strides=(1, 1), padding=((1, 1), (1, 1)),
            dimension_numbers=("NCHW", "OIHW", "NCHW"))
        return jnp.maximum(y + b[None, :, None, None], 0.0)

    def pool(x):
        B, C, H, W = x.shape
        return x.reshape(B, C, H // 2, 2, W // 2, 2).max(axis=(3, 5))

    h = pool(conv(x, params["conv1_w"], params["conv1_b"]))
    h = pool(conv(h, params["conv2_w"], params["conv2_b"]))
    flat = h.reshape(h.shape[0], -1)
    h = jnp.maximum(flat @ params["fc1_w"].T + params["fc1_b"], 0.0)
    return jnp.maximum(h @ params["fc2_w"].T + params["fc2_b"], 0.0)


if __name__ == "__main__":
    LAMBDA = 32            # latent dimension
    B = 2                  # batch size
    key = jax.random.PRNGKey(0)
    k_param, k_x = jax.random.split(key)

    params = init_params(k_param, LAMBDA)
    x = jax.random.uniform(k_x, (B, 1, 28, 28), jnp.float32)   # MNIST-sized

    dtype = jnp.bfloat16 if USE_BF16 else jnp.float32
    packed = pack_params(params, dtype)

    latent = jax.block_until_ready(cnn_encoder_forward(packed, x))
    ref = jax.block_until_ready(cnn_encoder_reference(params, x))

    assert latent.shape == (B, LAMBDA), latent.shape
    tol = 5e-2 if USE_BF16 else 1e-4     # bf16 MXU operands vs. f32 reference
    max_err = float(jnp.max(jnp.abs(latent - ref)))
    assert jnp.allclose(latent, ref, atol=tol, rtol=tol), max_err

    print("KERNEL_OK")
</pallas_src>

<mosaic_0001>
module attributes {stable_mosaic.version = 11 : i64} {
  func.func @_encoder_kernel(%arg0: i32, %arg1: memref<2x4x9x196xbf16, #tpu.memory_space<vmem>>, %arg2: memref<16x9xbf16, #tpu.memory_space<vmem>>, %arg3: memref<16x1xf32, #tpu.memory_space<vmem>>, %arg4: memref<9x196x196xbf16, #tpu.memory_space<vmem>>, %arg5: memref<9x8x16xbf16, #tpu.memory_space<vmem>>, %arg6: memref<8x1xf32, #tpu.memory_space<vmem>>, %arg7: memref<3x196x196xbf16, #tpu.memory_space<vmem>>, %arg8: memref<196x49xbf16, #tpu.memory_space<vmem>>, %arg9: memref<8x49x392xbf16, #tpu.memory_space<vmem>>, %arg10: memref<1x392xf32, #tpu.memory_space<vmem>>, %arg11: memref<392x32xbf16, #tpu.memory_space<vmem>>, %arg12: memref<1x32xf32, #tpu.memory_space<vmem>>, %arg13: memref<2x32xf32, #tpu.memory_space<vmem>>) attributes {dimension_semantics = [#tpu.dimension_semantics<arbitrary>], iteration_bounds = array<i64: 1>, scalar_prefetch = 0 : i64, scratch_operands = 0 : i64, tpu.core_type = #tpu.core_type<tc>, window_params = [{pipeline_mode = #tpu.pipeline_mode<synchronous>, transform_indices = @transform_0, window_bounds = array<i64: 2, 4, 9, 196>}, {pipeline_mode = #tpu.pipeline_mode<synchronous>, transform_indices = @transform_1, window_bounds = array<i64: 16, 9>}, {pipeline_mode = #tpu.pipeline_mode<synchronous>, transform_indices = @transform_2, window_bounds = array<i64: 16, 1>}, {pipeline_mode = #tpu.pipeline_mode<synchronous>, transform_indices = @transform_3, window_bounds = array<i64: 9, 196, 196>}, {pipeline_mode = #tpu.pipeline_mode<synchronous>, transform_indices = @transform_4, window_bounds = array<i64: 9, 8, 16>}, {pipeline_mode = #tpu.pipeline_mode<synchronous>, transform_indices = @transform_5, window_bounds = array<i64: 8, 1>}, {pipeline_mode = #tpu.pipeline_mode<synchronous>, transform_indices = @transform_6, window_bounds = array<i64: 3, 196, 196>}, {pipeline_mode = #tpu.pipeline_mode<synchronous>, transform_indices = @transform_7, window_bounds = array<i64: 196, 49>}, {pipeline_mode = #tpu.pipeline_mode<synchronous>, transform_indices = @transform_8, window_bounds = array<i64: 8, 49, 392>}, {pipeline_mode = #tpu.pipeline_mode<synchronous>, transform_indices = @transform_9, window_bounds = array<i64: 1, 392>}, {pipeline_mode = #tpu.pipeline_mode<synchronous>, transform_indices = @transform_10, window_bounds = array<i64: 392, 32>}, {pipeline_mode = #tpu.pipeline_mode<synchronous>, transform_indices = @transform_11, window_bounds = array<i64: 1, 32>}, {pipeline_mode = #tpu.pipeline_mode<synchronous>, transform_indices = @transform_12, window_bounds = array<i64: 2, 32>}]} {
    %c0 = arith.constant 0 : index
    %c0_0 = arith.constant 0 : index
    %0 = vector.load %arg3[%c0, %c0_0] : memref<16x1xf32, #tpu.memory_space<vmem>>, vector<16x1xf32>
    %c0_1 = arith.constant 0 : index
    %c0_2 = arith.constant 0 : index
    %1 = vector.load %arg6[%c0_1, %c0_2] : memref<8x1xf32, #tpu.memory_space<vmem>>, vector<8x1xf32>
    %c0_3 = arith.constant 0 : index
    %c0_4 = arith.constant 0 : index
    %2 = vector.load %arg2[%c0_3, %c0_4] : memref<16x9xbf16, #tpu.memory_space<vmem>>, vector<16x9xbf16>
    %c0_5 = arith.constant 0 : index
    %c0_6 = arith.constant 0 : index
    %c0_7 = arith.constant 0 : index
    %c0_8 = arith.constant 0 : index
    %3 = vector.load %arg1[%c0_5, %c0_6, %c0_7, %c0_8] : memref<2x4x9x196xbf16, #tpu.memory_space<vmem>>, vector<1x1x9x196xbf16>
    %4 = vector.shape_cast %3 : vector<1x1x9x196xbf16> to vector<9x196xbf16>
    %cst = arith.constant dense<0.000000e+00> : vector<16x196xf32>
    %5 = tpu.matmul %2, %4, %cst {dimension_numbers = #tpu.dot_dimension_numbers<[1], [0], [0], [1], [0, 0, 1, 1], [], []>} : vector<16x9xbf16>, vector<9x196xbf16>, vector<16x196xf32> -> vector<16x196xf32>
    %c0_9 = arith.constant 0 : index
    %c0_10 = arith.constant 0 : index
    %6 = vector.load %arg2[%c0_9, %c0_10] : memref<16x9xbf16, #tpu.memory_space<vmem>>, vector<16x9xbf16>
    %c0_11 = arith.constant 0 : index
    %c1 = arith.constant 1 : index
    %c0_12 = arith.constant 0 : index
    %c0_13 = arith.constant 0 : index
    %7 = vector.load %arg1[%c0_11, %c1, %c0_12, %c0_13] : memref<2x4x9x196xbf16, #tpu.memory_space<vmem>>, vector<1x1x9x196xbf16>
    %8 = vector.shape_cast %7 : vector<1x1x9x196xbf16> to vector<9x196xbf16>
    %cst_14 = arith.constant dense<0.000000e+00> : vector<16x196xf32>
    %9 = tpu.matmul %6, %8, %cst_14 {dimension_numbers = #tpu.dot_dimension_numbers<[1], [0], [0], [1], [0, 0, 1, 1], [], []>} : vector<16x9xbf16>, vector<9x196xbf16>, vector<16x196xf32> -> vector<16x196xf32>
    %10 = arith.maximumf %5, %9 : vector<16x196xf32>
    %c0_15 = arith.constant 0 : index
    %c0_16 = arith.constant 0 : index
    %11 = vector.load %arg2[%c0_15, %c0_16] : memref<16x9xbf16, #tpu.memory_space<vmem>>, vector<16x9xbf16>
    %c0_17 = arith.constant 0 : index
    %c2 = arith.constant 2 : index
    %c0_18 = arith.constant 0 : index
    %c0_19 = arith.constant 0 : index
    %12 = vector.load %arg1[%c0_17, %c2, %c0_18, %c0_19] : memref<2x4x9x196xbf16, #tpu.memory_space<vmem>>, vector<1x1x9x196xbf16>
    %13 = vector.shape_cast %12 : vector<1x1x9x196xbf16> to vector<9x196xbf16>
    %cst_20 = arith.constant dense<0.000000e+00> : vector<16x196xf32>
    %14 = tpu.matmul %11, %13, %cst_20 {dimension_numbers = #tpu.dot_dimension_numbers<[1], [0], [0], [1], [0, 0, 1, 1], [], []>} : vector<16x9xbf16>, vector<9x196xbf16>, vector<16x196xf32> -> vector<16x196xf32>
    %15 = arith.maximumf %10, %14 : vector<16x196xf32>
    %c0_21 = arith.constant 0 : index
    %c0_22 = arith.constant 0 : index
    %16 = vector.load %arg2[%c0_21, %c0_22] : memref<16x9xbf16, #tpu.memory_space<vmem>>, vector<16x9xbf16>
    %c0_23 = arith.constant 0 : index
    %c3 = arith.constant 3 : index
    %c0_24 = arith.constant 0 : index
    %c0_25 = arith.constant 0 : index
    %17 = vector.load %arg1[%c0_23, %c3, %c0_24, %c0_25] : memref<2x4x9x196xbf16, #tpu.memory_space<vmem>>, vector<1x1x9x196xbf16>
    %18 = vector.shape_cast %17 : vector<1x1x9x196xbf16> to vector<9x196xbf16>
    %cst_26 = arith.constant dense<0.000000e+00> : vector<16x196xf32>
    %19 = tpu.matmul %16, %18, %cst_26 {dimension_numbers = #tpu.dot_dimension_numbers<[1], [0], [0], [1], [0, 0, 1, 1], [], []>} : vector<16x9xbf16>, vector<9x196xbf16>, vector<16x196xf32> -> vector<16x196xf32>
    %20 = arith.maximumf %15, %19 : vector<16x196xf32>
    %21 = vector.broadcast %0 : vector<16x1xf32> to vector<16x196xf32>
    %22 = arith.addf %20, %21 : vector<16x196xf32>
    %cst_27 = arith.constant 0.000000e+00 : f32
    %23 = vector.broadcast %cst_27 : f32 to vector<16x196xf32>
    %24 = arith.maximumf %22, %23 : vector<16x196xf32>
    %25 = arith.truncf %24 : vector<16x196xf32> to vector<16x196xbf16>
    %c0_28 = arith.constant 0 : index
    %c0_29 = arith.constant 0 : index
    %c0_30 = arith.constant 0 : index
    %26 = vector.load %arg5[%c0_28, %c0_29, %c0_30] : memref<9x8x16xbf16, #tpu.memory_space<vmem>>, vector<1x8x16xbf16>
    %27 = vector.shape_cast %26 : vector<1x8x16xbf16> to vector<8x16xbf16>
    %cst_31 = arith.constant dense<0.000000e+00> : vector<8x196xf32>
    %28 = tpu.matmul %27, %25, %cst_31 {dimension_numbers = #tpu.dot_dimension_numbers<[1], [0], [0], [1], [0, 0, 1, 1], [], []>} : vector<8x16xbf16>, vector<16x196xbf16>, vector<8x196xf32> -> vector<8x196xf32>
    %29 = arith.truncf %28 : vector<8x196xf32> to vector<8x196xbf16>
    %c0_32 = arith.constant 0 : index
    %c0_33 = arith.constant 0 : index
    %c0_34 = arith.constant 0 : index
    %30 = vector.load %arg4[%c0_32, %c0_33, %c0_34] : memref<9x196x196xbf16, #tpu.memory_space<vmem>>, vector<1x196x196xbf16>
    %31 = vector.shape_cast %30 : vector<1x196x196xbf16> to vector<196x196xbf16>
    %cst_35 = arith.constant dense<0.000000e+00> : vector<8x196xf32>
    %32 = tpu.matmul %29, %31, %cst_35 {dimension_numbers = #tpu.dot_dimension_numbers<[1], [0], [0], [1], [0, 0, 1, 1], [], []>} : vector<8x196xbf16>, vector<196x196xbf16>, vector<8x196xf32> -> vector<8x196xf32>
    %c1_36 = arith.constant 1 : index
    %c0_37 = arith.constant 0 : index
    %c0_38 = arith.constant 0 : index
    %33 = vector.load %arg5[%c1_36, %c0_37, %c0_38] : memref<9x8x16xbf16, #tpu.memory_space<vmem>>, vector<1x8x16xbf16>
    %34 = vector.shape_cast %33 : vector<1x8x16xbf16> to vector<8x16xbf16>
    %cst_39 = arith.constant dense<0.000000e+00> : vector<8x196xf32>
    %35 = tpu.matmul %34, %25, %cst_39 {dimension_numbers = #tpu.dot_dimension_numbers<[1], [0], [0], [1], [0, 0, 1, 1], [], []>} : vector<8x16xbf16>, vector<16x196xbf16>, vector<8x196xf32> -> vector<8x196xf32>
    %36 = arith.truncf %35 : vector<8x196xf32> to vector<8x196xbf16>
    %c1_40 = arith.constant 1 : index
    %c0_41 = arith.constant 0 : index
    %c0_42 = arith.constant 0 : index
    %37 = vector.load %arg4[%c1_40, %c0_41, %c0_42] : memref<9x196x196xbf16, #tpu.memory_space<vmem>>, vector<1x196x196xbf16>
    %38 = vector.shape_cast %37 : vector<1x196x196xbf16> to vector<196x196xbf16>
    %cst_43 = arith.constant dense<0.000000e+00> : vector<8x196xf32>
    %39 = tpu.matmul %36, %38, %cst_43 {dimension_numbers = #tpu.dot_dimension_numbers<[1], [0], [0], [1], [0, 0, 1, 1], [], []>} : vector<8x196xbf16>, vector<196x196xbf16>, vector<8x196xf32> -> vector<8x196xf32>
    %40 = arith.addf %32, %39 : vector<8x196xf32>
    %c2_44 = arith.constant 2 : index
    %c0_45 = arith.constant 0 : index
    %c0_46 = arith.constant 0 : index
    %41 = vector.load %arg5[%c2_44, %c0_45, %c0_46] : memref<9x8x16xbf16, #tpu.memory_space<vmem>>, vector<1x8x16xbf16>
    %42 = vector.shape_cast %41 : vector<1x8x16xbf16> to vector<8x16xbf16>
    %cst_47 = arith.constant dense<0.000000e+00> : vector<8x196xf32>
    %43 = tpu.matmul %42, %25, %cst_47 {dimension_numbers = #tpu.dot_dimension_numbers<[1], [0], [0], [1], [0, 0, 1, 1], [], []>} : vector<8x16xbf16>, vector<16x196xbf16>, vector<8x196xf32> -> vector<8x196xf32>
    %44 = arith.truncf %43 : vector<8x196xf32> to vector<8x196xbf16>
    %c2_48 = arith.constant 2 : index
    %c0_49 = arith.constant 0 : index
    %c0_50 = arith.constant 0 : index
    %45 = vector.load %arg4[%c2_48, %c0_49, %c0_50] : memref<9x196x196xbf16, #tpu.memory_space<vmem>>, vector<1x196x196xbf16>
    %46 = vector.shape_cast %45 : vector<1x196x196xbf16> to vector<196x196xbf16>
    %cst_51 = arith.constant dense<0.000000e+00> : vector<8x196xf32>
    %47 = tpu.matmul %44, %46, %cst_51 {dimension_numbers = #tpu.dot_dimension_numbers<[1], [0], [0], [1], [0, 0, 1, 1], [], []>} : vector<8x196xbf16>, vector<196x196xbf16>, vector<8x196xf32> -> vector<8x196xf32>
    %48 = arith.addf %40, %47 : vector<8x196xf32>
    %c3_52 = arith.constant 3 : index
    %c0_53 = arith.constant 0 : index
    %c0_54 = arith.constant 0 : index
    %49 = vector.load %arg5[%c3_52, %c0_53, %c0_54] : memref<9x8x16xbf16, #tpu.memory_space<vmem>>, vector<1x8x16xbf16>
    %50 = vector.shape_cast %49 : vector<1x8x16xbf16> to vector<8x16xbf16>
    %cst_55 = arith.constant dense<0.000000e+00> : vector<8x196xf32>
    %51 = tpu.matmul %50, %25, %cst_55 {dimension_numbers = #tpu.dot_dimension_numbers<[1], [0], [0], [1], [0, 0, 1, 1], [], []>} : vector<8x16xbf16>, vector<16x196xbf16>, vector<8x196xf32> -> vector<8x196xf32>
    %52 = arith.truncf %51 : vector<8x196xf32> to vector<8x196xbf16>
    %c3_56 = arith.constant 3 : index
    %c0_57 = arith.constant 0 : index
    %c0_58 = arith.constant 0 : index
    %53 = vector.load %arg4[%c3_56, %c0_57, %c0_58] : memref<9x196x196xbf16, #tpu.memory_space<vmem>>, vector<1x196x196xbf16>
    %54 = vector.shape_cast %53 : vector<1x196x196xbf16> to vector<196x196xbf16>
    %cst_59 = arith.constant dense<0.000000e+00> : vector<8x196xf32>
    %55 = tpu.matmul %52, %54, %cst_59 {dimension_numbers = #tpu.dot_dimension_numbers<[1], [0], [0], [1], [0, 0, 1, 1], [], []>} : vector<8x196xbf16>, vector<196x196xbf16>, vector<8x196xf32> -> vector<8x196xf32>
    %56 = arith.addf %48, %55 : vector<8x196xf32>
    %c4 = arith.constant 4 : index
    %c0_60 = arith.constant 0 : index
    %c0_61 = arith.constant 0 : index
    %57 = vector.load %arg5[%c4, %c0_60, %c0_61] : memref<9x8x16xbf16, #tpu.memory_space<vmem>>, vector<1x8x16xbf16>
    %58 = vector.shape_cast %57 : vector<1x8x16xbf16> to vector<8x16xbf16>
    %cst_62 = arith.constant dense<0.000000e+00> : vector<8x196xf32>
    %59 = tpu.matmul %58, %25, %cst_62 {dimension_numbers = #tpu.dot_dimension_numbers<[1], [0], [0], [1], [0, 0, 1, 1], [], []>} : vector<8x16xbf16>, vector<16x196xbf16>, vector<8x196xf32> -> vector<8x196xf32>
    %60 = arith.truncf %59 : vector<8x196xf32> to vector<8x196xbf16>
    %c4_63 = arith.constant 4 : index
    %c0_64 = arith.constant 0 : index
    %c0_65 = arith.constant 0 : index
    %61 = vector.load %arg4[%c4_63, %c0_64, %c0_65] : memref<9x196x196xbf16, #tpu.memory_space<vmem>>, vector<1x196x196xbf16>
    %62 = vector.shape_cast %61 : vector<1x196x196xbf16> to vector<196x196xbf16>
    %cst_66 = arith.constant dense<0.000000e+00> : vector<8x196xf32>
    %63 = tpu.matmul %60, %62, %cst_66 {dimension_numbers = #tpu.dot_dimension_numbers<[1], [0], [0], [1], [0, 0, 1, 1], [], []>} : vector<8x196xbf16>, vector<196x196xbf16>, vector<8x196xf32> -> vector<8x196xf32>
    %64 = arith.addf %56, %63 : vector<8x196xf32>
    %c5 = arith.constant 5 : index
    %c0_67 = arith.constant 0 : index
    %c0_68 = arith.constant 0 : index
    %65 = vector.load %arg5[%c5, %c0_67, %c0_68] : memref<9x8x16xbf16, #tpu.memory_space<vmem>>, vector<1x8x16xbf16>
    %66 = vector.shape_cast %65 : vector<1x8x16xbf16> to vector<8x16xbf16>
    %cst_69 = arith.constant dense<0.000000e+00> : vector<8x196xf32>
    %67 = tpu.matmul %66, %25, %cst_69 {dimension_numbers = #tpu.dot_dimension_numbers<[1], [0], [0], [1], [0, 0, 1, 1], [], []>} : vector<8x16xbf16>, vector<16x196xbf16>, vector<8x196xf32> -> vector<8x196xf32>
    %68 = arith.truncf %67 : vector<8x196xf32> to vector<8x196xbf16>
    %c5_70 = arith.constant 5 : index
    %c0_71 = arith.constant 0 : index
    %c0_72 = arith.constant 0 : index
    %69 = vector.load %arg4[%c5_70, %c0_71, %c0_72] : memref<9x196x196xbf16, #tpu.memory_space<vmem>>, vector<1x196x196xbf16>
    %70 = vector.shape_cast %69 : vector<1x196x196xbf16> to vector<196x196xbf16>
    %cst_73 = arith.constant dense<0.000000e+00> : vector<8x196xf32>
    %71 = tpu.matmul %68, %70, %cst_73 {dimension_numbers = #tpu.dot_dimension_numbers<[1], [0], [0], [1], [0, 0, 1, 1], [], []>} : vector<8x196xbf16>, vector<196x196xbf16>, vector<8x196xf32> -> vector<8x196xf32>
    %72 = arith.addf %64, %71 : vector<8x196xf32>
    %c6 = arith.constant 6 : index
    %c0_74 = arith.constant 0 : index
    %c0_75 = arith.constant 0 : index
    %73 = vector.load %arg5[%c6, %c0_74, %c0_75] : memref<9x8x16xbf16, #tpu.memory_space<vmem>>, vector<1x8x16xbf16>
    %74 = vector.shape_cast %73 : vector<1x8x16xbf16> to vector<8x16xbf16>
    %cst_76 = arith.constant dense<0.000000e+00> : vector<8x196xf32>
    %75 = tpu.matmul %74, %25, %cst_76 {dimension_numbers = #tpu.dot_dimension_numbers<[1], [0], [0], [1], [0, 0, 1, 1], [], []>} : vector<8x16xbf16>, vector<16x196xbf16>, vector<8x196xf32> -> vector<8x196xf32>
    %76 = arith.truncf %75 : vector<8x196xf32> to vector<8x196xbf16>
    %c6_77 = arith.constant 6 : index
    %c0_78 = arith.constant 0 : index
    %c0_79 = arith.constant 0 : index
    %77 = vector.load %arg4[%c6_77, %c0_78, %c0_79] : memref<9x196x196xbf16, #tpu.memory_space<vmem>>, vector<1x196x196xbf16>
    %78 = vector.shape_cast %77 : vector<1x196x196xbf16> to vector<196x196xbf16>
    %cst_80 = arith.constant dense<0.000000e+00> : vector<8x196xf32>
    %79 = tpu.matmul %76, %78, %cst_80 {dimension_numbers = #tpu.dot_dimension_numbers<[1], [0], [0], [1], [0, 0, 1, 1], [], []>} : vector<8x196xbf16>, vector<196x196xbf16>, vector<8x196xf32> -> vector<8x196xf32>
    %80 = arith.addf %72, %79 : vector<8x196xf32>
    %c7 = arith.constant 7 : index
    %c0_81 = arith.constant 0 : index
    %c0_82 = arith.constant 0 : index
    %81 = vector.load %arg5[%c7, %c0_81, %c0_82] : memref<9x8x16xbf16, #tpu.memory_space<vmem>>, vector<1x8x16xbf16>
    %82 = vector.shape_cast %81 : vector<1x8x16xbf16> to vector<8x16xbf16>
    %cst_83 = arith.constant dense<0.000000e+00> : vector<8x196xf32>
    %83 = tpu.matmul %82, %25, %cst_83 {dimension_numbers = #tpu.dot_dimension_numbers<[1], [0], [0], [1], [0, 0, 1, 1], [], []>} : vector<8x16xbf16>, vector<16x196xbf16>, vector<8x196xf32> -> vector<8x196xf32>
    %84 = arith.truncf %83 : vector<8x196xf32> to vector<8x196xbf16>
    %c7_84 = arith.constant 7 : index
    %c0_85 = arith.constant 0 : index
    %c0_86 = arith.constant 0 : index
    %85 = vector.load %arg4[%c7_84, %c0_85, %c0_86] : memref<9x196x196xbf16, #tpu.memory_space<vmem>>, vector<1x196x196xbf16>
    %86 = vector.shape_cast %85 : vector<1x196x196xbf16> to vector<196x196xbf16>
    %cst_87 = arith.constant dense<0.000000e+00> : vector<8x196xf32>
    %87 = tpu.matmul %84, %86, %cst_87 {dimension_numbers = #tpu.dot_dimension_numbers<[1], [0], [0], [1], [0, 0, 1, 1], [], []>} : vector<8x196xbf16>, vector<196x196xbf16>, vector<8x196xf32> -> vector<8x196xf32>
    %88 = arith.addf %80, %87 : vector<8x196xf32>
    %c8 = arith.constant 8 : index
    %c0_88 = arith.constant 0 : index
    %c0_89 = arith.constant 0 : index
    %89 = vector.load %arg5[%c8, %c0_88, %c0_89] : memref<9x8x16xbf16, #tpu.memory_space<vmem>>, vector<1x8x16xbf16>
    %90 = vector.shape_cast %89 : vector<1x8x16xbf16> to vector<8x16xbf16>
    %cst_90 = arith.constant dense<0.000000e+00> : vector<8x196xf32>
    %91 = tpu.matmul %90, %25, %cst_90 {dimension_numbers = #tpu.dot_dimension_numbers<[1], [0], [0], [1], [0, 0, 1, 1], [], []>} : vector<8x16xbf16>, vector<16x196xbf16>, vector<8x196xf32> -> vector<8x196xf32>
    %92 = arith.truncf %91 : vector<8x196xf32> to vector<8x196xbf16>
    %c8_91 = arith.constant 8 : index
    %c0_92 = arith.constant 0 : index
    %c0_93 = arith.constant 0 : index
    %93 = vector.load %arg4[%c8_91, %c0_92, %c0_93] : memref<9x196x196xbf16, #tpu.memory_space<vmem>>, vector<1x196x196xbf16>
    %94 = vector.shape_cast %93 : vector<1x196x196xbf16> to vector<196x196xbf16>
    %cst_94 = arith.constant dense<0.000000e+00> : vector<8x196xf32>
    %95 = tpu.matmul %92, %94, %cst_94 {dimension_numbers = #tpu.dot_dimension_numbers<[1], [0], [0], [1], [0, 0, 1, 1], [], []>} : vector<8x196xbf16>, vector<196x196xbf16>, vector<8x196xf32> -> vector<8x196xf32>
    %96 = arith.addf %88, %95 : vector<8x196xf32>
    %97 = vector.broadcast %1 : vector<8x1xf32> to vector<8x196xf32>
    %98 = arith.addf %96, %97 : vector<8x196xf32>
    %cst_95 = arith.constant 0.000000e+00 : f32
    %99 = vector.broadcast %cst_95 : f32 to vector<8x196xf32>
    %100 = arith.maximumf %98, %99 : vector<8x196xf32>
    %101 = arith.truncf %100 : vector<8x196xf32> to vector<8x196xbf16>
    %c0_96 = arith.constant 0 : index
    %c0_97 = arith.constant 0 : index
    %c0_98 = arith.constant 0 : index
    %102 = vector.load %arg7[%c0_96, %c0_97, %c0_98] : memref<3x196x196xbf16, #tpu.memory_space<vmem>>, vector<1x196x196xbf16>
    %103 = vector.shape_cast %102 : vector<1x196x196xbf16> to vector<196x196xbf16>
    %cst_99 = arith.constant dense<0.000000e+00> : vector<8x196xf32>
    %104 = tpu.matmul %101, %103, %cst_99 {dimension_numbers = #tpu.dot_dimension_numbers<[1], [0], [0], [1], [0, 0, 1, 1], [], []>} : vector<8x196xbf16>, vector<196x196xbf16>, vector<8x196xf32> -> vector<8x196xf32>
    %105 = arith.maximumf %100, %104 : vector<8x196xf32>
    %c1_100 = arith.constant 1 : index
    %c0_101 = arith.constant 0 : index
    %c0_102 = arith.constant 0 : index
    %106 = vector.load %arg7[%c1_100, %c0_101, %c0_102] : memref<3x196x196xbf16, #tpu.memory_space<vmem>>, vector<1x196x196xbf16>
    %107 = vector.shape_cast %106 : vector<1x196x196xbf16> to vector<196x196xbf16>
    %cst_103 = arith.constant dense<0.000000e+00> : vector<8x196xf32>
    %108 = tpu.matmul %101, %107, %cst_103 {dimension_numbers = #tpu.dot_dimension_numbers<[1], [0], [0], [1], [0, 0, 1, 1], [], []>} : vector<8x196xbf16>, vector<196x196xbf16>, vector<8x196xf32> -> vector<8x196xf32>
    %109 = arith.maximumf %105, %108 : vector<8x196xf32>
    %c2_104 = arith.constant 2 : index
    %c0_105 = arith.constant 0 : index
    %c0_106 = arith.constant 0 : index
    %110 = vector.load %arg7[%c2_104, %c0_105, %c0_106] : memref<3x196x196xbf16, #tpu.memory_space<vmem>>, vector<1x196x196xbf16>
    %111 = vector.shape_cast %110 : vector<1x196x196xbf16> to vector<196x196xbf16>
    %cst_107 = arith.constant dense<0.000000e+00> : vector<8x196xf32>
    %112 = tpu.matmul %101, %111, %cst_107 {dimension_numbers = #tpu.dot_dimension_numbers<[1], [0], [0], [1], [0, 0, 1, 1], [], []>} : vector<8x196xbf16>, vector<196x196xbf16>, vector<8x196xf32> -> vector<8x196xf32>
    %113 = arith.maximumf %109, %112 : vector<8x196xf32>
    %114 = arith.truncf %113 : vector<8x196xf32> to vector<8x196xbf16>
    %c0_108 = arith.constant 0 : index
    %c0_109 = arith.constant 0 : index
    %115 = vector.load %arg8[%c0_108, %c0_109] : memref<196x49xbf16, #tpu.memory_space<vmem>>, vector<196x49xbf16>
    %cst_110 = arith.constant dense<0.000000e+00> : vector<8x49xf32>
    %116 = tpu.matmul %114, %115, %cst_110 {dimension_numbers = #tpu.dot_dimension_numbers<[1], [0], [0], [1], [0, 0, 1, 1], [], []>} : vector<8x196xbf16>, vector<196x49xbf16>, vector<8x49xf32> -> vector<8x49xf32>
    %c0_111 = arith.constant 0 : index
    %c0_112 = arith.constant 0 : index
    %117 = vector.load %arg2[%c0_111, %c0_112] : memref<16x9xbf16, #tpu.memory_space<vmem>>, vector<16x9xbf16>
    %c1_113 = arith.constant 1 : index
    %c0_114 = arith.constant 0 : index
    %c0_115 = arith.constant 0 : index
    %c0_116 = arith.constant 0 : index
    %118 = vector.load %arg1[%c1_113, %c0_114, %c0_115, %c0_116] : memref<2x4x9x196xbf16, #tpu.memory_space<vmem>>, vector<1x1x9x196xbf16>
    %119 = vector.shape_cast %118 : vector<1x1x9x196xbf16> to vector<9x196xbf16>
    %cst_117 = arith.constant dense<0.000000e+00> : vector<16x196xf32>
    %120 = tpu.matmul %117, %119, %cst_117 {dimension_numbers = #tpu.dot_dimension_numbers<[1], [0], [0], [1], [0, 0, 1, 1], [], []>} : vector<16x9xbf16>, vector<9x196xbf16>, vector<16x196xf32> -> vector<16x196xf32>
    %c0_118 = arith.constant 0 : index
    %c0_119 = arith.constant 0 : index
    %121 = vector.load %arg2[%c0_118, %c0_119] : memref<16x9xbf16, #tpu.memory_space<vmem>>, vector<16x9xbf16>
    %c1_120 = arith.constant 1 : index
    %c1_121 = arith.constant 1 : index
    %c0_122 = arith.constant 0 : index
    %c0_123 = arith.constant 0 : index
    %122 = vector.load %arg1[%c1_120, %c1_121, %c0_122, %c0_123] : memref<2x4x9x196xbf16, #tpu.memory_space<vmem>>, vector<1x1x9x196xbf16>
    %123 = vector.shape_cast %122 : vector<1x1x9x196xbf16> to vector<9x196xbf16>
    %cst_124 = arith.constant dense<0.000000e+00> : vector<16x196xf32>
    %124 = tpu.matmul %121, %123, %cst_124 {dimension_numbers = #tpu.dot_dimension_numbers<[1], [0], [0], [1], [0, 0, 1, 1], [], []>} : vector<16x9xbf16>, vector<9x196xbf16>, vector<16x196xf32> -> vector<16x196xf32>
    %125 = arith.maximumf %120, %124 : vector<16x196xf32>
    %c0_125 = arith.constant 0 : index
    %c0_126 = arith.constant 0 : index
    %126 = vector.load %arg2[%c0_125, %c0_126] : memref<16x9xbf16, #tpu.memory_space<vmem>>, vector<16x9xbf16>
    %c1_127 = arith.constant 1 : index
    %c2_128 = arith.constant 2 : index
    %c0_129 = arith.constant 0 : index
    %c0_130 = arith.constant 0 : index
    %127 = vector.load %arg1[%c1_127, %c2_128, %c0_129, %c0_130] : memref<2x4x9x196xbf16, #tpu.memory_space<vmem>>, vector<1x1x9x196xbf16>
    %128 = vector.shape_cast %127 : vector<1x1x9x196xbf16> to vector<9x196xbf16>
    %cst_131 = arith.constant dense<0.000000e+00> : vector<16x196xf32>
    %129 = tpu.matmul %126, %128, %cst_131 {dimension_numbers = #tpu.dot_dimension_numbers<[1], [0], [0], [1], [0, 0, 1, 1], [], []>} : vector<16x9xbf16>, vector<9x196xbf16>, vector<16x196xf32> -> vector<16x196xf32>
    %130 = arith.maximumf %125, %129 : vector<16x196xf32>
    %c0_132 = arith.constant 0 : index
    %c0_133 = arith.constant 0 : index
    %131 = vector.load %arg2[%c0_132, %c0_133] : memref<16x9xbf16, #tpu.memory_space<vmem>>, vector<16x9xbf16>
    %c1_134 = arith.constant 1 : index
    %c3_135 = arith.constant 3 : index
    %c0_136 = arith.constant 0 : index
    %c0_137 = arith.constant 0 : index
    %132 = vector.load %arg1[%c1_134, %c3_135, %c0_136, %c0_137] : memref<2x4x9x196xbf16, #tpu.memory_space<vmem>>, vector<1x1x9x196xbf16>
    %133 = vector.shape_cast %132 : vector<1x1x9x196xbf16> to vector<9x196xbf16>
    %cst_138 = arith.constant dense<0.000000e+00> : vector<16x196xf32>
    %134 = tpu.matmul %131, %133, %cst_138 {dimension_numbers = #tpu.dot_dimension_numbers<[1], [0], [0], [1], [0, 0, 1, 1], [], []>} : vector<16x9xbf16>, vector<9x196xbf16>, vector<16x196xf32> -> vector<16x196xf32>
    %135 = arith.maximumf %130, %134 : vector<16x196xf32>
    %136 = vector.broadcast %0 : vector<16x1xf32> to vector<16x196xf32>
    %137 = arith.addf %135, %136 : vector<16x196xf32>
    %cst_139 = arith.constant 0.000000e+00 : f32
    %138 = vector.broadcast %cst_139 : f32 to vector<16x196xf32>
    %139 = arith.maximumf %137, %138 : vector<16x196xf32>
    %140 = arith.truncf %139 : vector<16x196xf32> to vector<16x196xbf16>
    %c0_140 = arith.constant 0 : index
    %c0_141 = arith.constant 0 : index
    %c0_142 = arith.constant 0 : index
    %141 = vector.load %arg5[%c0_140, %c0_141, %c0_142] : memref<9x8x16xbf16, #tpu.memory_space<vmem>>, vector<1x8x16xbf16>
    %142 = vector.shape_cast %141 : vector<1x8x16xbf16> to vector<8x16xbf16>
    %cst_143 = arith.constant dense<0.000000e+00> : vector<8x196xf32>
    %143 = tpu.matmul %142, %140, %cst_143 {dimension_numbers = #tpu.dot_dimension_numbers<[1], [0], [0], [1], [0, 0, 1, 1], [], []>} : vector<8x16xbf16>, vector<16x196xbf16>, vector<8x196xf32> -> vector<8x196xf32>
    %144 = arith.truncf %143 : vector<8x196xf32> to vector<8x196xbf16>
    %c0_144 = arith.constant 0 : index
    %c0_145 = arith.constant 0 : index
    %c0_146 = arith.constant 0 : index
    %145 = vector.load %arg4[%c0_144, %c0_145, %c0_146] : memref<9x196x196xbf16, #tpu.memory_space<vmem>>, vector<1x196x196xbf16>
    %146 = vector.shape_cast %145 : vector<1x196x196xbf16> to vector<196x196xbf16>
    %cst_147 = arith.constant dense<0.000000e+00> : vector<8x196xf32>
    %147 = tpu.matmul %144, %146, %cst_147 {dimension_numbers = #tpu.dot_dimension_numbers<[1], [0], [0], [1], [0, 0, 1, 1], [], []>} : vector<8x196xbf16>, vector<196x196xbf16>, vector<8x196xf32> -> vector<8x196xf32>
    %c1_148 = arith.constant 1 : index
    %c0_149 = arith.constant 0 : index
    %c0_150 = arith.constant 0 : index
    %148 = vector.load %arg5[%c1_148, %c0_149, %c0_150] : memref<9x8x16xbf16, #tpu.memory_space<vmem>>, vector<1x8x16xbf16>
    %149 = vector.shape_cast %148 : vector<1x8x16xbf16> to vector<8x16xbf16>
    %cst_151 = arith.constant dense<0.000000e+00> : vector<8x196xf32>
    %150 = tpu.matmul %149, %140, %cst_151 {dimension_numbers = #tpu.dot_dimension_numbers<[1], [0], [0], [1], [0, 0, 1, 1], [], []>} : vector<8x16xbf16>, vector<16x196xbf16>, vector<8x196xf32> -> vector<8x196xf32>
    %151 = arith.truncf %150 : vector<8x196xf32> to vector<8x196xbf16>
    %c1_152 = arith.constant 1 : index
    %c0_153 = arith.constant 0 : index
    %c0_154 = arith.constant 0 : index
    %152 = vector.load %arg4[%c1_152, %c0_153, %c0_154] : memref<9x196x196xbf16, #tpu.memory_space<vmem>>, vector<1x196x196xbf16>
    %153 = vector.shape_cast %152 : vector<1x196x196xbf16> to vector<196x196xbf16>
    %cst_155 = arith.constant dense<0.000000e+00> : vector<8x196xf32>
    %154 = tpu.matmul %151, %153, %cst_155 {dimension_numbers = #tpu.dot_dimension_numbers<[1], [0], [0], [1], [0, 0, 1, 1], [], []>} : vector<8x196xbf16>, vector<196x196xbf16>, vector<8x196xf32> -> vector<8x196xf32>
    %155 = arith.addf %147, %154 : vector<8x196xf32>
    %c2_156 = arith.constant 2 : index
    %c0_157 = arith.constant 0 : index
    %c0_158 = arith.constant 0 : index
    %156 = vector.load %arg5[%c2_156, %c0_157, %c0_158] : memref<9x8x16xbf16, #tpu.memory_space<vmem>>, vector<1x8x16xbf16>
    %157 = vector.shape_cast %156 : vector<1x8x16xbf16> to vector<8x16xbf16>
    %cst_159 = arith.constant dense<0.000000e+00> : vector<8x196xf32>
    %158 = tpu.matmul %157, %140, %cst_159 {dimension_numbers = #tpu.dot_dimension_numbers<[1], [0], [0], [1], [0, 0, 1, 1], [], []>} : vector<8x16xbf16>, vector<16x196xbf16>, vector<8x196xf32> -> vector<8x196xf32>
    %159 = arith.truncf %158 : vector<8x196xf32> to vector<8x196xbf16>
    %c2_160 = arith.constant 2 : index
    %c0_161 = arith.constant 0 : index
    %c0_162 = arith.constant 0 : index
    %160 = vector.load %arg4[%c2_160, %c0_161, %c0_162] : memref<9x196x196xbf16, #tpu.memory_space<vmem>>, vector<1x196x196xbf16>
    %161 = vector.shape_cast %160 : vector<1x196x196xbf16> to vector<196x196xbf16>
    %cst_163 = arith.constant dense<0.000000e+00> : vector<8x196xf32>
    %162 = tpu.matmul %159, %161, %cst_163 {dimension_numbers = #tpu.dot_dimension_numbers<[1], [0], [0], [1], [0, 0, 1, 1], [], []>} : vector<8x196xbf16>, vector<196x196xbf16>, vector<8x196xf32> -> vector<8x196xf32>
    %163 = arith.addf %155, %162 : vector<8x196xf32>
    %c3_164 = arith.constant 3 : index
    %c0_165 = arith.constant 0 : index
    %c0_166 = arith.constant 0 : index
    %164 = vector.load %arg5[%c3_164, %c0_165, %c0_166] : memref<9x8x16xbf16, #tpu.memory_space<vmem>>, vector<1x8x16xbf16>
    %165 = vector.shape_cast %164 : vector<1x8x16xbf16> to vector<8x16xbf16>
    %cst_167 = arith.constant dense<0.000000e+00> : vector<8x196xf32>
    %166 = tpu.matmul %165, %140, %cst_167 {dimension_numbers = #tpu.dot_dimension_numbers<[1], [0], [0], [1], [0, 0, 1, 1], [], []>} : vector<8x16xbf16>, vector<16x196xbf16>, vector<8x196xf32> -> vector<8x196xf32>
    %167 = arith.truncf %166 : vector<8x196xf32> to vector<8x196xbf16>
    %c3_168 = arith.constant 3 : index
    %c0_169 = arith.constant 0 : index
    %c0_170 = arith.constant 0 : index
    %168 = vector.load %arg4[%c3_168, %c0_169, %c0_170] : memref<9x196x196xbf16, #tpu.memory_space<vmem>>, vector<1x196x196xbf16>
    %169 = vector.shape_cast %168 : vector<1x196x196xbf16> to vector<196x196xbf16>
    %cst_171 = arith.constant dense<0.000000e+00> : vector<8x196xf32>
    %170 = tpu.matmul %167, %169, %cst_171 {dimension_numbers = #tpu.dot_dimension_numbers<[1], [0], [0], [1], [0, 0, 1, 1], [], []>} : vector<8x196xbf16>, vector<196x196xbf16>, vector<8x196xf32> -> vector<8x196xf32>
    %171 = arith.addf %163, %170 : vector<8x196xf32>
    %c4_172 = arith.constant 4 : index
    %c0_173 = arith.constant 0 : index
    %c0_174 = arith.constant 0 : index
    %172 = vector.load %arg5[%c4_172, %c0_173, %c0_174] : memref<9x8x16xbf16, #tpu.memory_space<vmem>>, vector<1x8x16xbf16>
    %173 = vector.shape_cast %172 : vector<1x8x16xbf16> to vector<8x16xbf16>
    %cst_175 = arith.constant dense<0.000000e+00> : vector<8x196xf32>
    %174 = tpu.matmul %173, %140, %cst_175 {dimension_numbers = #tpu.dot_dimension_numbers<[1], [0], [0], [1], [0, 0, 1, 1], [], []>} : vector<8x16xbf16>, vector<16x196xbf16>, vector<8x196xf32> -> vector<8x196xf32>
    %175 = arith.truncf %174 : vector<8x196xf32> to vector<8x196xbf16>
    %c4_176 = arith.constant 4 : index
    %c0_177 = arith.constant 0 : index
    %c0_178 = arith.constant 0 : index
    %176 = vector.load %arg4[%c4_176, %c0_177, %c0_178] : memref<9x196x196xbf16, #tpu.memory_space<vmem>>, vector<1x196x196xbf16>
    %177 = vector.shape_cast %176 : vector<1x196x196xbf16> to vector<196x196xbf16>
    %cst_179 = arith.constant dense<0.000000e+00> : vector<8x196xf32>
    %178 = tpu.matmul %175, %177, %cst_179 {dimension_numbers = #tpu.dot_dimension_numbers<[1], [0], [0], [1], [0, 0, 1, 1], [], []>} : vector<8x196xbf16>, vector<196x196xbf16>, vector<8x196xf32> -> vector<8x196xf32>
    %179 = arith.addf %171, %178 : vector<8x196xf32>
    %c5_180 = arith.constant 5 : index
    %c0_181 = arith.constant 0 : index
    %c0_182 = arith.constant 0 : index
    %180 = vector.load %arg5[%c5_180, %c0_181, %c0_182] : memref<9x8x16xbf16, #tpu.memory_space<vmem>>, vector<1x8x16xbf16>
    %181 = vector.shape_cast %180 : vector<1x8x16xbf16> to vector<8x16xbf16>
    %cst_183 = arith.constant dense<0.000000e+00> : vector<8x196xf32>
    %182 = tpu.matmul %181, %140, %cst_183 {dimension_numbers = #tpu.dot_dimension_numbers<[1], [0], [0], [1], [0, 0, 1, 1], [], []>} : vector<8x16xbf16>, vector<16x196xbf16>, vector<8x196xf32> -> vector<8x196xf32>
    %183 = arith.truncf %182 : vector<8x196xf32> to vector<8x196xbf16>
    %c5_184 = arith.constant 5 : index
    %c0_185 = arith.constant 0 : index
    %c0_186 = arith.constant 0 : index
    %184 = vector.load %arg4[%c5_184, %c0_185, %c0_186] : memref<9x196x196xbf16, #tpu.memory_space<vmem>>, vector<1x196x196xbf16>
    %185 = vector.shape_cast %184 : vector<1x196x196xbf16> to vector<196x196xbf16>
    %cst_187 = arith.constant dense<0.000000e+00> : vector<8x196xf32>
    %186 = tpu.matmul %183, %185, %cst_187 {dimension_numbers = #tpu.dot_dimension_numbers<[1], [0], [0], [1], [0, 0, 1, 1], [], []>} : vector<8x196xbf16>, vector<196x196xbf16>, vector<8x196xf32> -> vector<8x196xf32>
    %187 = arith.addf %179, %186 : vector<8x196xf32>
    %c6_188 = arith.constant 6 : index
    %c0_189 = arith.constant 0 : index
    %c0_190 = arith.constant 0 : index
    %188 = vector.load %arg5[%c6_188, %c0_189, %c0_190] : memref<9x8x16xbf16, #tpu.memory_space<vmem>>, vector<1x8x16xbf16>
    %189 = vector.shape_cast %188 : vector<1x8x16xbf16> to vector<8x16xbf16>
    %cst_191 = arith.constant dense<0.000000e+00> : vector<8x196xf32>
    %190 = tpu.matmul %189, %140, %cst_191 {dimension_numbers = #tpu.dot_dimension_numbers<[1], [0], [0], [1], [0, 0, 1, 1], [], []>} : vector<8x16xbf16>, vector<16x196xbf16>, vector<8x196xf32> -> vector<8x196xf32>
    %191 = arith.truncf %190 : vector<8x196xf32> to vector<8x196xbf16>
    %c6_192 = arith.constant 6 : index
    %c0_193 = arith.constant 0 : index
    %c0_194 = arith.constant 0 : index
    %192 = vector.load %arg4[%c6_192, %c0_193, %c0_194] : memref<9x196x196xbf16, #tpu.memory_space<vmem>>, vector<1x196x196xbf16>
    %193 = vector.shape_cast %192 : vector<1x196x196xbf16> to vector<196x196xbf16>
    %cst_195 = arith.constant dense<0.000000e+00> : vector<8x196xf32>
    %194 = tpu.matmul %191, %193, %cst_195 {dimension_numbers = #tpu.dot_dimension_numbers<[1], [0], [0], [1], [0, 0, 1, 1], [], []>} : vector<8x196xbf16>, vector<196x196xbf16>, vector<8x196xf32> -> vector<8x196xf32>
    %195 = arith.addf %187, %194 : vector<8x196xf32>
    %c7_196 = arith.constant 7 : index
    %c0_197 = arith.constant 0 : index
    %c0_198 = arith.constant 0 : index
    %196 = vector.load %arg5[%c7_196, %c0_197, %c0_198] : memref<9x8x16xbf16, #tpu.memory_space<vmem>>, vector<1x8x16xbf16>
    %197 = vector.shape_cast %196 : vector<1x8x16xbf16> to vector<8x16xbf16>
    %cst_199 = arith.constant dense<0.000000e+00> : vector<8x196xf32>
    %198 = tpu.matmul %197, %140, %cst_199 {dimension_numbers = #tpu.dot_dimension_numbers<[1], [0], [0], [1], [0, 0, 1, 1], [], []>} : vector<8x16xbf16>, vector<16x196xbf16>, vector<8x196xf32> -> vector<8x196xf32>
    %199 = arith.truncf %198 : vector<8x196xf32> to vector<8x196xbf16>
    %c7_200 = arith.constant 7 : index
    %c0_201 = arith.constant 0 : index
    %c0_202 = arith.constant 0 : index
    %200 = vector.load %arg4[%c7_200, %c0_201, %c0_202] : memref<9x196x196xbf16, #tpu.memory_space<vmem>>, vector<1x196x196xbf16>
    %201 = vector.shape_cast %200 : vector<1x196x196xbf16> to vector<196x196xbf16>
    %cst_203 = arith.constant dense<0.000000e+00> : vector<8x196xf32>
    %202 = tpu.matmul %199, %201, %cst_203 {dimension_numbers = #tpu.dot_dimension_numbers<[1], [0], [0], [1], [0, 0, 1, 1], [], []>} : vector<8x196xbf16>, vector<196x196xbf16>, vector<8x196xf32> -> vector<8x196xf32>
    %203 = arith.addf %195, %202 : vector<8x196xf32>
    %c8_204 = arith.constant 8 : index
    %c0_205 = arith.constant 0 : index
    %c0_206 = arith.constant 0 : index
    %204 = vector.load %arg5[%c8_204, %c0_205, %c0_206] : memref<9x8x16xbf16, #tpu.memory_space<vmem>>, vector<1x8x16xbf16>
    %205 = vector.shape_cast %204 : vector<1x8x16xbf16> to vector<8x16xbf16>
    %cst_207 = arith.constant dense<0.000000e+00> : vector<8x196xf32>
    %206 = tpu.matmul %205, %140, %cst_207 {dimension_numbers = #tpu.dot_dimension_numbers<[1], [0], [0], [1], [0, 0, 1, 1], [], []>} : vector<8x16xbf16>, vector<16x196xbf16>, vector<8x196xf32> -> vector<8x196xf32>
    %207 = arith.truncf %206 : vector<8x196xf32> to vector<8x196xbf16>
    %c8_208 = arith.constant 8 : index
    %c0_209 = arith.constant 0 : index
    %c0_210 = arith.constant 0 : index
    %208 = vector.load %arg4[%c8_208, %c0_209, %c0_210] : memref<9x196x196xbf16, #tpu.memory_space<vmem>>, vector<1x196x196xbf16>
    %209 = vector.shape_cast %208 : vector<1x196x196xbf16> to vector<196x196xbf16>
    %cst_211 = arith.constant dense<0.000000e+00> : vector<8x196xf32>
    %210 = tpu.matmul %207, %209, %cst_211 {dimension_numbers = #tpu.dot_dimension_numbers<[1], [0], [0], [1], [0, 0, 1, 1], [], []>} : vector<8x196xbf16>, vector<196x196xbf16>, vector<8x196xf32> -> vector<8x196xf32>
    %211 = arith.addf %203, %210 : vector<8x196xf32>
    %212 = vector.broadcast %1 : vector<8x1xf32> to vector<8x196xf32>
    %213 = arith.addf %211, %212 : vector<8x196xf32>
    %cst_212 = arith.constant 0.000000e+00 : f32
    %214 = vector.broadcast %cst_212 : f32 to vector<8x196xf32>
    %215 = arith.maximumf %213, %214 : vector<8x196xf32>
    %216 = arith.truncf %215 : vector<8x196xf32> to vector<8x196xbf16>
    %c0_213 = arith.constant 0 : index
    %c0_214 = arith.constant 0 : index
    %c0_215 = arith.constant 0 : index
    %217 = vector.load %arg7[%c0_213, %c0_214, %c0_215] : memref<3x196x196xbf16, #tpu.memory_space<vmem>>, vector<1x196x196xbf16>
    %218 = vector.shape_cast %217 : vector<1x196x196xbf16> to vector<196x196xbf16>
    %cst_216 = arith.constant dense<0.000000e+00> : vector<8x196xf32>
    %219 = tpu.matmul %216, %218, %cst_216 {dimension_numbers = #tpu.dot_dimension_numbers<[1], [0], [0], [1], [0, 0, 1, 1], [], []>} : vector<8x196xbf16>, vector<196x196xbf16>, vector<8x196xf32> -> vector<8x196xf32>
    %220 = arith.maximumf %215, %219 : vector<8x196xf32>
    %c1_217 = arith.constant 1 : index
    %c0_218 = arith.constant 0 : index
    %c0_219 = arith.constant 0 : index
    %221 = vector.load %arg7[%c1_217, %c0_218, %c0_219] : memref<3x196x196xbf16, #tpu.memory_space<vmem>>, vector<1x196x196xbf16>
    %222 = vector.shape_cast %221 : vector<1x196x196xbf16> to vector<196x196xbf16>
    %cst_220 = arith.constant dense<0.000000e+00> : vector<8x196xf32>
    %223 = tpu.matmul %216, %222, %cst_220 {dimension_numbers = #tpu.dot_dimension_numbers<[1], [0], [0], [1], [0, 0, 1, 1], [], []>} : vector<8x196xbf16>, vector<196x196xbf16>, vector<8x196xf32> -> vector<8x196xf32>
    %224 = arith.maximumf %220, %223 : vector<8x196xf32>
    %c2_221 = arith.constant 2 : index
    %c0_222 = arith.constant 0 : index
    %c0_223 = arith.constant 0 : index
    %225 = vector.load %arg7[%c2_221, %c0_222, %c0_223] : memref<3x196x196xbf16, #tpu.memory_space<vmem>>, vector<1x196x196xbf16>
    %226 = vector.shape_cast %225 : vector<1x196x196xbf16> to vector<196x196xbf16>
    %cst_224 = arith.constant dense<0.000000e+00> : vector<8x196xf32>
    %227 = tpu.matmul %216, %226, %cst_224 {dimension_numbers = #tpu.dot_dimension_numbers<[1], [0], [0], [1], [0, 0, 1, 1], [], []>} : vector<8x196xbf16>, vector<196x196xbf16>, vector<8x196xf32> -> vector<8x196xf32>
    %228 = arith.maximumf %224, %227 : vector<8x196xf32>
    %229 = arith.truncf %228 : vector<8x196xf32> to vector<8x196xbf16>
    %c0_225 = arith.constant 0 : index
    %c0_226 = arith.constant 0 : index
    %230 = vector.load %arg8[%c0_225, %c0_226] : memref<196x49xbf16, #tpu.memory_space<vmem>>, vector<196x49xbf16>
    %cst_227 = arith.constant dense<0.000000e+00> : vector<8x49xf32>
    %231 = tpu.matmul %229, %230, %cst_227 {dimension_numbers = #tpu.dot_dimension_numbers<[1], [0], [0], [1], [0, 0, 1, 1], [], []>} : vector<8x196xbf16>, vector<196x49xbf16>, vector<8x49xf32> -> vector<8x49xf32>
    %232 = vector.extract_strided_slice %116 {offsets = [0, 0], sizes = [1, 49], strides = [1, 1]} : vector<8x49xf32> to vector<1x49xf32>
    %233 = vector.extract_strided_slice %231 {offsets = [0, 0], sizes = [1, 49], strides = [1, 1]} : vector<8x49xf32> to vector<1x49xf32>
    %234 = tpu.concatenate %232, %233 in 0 : vector<1x49xf32>, vector<1x49xf32> -> vector<2x49xf32>
    %235 = arith.truncf %234 : vector<2x49xf32> to vector<2x49xbf16>
    %c0_228 = arith.constant 0 : index
    %c0_229 = arith.constant 0 : index
    %c0_230 = arith.constant 0 : index
    %236 = vector.load %arg9[%c0_228, %c0_229, %c0_230] : memref<8x49x392xbf16, #tpu.memory_space<vmem>>, vector<1x49x392xbf16>
    %237 = vector.shape_cast %236 : vector<1x49x392xbf16> to vector<49x392xbf16>
    %cst_231 = arith.constant dense<0.000000e+00> : vector<2x392xf32>
    %238 = tpu.matmul %235, %237, %cst_231 {dimension_numbers = #tpu.dot_dimension_numbers<[1], [0], [0], [1], [0, 0, 1, 1], [], []>} : vector<2x49xbf16>, vector<49x392xbf16>, vector<2x392xf32> -> vector<2x392xf32>
    %239 = vector.extract_strided_slice %116 {offsets = [1, 0], sizes = [1, 49], strides = [1, 1]} : vector<8x49xf32> to vector<1x49xf32>
    %240 = vector.extract_strided_slice %231 {offsets = [1, 0], sizes = [1, 49], strides = [1, 1]} : vector<8x49xf32> to vector<1x49xf32>
    %241 = tpu.concatenate %239, %240 in 0 : vector<1x49xf32>, vector<1x49xf32> -> vector<2x49xf32>
    %242 = arith.truncf %241 : vector<2x49xf32> to vector<2x49xbf16>
    %c1_232 = arith.constant 1 : index
    %c0_233 = arith.constant 0 : index
    %c0_234 = arith.constant 0 : index
    %243 = vector.load %arg9[%c1_232, %c0_233, %c0_234] : memref<8x49x392xbf16, #tpu.memory_space<vmem>>, vector<1x49x392xbf16>
    %244 = vector.shape_cast %243 : vector<1x49x392xbf16> to vector<49x392xbf16>
    %cst_235 = arith.constant dense<0.000000e+00> : vector<2x392xf32>
    %245 = tpu.matmul %242, %244, %cst_235 {dimension_numbers = #tpu.dot_dimension_numbers<[1], [0], [0], [1], [0, 0, 1, 1], [], []>} : vector<2x49xbf16>, vector<49x392xbf16>, vector<2x392xf32> -> vector<2x392xf32>
    %246 = arith.addf %238, %245 : vector<2x392xf32>
    %247 = vector.extract_strided_slice %116 {offsets = [2, 0], sizes = [1, 49], strides = [1, 1]} : vector<8x49xf32> to vector<1x49xf32>
    %248 = vector.extract_strided_slice %231 {offsets = [2, 0], sizes = [1, 49], strides = [1, 1]} : vector<8x49xf32> to vector<1x49xf32>
    %249 = tpu.concatenate %247, %248 in 0 : vector<1x49xf32>, vector<1x49xf32> -> vector<2x49xf32>
    %250 = arith.truncf %249 : vector<2x49xf32> to vector<2x49xbf16>
    %c2_236 = arith.constant 2 : index
    %c0_237 = arith.constant 0 : index
    %c0_238 = arith.constant 0 : index
    %251 = vector.load %arg9[%c2_236, %c0_237, %c0_238] : memref<8x49x392xbf16, #tpu.memory_space<vmem>>, vector<1x49x392xbf16>
    %252 = vector.shape_cast %251 : vector<1x49x392xbf16> to vector<49x392xbf16>
    %cst_239 = arith.constant dense<0.000000e+00> : vector<2x392xf32>
    %253 = tpu.matmul %250, %252, %cst_239 {dimension_numbers = #tpu.dot_dimension_numbers<[1], [0], [0], [1], [0, 0, 1, 1], [], []>} : vector<2x49xbf16>, vector<49x392xbf16>, vector<2x392xf32> -> vector<2x392xf32>
    %254 = arith.addf %246, %253 : vector<2x392xf32>
    %255 = vector.extract_strided_slice %116 {offsets = [3, 0], sizes = [1, 49], strides = [1, 1]} : vector<8x49xf32> to vector<1x49xf32>
    %256 = vector.extract_strided_slice %231 {offsets = [3, 0], sizes = [1, 49], strides = [1, 1]} : vector<8x49xf32> to vector<1x49xf32>
    %257 = tpu.concatenate %255, %256 in 0 : vector<1x49xf32>, vector<1x49xf32> -> vector<2x49xf32>
    %258 = arith.truncf %257 : vector<2x49xf32> to vector<2x49xbf16>
    %c3_240 = arith.constant 3 : index
    %c0_241 = arith.constant 0 : index
    %c0_242 = arith.constant 0 : index
    %259 = vector.load %arg9[%c3_240, %c0_241, %c0_242] : memref<8x49x392xbf16, #tpu.memory_space<vmem>>, vector<1x49x392xbf16>
    %260 = vector.shape_cast %259 : vector<1x49x392xbf16> to vector<49x392xbf16>
    %cst_243 = arith.constant dense<0.000000e+00> : vector<2x392xf32>
    %261 = tpu.matmul %258, %260, %cst_243 {dimension_numbers = #tpu.dot_dimension_numbers<[1], [0], [0], [1], [0, 0, 1, 1], [], []>} : vector<2x49xbf16>, vector<49x392xbf16>, vector<2x392xf32> -> vector<2x392xf32>
    %262 = arith.addf %254, %261 : vector<2x392xf32>
    %263 = vector.extract_strided_slice %116 {offsets = [4, 0], sizes = [1, 49], strides = [1, 1]} : vector<8x49xf32> to vector<1x49xf32>
    %264 = vector.extract_strided_slice %231 {offsets = [4, 0], sizes = [1, 49], strides = [1, 1]} : vector<8x49xf32> to vector<1x49xf32>
    %265 = tpu.concatenate %263, %264 in 0 : vector<1x49xf32>, vector<1x49xf32> -> vector<2x49xf32>
    %266 = arith.truncf %265 : vector<2x49xf32> to vector<2x49xbf16>
    %c4_244 = arith.constant 4 : index
    %c0_245 = arith.constant 0 : index
    %c0_246 = arith.constant 0 : index
    %267 = vector.load %arg9[%c4_244, %c0_245, %c0_246] : memref<8x49x392xbf16, #tpu.memory_space<vmem>>, vector<1x49x392xbf16>
    %268 = vector.shape_cast %267 : vector<1x49x392xbf16> to vector<49x392xbf16>
    %cst_247 = arith.constant dense<0.000000e+00> : vector<2x392xf32>
    %269 = tpu.matmul %266, %268, %cst_247 {dimension_numbers = #tpu.dot_dimension_numbers<[1], [0], [0], [1], [0, 0, 1, 1], [], []>} : vector<2x49xbf16>, vector<49x392xbf16>, vector<2x392xf32> -> vector<2x392xf32>
    %270 = arith.addf %262, %269 : vector<2x392xf32>
    %271 = vector.extract_strided_slice %116 {offsets = [5, 0], sizes = [1, 49], strides = [1, 1]} : vector<8x49xf32> to vector<1x49xf32>
    %272 = vector.extract_strided_slice %231 {offsets = [5, 0], sizes = [1, 49], strides = [1, 1]} : vector<8x49xf32> to vector<1x49xf32>
    %273 = tpu.concatenate %271, %272 in 0 : vector<1x49xf32>, vector<1x49xf32> -> vector<2x49xf32>
    %274 = arith.truncf %273 : vector<2x49xf32> to vector<2x49xbf16>
    %c5_248 = arith.constant 5 : index
    %c0_249 = arith.constant 0 : index
    %c0_250 = arith.constant 0 : index
    %275 = vector.load %arg9[%c5_248, %c0_249, %c0_250] : memref<8x49x392xbf16, #tpu.memory_space<vmem>>, vector<1x49x392xbf16>
    %276 = vector.shape_cast %275 : vector<1x49x392xbf16> to vector<49x392xbf16>
    %cst_251 = arith.constant dense<0.000000e+00> : vector<2x392xf32>
    %277 = tpu.matmul %274, %276, %cst_251 {dimension_numbers = #tpu.dot_dimension_numbers<[1], [0], [0], [1], [0, 0, 1, 1], [], []>} : vector<2x49xbf16>, vector<49x392xbf16>, vector<2x392xf32> -> vector<2x392xf32>
    %278 = arith.addf %270, %277 : vector<2x392xf32>
    %279 = vector.extract_strided_slice %116 {offsets = [6, 0], sizes = [1, 49], strides = [1, 1]} : vector<8x49xf32> to vector<1x49xf32>
    %280 = vector.extract_strided_slice %231 {offsets = [6, 0], sizes = [1, 49], strides = [1, 1]} : vector<8x49xf32> to vector<1x49xf32>
    %281 = tpu.concatenate %279, %280 in 0 : vector<1x49xf32>, vector<1x49xf32> -> vector<2x49xf32>
    %282 = arith.truncf %281 : vector<2x49xf32> to vector<2x49xbf16>
    %c6_252 = arith.constant 6 : index
    %c0_253 = arith.constant 0 : index
    %c0_254 = arith.constant 0 : index
    %283 = vector.load %arg9[%c6_252, %c0_253, %c0_254] : memref<8x49x392xbf16, #tpu.memory_space<vmem>>, vector<1x49x392xbf16>
    %284 = vector.shape_cast %283 : vector<1x49x392xbf16> to vector<49x392xbf16>
    %cst_255 = arith.constant dense<0.000000e+00> : vector<2x392xf32>
    %285 = tpu.matmul %282, %284, %cst_255 {dimension_numbers = #tpu.dot_dimension_numbers<[1], [0], [0], [1], [0, 0, 1, 1], [], []>} : vector<2x49xbf16>, vector<49x392xbf16>, vector<2x392xf32> -> vector<2x392xf32>
    %286 = arith.addf %278, %285 : vector<2x392xf32>
    %287 = vector.extract_strided_slice %116 {offsets = [7, 0], sizes = [1, 49], strides = [1, 1]} : vector<8x49xf32> to vector<1x49xf32>
    %288 = vector.extract_strided_slice %231 {offsets = [7, 0], sizes = [1, 49], strides = [1, 1]} : vector<8x49xf32> to vector<1x49xf32>
    %289 = tpu.concatenate %287, %288 in 0 : vector<1x49xf32>, vector<1x49xf32> -> vector<2x49xf32>
    %290 = arith.truncf %289 : vector<2x49xf32> to vector<2x49xbf16>
    %c7_256 = arith.constant 7 : index
    %c0_257 = arith.constant 0 : index
    %c0_258 = arith.constant 0 : index
    %291 = vector.load %arg9[%c7_256, %c0_257, %c0_258] : memref<8x49x392xbf16, #tpu.memory_space<vmem>>, vector<1x49x392xbf16>
    %292 = vector.shape_cast %291 : vector<1x49x392xbf16> to vector<49x392xbf16>
    %cst_259 = arith.constant dense<0.000000e+00> : vector<2x392xf32>
    %293 = tpu.matmul %290, %292, %cst_259 {dimension_numbers = #tpu.dot_dimension_numbers<[1], [0], [0], [1], [0, 0, 1, 1], [], []>} : vector<2x49xbf16>, vector<49x392xbf16>, vector<2x392xf32> -> vector<2x392xf32>
    %294 = arith.addf %286, %293 : vector<2x392xf32>
    %c0_260 = arith.constant 0 : index
    %c0_261 = arith.constant 0 : index
    %295 = vector.load %arg10[%c0_260, %c0_261] : memref<1x392xf32, #tpu.memory_space<vmem>>, vector<1x392xf32>
    %296 = vector.broadcast %295 : vector<1x392xf32> to vector<2x392xf32>
    %297 = arith.addf %294, %296 : vector<2x392xf32>
    %cst_262 = arith.constant 0.000000e+00 : f32
    %298 = vector.broadcast %cst_262 : f32 to vector<2x392xf32>
    %299 = arith.maximumf %297, %298 : vector<2x392xf32>
    %300 = arith.truncf %299 : vector<2x392xf32> to vector<2x392xbf16>
    %c0_263 = arith.constant 0 : index
    %c0_264 = arith.constant 0 : index
    %301 = vector.load %arg11[%c0_263, %c0_264] : memref<392x32xbf16, #tpu.memory_space<vmem>>, vector<392x32xbf16>
    %cst_265 = arith.constant dense<0.000000e+00> : vector<2x32xf32>
    %302 = tpu.matmul %300, %301, %cst_265 {dimension_numbers = #tpu.dot_dimension_numbers<[1], [0], [0], [1], [0, 0, 1, 1], [], []>} : vector<2x392xbf16>, vector<392x32xbf16>, vector<2x32xf32> -> vector<2x32xf32>
    %c0_266 = arith.constant 0 : index
    %c0_267 = arith.constant 0 : index
    %303 = vector.load %arg12[%c0_266, %c0_267] : memref<1x32xf32, #tpu.memory_space<vmem>>, vector<1x32xf32>
    %304 = vector.broadcast %303 : vector<1x32xf32> to vector<2x32xf32>
    %305 = arith.addf %302, %304 : vector<2x32xf32>
    %cst_268 = arith.constant 0.000000e+00 : f32
    %306 = vector.broadcast %cst_268 : f32 to vector<2x32xf32>
    %307 = arith.maximumf %305, %306 : vector<2x32xf32>
    %c0_269 = arith.constant 0 : index
    %c0_270 = arith.constant 0 : index
    %308 = vector.load %arg13[%c0_269, %c0_270] : memref<2x32xf32, #tpu.memory_space<vmem>>, vector<2x32xf32>
    tpu.vector_store %arg13[%c0_269, %c0_270], %307 {strides = array<i32>} : memref<2x32xf32, #tpu.memory_space<vmem>>, vector<2x32xf32>,
    return
  }
  func.func @transform_0(%arg0: i32) -> (i32, i32, i32, i32) {
    %c0_i32 = arith.constant 0 : i32
    %c0_i32_0 = arith.constant 0 : i32
    %c0_i32_1 = arith.constant 0 : i32
    %c0_i32_2 = arith.constant 0 : i32
    %c0_i32_3 = arith.constant 0 : i32
    return %c0_i32, %c0_i32_0, %c0_i32_1, %c0_i32_2 : i32, i32, i32, i32
  }
  func.func @transform_1(%arg0: i32) -> (i32, i32) {
    %c0_i32 = arith.constant 0 : i32
    %c0_i32_0 = arith.constant 0 : i32
    %c0_i32_1 = arith.constant 0 : i32
    return %c0_i32, %c0_i32_0 : i32, i32
  }
  func.func @transform_2(%arg0: i32) -> (i32, i32) {
    %c0_i32 = arith.constant 0 : i32
    %c0_i32_0 = arith.constant 0 : i32
    %c0_i32_1 = arith.constant 0 : i32
    return %c0_i32, %c0_i32_0 : i32, i32
  }
  func.func @transform_3(%arg0: i32) -> (i32, i32, i32) {
    %c0_i32 = arith.constant 0 : i32
    %c0_i32_0 = arith.constant 0 : i32
    %c0_i32_1 = arith.constant 0 : i32
    %c0_i32_2 = arith.constant 0 : i32
    return %c0_i32, %c0_i32_0, %c0_i32_1 : i32, i32, i32
  }
  func.func @transform_4(%arg0: i32) -> (i32, i32, i32) {
    %c0_i32 = arith.constant 0 : i32
    %c0_i32_0 = arith.constant 0 : i32
    %c0_i32_1 = arith.constant 0 : i32
    %c0_i32_2 = arith.constant 0 : i32
    return %c0_i32, %c0_i32_0, %c0_i32_1 : i32, i32, i32
  }
  func.func @transform_5(%arg0: i32) -> (i32, i32) {
    %c0_i32 = arith.constant 0 : i32
    %c0_i32_0 = arith.constant 0 : i32
    %c0_i32_1 = arith.constant 0 : i32
    return %c0_i32, %c0_i32_0 : i32, i32
  }
  func.func @transform_6(%arg0: i32) -> (i32, i32, i32) {
    %c0_i32 = arith.constant 0 : i32
    %c0_i32_0 = arith.constant 0 : i32
    %c0_i32_1 = arith.constant 0 : i32
    %c0_i32_2 = arith.constant 0 : i32
    return %c0_i32, %c0_i32_0, %c0_i32_1 : i32, i32, i32
  }
  func.func @transform_7(%arg0: i32) -> (i32, i32) {
    %c0_i32 = arith.constant 0 : i32
    %c0_i32_0 = arith.constant 0 : i32
    %c0_i32_1 = arith.constant 0 : i32
    return %c0_i32, %c0_i32_0 : i32, i32
  }
  func.func @transform_8(%arg0: i32) -> (i32, i32, i32) {
    %c0_i32 = arith.constant 0 : i32
    %c0_i32_0 = arith.constant 0 : i32
    %c0_i32_1 = arith.constant 0 : i32
    %c0_i32_2 = arith.constant 0 : i32
    return %c0_i32, %c0_i32_0, %c0_i32_1 : i32, i32, i32
  }
  func.func @transform_9(%arg0: i32) -> (i32, i32) {
    %c0_i32 = arith.constant 0 : i32
    %c0_i32_0 = arith.constant 0 : i32
    %c0_i32_1 = arith.constant 0 : i32
    return %c0_i32, %c0_i32_0 : i32, i32
  }
  func.func @transform_10(%arg0: i32) -> (i32, i32) {
    %c0_i32 = arith.constant 0 : i32
    %c0_i32_0 = arith.constant 0 : i32
    %c0_i32_1 = arith.constant 0 : i32
    return %c0_i32, %c0_i32_0 : i32, i32
  }
  func.func @transform_11(%arg0: i32) -> (i32, i32) {
    %c0_i32 = arith.constant 0 : i32
    %c0_i32_0 = arith.constant 0 : i32
    %c0_i32_1 = arith.constant 0 : i32
    return %c0_i32, %c0_i32_0 : i32, i32
  }
  func.func @transform_12(%arg0: i32) -> (i32, i32) {
    %c0_i32 = arith.constant 0 : i32
    %c0_i32_0 = arith.constant 0 : i32
    %c0_i32_1 = arith.constant 0 : i32
    return %c0_i32, %c0_i32_0 : i32, i32
  }
}

</mosaic_0001>

<llo_original>
// kernel: cnn_encoder_forward.1
$region0: #{cnn_encoder_forward.1}
  #allocation0 [shape = 'u32[]', space=smem, size = 0x4, offset = 0x4, fixed_abs, tag = 'smem constant byte address 0x4 - core index']
  #allocation1 [shape = 'u32[144,128]{1,0:T(1,128)}', space=vmem, size = 0x12000, scoped, tag = 'internal scratch']
  %s0 = inlined_call_operand.vmem [shape: bf16[2,4,9,196], index: 0, kind: input, shape index: {}]
  %s1 = inlined_call_operand.vmem [shape: bf16[16,9], index: 1, kind: input, shape index: {}]
  %s2 = inlined_call_operand.vmem [shape: f32[16,1], index: 2, kind: input, shape index: {}]
  %s3 = inlined_call_operand.vmem [shape: bf16[9,196,196], index: 3, kind: input, shape index: {}]
  %s4 = inlined_call_operand.vmem [shape: bf16[9,8,16], index: 4, kind: input, shape index: {}]
  %s5 = inlined_call_operand.vmem [shape: f32[8,1], index: 5, kind: input, shape index: {}]
  %s6 = inlined_call_operand.vmem [shape: bf16[3,196,196], index: 6, kind: input, shape index: {}]
  %s7 = inlined_call_operand.vmem [shape: bf16[196,49], index: 7, kind: input, shape index: {}]
  %s8 = inlined_call_operand.vmem [shape: bf16[8,49,392], index: 8, kind: input, shape index: {}]
  %s9 = inlined_call_operand.vmem [shape: f32[1,392], index: 9, kind: input, shape index: {}]
  %s10 = inlined_call_operand.vmem [shape: bf16[392,32], index: 10, kind: input, shape index: {}]
  %s11 = inlined_call_operand.vmem [shape: f32[1,32], index: 11, kind: input, shape index: {}]
  %s12 = inlined_call_operand.hbm [shape: f32[2,32], index: 12, kind: output, shape index: {}]
  %s13 = sld [smem:[#allocation0]]
  $region58: #{cnn_encoder_forward.1} parent=0
    _
  %s15 = ssub.s32 1, %s13
  %s16 = scalar_select 0, %s15, %s13
  $region1: #{cnn_encoder_forward.1} parent=0
    #allocation2 [shape = 'u8[1024]{0}', space=vmem, size = 0x400, scoped, tag = 'output window, operand 0, single buffered']
    #allocation3 [shape = 's32[1]{0}', space=sflag, size = 0x4, scoped, tag = 'scoped memory for cnn_encoder_forward.1']
    %17 = vsyncpa [#allocation3], 0
    // Predicated region
    $region2: #{cnn_encoder_forward.1} parent=1 // pred_check
      _
    $region3: #{cnn_encoder_forward.1} parent=1 // pred_check_branch
      %19 = sbr.rel (0) target = $region5
    $region4: #{cnn_encoder_forward.1} parent=1 // pred_region
      _
    $region5: #{cnn_encoder_forward.1} parent=1 // pred_fallthru
      _
    // Predicated region
    $region6: #{cnn_encoder_forward.1} parent=1 // pred_check
      _
    $region7: #{cnn_encoder_forward.1} parent=1 // pred_check_branch
      %21 = sbr.rel (0) target = $region9
    $region8: #{cnn_encoder_forward.1} parent=1 // pred_region
      _
    $region9: #{cnn_encoder_forward.1} parent=1 // pred_fallthru
      _
    // Predicated region
    $region10: #{cnn_encoder_forward.1} parent=1 // pred_check
      _
    $region11: #{cnn_encoder_forward.1} parent=1 // pred_check_branch
      %23 = sbr.rel (0) target = $region13
    $region12: #{cnn_encoder_forward.1} parent=1 // pred_region
      _
    $region13: #{cnn_encoder_forward.1} parent=1 // pred_fallthru
      _
    // Predicated region
    $region14: #{cnn_encoder_forward.1} parent=1 // pred_check
      _
    $region15: #{cnn_encoder_forward.1} parent=1 // pred_check_branch
      %25 = sbr.rel (0) target = $region17
    $region16: #{cnn_encoder_forward.1} parent=1 // pred_region
      _
    $region17: #{cnn_encoder_forward.1} parent=1 // pred_fallthru
      _
    // Predicated region
    $region18: #{cnn_encoder_forward.1} parent=1 // pred_check
      _
    $region19: #{cnn_encoder_forward.1} parent=1 // pred_check_branch
      %27 = sbr.rel (0) target = $region21
    $region20: #{cnn_encoder_forward.1} parent=1 // pred_region
      _
    $region21: #{cnn_encoder_forward.1} parent=1 // pred_fallthru
      _
    // Predicated region
    $region22: #{cnn_encoder_forward.1} parent=1 // pred_check
      _
    $region23: #{cnn_encoder_forward.1} parent=1 // pred_check_branch
      %29 = sbr.rel (0) target = $region25
    $region24: #{cnn_encoder_forward.1} parent=1 // pred_region
      _
    $region25: #{cnn_encoder_forward.1} parent=1 // pred_fallthru
      _
    // Predicated region
    $region26: #{cnn_encoder_forward.1} parent=1 // pred_check
      _
    $region27: #{cnn_encoder_forward.1} parent=1 // pred_check_branch
      %31 = sbr.rel (0) target = $region29
    $region28: #{cnn_encoder_forward.1} parent=1 // pred_region
      _
    $region29: #{cnn_encoder_forward.1} parent=1 // pred_fallthru
      _
    // Predicated region
    $region30: #{cnn_encoder_forward.1} parent=1 // pred_check
      _
    $region31: #{cnn_encoder_forward.1} parent=1 // pred_check_branch
      %33 = sbr.rel (0) target = $region33
    $region32: #{cnn_encoder_forward.1} parent=1 // pred_region
      _
    $region33: #{cnn_encoder_forward.1} parent=1 // pred_fallthru
      _
    // Predicated region
    $region34: #{cnn_encoder_forward.1} parent=1 // pred_check
      _
    $region35: #{cnn_encoder_forward.1} parent=1 // pred_check_branch
      %35 = sbr.rel (0) target = $region37
    $region36: #{cnn_encoder_forward.1} parent=1 // pred_region
      _
    $region37: #{cnn_encoder_forward.1} parent=1 // pred_fallthru
      _
    // Predicated region
    $region38: #{cnn_encoder_forward.1} parent=1 // pred_check
      _
    $region39: #{cnn_encoder_forward.1} parent=1 // pred_check_branch
      %37 = sbr.rel (0) target = $region41
    $region40: #{cnn_encoder_forward.1} parent=1 // pred_region
      _
    $region41: #{cnn_encoder_forward.1} parent=1 // pred_fallthru
      _
    // Predicated region
    $region42: #{cnn_encoder_forward.1} parent=1 // pred_check
      _
    $region43: #{cnn_encoder_forward.1} parent=1 // pred_check_branch
      %39 = sbr.rel (0) target = $region45
    $region44: #{cnn_encoder_forward.1} parent=1 // pred_region
      _
    $region45: #{cnn_encoder_forward.1} parent=1 // pred_fallthru
      _
    // Predicated region
    $region46: #{cnn_encoder_forward.1} parent=1 // pred_check
      _
    $region47: #{cnn_encoder_forward.1} parent=1 // pred_check_branch
      %41 = sbr.rel (0) target = $region49
    $region48: #{cnn_encoder_forward.1} parent=1 // pred_region
      _
    $region49: #{cnn_encoder_forward.1} parent=1 // pred_fallthru
      _
    %v43 = vld [vmem:[%s2] sm:$0xff]
    %v44 = vld [vmem:[%s2 + $0x8] sm:$0xff]
    %v45 = vld [vmem:[%s5] sm:$0xff]
    %v46 = vld [vmem:[%s1] sm:$0xf]
    %v47 = vld [vmem:[%s1 + $0x4] sm:$0xf]
    %v48 = vld [vmem:[%s0] sm:$0xff]
    %v49 = vld [vmem:[%s0 + $0x8] sm:$0x11]
    %v52 = vunpack.c.l.b16 %v46
    %v53 = vunpack.c.l.b16 %v47
    %v54 = vpack.c.b16 %v53, %v52
    %v57 = vunpack.c.l.b16 %v48
    %v58 = vunpack.c.h.b16 %v48
    %v59 = vunpack.c.l.b16 %v49
    %v60 = vunpack.c.h.b16 %v49
    %v61 = vpack.c.b16 %v59, %v57
    %v62 = vpack.c.b16 %v60, %v58
    %vm63 = vcmask 72704
    %v65 = vsel %vm63, %v54, 0
    %vm67 = vcmask 1043456
    %vm68 = vcmask 1044480
    %v69 = vsel %vm67, 4294967295, 65535
    %v70 = vsel %vm68, %v69, 0
    %v72 = vand.u32 %v61, %v70
    %v75 = vand.u32 %v62, %v70
    %77 = vmatprep.subr.bf16.mxu0 %v75
    %78 = vmatpush1.bf16.msra.mxu0 %v72
    %79 = vmatprep.subr.bf16.mxu0 0
    %80 = vmatpush1.bf16.msra.mxu0 0
    %81 = vmatprep.subr.bf16.mxu0 0
    %82 = vmatpush1.bf16.msra.mxu0 0
    %83 = vmatprep.subr.bf16.mxu0 0
    %84 = vmatpush1.bf16.msra.mxu0 0
    %85 = vmatprep.subr.bf16.mxu0 0
    %86 = vmatpush1.bf16.msra.mxu0 0
    %87 = vmatprep.subr.bf16.mxu0 0
    %88 = vmatpush1.bf16.msra.mxu0 0
    %89 = vmatprep.subr.bf16.mxu0 0
    %90 = vmatpush1.bf16.msra.mxu0 0
    %91 = vmatprep.subr.bf16.mxu0 0
    %92 = vmatpush1.bf16.msra.mxu0 0
    %93 = vmatprep.subr.bf16.mxu0 0
    %94 = vmatpush1.bf16.msra.mxu0 0
    %95 = vmatprep.subr.bf16.mxu0 0
    %96 = vmatpush1.bf16.msra.mxu0 0
    %97 = vmatprep.subr.bf16.mxu0 0
    %98 = vmatpush1.bf16.msra.mxu0 0
    %99 = vmatprep.subr.bf16.mxu0 0
    %100 = vmatpush1.bf16.msra.mxu0 0
    %101 = vmatprep.subr.bf16.mxu0 0
    %102 = vmatpush1.bf16.msra.mxu0 0
    %103 = vmatprep.subr.bf16.mxu0 0
    %104 = vmatpush1.bf16.msra.mxu0 0
    %105 = vmatprep.subr.bf16.mxu0 0
    %106 = vmatpush1.bf16.msra.mxu0 0
    %107 = vmatprep.subr.bf16.mxu0 0
    %108 = vmatpush1.bf16.msra.mxu0 0
    %109 = vmatprep.mubr.bf16.mxu0 0
    %110 = vmatmul.mubr.bf16.gmra.mrb[0].mxu0 %v65
    %v111 = vpop.f32.mrb[0].mxu0
    %v112 = vadd.f32 0.0, %v111
    %v113 = vpop.f32.mrb[0].mxu0
    %v114 = vadd.f32 0.0, %v113
    %v115 = vpop.f32.mrb[0].mxu0
    %v116 = vadd.f32 0.0, %v115
    %v117 = vpop.f32.mrb[0].mxu0
    %v118 = vadd.f32 0.0, %v117
    %119 = vdwg.mxu0
    %s120 = scalar_lea.vmem %s0, 16
    %v121 = vld [vmem:[%s120] sm:$0xff]
    %v122 = vld [vmem:[%s120 + $0x8] sm:$0x11]
    %v125 = vunpack.c.l.b16 %v121
    %v126 = vunpack.c.h.b16 %v121
    %v127 = vunpack.c.l.b16 %v122
    %v128 = vunpack.c.h.b16 %v122
    %v129 = vpack.c.b16 %v127, %v125
    %v130 = vpack.c.b16 %v128, %v126
    %v132 = vand.u32 %v129, %v70
    %v135 = vand.u32 %v130, %v70
    %137 = vmatprep.subr.bf16.mxu0 %v135
    %138 = vmatpush1.bf16.msra.mxu0 %v132
    %139 = vmatprep.subr.bf16.mxu0 0
    %140 = vmatpush1.bf16.msra.mxu0 0
    %141 = vmatprep.subr.bf16.mxu0 0
    %142 = vmatpush1.bf16.msra.mxu0 0
    %143 = vmatprep.subr.bf16.mxu0 0
    %144 = vmatpush1.bf16.msra.mxu0 0
    %145 = vmatprep.subr.bf16.mxu0 0
    %146 = vmatpush1.bf16.msra.mxu0 0
    %147 = vmatprep.subr.bf16.mxu0 0
    %148 = vmatpush1.bf16.msra.mxu0 0
    %149 = vmatprep.subr.bf16.mxu0 0
    %150 = vmatpush1.bf16.msra.mxu0 0
    %151 = vmatprep.subr.bf16.mxu0 0
    %152 = vmatpush1.bf16.msra.mxu0 0
    %153 = vmatprep.subr.bf16.mxu0 0
    %154 = vmatpush1.bf16.msra.mxu0 0
    %155 = vmatprep.subr.bf16.mxu0 0
    %156 = vmatpush1.bf16.msra.mxu0 0
    %157 = vmatprep.subr.bf16.mxu0 0
    %158 = vmatpush1.bf16.msra.mxu0 0
    %159 = vmatprep.subr.bf16.mxu0 0
    %160 = vmatpush1.bf16.msra.mxu0 0
    %161 = vmatprep.subr.bf16.mxu0 0
    %162 = vmatpush1.bf16.msra.mxu0 0
    %163 = vmatprep.subr.bf16.mxu0 0
    %164 = vmatpush1.bf16.msra.mxu0 0
    %165 = vmatprep.subr.bf16.mxu0 0
    %166 = vmatpush1.bf16.msra.mxu0 0
    %167 = vmatprep.subr.bf16.mxu0 0
    %168 = vmatpush1.bf16.msra.mxu0 0
    %169 = vmatprep.mubr.bf16.mxu0 0
    %170 = vmatmul.mubr.bf16.gmra.mrb[0].mxu0 %v65
    %v171 = vpop.f32.mrb[0].mxu0
    %v172 = vadd.f32 0.0, %v171
    %v173 = vpop.f32.mrb[0].mxu0
    %v174 = vadd.f32 0.0, %v173
    %v175 = vpop.f32.mrb[0].mxu0
    %v176 = vadd.f32 0.0, %v175
    %v177 = vpop.f32.mrb[0].mxu0
    %v178 = vadd.f32 0.0, %v177
    %179 = vdwg.mxu0
    %v180 = vmax.f32 %v112, %v172
    %v181 = vmax.f32 %v114, %v174
    %v182 = vmax.f32 %v116, %v176
    %v183 = vmax.f32 %v118, %v178
    %s184 = scalar_lea.vmem %s0, 32
    %v185 = vld [vmem:[%s184] sm:$0xff]
    %v186 = vld [vmem:[%s184 + $0x8] sm:$0x11]
    %v189 = vunpack.c.l.b16 %v185
    %v190 = vunpack.c.h.b16 %v185
    %v191 = vunpack.c.l.b16 %v186
    %v192 = vunpack.c.h.b16 %v186
    %v193 = vpack.c.b16 %v191, %v189
    %v194 = vpack.c.b16 %v192, %v190
    %v196 = vand.u32 %v193, %v70
    %v199 = vand.u32 %v194, %v70
    %201 = vmatprep.subr.bf16.mxu0 %v199
    %202 = vmatpush1.bf16.msra.mxu0 %v196
    %203 = vmatprep.subr.bf16.mxu0 0
    %204 = vmatpush1.bf16.msra.mxu0 0
    %205 = vmatprep.subr.bf16.mxu0 0
    %206 = vmatpush1.bf16.msra.mxu0 0
    %207 = vmatprep.subr.bf16.mxu0 0
    %208 = vmatpush1.bf16.msra.mxu0 0
    %209 = vmatprep.subr.bf16.mxu0 0
    %210 = vmatpush1.bf16.msra.mxu0 0
    %211 = vmatprep.subr.bf16.mxu0 0
    %212 = vmatpush1.bf16.msra.mxu0 0
    %213 = vmatprep.subr.bf16.mxu0 0
    %214 = vmatpush1.bf16.msra.mxu0 0
    %215 = vmatprep.subr.bf16.mxu0 0
    %216 = vmatpush1.bf16.msra.mxu0 0
    %217 = vmatprep.subr.bf16.mxu0 0
    %218 = vmatpush1.bf16.msra.mxu0 0
    %219 = vmatprep.subr.bf16.mxu0 0
    %220 = vmatpush1.bf16.msra.mxu0 0
    %221 = vmatprep.subr.bf16.mxu0 0
    %222 = vmatpush1.bf16.msra.mxu0 0
    %223 = vmatprep.subr.bf16.mxu0 0
    %224 = vmatpush1.bf16.msra.mxu0 0
    %225 = vmatprep.subr.bf16.mxu0 0
    %226 = vmatpush1.bf16.msra.mxu0 0
    %227 = vmatprep.subr.bf16.mxu0 0
    %228 = vmatpush1.bf16.msra.mxu0 0
    %229 = vmatprep.subr.bf16.mxu0 0
    %230 = vmatpush1.bf16.msra.mxu0 0
    %231 = vmatprep.subr.bf16.mxu0 0
    %232 = vmatpush1.bf16.msra.mxu0 0
    %233 = vmatprep.mubr.bf16.mxu0 0
    %234 = vmatmul.mubr.bf16.gmra.mrb[0].mxu0 %v65
    %v235 = vpop.f32.mrb[0].mxu0
    %v236 = vadd.f32 0.0, %v235
    %v237 = vpop.f32.mrb[0].mxu0
    %v238 = vadd.f32 0.0, %v237
    %v239 = vpop.f32.mrb[0].mxu0
    %v240 = vadd.f32 0.0, %v239
    %v241 = vpop.f32.mrb[0].mxu0
    %v242 = vadd.f32 0.0, %v241
    %243 = vdwg.mxu0
    %v244 = vmax.f32 %v180, %v236
    %v245 = vmax.f32 %v181, %v238
    %v246 = vmax.f32 %v182, %v240
    %v247 = vmax.f32 %v183, %v242
    %s248 = scalar_lea.vmem %s0, 48
    %v249 = vld [vmem:[%s248] sm:$0xff]
    %v250 = vld [vmem:[%s248 + $0x8] sm:$0x11]
    %v253 = vunpack.c.l.b16 %v249
    %v254 = vunpack.c.h.b16 %v249
    %v255 = vunpack.c.l.b16 %v250
    %v256 = vunpack.c.h.b16 %v250
    %v257 = vpack.c.b16 %v255, %v253
    %v258 = vpack.c.b16 %v256, %v254
    %v260 = vand.u32 %v257, %v70
    %v263 = vand.u32 %v258, %v70
    %265 = vmatprep.subr.bf16.mxu0 %v263
    %266 = vmatpush1.bf16.msra.mxu0 %v260
    %267 = vmatprep.subr.bf16.mxu0 0
    %268 = vmatpush1.bf16.msra.mxu0 0
    %269 = vmatprep.subr.bf16.mxu0 0
    %270 = vmatpush1.bf16.msra.mxu0 0
    %271 = vmatprep.subr.bf16.mxu0 0
    %272 = vmatpush1.bf16.msra.mxu0 0
    %273 = vmatprep.subr.bf16.mxu0 0
    %274 = vmatpush1.bf16.msra.mxu0 0
    %275 = vmatprep.subr.bf16.mxu0 0
    %276 = vmatpush1.bf16.msra.mxu0 0
    %277 = vmatprep.subr.bf16.mxu0 0
    %278 = vmatpush1.bf16.msra.mxu0 0
    %279 = vmatprep.subr.bf16.mxu0 0
    %280 = vmatpush1.bf16.msra.mxu0 0
    %281 = vmatprep.subr.bf16.mxu0 0
    %282 = vmatpush1.bf16.msra.mxu0 0
    %283 = vmatprep.subr.bf16.mxu0 0
    %284 = vmatpush1.bf16.msra.mxu0 0
    %285 = vmatprep.subr.bf16.mxu0 0
    %286 = vmatpush1.bf16.msra.mxu0 0
    %287 = vmatprep.subr.bf16.mxu0 0
    %288 = vmatpush1.bf16.msra.mxu0 0
    %289 = vmatprep.subr.bf16.mxu0 0
    %290 = vmatpush1.bf16.msra.mxu0 0
    %291 = vmatprep.subr.bf16.mxu0 0
    %292 = vmatpush1.bf16.msra.mxu0 0
    %293 = vmatprep.subr.bf16.mxu0 0
    %294 = vmatpush1.bf16.msra.mxu0 0
    %295 = vmatprep.subr.bf16.mxu0 0
    %296 = vmatpush1.bf16.msra.mxu0 0
    %297 = vmatprep.mubr.bf16.mxu0 0
    %298 = vmatmul.mubr.bf16.gmra.mrb[0].mxu0 %v65
    %v299 = vpop.f32.mrb[0].mxu0
    %v300 = vadd.f32 0.0, %v299
    %v301 = vpop.f32.mrb[0].mxu0
    %v302 = vadd.f32 0.0, %v301
    %v303 = vpop.f32.mrb[0].mxu0
    %v304 = vadd.f32 0.0, %v303
    %v305 = vpop.f32.mrb[0].mxu0
    %v306 = vadd.f32 0.0, %v305
    %307 = vdwg.mxu0
    %v308 = vmax.f32 %v244, %v300
    %v309 = vmax.f32 %v245, %v302
    %v310 = vmax.f32 %v246, %v304
    %v311 = vmax.f32 %v247, %v306
    %313 = vset.pattern.permute.xlu0 0
    %314 = vperm.xlu0 %313, %v43
    %v315 = vpop.permute.xlu0 %314
    %318 = vset.pattern.permute.xlu0 0
    %319 = vperm.xlu0 %318, %v44
    %v320 = vpop.permute.xlu0 %319
    %v322 = vadd.f32 %v308, %v315
    %v323 = vadd.f32 %v309, %v315
    %v324 = vadd.f32 %v310, %v320
    %v325 = vadd.f32 %v311, %v320
    %v326 = vmax.f32 %v322, 0.0
    %v327 = vmax.f32 %v323, 0.0
    %v328 = vmax.f32 %v324, 0.0
    %v329 = vmax.f32 %v325, 0.0
    %v330 = vpack.c.bf16 %v328, %v326
    %v331 = vpack.c.bf16 %v329, %v327
    %v332 = vld [vmem:[%s4] sm:$0xf]
    %vm333 = vcmask 130048
    %v335 = vsel %vm333, %v332, 0
    %337 = vmatprep.subr.bf16.mxu0 %v331
    %338 = vmatpush1.bf16.msra.mxu0 %v330
    %339 = vmatprep.subr.bf16.mxu0 0
    %340 = vmatpush1.bf16.msra.mxu0 0
    %341 = vmatprep.subr.bf16.mxu0 0
    %342 = vmatpush1.bf16.msra.mxu0 0
    %343 = vmatprep.subr.bf16.mxu0 0
    %344 = vmatpush1.bf16.msra.mxu0 0
    %345 = vmatprep.subr.bf16.mxu0 0
    %346 = vmatpush1.bf16.msra.mxu0 0
    %347 = vmatprep.subr.bf16.mxu0 0
    %348 = vmatpush1.bf16.msra.mxu0 0
    %349 = vmatprep.subr.bf16.mxu0 0
    %350 = vmatpush1.bf16.msra.mxu0 0
    %351 = vmatprep.subr.bf16.mxu0 0
    %352 = vmatpush1.bf16.msra.mxu0 0
    %353 = vmatprep.subr.bf16.mxu0 0
    %354 = vmatpush1.bf16.msra.mxu0 0
    %355 = vmatprep.subr.bf16.mxu0 0
    %356 = vmatpush1.bf16.msra.mxu0 0
    %357 = vmatprep.subr.bf16.mxu0 0
    %358 = vmatpush1.bf16.msra.mxu0 0
    %359 = vmatprep.subr.bf16.mxu0 0
    %360 = vmatpush1.bf16.msra.mxu0 0
    %361 = vmatprep.subr.bf16.mxu0 0
    %362 = vmatpush1.bf16.msra.mxu0 0
    %363 = vmatprep.subr.bf16.mxu0 0
    %364 = vmatpush1.bf16.msra.mxu0 0
    %365 = vmatprep.subr.bf16.mxu0 0
    %366 = vmatpush1.bf16.msra.mxu0 0
    %367 = vmatprep.subr.bf16.mxu0 0
    %368 = vmatpush1.bf16.msra.mxu0 0
    %369 = vmatprep.mubr.bf16.mxu0 0
    %370 = vmatmul.mubr.bf16.gmra.mrb[0].mxu0 %v335
    %v371 = vpop.f32.mrb[0].mxu0
    %v372 = vadd.f32 0.0, %v371
    %v373 = vpop.f32.mrb[0].mxu0
    %v374 = vadd.f32 0.0, %v373
    %v375 = vpop.f32.mrb[0].mxu0
    %v376 = vpop.f32.mrb[0].mxu0
    %377 = vdwg.mxu0
    %v378 = vpack.c.bf16 %v372, %v372
    %v379 = vpack.c.bf16 %v374, %v374
    %v380 = vld [vmem:[%s3] sm:$0xff]
    %v381 = vld [vmem:[%s3 + $0x8] sm:$0xff]
    %v382 = vld [vmem:[%s3 + $0x10] sm:$0xff]
    %v383 = vld [vmem:[%s3 + $0x18] sm:$0xff]
    %v384 = vld [vmem:[%s3 + $0x20] sm:$0xff]
    %v385 = vld [vmem:[%s3 + $0x28] sm:$0xff]
    %v386 = vld [vmem:[%s3 + $0x30] sm:$0xff]
    %v387 = vld [vmem:[%s3 + $0x38] sm:$0xff]
    %v388 = vld [vmem:[%s3 + $0x40] sm:$0xff]
    %v389 = vld [vmem:[%s3 + $0x48] sm:$0xff]
    %v390 = vld [vmem:[%s3 + $0x50] sm:$0xff]
    %v391 = vld [vmem:[%s3 + $0x58] sm:$0xff]
    %v392 = vld [vmem:[%s3 + $0x60] sm:$0xff]
    %v393 = vld [vmem:[%s3 + $0x68] sm:$0xff]
    %v394 = vld [vmem:[%s3 + $0x70] sm:$0xff]
    %v395 = vld [vmem:[%s3 + $0x78] sm:$0xff]
    %v396 = vld [vmem:[%s3 + $0x80] sm:$0xff]
    %v397 = vld [vmem:[%s3 + $0x88] sm:$0xff]
    %v398 = vld [vmem:[%s3 + $0x90] sm:$0xff]
    %v399 = vld [vmem:[%s3 + $0x98] sm:$0xff]
    %v400 = vld [vmem:[%s3 + $0xa0] sm:$0xff]
    %v401 = vld [vmem:[%s3 + $0xa8] sm:$0xff]
    %v402 = vld [vmem:[%s3 + $0xb0] sm:$0xff]
    %v403 = vld [vmem:[%s3 + $0xb8] sm:$0xff]
    %v404 = vld [vmem:[%s3 + $0xc0] sm:$0x33]
    %s405 = scalar_lea.vmem %s4, 4
    %v406 = vld [vmem:[%s405] sm:$0xf]
    %v408 = vsel %vm333, %v406, 0
    %410 = vmatprep.subr.bf16.mxu0 %v331
    %411 = vmatpush1.bf16.msra.mxu0 %v330
    %412 = vmatprep.subr.bf16.mxu0 0
    %413 = vmatpush1.bf16.msra.mxu0 0
    %414 = vmatprep.subr.bf16.mxu0 0
    %415 = vmatpush1.bf16.msra.mxu0 0
    %416 = vmatprep.subr.bf16.mxu0 0
    %417 = vmatpush1.bf16.msra.mxu0 0
    %418 = vmatprep.subr.bf16.mxu0 0
    %419 = vmatpush1.bf16.msra.mxu0 0
    %420 = vmatprep.subr.bf16.mxu0 0
    %421 = vmatpush1.bf16.msra.mxu0 0
    %422 = vmatprep.subr.bf16.mxu0 0
    %423 = vmatpush1.bf16.msra.mxu0 0
    %424 = vmatprep.subr.bf16.mxu0 0
    %425 = vmatpush1.bf16.msra.mxu0 0
    %426 = vmatprep.subr.bf16.mxu0 0
    %427 = vmatpush1.bf16.msra.mxu0 0
    %428 = vmatprep.subr.bf16.mxu0 0
    %429 = vmatpush1.bf16.msra.mxu0 0
    %430 = vmatprep.subr.bf16.mxu0 0
    %431 = vmatpush1.bf16.msra.mxu0 0
    %432 = vmatprep.subr.bf16.mxu0 0
    %433 = vmatpush1.bf16.msra.mxu0 0
    %434 = vmatprep.subr.bf16.mxu0 0
    %435 = vmatpush1.bf16.msra.mxu0 0
    %436 = vmatprep.subr.bf16.mxu0 0
    %437 = vmatpush1.bf16.msra.mxu0 0
    %438 = vmatprep.subr.bf16.mxu0 0
    %439 = vmatpush1.bf16.msra.mxu0 0
    %440 = vmatprep.subr.bf16.mxu0 0
    %441 = vmatpush1.bf16.msra.mxu0 0
    %442 = vmatprep.mubr.bf16.mxu0 0
    %443 = vmatmul.mubr.bf16.gmra.mrb[0].mxu0 %v408
    %v444 = vpop.f32.mrb[0].mxu0
    %v445 = vadd.f32 0.0, %v444
    %v446 = vpop.f32.mrb[0].mxu0
    %v447 = vadd.f32 0.0, %v446
    %v448 = vpop.f32.mrb[0].mxu0
    %v449 = vpop.f32.mrb[0].mxu0
    %450 = vdwg.mxu0
    %v451 = vpack.c.bf16 %v445, %v445
    %v452 = vpack.c.bf16 %v447, %v447
    %s453 = scalar_lea.vmem %s3, 200
    %v454 = vld [vmem:[%s453] sm:$0xff]
    %v455 = vld [vmem:[%s453 + $0x8] sm:$0xff]
    %v456 = vld [vmem:[%s453 + $0x10] sm:$0xff]
    %v457 = vld [vmem:[%s453 + $0x18] sm:$0xff]
    %v458 = vld [vmem:[%s453 + $0x20] sm:$0xff]
    %v459 = vld [vmem:[%s453 + $0x28] sm:$0xff]
    %v460 = vld [vmem:[%s453 + $0x30] sm:$0xff]
    %v461 = vld [vmem:[%s453 + $0x38] sm:$0xff]
    %v462 = vld [vmem:[%s453 + $0x40] sm:$0xff]
    %v463 = vld [vmem:[%s453 + $0x48] sm:$0xff]
    %v464 = vld [vmem:[%s453 + $0x50] sm:$0xff]
    %v465 = vld [vmem:[%s453 + $0x58] sm:$0xff]
    %v466 = vld [vmem:[%s453 + $0x60] sm:$0xff]
    %v467 = vld [vmem:[%s453 + $0x68] sm:$0xff]
    %v468 = vld [vmem:[%s453 + $0x70] sm:$0xff]
    %v469 = vld [vmem:[%s453 + $0x78] sm:$0xff]
    %v470 = vld [vmem:[%s453 + $0x80] sm:$0xff]
    %v471 = vld [vmem:[%s453 + $0x88] sm:$0xff]
    %v472 = vld [vmem:[%s453 + $0x90] sm:$0xff]
    %v473 = vld [vmem:[%s453 + $0x98] sm:$0xff]
    %v474 = vld [vmem:[%s453 + $0xa0] sm:$0xff]
    %v475 = vld [vmem:[%s453 + $0xa8] sm:$0xff]
    %v476 = vld [vmem:[%s453 + $0xb0] sm:$0xff]
    %v477 = vld [vmem:[%s453 + $0xb8] sm:$0xff]
    %v478 = vld [vmem:[%s453 + $0xc0] sm:$0x33]
    %v504 = vunpack.c.l.b16 %v454
    %v505 = vunpack.c.h.b16 %v454
    %v506 = vunpack.c.l.b16 %v455
    %v507 = vunpack.c.h.b16 %v455
    %v508 = vunpack.c.l.b16 %v456
    %v509 = vunpack.c.h.b16 %v456
    %v510 = vunpack.c.l.b16 %v457
    %v511 = vunpack.c.h.b16 %v457
    %v512 = vunpack.c.l.b16 %v458
    %v513 = vunpack.c.h.b16 %v458
    %v514 = vunpack.c.l.b16 %v459
    %v515 = vunpack.c.h.b16 %v459
    %v516 = vunpack.c.l.b16 %v460
    %v517 = vunpack.c.h.b16 %v460
    %v518 = vunpack.c.l.b16 %v461
    %v519 = vunpack.c.h.b16 %v461
    %v520 = vunpack.c.l.b16 %v462
    %v521 = vunpack.c.h.b16 %v462
    %v522 = vunpack.c.l.b16 %v463
    %v523 = vunpack.c.h.b16 %v463
    %v524 = vunpack.c.l.b16 %v464
    %v525 = vunpack.c.h.b16 %v464
    %v526 = vunpack.c.l.b16 %v465
    %v527 = vunpack.c.h.b16 %v465
    %v528 = vunpack.c.l.b16 %v466
    %v529 = vunpack.c.h.b16 %v466
    %v530 = vunpack.c.l.b16 %v467
    %v531 = vunpack.c.h.b16 %v467
    %v532 = vunpack.c.l.b16 %v468
    %v533 = vunpack.c.h.b16 %v468
    %v534 = vunpack.c.l.b16 %v469
    %v535 = vunpack.c.h.b16 %v469
    %v536 = vunpack.c.l.b16 %v470
    %v537 = vunpack.c.h.b16 %v470
    %v538 = vunpack.c.l.b16 %v471
    %v539 = vunpack.c.h.b16 %v471
    %v540 = vunpack.c.l.b16 %v472
    %v541 = vunpack.c.h.b16 %v472
    %v542 = vunpack.c.l.b16 %v473
    %v543 = vunpack.c.h.b16 %v473
    %v544 = vunpack.c.l.b16 %v474
    %v545 = vunpack.c.h.b16 %v474
    %v546 = vunpack.c.l.b16 %v475
    %v547 = vunpack.c.h.b16 %v475
    %v548 = vunpack.c.l.b16 %v476
    %v549 = vunpack.c.h.b16 %v476
    %v550 = vunpack.c.l.b16 %v477
    %v551 = vunpack.c.h.b16 %v477
    %v552 = vunpack.c.l.b16 %v478
    %v553 = vunpack.c.h.b16 %v478
    %v554 = vpack.c.b16 %v506, %v504
    %v555 = vpack.c.b16 %v507, %v505
    %v556 = vpack.c.b16 %v510, %v508
    %v557 = vpack.c.b16 %v511, %v509
    %v558 = vpack.c.b16 %v514, %v512
    %v559 = vpack.c.b16 %v515, %v513
    %v560 = vpack.c.b16 %v518, %v516
    %v561 = vpack.c.b16 %v519, %v517
    %v562 = vpack.c.b16 %v522, %v520
    %v563 = vpack.c.b16 %v523, %v521
    %v564 = vpack.c.b16 %v526, %v524
    %v565 = vpack.c.b16 %v527, %v525
    %v566 = vpack.c.b16 %v530, %v528
    %v567 = vpack.c.b16 %v531, %v529
    %v568 = vpack.c.b16 %v534, %v532
    %v569 = vpack.c.b16 %v535, %v533
    %v570 = vpack.c.b16 %v538, %v536
    %v571 = vpack.c.b16 %v539, %v537
    %v572 = vpack.c.b16 %v542, %v540
    %v573 = vpack.c.b16 %v543, %v541
    %v574 = vpack.c.b16 %v546, %v544
    %v575 = vpack.c.b16 %v547, %v545
    %v576 = vpack.c.b16 %v550, %v548
    %v577 = vpack.c.b16 %v551, %v549
    %v578 = vpack.c.b16 %v552, %v552
    %v579 = vpack.c.b16 %v553, %v553
    %vm604 = vcmask 556032
    %v606 = vsel %vm604, %v452, 0
    %vm608 = vcmask 1041408
    %v610 = vsel %vm608, %v578, 0
    %v613 = vsel %vm608, %v579, 0
    %615 = vmatprep.subr.bf16.mxu0 %v555
    %616 = vmatpush1.bf16.msra.mxu0 %v554
    %617 = vmatprep.subr.bf16.mxu0 %v557
    %618 = vmatpush1.bf16.msra.mxu0 %v556
    %619 = vmatprep.subr.bf16.mxu0 %v559
    %620 = vmatpush1.bf16.msra.mxu0 %v558
    %621 = vmatprep.subr.bf16.mxu0 %v561
    %622 = vmatpush1.bf16.msra.mxu0 %v560
    %623 = vmatprep.subr.bf16.mxu0 %v563
    %624 = vmatpush1.bf16.msra.mxu0 %v562
    %625 = vmatprep.subr.bf16.mxu0 %v565
    %626 = vmatpush1.bf16.msra.mxu0 %v564
    %627 = vmatprep.subr.bf16.mxu0 %v567
    %628 = vmatpush1.bf16.msra.mxu0 %v566
    %629 = vmatprep.subr.bf16.mxu0 %v569
    %630 = vmatpush1.bf16.msra.mxu0 %v568
    %631 = vmatprep.subr.bf16.mxu0 %v571
    %632 = vmatpush1.bf16.msra.mxu0 %v570
    %633 = vmatprep.subr.bf16.mxu0 %v573
    %634 = vmatpush1.bf16.msra.mxu0 %v572
    %635 = vmatprep.subr.bf16.mxu0 %v575
    %636 = vmatpush1.bf16.msra.mxu0 %v574
    %637 = vmatprep.subr.bf16.mxu0 %v577
    %638 = vmatpush1.bf16.msra.mxu0 %v576
    %639 = vmatprep.subr.bf16.mxu0 %v613
    %640 = vmatpush1.bf16.msra.mxu0 %v610
    %641 = vmatprep.subr.bf16.mxu0 0
    %642 = vmatpush1.bf16.msra.mxu0 0
    %643 = vmatprep.subr.bf16.mxu0 0
    %644 = vmatpush1.bf16.msra.mxu0 0
    %645 = vmatprep.subr.bf16.mxu0 0
    %646 = vmatpush1.bf16.msra.mxu0 0
    %647 = vmatprep.mubr.bf16.mxu0 %v606
    %648 = vmatmul.mubr.bf16.gmra.mrb[0].mxu0 %v451
    %v649 = vpop.f32.mrb[0].mxu0
    %v650 = vadd.f32 0.0, %v649
    %v651 = vpop.f32.mrb[0].mxu0
    %v652 = vadd.f32 0.0, %v651
    %v653 = vpop.f32.mrb[0].mxu0
    %v654 = vpop.f32.mrb[0].mxu0
    %655 = vdwg.mxu0
    %v681 = vunpack.c.l.b16 %v380
    %v682 = vunpack.c.h.b16 %v380
    %v683 = vunpack.c.l.b16 %v381
    %v684 = vunpack.c.h.b16 %v381
    %v685 = vunpack.c.l.b16 %v382
    %v686 = vunpack.c.h.b16 %v382
    %v687 = vunpack.c.l.b16 %v383
    %v688 = vunpack.c.h.b16 %v383
    %v689 = vunpack.c.l.b16 %v384
    %v690 = vunpack.c.h.b16 %v384
    %v691 = vunpack.c.l.b16 %v385
    %v692 = vunpack.c.h.b16 %v385
    %v693 = vunpack.c.l.b16 %v386
    %v694 = vunpack.c.h.b16 %v386
    %v695 = vunpack.c.l.b16 %v387
    %v696 = vunpack.c.h.b16 %v387
    %v697 = vunpack.c.l.b16 %v388
    %v698 = vunpack.c.h.b16 %v388
    %v699 = vunpack.c.l.b16 %v389
    %v700 = vunpack.c.h.b16 %v389
    %v701 = vunpack.c.l.b16 %v390
    %v702 = vunpack.c.h.b16 %v390
    %v703 = vunpack.c.l.b16 %v391
    %v704 = vunpack.c.h.b16 %v391
    %v705 = vunpack.c.l.b16 %v392
    %v706 = vunpack.c.h.b16 %v392
    %v707 = vunpack.c.l.b16 %v393
    %v708 = vunpack.c.h.b16 %v393
    %v709 = vunpack.c.l.b16 %v394
    %v710 = vunpack.c.h.b16 %v394
    %v711 = vunpack.c.l.b16 %v395
    %v712 = vunpack.c.h.b16 %v395
    %v713 = vunpack.c.l.b16 %v396
    %v714 = vunpack.c.h.b16 %v396
    %v715 = vunpack.c.l.b16 %v397
    %v716 = vunpack.c.h.b16 %v397
    %v717 = vunpack.c.l.b16 %v398
    %v718 = vunpack.c.h.b16 %v398
    %v719 = vunpack.c.l.b16 %v399
    %v720 = vunpack.c.h.b16 %v399
    %v721 = vunpack.c.l.b16 %v400
    %v722 = vunpack.c.h.b16 %v400
    %v723 = vunpack.c.l.b16 %v401
    %v724 = vunpack.c.h.b16 %v401
    %v725 = vunpack.c.l.b16 %v402
    %v726 = vunpack.c.h.b16 %v402
    %v727 = vunpack.c.l.b16 %v403
    %v728 = vunpack.c.h.b16 %v403
    %v729 = vunpack.c.l.b16 %v404
    %v730 = vunpack.c.h.b16 %v404
    %v731 = vpack.c.b16 %v683, %v681
    %v732 = vpack.c.b16 %v684, %v682
    %v733 = vpack.c.b16 %v687, %v685
    %v734 = vpack.c.b16 %v688, %v686
    %v735 = vpack.c.b16 %v691, %v689
    %v736 = vpack.c.b16 %v692, %v690
    %v737 = vpack.c.b16 %v695, %v693
    %v738 = vpack.c.b16 %v696, %v694
    %v739 = vpack.c.b16 %v699, %v697
    %v740 = vpack.c.b16 %v700, %v698
    %v741 = vpack.c.b16 %v703, %v701
    %v742 = vpack.c.b16 %v704, %v702
    %v743 = vpack.c.b16 %v707, %v705
    %v744 = vpack.c.b16 %v708, %v706
    %v745 = vpack.c.b16 %v711, %v709
    %v746 = vpack.c.b16 %v712, %v710
    %v747 = vpack.c.b16 %v715, %v713
    %v748 = vpack.c.b16 %v716, %v714
    %v749 = vpack.c.b16 %v719, %v717
    %v750 = vpack.c.b16 %v720, %v718
    %v751 = vpack.c.b16 %v723, %v721
    %v752 = vpack.c.b16 %v724, %v722
    %v753 = vpack.c.b16 %v727, %v725
    %v754 = vpack.c.b16 %v728, %v726
    %v755 = vpack.c.b16 %v729, %v729
    %v756 = vpack.c.b16 %v730, %v730
    %v782 = vsel %vm604, %v379, 0
    %v785 = vsel %vm608, %v755, 0
    %v788 = vsel %vm608, %v756, 0
    %790 = vmatprep.subr.bf16.mxu0 %v732
    %791 = vmatpush1.bf16.msra.mxu0 %v731
    %792 = vmatprep.subr.bf16.mxu0 %v734
    %793 = vmatpush1.bf16.msra.mxu0 %v733
    %794 = vmatprep.subr.bf16.mxu0 %v736
    %795 = vmatpush1.bf16.msra.mxu0 %v735
    %796 = vmatprep.subr.bf16.mxu0 %v738
    %797 = vmatpush1.bf16.msra.mxu0 %v737
    %798 = vmatprep.subr.bf16.mxu0 %v740
    %799 = vmatpush1.bf16.msra.mxu0 %v739
    %800 = vmatprep.subr.bf16.mxu0 %v742
    %801 = vmatpush1.bf16.msra.mxu0 %v741
    %802 = vmatprep.subr.bf16.mxu0 %v744
    %803 = vmatpush1.bf16.msra.mxu0 %v743
    %804 = vmatprep.subr.bf16.mxu0 %v746
    %805 = vmatpush1.bf16.msra.mxu0 %v745
    %806 = vmatprep.subr.bf16.mxu0 %v748
    %807 = vmatpush1.bf16.msra.mxu0 %v747
    %808 = vmatprep.subr.bf16.mxu0 %v750
    %809 = vmatpush1.bf16.msra.mxu0 %v749
    %810 = vmatprep.subr.bf16.mxu0 %v752
    %811 = vmatpush1.bf16.msra.mxu0 %v751
    %812 = vmatprep.subr.bf16.mxu0 %v754
    %813 = vmatpush1.bf16.msra.mxu0 %v753
    %814 = vmatprep.subr.bf16.mxu0 %v788
    %815 = vmatpush1.bf16.msra.mxu0 %v785
    %816 = vmatprep.subr.bf16.mxu0 0
    %817 = vmatpush1.bf16.msra.mxu0 0
    %818 = vmatprep.subr.bf16.mxu0 0
    %819 = vmatpush1.bf16.msra.mxu0 0
    %820 = vmatprep.subr.bf16.mxu0 0
    %821 = vmatpush1.bf16.msra.mxu0 0
    %822 = vmatprep.mubr.bf16.mxu0 %v782
    %823 = vmatmul.mubr.bf16.gmra.mrb[0].mxu0 %v378
    %v824 = vpop.f32.mrb[0].mxu0
    %v825 = vadd.f32 %v650, %v824
    %v826 = vpop.f32.mrb[0].mxu0
    %v827 = vadd.f32 %v652, %v826
    %v828 = vpop.f32.mrb[0].mxu0
    %v829 = vpop.f32.mrb[0].mxu0
    %830 = vdwg.mxu0
    %s831 = scalar_lea.vmem %s4, 8
    %v832 = vld [vmem:[%s831] sm:$0xf]
    %v834 = vsel %vm333, %v832, 0
    %836 = vmatprep.subr.bf16.mxu0 %v331
    %837 = vmatpush1.bf16.msra.mxu0 %v330
    %838 = vmatprep.subr.bf16.mxu0 0
    %839 = vmatpush1.bf16.msra.mxu0 0
    %840 = vmatprep.subr.bf16.mxu0 0
    %841 = vmatpush1.bf16.msra.mxu0 0
    %842 = vmatprep.subr.bf16.mxu0 0
    %843 = vmatpush1.bf16.msra.mxu0 0
    %844 = vmatprep.subr.bf16.mxu0 0
    %845 = vmatpush1.bf16.msra.mxu0 0
    %846 = vmatprep.subr.bf16.mxu0 0
    %847 = vmatpush1.bf16.msra.mxu0 0
    %848 = vmatprep.subr.bf16.mxu0 0
    %849 = vmatpush1.bf16.msra.mxu0 0
    %850 = vmatprep.subr.bf16.mxu0 0
    %851 = vmatpush1.bf16.msra.mxu0 0
    %852 = vmatprep.subr.bf16.mxu0 0
    %853 = vmatpush1.bf16.msra.mxu0 0
    %854 = vmatprep.subr.bf16.mxu0 0
    %855 = vmatpush1.bf16.msra.mxu0 0
    %856 = vmatprep.subr.bf16.mxu0 0
    %857 = vmatpush1.bf16.msra.mxu0 0
    %858 = vmatprep.subr.bf16.mxu0 0
    %859 = vmatpush1.bf16.msra.mxu0 0
    %860 = vmatprep.subr.bf16.mxu0 0
    %861 = vmatpush1.bf16.msra.mxu0 0
    %862 = vmatprep.subr.bf16.mxu0 0
    %863 = vmatpush1.bf16.msra.mxu0 0
    %864 = vmatprep.subr.bf16.mxu0 0
    %865 = vmatpush1.bf16.msra.mxu0 0
    %866 = vmatprep.subr.bf16.mxu0 0
    %867 = vmatpush1.bf16.msra.mxu0 0
    %868 = vmatprep.mubr.bf16.mxu0 0
    %869 = vmatmul.mubr.bf16.gmra.mrb[0].mxu0 %v834
    %v870 = vpop.f32.mrb[0].mxu0
    %v871 = vadd.f32 0.0, %v870
    %v872 = vpop.f32.mrb[0].mxu0
    %v873 = vadd.f32 0.0, %v872
    %v874 = vpop.f32.mrb[0].mxu0
    %v875 = vpop.f32.mrb[0].mxu0
    %876 = vdwg.mxu0
    %v877 = vpack.c.bf16 %v871, %v871
    %v878 = vpack.c.bf16 %v873, %v873
    %s879 = scalar_lea.vmem %s3, 400
    %v880 = vld [vmem:[%s879] sm:$0xff]
    %v881 = vld [vmem:[%s879 + $0x8] sm:$0xff]
    %v882 = vld [vmem:[%s879 + $0x10] sm:$0xff]
    %v883 = vld [vmem:[%s879 + $0x18] sm:$0xff]
    %v884 = vld [vmem:[%s879 + $0x20] sm:$0xff]
    %v885 = vld [vmem:[%s879 + $0x28] sm:$0xff]
    %v886 = vld [vmem:[%s879 + $0x30] sm:$0xff]
    %v887 = vld [vmem:[%s879 + $0x38] sm:$0xff]
    %v888 = vld [vmem:[%s879 + $0x40] sm:$0xff]
    %v889 = vld [vmem:[%s879 + $0x48] sm:$0xff]
    %v890 = vld [vmem:[%s879 + $0x50] sm:$0xff]
    %v891 = vld [vmem:[%s879 + $0x58] sm:$0xff]
    %v892 = vld [vmem:[%s879 + $0x60] sm:$0xff]
    %v893 = vld [vmem:[%s879 + $0x68] sm:$0xff]
    %v894 = vld [vmem:[%s879 + $0x70] sm:$0xff]
    %v895 = vld [vmem:[%s879 + $0x78] sm:$0xff]
    %v896 = vld [vmem:[%s879 + $0x80] sm:$0xff]
    %v897 = vld [vmem:[%s879 + $0x88] sm:$0xff]
    %v898 = vld [vmem:[%s879 + $0x90] sm:$0xff]
    %v899 = vld [vmem:[%s879 + $0x98] sm:$0xff]
    %v900 = vld [vmem:[%s879 + $0xa0] sm:$0xff]
    %v901 = vld [vmem:[%s879 + $0xa8] sm:$0xff]
    %v902 = vld [vmem:[%s879 + $0xb0] sm:$0xff]
    %v903 = vld [vmem:[%s879 + $0xb8] sm:$0xff]
    %v904 = vld [vmem:[%s879 + $0xc0] sm:$0x33]
    %v930 = vunpack.c.l.b16 %v880
    %v931 = vunpack.c.h.b16 %v880
    %v932 = vunpack.c.l.b16 %v881
    %v933 = vunpack.c.h.b16 %v881
    %v934 = vunpack.c.l.b16 %v882
    %v935 = vunpack.c.h.b16 %v882
    %v936 = vunpack.c.l.b16 %v883
    %v937 = vunpack.c.h.b16 %v883
    %v938 = vunpack.c.l.b16 %v884
    %v939 = vunpack.c.h.b16 %v884
    %v940 = vunpack.c.l.b16 %v885
    %v941 = vunpack.c.h.b16 %v885
    %v942 = vunpack.c.l.b16 %v886
    %v943 = vunpack.c.h.b16 %v886
    %v944 = vunpack.c.l.b16 %v887
    %v945 = vunpack.c.h.b16 %v887
    %v946 = vunpack.c.l.b16 %v888
    %v947 = vunpack.c.h.b16 %v888
    %v948 = vunpack.c.l.b16 %v889
    %v949 = vunpack.c.h.b16 %v889
    %v950 = vunpack.c.l.b16 %v890
    %v951 = vunpack.c.h.b16 %v890
    %v952 = vunpack.c.l.b16 %v891
    %v953 = vunpack.c.h.b16 %v891
    %v954 = vunpack.c.l.b16 %v892
    %v955 = vunpack.c.h.b16 %v892
    %v956 = vunpack.c.l.b16 %v893
    %v957 = vunpack.c.h.b16 %v893
    %v958 = vunpack.c.l.b16 %v894
    %v959 = vunpack.c.h.b16 %v894
    %v960 = vunpack.c.l.b16 %v895
    %v961 = vunpack.c.h.b16 %v895
    %v962 = vunpack.c.l.b16 %v896
    %v963 = vunpack.c.h.b16 %v896
    %v964 = vunpack.c.l.b16 %v897
    %v965 = vunpack.c.h.b16 %v897
    %v966 = vunpack.c.l.b16 %v898
    %v967 = vunpack.c.h.b16 %v898
    %v968 = vunpack.c.l.b16 %v899
    %v969 = vunpack.c.h.b16 %v899
    %v970 = vunpack.c.l.b16 %v900
    %v971 = vunpack.c.h.b16 %v900
    %v972 = vunpack.c.l.b16 %v901
    %v973 = vunpack.c.h.b16 %v901
    %v974 = vunpack.c.l.b16 %v902
    %v975 = vunpack.c.h.b16 %v902
    %v976 = vunpack.c.l.b16 %v903
    %v977 = vunpack.c.h.b16 %v903
    %v978 = vunpack.c.l.b16 %v904
    %v979 = vunpack.c.h.b16 %v904
    %v980 = vpack.c.b16 %v932, %v930
    %v981 = vpack.c.b16 %v933, %v931
    %v982 = vpack.c.b16 %v936, %v934
    %v983 = vpack.c.b16 %v937, %v935
    %v984 = vpack.c.b16 %v940, %v938
    %v985 = vpack.c.b16 %v941, %v939
    %v986 = vpack.c.b16 %v944, %v942
    %v987 = vpack.c.b16 %v945, %v943
    %v988 = vpack.c.b16 %v948, %v946
    %v989 = vpack.c.b16 %v949, %v947
    %v990 = vpack.c.b16 %v952, %v950
    %v991 = vpack.c.b16 %v953, %v951
    %v992 = vpack.c.b16 %v956, %v954
    %v993 = vpack.c.b16 %v957, %v955
    %v994 = vpack.c.b16 %v960, %v958
    %v995 = vpack.c.b16 %v961, %v959
    %v996 = vpack.c.b16 %v964, %v962
    %v997 = vpack.c.b16 %v965, %v963
    %v998 = vpack.c.b16 %v968, %v966
    %v999 = vpack.c.b16 %v969, %v967
    %v1000 = vpack.c.b16 %v972, %v970
    %v1001 = vpack.c.b16 %v973, %v971
    %v1002 = vpack.c.b16 %v976, %v974
    %v1003 = vpack.c.b16 %v977, %v975
    %v1004 = vpack.c.b16 %v978, %v978
    %v1005 = vpack.c.b16 %v979, %v979
    %v1031 = vsel %vm604, %v878, 0
    %v1034 = vsel %vm608, %v1004, 0
    %v1037 = vsel %vm608, %v1005, 0
    %1039 = vmatprep.subr.bf16.mxu0 %v981
    %1040 = vmatpush1.bf16.msra.mxu0 %v980
    %1041 = vmatprep.subr.bf16.mxu0 %v983
    %1042 = vmatpush1.bf16.msra.mxu0 %v982
    %1043 = vmatprep.subr.bf16.mxu0 %v985
    %1044 = vmatpush1.bf16.msra.mxu0 %v984
    %1045 = vmatprep.subr.bf16.mxu0 %v987
    %1046 = vmatpush1.bf16.msra.mxu0 %v986
    %1047 = vmatprep.subr.bf16.mxu0 %v989
    %1048 = vmatpush1.bf16.msra.mxu0 %v988
    %1049 = vmatprep.subr.bf16.mxu0 %v991
    %1050 = vmatpush1.bf16.msra.mxu0 %v990
    %1051 = vmatprep.subr.bf16.mxu0 %v993
    %1052 = vmatpush1.bf16.msra.mxu0 %v992
    %1053 = vmatprep.subr.bf16.mxu0 %v995
    %1054 = vmatpush1.bf16.msra.mxu0 %v994
    %1055 = vmatprep.subr.bf16.mxu0 %v997
    %1056 = vmatpush1.bf16.msra.mxu0 %v996
    %1057 = vmatprep.subr.bf16.mxu0 %v999
    %1058 = vmatpush1.bf16.msra.mxu0 %v998
    %1059 = vmatprep.subr.bf16.mxu0 %v1001
    %1060 = vmatpush1.bf16.msra.mxu0 %v1000
    %1061 = vmatprep.subr.bf16.mxu0 %v1003
    %1062 = vmatpush1.bf16.msra.mxu0 %v1002
    %1063 = vmatprep.subr.bf16.mxu0 %v1037
    %1064 = vmatpush1.bf16.msra.mxu0 %v1034
    %1065 = vmatprep.subr.bf16.mxu0 0
    %1066 = vmatpush1.bf16.msra.mxu0 0
    %1067 = vmatprep.subr.bf16.mxu0 0
    %1068 = vmatpush1.bf16.msra.mxu0 0
    %1069 = vmatprep.subr.bf16.mxu0 0
    %1070 = vmatpush1.bf16.msra.mxu0 0
    %1071 = vmatprep.mubr.bf16.mxu0 %v1031
    %1072 = vmatmul.mubr.bf16.gmra.mrb[0].mxu0 %v877
    %v1073 = vpop.f32.mrb[0].mxu0
    %v1074 = vadd.f32 0.0, %v1073
    %v1075 = vpop.f32.mrb[0].mxu0
    %v1076 = vadd.f32 0.0, %v1075
    %v1077 = vpop.f32.mrb[0].mxu0
    %v1078 = vpop.f32.mrb[0].mxu0
    %1079 = vdwg.mxu0
    %v1080 = vadd.f32 %v825, %v1074
    %v1081 = vadd.f32 %v827, %v1076
    %s1082 = scalar_lea.vmem %s4, 12
    %v1083 = vld [vmem:[%s1082] sm:$0xf]
    %v1085 = vsel %vm333, %v1083, 0
    %1087 = vmatprep.subr.bf16.mxu0 %v331
    %1088 = vmatpush1.bf16.msra.mxu0 %v330
    %1089 = vmatprep.subr.bf16.mxu0 0
    %1090 = vmatpush1.bf16.msra.mxu0 0
    %1091 = vmatprep.subr.bf16.mxu0 0
    %1092 = vmatpush1.bf16.msra.mxu0 0
    %1093 = vmatprep.subr.bf16.mxu0 0
    %1094 = vmatpush1.bf16.msra.mxu0 0
    %1095 = vmatprep.subr.bf16.mxu0 0
    %1096 = vmatpush1.bf16.msra.mxu0 0
    %1097 = vmatprep.subr.bf16.mxu0 0
    %1098 = vmatpush1.bf16.msra.mxu0 0
    %1099 = vmatprep.subr.bf16.mxu0 0
    %1100 = vmatpush1.bf16.msra.mxu0 0
    %1101 = vmatprep.subr.bf16.mxu0 0
    %1102 = vmatpush1.bf16.msra.mxu0 0
    %1103 = vmatprep.subr.bf16.mxu0 0
    %1104 = vmatpush1.bf16.msra.mxu0 0
    %1105 = vmatprep.subr.bf16.mxu0 0
    %1106 = vmatpush1.bf16.msra.mxu0 0
    %1107 = vmatprep.subr.bf16.mxu0 0
    %1108 = vmatpush1.bf16.msra.mxu0 0
    %1109 = vmatprep.subr.bf16.mxu0 0
    %1110 = vmatpush1.bf16.msra.mxu0 0
    %1111 = vmatprep.subr.bf16.mxu0 0
    %1112 = vmatpush1.bf16.msra.mxu0 0
    %1113 = vmatprep.subr.bf16.mxu0 0
    %1114 = vmatpush1.bf16.msra.mxu0 0
    %1115 = vmatprep.subr.bf16.mxu0 0
    %1116 = vmatpush1.bf16.msra.mxu0 0
    %1117 = vmatprep.subr.bf16.mxu0 0
    %1118 = vmatpush1.bf16.msra.mxu0 0
    %1119 = vmatprep.mubr.bf16.mxu0 0
    %1120 = vmatmul.mubr.bf16.gmra.mrb[0].mxu0 %v1085
    %v1121 = vpop.f32.mrb[0].mxu0
    %v1122 = vadd.f32 0.0, %v1121
    %v1123 = vpop.f32.mrb[0].mxu0
    %v1124 = vadd.f32 0.0, %v1123
    %v1125 = vpop.f32.mrb[0].mxu0
    %v1126 = vpop.f32.mrb[0].mxu0
    %1127 = vdwg.mxu0
    %v1128 = vpack.c.bf16 %v1122, %v1122
    %v1129 = vpack.c.bf16 %v1124, %v1124
    %s1130 = scalar_lea.vmem %s3, 600
    %v1131 = vld [vmem:[%s1130] sm:$0xff]
    %v1132 = vld [vmem:[%s1130 + $0x8] sm:$0xff]
    %v1133 = vld [vmem:[%s1130 + $0x10] sm:$0xff]
    %v1134 = vld [vmem:[%s1130 + $0x18] sm:$0xff]
    %v1135 = vld [vmem:[%s1130 + $0x20] sm:$0xff]
    %v1136 = vld [vmem:[%s1130 + $0x28] sm:$0xff]
    %v1137 = vld [vmem:[%s1130 + $0x30] sm:$0xff]
    %v1138 = vld [vmem:[%s1130 + $0x38] sm:$0xff]
    %v1139 = vld [vmem:[%s1130 + $0x40] sm:$0xff]
    %v1140 = vld [vmem:[%s1130 + $0x48] sm:$0xff]
    %v1141 = vld [vmem:[%s1130 + $0x50] sm:$0xff]
    %v1142 = vld [vmem:[%s1130 + $0x58] sm:$0xff]
    %v1143 = vld [vmem:[%s1130 + $0x60] sm:$0xff]
    %v1144 = vld [vmem:[%s1130 + $0x68] sm:$0xff]
    %v1145 = vld [vmem:[%s1130 + $0x70] sm:$0xff]
    %v1146 = vld [vmem:[%s1130 + $0x78] sm:$0xff]
    %v1147 = vld [vmem:[%s1130 + $0x80] sm:$0xff]
    %v1148 = vld [vmem:[%s1130 + $0x88] sm:$0xff]
    %v1149 = vld [vmem:[%s1130 + $0x90] sm:$0xff]
    %v1150 = vld [vmem:[%s1130 + $0x98] sm:$0xff]
    %v1151 = vld [vmem:[%s1130 + $0xa0] sm:$0xff]
    %v1152 = vld [vmem:[%s1130 + $0xa8] sm:$0xff]
    %v1153 = vld [vmem:[%s1130 + $0xb0] sm:$0xff]
    %v1154 = vld [vmem:[%s1130 + $0xb8] sm:$0xff]
    %v1155 = vld [vmem:[%s1130 + $0xc0] sm:$0x33]
    %v1181 = vunpack.c.l.b16 %v1131
    %v1182 = vunpack.c.h.b16 %v1131
    %v1183 = vunpack.c.l.b16 %v1132
    %v1184 = vunpack.c.h.b16 %v1132
    %v1185 = vunpack.c.l.b16 %v1133
    %v1186 = vunpack.c.h.b16 %v1133
    %v1187 = vunpack.c.l.b16 %v1134
    %v1188 = vunpack.c.h.b16 %v1134
    %v1189 = vunpack.c.l.b16 %v1135
    %v1190 = vunpack.c.h.b16 %v1135
    %v1191 = vunpack.c.l.b16 %v1136
    %v1192 = vunpack.c.h.b16 %v1136
    %v1193 = vunpack.c.l.b16 %v1137
    %v1194 = vunpack.c.h.b16 %v1137
    %v1195 = vunpack.c.l.b16 %v1138
    %v1196 = vunpack.c.h.b16 %v1138
    %v1197 = vunpack.c.l.b16 %v1139
    %v1198 = vunpack.c.h.b16 %v1139
    %v1199 = vunpack.c.l.b16 %v1140
    %v1200 = vunpack.c.h.b16 %v1140
    %v1201 = vunpack.c.l.b16 %v1141
    %v1202 = vunpack.c.h.b16 %v1141
    %v1203 = vunpack.c.l.b16 %v1142
    %v1204 = vunpack.c.h.b16 %v1142
    %v1205 = vunpack.c.l.b16 %v1143
    %v1206 = vunpack.c.h.b16 %v1143
    %v1207 = vunpack.c.l.b16 %v1144
    %v1208 = vunpack.c.h.b16 %v1144
    %v1209 = vunpack.c.l.b16 %v1145
    %v1210 = vunpack.c.h.b16 %v1145
    %v1211 = vunpack.c.l.b16 %v1146
    %v1212 = vunpack.c.h.b16 %v1146
    %v1213 = vunpack.c.l.b16 %v1147
    %v1214 = vunpack.c.h.b16 %v1147
    %v1215 = vunpack.c.l.b16 %v1148
    %v1216 = vunpack.c.h.b16 %v1148
    %v1217 = vunpack.c.l.b16 %v1149
    %v1218 = vunpack.c.h.b16 %v1149
    %v1219 = vunpack.c.l.b16 %v1150
    %v1220 = vunpack.c.h.b16 %v1150
    %v1221 = vunpack.c.l.b16 %v1151
    %v1222 = vunpack.c.h.b16 %v1151
    %v1223 = vunpack.c.l.b16 %v1152
    %v1224 = vunpack.c.h.b16 %v1152
    %v1225 = vunpack.c.l.b16 %v1153
    %v1226 = vunpack.c.h.b16 %v1153
    %v1227 = vunpack.c.l.b16 %v1154
    %v1228 = vunpack.c.h.b16 %v1154
    %v1229 = vunpack.c.l.b16 %v1155
    %v1230 = vunpack.c.h.b16 %v1155
    %v1231 = vpack.c.b16 %v1183, %v1181
    %v1232 = vpack.c.b16 %v1184, %v1182
    %v1233 = vpack.c.b16 %v1187, %v1185
    %v1234 = vpack.c.b16 %v1188, %v1186
    %v1235 = vpack.c.b16 %v1191, %v1189
    %v1236 = vpack.c.b16 %v1192, %v1190
    %v1237 = vpack.c.b16 %v1195, %v1193
    %v1238 = vpack.c.b16 %v1196, %v1194
    %v1239 = vpack.c.b16 %v1199, %v1197
    %v1240 = vpack.c.b16 %v1200, %v1198
    %v1241 = vpack.c.b16 %v1203, %v1201
    %v1242 = vpack.c.b16 %v1204, %v1202
    %v1243 = vpack.c.b16 %v1207, %v1205
    %v1244 = vpack.c.b16 %v1208, %v1206
    %v1245 = vpack.c.b16 %v1211, %v1209
    %v1246 = vpack.c.b16 %v1212, %v1210
    %v1247 = vpack.c.b16 %v1215, %v1213
    %v1248 = vpack.c.b16 %v1216, %v1214
    %v1249 = vpack.c.b16 %v1219, %v1217
    %v1250 = vpack.c.b16 %v1220, %v1218
    %v1251 = vpack.c.b16 %v1223, %v1221
    %v1252 = vpack.c.b16 %v1224, %v1222
    %v1253 = vpack.c.b16 %v1227, %v1225
    %v1254 = vpack.c.b16 %v1228, %v1226
    %v1255 = vpack.c.b16 %v1229, %v1229
    %v1256 = vpack.c.b16 %v1230, %v1230
    %v1282 = vsel %vm604, %v1129, 0
    %v1285 = vsel %vm608, %v1255, 0
    %v1288 = vsel %vm608, %v1256, 0
    %1290 = vmatprep.subr.bf16.mxu0 %v1232
    %1291 = vmatpush1.bf16.msra.mxu0 %v1231
    %1292 = vmatprep.subr.bf16.mxu0 %v1234
    %1293 = vmatpush1.bf16.msra.mxu0 %v1233
    %1294 = vmatprep.subr.bf16.mxu0 %v1236
    %1295 = vmatpush1.bf16.msra.mxu0 %v1235
    %1296 = vmatprep.subr.bf16.mxu0 %v1238
    %1297 = vmatpush1.bf16.msra.mxu0 %v1237
    %1298 = vmatprep.subr.bf16.mxu0 %v1240
    %1299 = vmatpush1.bf16.msra.mxu0 %v1239
    %1300 = vmatprep.subr.bf16.mxu0 %v1242
    %1301 = vmatpush1.bf16.msra.mxu0 %v1241
    %1302 = vmatprep.subr.bf16.mxu0 %v1244
    %1303 = vmatpush1.bf16.msra.mxu0 %v1243
    %1304 = vmatprep.subr.bf16.mxu0 %v1246
    %1305 = vmatpush1.bf16.msra.mxu0 %v1245
    %1306 = vmatprep.subr.bf16.mxu0 %v1248
    %1307 = vmatpush1.bf16.msra.mxu0 %v1247
    %1308 = vmatprep.subr.bf16.mxu0 %v1250
    %1309 = vmatpush1.bf16.msra.mxu0 %v1249
    %1310 = vmatprep.subr.bf16.mxu0 %v1252
    %1311 = vmatpush1.bf16.msra.mxu0 %v1251
    %1312 = vmatprep.subr.bf16.mxu0 %v1254
    %1313 = vmatpush1.bf16.msra.mxu0 %v1253
    %1314 = vmatprep.subr.bf16.mxu0 %v1288
    %1315 = vmatpush1.bf16.msra.mxu0 %v1285
    %1316 = vmatprep.subr.bf16.mxu0 0
    %1317 = vmatpush1.bf16.msra.mxu0 0
    %1318 = vmatprep.subr.bf16.mxu0 0
    %1319 = vmatpush1.bf16.msra.mxu0 0
    %1320 = vmatprep.subr.bf16.mxu0 0
    %1321 = vmatpush1.bf16.msra.mxu0 0
    %1322 = vmatprep.mubr.bf16.mxu0 %v1282
    %1323 = vmatmul.mubr.bf16.gmra.mrb[0].mxu0 %v1128
    %v1324 = vpop.f32.mrb[0].mxu0
    %v1325 = vadd.f32 0.0, %v1324
    %v1326 = vpop.f32.mrb[0].mxu0
    %v1327 = vadd.f32 0.0, %v1326
    %v1328 = vpop.f32.mrb[0].mxu0
    %v1329 = vpop.f32.mrb[0].mxu0
    %1330 = vdwg.mxu0
    %v1331 = vadd.f32 %v1080, %v1325
    %v1332 = vadd.f32 %v1081, %v1327
    %s1333 = scalar_lea.vmem %s4, 16
    %v1334 = vld [vmem:[%s1333] sm:$0xf]
    %v1336 = vsel %vm333, %v1334, 0
    %1338 = vmatprep.subr.bf16.mxu0 %v331
    %1339 = vmatpush1.bf16.msra.mxu0 %v330
    %1340 = vmatprep.subr.bf16.mxu0 0
    %1341 = vmatpush1.bf16.msra.mxu0 0
    %1342 = vmatprep.subr.bf16.mxu0 0
    %1343 = vmatpush1.bf16.msra.mxu0 0
    %1344 = vmatprep.subr.bf16.mxu0 0
    %1345 = vmatpush1.bf16.msra.mxu0 0
    %1346 = vmatprep.subr.bf16.mxu0 0
    %1347 = vmatpush1.bf16.msra.mxu0 0
    %1348 = vmatprep.subr.bf16.mxu0 0
    %1349 = vmatpush1.bf16.msra.mxu0 0
    %1350 = vmatprep.subr.bf16.mxu0 0
    %1351 = vmatpush1.bf16.msra.mxu0 0
    %1352 = vmatprep.subr.bf16.mxu0 0
    %1353 = vmatpush1.bf16.msra.mxu0 0
    %1354 = vmatprep.subr.bf16.mxu0 0
    %1355 = vmatpush1.bf16.msra.mxu0 0
    %1356 = vmatprep.subr.bf16.mxu0 0
    %1357 = vmatpush1.bf16.msra.mxu0 0
    %1358 = vmatprep.subr.bf16.mxu0 0
    %1359 = vmatpush1.bf16.msra.mxu0 0
    %1360 = vmatprep.subr.bf16.mxu0 0
    %1361 = vmatpush1.bf16.msra.mxu0 0
    %1362 = vmatprep.subr.bf16.mxu0 0
    %1363 = vmatpush1.bf16.msra.mxu0 0
    %1364 = vmatprep.subr.bf16.mxu0 0
    %1365 = vmatpush1.bf16.msra.mxu0 0
    %1366 = vmatprep.subr.bf16.mxu0 0
    %1367 = vmatpush1.bf16.msra.mxu0 0
    %1368 = vmatprep.subr.bf16.mxu0 0
    %1369 = vmatpush1.bf16.msra.mxu0 0
    %1370 = vmatprep.mubr.bf16.mxu0 0
    %1371 = vmatmul.mubr.bf16.gmra.mrb[0].mxu0 %v1336
    %v1372 = vpop.f32.mrb[0].mxu0
    %v1373 = vadd.f32 0.0, %v1372
    %v1374 = vpop.f32.mrb[0].mxu0
    %v1375 = vadd.f32 0.0, %v1374
    %v1376 = vpop.f32.mrb[0].mxu0
    %v1377 = vpop.f32.mrb[0].mxu0
    %1378 = vdwg.mxu0
    %v1379 = vpack.c.bf16 %v1373, %v1373
    %v1380 = vpack.c.bf16 %v1375, %v1375
    %s1381 = scalar_lea.vmem %s3, 800
    %v1382 = vld [vmem:[%s1381] sm:$0xff]
    %v1383 = vld [vmem:[%s1381 + $0x8] sm:$0xff]
    %v1384 = vld [vmem:[%s1381 + $0x10] sm:$0xff]
    %v1385 = vld [vmem:[%s1381 + $0x18] sm:$0xff]
    %v1386 = vld [vmem:[%s1381 + $0x20] sm:$0xff]
    %v1387 = vld [vmem:[%s1381 + $0x28] sm:$0xff]
    %v1388 = vld [vmem:[%s1381 + $0x30] sm:$0xff]
    %v1389 = vld [vmem:[%s1381 + $0x38] sm:$0xff]
    %v1390 = vld [vmem:[%s1381 + $0x40] sm:$0xff]
    %v1391 = vld [vmem:[%s1381 + $0x48] sm:$0xff]
    %v1392 = vld [vmem:[%s1381 + $0x50] sm:$0xff]
    %v1393 = vld [vmem:[%s1381 + $0x58] sm:$0xff]
    %v1394 = vld [vmem:[%s1381 + $0x60] sm:$0xff]
    %v1395 = vld [vmem:[%s1381 + $0x68] sm:$0xff]
    %v1396 = vld [vmem:[%s1381 + $0x70] sm:$0xff]
    %v1397 = vld [vmem:[%s1381 + $0x78] sm:$0xff]
    %v1398 = vld [vmem:[%s1381 + $0x80] sm:$0xff]
    %v1399 = vld [vmem:[%s1381 + $0x88] sm:$0xff]
    %v1400 = vld [vmem:[%s1381 + $0x90] sm:$0xff]
    %v1401 = vld [vmem:[%s1381 + $0x98] sm:$0xff]
    %v1402 = vld [vmem:[%s1381 + $0xa0] sm:$0xff]
    %v1403 = vld [vmem:[%s1381 + $0xa8] sm:$0xff]
    %v1404 = vld [vmem:[%s1381 + $0xb0] sm:$0xff]
    %v1405 = vld [vmem:[%s1381 + $0xb8] sm:$0xff]
    %v1406 = vld [vmem:[%s1381 + $0xc0] sm:$0x33]
    %v1432 = vunpack.c.l.b16 %v1382
    %v1433 = vunpack.c.h.b16 %v1382
    %v1434 = vunpack.c.l.b16 %v1383
    %v1435 = vunpack.c.h.b16 %v1383
    %v1436 = vunpack.c.l.b16 %v1384
    %v1437 = vunpack.c.h.b16 %v1384
    %v1438 = vunpack.c.l.b16 %v1385
    %v1439 = vunpack.c.h.b16 %v1385
    %v1440 = vunpack.c.l.b16 %v1386
    %v1441 = vunpack.c.h.b16 %v1386
    %v1442 = vunpack.c.l.b16 %v1387
    %v1443 = vunpack.c.h.b16 %v1387
    %v1444 = vunpack.c.l.b16 %v1388
    %v1445 = vunpack.c.h.b16 %v1388
    %v1446 = vunpack.c.l.b16 %v1389
    %v1447 = vunpack.c.h.b16 %v1389
    %v1448 = vunpack.c.l.b16 %v1390
    %v1449 = vunpack.c.h.b16 %v1390
    %v1450 = vunpack.c.l.b16 %v1391
    %v1451 = vunpack.c.h.b16 %v1391
    %v1452 = vunpack.c.l.b16 %v1392
    %v1453 = vunpack.c.h.b16 %v1392
    %v1454 = vunpack.c.l.b16 %v1393
    %v1455 = vunpack.c.h.b16 %v1393
    %v1456 = vunpack.c.l.b16 %v1394
    %v1457 = vunpack.c.h.b16 %v1394
    %v1458 = vunpack.c.l.b16 %v1395
    %v1459 = vunpack.c.h.b16 %v1395
    %v1460 = vunpack.c.l.b16 %v1396
    %v1461 = vunpack.c.h.b16 %v1396
    %v1462 = vunpack.c.l.b16 %v1397
    %v1463 = vunpack.c.h.b16 %v1397
    %v1464 = vunpack.c.l.b16 %v1398
    %v1465 = vunpack.c.h.b16 %v1398
    %v1466 = vunpack.c.l.b16 %v1399
    %v1467 = vunpack.c.h.b16 %v1399
    %v1468 = vunpack.c.l.b16 %v1400
    %v1469 = vunpack.c.h.b16 %v1400
    %v1470 = vunpack.c.l.b16 %v1401
    %v1471 = vunpack.c.h.b16 %v1401
    %v1472 = vunpack.c.l.b16 %v1402
    %v1473 = vunpack.c.h.b16 %v1402
    %v1474 = vunpack.c.l.b16 %v1403
    %v1475 = vunpack.c.h.b16 %v1403
    %v1476 = vunpack.c.l.b16 %v1404
    %v1477 = vunpack.c.h.b16 %v1404
    %v1478 = vunpack.c.l.b16 %v1405
    %v1479 = vunpack.c.h.b16 %v1405
    %v1480 = vunpack.c.l.b16 %v1406
    %v1481 = vunpack.c.h.b16 %v1406
    %v1482 = vpack.c.b16 %v1434, %v1432
    %v1483 = vpack.c.b16 %v1435, %v1433
    %v1484 = vpack.c.b16 %v1438, %v1436
    %v1485 = vpack.c.b16 %v1439, %v1437
    %v1486 = vpack.c.b16 %v1442, %v1440
    %v1487 = vpack.c.b16 %v1443, %v1441
    %v1488 = vpack.c.b16 %v1446, %v1444
    %v1489 = vpack.c.b16 %v1447, %v1445
    %v1490 = vpack.c.b16 %v1450, %v1448
    %v1491 = vpack.c.b16 %v1451, %v1449
    %v1492 = vpack.c.b16 %v1454, %v1452
    %v1493 = vpack.c.b16 %v1455, %v1453
    %v1494 = vpack.c.b16 %v1458, %v1456
    %v1495 = vpack.c.b16 %v1459, %v1457
    %v1496 = vpack.c.b16 %v1462, %v1460
    %v1497 = vpack.c.b16 %v1463, %v1461
    %v1498 = vpack.c.b16 %v1466, %v1464
    %v1499 = vpack.c.b16 %v1467, %v1465
    %v1500 = vpack.c.b16 %v1470, %v1468
    %v1501 = vpack.c.b16 %v1471, %v1469
    %v1502 = vpack.c.b16 %v1474, %v1472
    %v1503 = vpack.c.b16 %v1475, %v1473
    %v1504 = vpack.c.b16 %v1478, %v1476
    %v1505 = vpack.c.b16 %v1479, %v1477
    %v1506 = vpack.c.b16 %v1480, %v1480
    %v1507 = vpack.c.b16 %v1481, %v1481
    %v1533 = vsel %vm604, %v1380, 0
    %v1536 = vsel %vm608, %v1506, 0
    %v1539 = vsel %vm608, %v1507, 0
    %1541 = vmatprep.subr.bf16.mxu0 %v1483
    %1542 = vmatpush1.bf16.msra.mxu0 %v1482
    %1543 = vmatprep.subr.bf16.mxu0 %v1485
    %1544 = vmatpush1.bf16.msra.mxu0 %v1484
    %1545 = vmatprep.subr.bf16.mxu0 %v1487
    %1546 = vmatpush1.bf16.msra.mxu0 %v1486
    %1547 = vmatprep.subr.bf16.mxu0 %v1489
    %1548 = vmatpush1.bf16.msra.mxu0 %v1488
    %1549 = vmatprep.subr.bf16.mxu0 %v1491
    %1550 = vmatpush1.bf16.msra.mxu0 %v1490
    %1551 = vmatprep.subr.bf16.mxu0 %v1493
    %1552 = vmatpush1.bf16.msra.mxu0 %v1492
    %1553 = vmatprep.subr.bf16.mxu0 %v1495
    %1554 = vmatpush1.bf16.msra.mxu0 %v1494
    %1555 = vmatprep.subr.bf16.mxu0 %v1497
    %1556 = vmatpush1.bf16.msra.mxu0 %v1496
    %1557 = vmatprep.subr.bf16.mxu0 %v1499
    %1558 = vmatpush1.bf16.msra.mxu0 %v1498
    %1559 = vmatprep.subr.bf16.mxu0 %v1501
    %1560 = vmatpush1.bf16.msra.mxu0 %v1500
    %1561 = vmatprep.subr.bf16.mxu0 %v1503
    %1562 = vmatpush1.bf16.msra.mxu0 %v1502
    %1563 = vmatprep.subr.bf16.mxu0 %v1505
    %1564 = vmatpush1.bf16.msra.mxu0 %v1504
    %1565 = vmatprep.subr.bf16.mxu0 %v1539
    %1566 = vmatpush1.bf16.msra.mxu0 %v1536
    %1567 = vmatprep.subr.bf16.mxu0 0
    %1568 = vmatpush1.bf16.msra.mxu0 0
    %1569 = vmatprep.subr.bf16.mxu0 0
    %1570 = vmatpush1.bf16.msra.mxu0 0
    %1571 = vmatprep.subr.bf16.mxu0 0
    %1572 = vmatpush1.bf16.msra.mxu0 0
    %1573 = vmatprep.mubr.bf16.mxu0 %v1533
    %1574 = vmatmul.mubr.bf16.gmra.mrb[0].mxu0 %v1379
    %v1575 = vpop.f32.mrb[0].mxu0
    %v1576 = vadd.f32 0.0, %v1575
    %v1577 = vpop.f32.mrb[0].mxu0
    %v1578 = vadd.f32 0.0, %v1577
    %v1579 = vpop.f32.mrb[0].mxu0
    %v1580 = vpop.f32.mrb[0].mxu0
    %1581 = vdwg.mxu0
    %v1582 = vadd.f32 %v1331, %v1576
    %v1583 = vadd.f32 %v1332, %v1578
    %s1584 = scalar_lea.vmem %s4, 20
    %v1585 = vld [vmem:[%s1584] sm:$0xf]
    %v1587 = vsel %vm333, %v1585, 0
    %1589 = vmatprep.subr.bf16.mxu0 %v331
    %1590 = vmatpush1.bf16.msra.mxu0 %v330
    %1591 = vmatprep.subr.bf16.mxu0 0
    %1592 = vmatpush1.bf16.msra.mxu0 0
    %1593 = vmatprep.subr.bf16.mxu0 0
    %1594 = vmatpush1.bf16.msra.mxu0 0
    %1595 = vmatprep.subr.bf16.mxu0 0
    %1596 = vmatpush1.bf16.msra.mxu0 0
    %1597 = vmatprep.subr.bf16.mxu0 0
    %1598 = vmatpush1.bf16.msra.mxu0 0
    %1599 = vmatprep.subr.bf16.mxu0 0
    %1600 = vmatpush1.bf16.msra.mxu0 0
    %1601 = vmatprep.subr.bf16.mxu0 0
    %1602 = vmatpush1.bf16.msra.mxu0 0
    %1603 = vmatprep.subr.bf16.mxu0 0
    %1604 = vmatpush1.bf16.msra.mxu0 0
    %1605 = vmatprep.subr.bf16.mxu0 0
    %1606 = vmatpush1.bf16.msra.mxu0 0
    %1607 = vmatprep.subr.bf16.mxu0 0
    %1608 = vmatpush1.bf16.msra.mxu0 0
    %1609 = vmatprep.subr.bf16.mxu0 0
    %1610 = vmatpush1.bf16.msra.mxu0 0
    %1611 = vmatprep.subr.bf16.mxu0 0
    %1612 = vmatpush1.bf16.msra.mxu0 0
    %1613 = vmatprep.subr.bf16.mxu0 0
    %1614 = vmatpush1.bf16.msra.mxu0 0
    %1615 = vmatprep.subr.bf16.mxu0 0
    %1616 = vmatpush1.bf16.msra.mxu0 0
    %1617 = vmatprep.subr.bf16.mxu0 0
    %1618 = vmatpush1.bf16.msra.mxu0 0
    %1619 = vmatprep.subr.bf16.mxu0 0
    %1620 = vmatpush1.bf16.msra.mxu0 0
    %1621 = vmatprep.mubr.bf16.mxu0 0
    %1622 = vmatmul.mubr.bf16.gmra.mrb[0].mxu0 %v1587
    %v1623 = vpop.f32.mrb[0].mxu0
    %v1624 = vadd.f32 0.0, %v1623
    %v1625 = vpop.f32.mrb[0].mxu0
    %v1626 = vadd.f32 0.0, %v1625
    %v1627 = vpop.f32.mrb[0].mxu0
    %v1628 = vpop.f32.mrb[0].mxu0
    %1629 = vdwg.mxu0
    %v1630 = vpack.c.bf16 %v1624, %v1624
    %v1631 = vpack.c.bf16 %v1626, %v1626
    %s1632 = scalar_lea.vmem %s3, 1000
    %v1633 = vld [vmem:[%s1632] sm:$0xff]
    %v1634 = vld [vmem:[%s1632 + $0x8] sm:$0xff]
    %v1635 = vld [vmem:[%s1632 + $0x10] sm:$0xff]
    %v1636 = vld [vmem:[%s1632 + $0x18] sm:$0xff]
    %v1637 = vld [vmem:[%s1632 + $0x20] sm:$0xff]
    %v1638 = vld [vmem:[%s1632 + $0x28] sm:$0xff]
    %v1639 = vld [vmem:[%s1632 + $0x30] sm:$0xff]
    %v1640 = vld [vmem:[%s1632 + $0x38] sm:$0xff]
    %v1641 = vld [vmem:[%s1632 + $0x40] sm:$0xff]
    %v1642 = vld [vmem:[%s1632 + $0x48] sm:$0xff]
    %v1643 = vld [vmem:[%s1632 + $0x50] sm:$0xff]
    %v1644 = vld [vmem:[%s1632 + $0x58] sm:$0xff]
    %v1645 = vld [vmem:[%s1632 + $0x60] sm:$0xff]
    %v1646 = vld [vmem:[%s1632 + $0x68] sm:$0xff]
    %v1647 = vld [vmem:[%s1632 + $0x70] sm:$0xff]
    %v1648 = vld [vmem:[%s1632 + $0x78] sm:$0xff]
    %v1649 = vld [vmem:[%s1632 + $0x80] sm:$0xff]
    %v1650 = vld [vmem:[%s1632 + $0x88] sm:$0xff]
    %v1651 = vld [vmem:[%s1632 + $0x90] sm:$0xff]
    %v1652 = vld [vmem:[%s1632 + $0x98] sm:$0xff]
    %v1653 = vld [vmem:[%s1632 + $0xa0] sm:$0xff]
    %v1654 = vld [vmem:[%s1632 + $0xa8] sm:$0xff]
    %v1655 = vld [vmem:[%s1632 + $0xb0] sm:$0xff]
    %v1656 = vld [vmem:[%s1632 + $0xb8] sm:$0xff]
    %v1657 = vld [vmem:[%s1632 + $0xc0] sm:$0x33]
    %v1683 = vunpack.c.l.b16 %v1633
    %v1684 = vunpack.c.h.b16 %v1633
    %v1685 = vunpack.c.l.b16 %v1634
    %v1686 = vunpack.c.h.b16 %v1634
    %v1687 = vunpack.c.l.b16 %v1635
    %v1688 = vunpack.c.h.b16 %v1635
    %v1689 = vunpack.c.l.b16 %v1636
    %v1690 = vunpack.c.h.b16 %v1636
    %v1691 = vunpack.c.l.b16 %v1637
    %v1692 = vunpack.c.h.b16 %v1637
    %v1693 = vunpack.c.l.b16 %v1638
    %v1694 = vunpack.c.h.b16 %v1638
    %v1695 = vunpack.c.l.b16 %v1639
    %v1696 = vunpack.c.h.b16 %v1639
    %v1697 = vunpack.c.l.b16 %v1640
    %v1698 = vunpack.c.h.b16 %v1640
    %v1699 = vunpack.c.l.b16 %v1641
    %v1700 = vunpack.c.h.b16 %v1641
    %v1701 = vunpack.c.l.b16 %v1642
    %v1702 = vunpack.c.h.b16 %v1642
    %v1703 = vunpack.c.l.b16 %v1643
    %v1704 = vunpack.c.h.b16 %v1643
    %v1705 = vunpack.c.l.b16 %v1644
    %v1706 = vunpack.c.h.b16 %v1644
    %v1707 = vunpack.c.l.b16 %v1645
    %v1708 = vunpack.c.h.b16 %v1645
    %v1709 = vunpack.c.l.b16 %v1646
    %v1710 = vunpack.c.h.b16 %v1646
    %v1711 = vunpack.c.l.b16 %v1647
    %v1712 = vunpack.c.h.b16 %v1647
    %v1713 = vunpack.c.l.b16 %v1648
    %v1714 = vunpack.c.h.b16 %v1648
    %v1715 = vunpack.c.l.b16 %v1649
    %v1716 = vunpack.c.h.b16 %v1649
    %v1717 = vunpack.c.l.b16 %v1650
    %v1718 = vunpack.c.h.b16 %v1650
    %v1719 = vunpack.c.l.b16 %v1651
    %v1720 = vunpack.c.h.b16 %v1651
    %v1721 = vunpack.c.l.b16 %v1652
    %v1722 = vunpack.c.h.b16 %v1652
    %v1723 = vunpack.c.l.b16 %v1653
    %v1724 = vunpack.c.h.b16 %v1653
    %v1725 = vunpack.c.l.b16 %v1654
    %v1726 = vunpack.c.h.b16 %v1654
    %v1727 = vunpack.c.l.b16 %v1655
    %v1728 = vunpack.c.h.b16 %v1655
    %v1729 = vunpack.c.l.b16 %v1656
    %v1730 = vunpack.c.h.b16 %v1656
    %v1731 = vunpack.c.l.b16 %v1657
    %v1732 = vunpack.c.h.b16 %v1657
    %v1733 = vpack.c.b16 %v1685, %v1683
    %v1734 = vpack.c.b16 %v1686, %v1684
    %v1735 = vpack.c.b16 %v1689, %v1687
    %v1736 = vpack.c.b16 %v1690, %v1688
    %v1737 = vpack.c.b16 %v1693, %v1691
    %v1738 = vpack.c.b16 %v1694, %v1692
    %v1739 = vpack.c.b16 %v1697, %v1695
    %v1740 = vpack.c.b16 %v1698, %v1696
    %v1741 = vpack.c.b16 %v1701, %v1699
    %v1742 = vpack.c.b16 %v1702, %v1700
    %v1743 = vpack.c.b16 %v1705, %v1703
    %v1744 = vpack.c.b16 %v1706, %v1704
    %v1745 = vpack.c.b16 %v1709, %v1707
    %v1746 = vpack.c.b16 %v1710, %v1708
    %v1747 = vpack.c.b16 %v1713, %v1711
    %v1748 = vpack.c.b16 %v1714, %v1712
    %v1749 = vpack.c.b16 %v1717, %v1715
    %v1750 = vpack.c.b16 %v1718, %v1716
    %v1751 = vpack.c.b16 %v1721, %v1719
    %v1752 = vpack.c.b16 %v1722, %v1720
    %v1753 = vpack.c.b16 %v1725, %v1723
    %v1754 = vpack.c.b16 %v1726, %v1724
    %v1755 = vpack.c.b16 %v1729, %v1727
    %v1756 = vpack.c.b16 %v1730, %v1728
    %v1757 = vpack.c.b16 %v1731, %v1731
    %v1758 = vpack.c.b16 %v1732, %v1732
    %v1784 = vsel %vm604, %v1631, 0
    %v1787 = vsel %vm608, %v1757, 0
    %v1790 = vsel %vm608, %v1758, 0
    %1792 = vmatprep.subr.bf16.mxu0 %v1734
    %1793 = vmatpush1.bf16.msra.mxu0 %v1733
    %1794 = vmatprep.subr.bf16.mxu0 %v1736
    %1795 = vmatpush1.bf16.msra.mxu0 %v1735
    %1796 = vmatprep.subr.bf16.mxu0 %v1738
    %1797 = vmatpush1.bf16.msra.mxu0 %v1737
    %1798 = vmatprep.subr.bf16.mxu0 %v1740
    %1799 = vmatpush1.bf16.msra.mxu0 %v1739
    %1800 = vmatprep.subr.bf16.mxu0 %v1742
    %1801 = vmatpush1.bf16.msra.mxu0 %v1741
    %1802 = vmatprep.subr.bf16.mxu0 %v1744
    %1803 = vmatpush1.bf16.msra.mxu0 %v1743
    %1804 = vmatprep.subr.bf16.mxu0 %v1746
    %1805 = vmatpush1.bf16.msra.mxu0 %v1745
    %1806 = vmatprep.subr.bf16.mxu0 %v1748
    %1807 = vmatpush1.bf16.msra.mxu0 %v1747
    %1808 = vmatprep.subr.bf16.mxu0 %v1750
    %1809 = vmatpush1.bf16.msra.mxu0 %v1749
    %1810 = vmatprep.subr.bf16.mxu0 %v1752
    %1811 = vmatpush1.bf16.msra.mxu0 %v1751
    %1812 = vmatprep.subr.bf16.mxu0 %v1754
    %1813 = vmatpush1.bf16.msra.mxu0 %v1753
    %1814 = vmatprep.subr.bf16.mxu0 %v1756
    %1815 = vmatpush1.bf16.msra.mxu0 %v1755
    %1816 = vmatprep.subr.bf16.mxu0 %v1790
    %1817 = vmatpush1.bf16.msra.mxu0 %v1787
    %1818 = vmatprep.subr.bf16.mxu0 0
    %1819 = vmatpush1.bf16.msra.mxu0 0
    %1820 = vmatprep.subr.bf16.mxu0 0
    %1821 = vmatpush1.bf16.msra.mxu0 0
    %1822 = vmatprep.subr.bf16.mxu0 0
    %1823 = vmatpush1.bf16.msra.mxu0 0
    %1824 = vmatprep.mubr.bf16.mxu0 %v1784
    %1825 = vmatmul.mubr.bf16.gmra.mrb[0].mxu0 %v1630
    %v1826 = vpop.f32.mrb[0].mxu0
    %v1827 = vadd.f32 0.0, %v1826
    %v1828 = vpop.f32.mrb[0].mxu0
    %v1829 = vadd.f32 0.0, %v1828
    %v1830 = vpop.f32.mrb[0].mxu0
    %v1831 = vpop.f32.mrb[0].mxu0
    %1832 = vdwg.mxu0
    %v1833 = vadd.f32 %v1582, %v1827
    %v1834 = vadd.f32 %v1583, %v1829
    %s1835 = scalar_lea.vmem %s4, 24
    %v1836 = vld [vmem:[%s1835] sm:$0xf]
    %v1838 = vsel %vm333, %v1836, 0
    %1840 = vmatprep.subr.bf16.mxu0 %v331
    %1841 = vmatpush1.bf16.msra.mxu0 %v330
    %1842 = vmatprep.subr.bf16.mxu0 0
    %1843 = vmatpush1.bf16.msra.mxu0 0
    %1844 = vmatprep.subr.bf16.mxu0 0
    %1845 = vmatpush1.bf16.msra.mxu0 0
    %1846 = vmatprep.subr.bf16.mxu0 0
    %1847 = vmatpush1.bf16.msra.mxu0 0
    %1848 = vmatprep.subr.bf16.mxu0 0
    %1849 = vmatpush1.bf16.msra.mxu0 0
    %1850 = vmatprep.subr.bf16.mxu0 0
    %1851 = vmatpush1.bf16.msra.mxu0 0
    %1852 = vmatprep.subr.bf16.mxu0 0
    %1853 = vmatpush1.bf16.msra.mxu0 0
    %1854 = vmatprep.subr.bf16.mxu0 0
    %1855 = vmatpush1.bf16.msra.mxu0 0
    %1856 = vmatprep.subr.bf16.mxu0 0
    %1857 = vmatpush1.bf16.msra.mxu0 0
    %1858 = vmatprep.subr.bf16.mxu0 0
    %1859 = vmatpush1.bf16.msra.mxu0 0
    %1860 = vmatprep.subr.bf16.mxu0 0
    %1861 = vmatpush1.bf16.msra.mxu0 0
    %1862 = vmatprep.subr.bf16.mxu0 0
    %1863 = vmatpush1.bf16.msra.mxu0 0
    %1864 = vmatprep.subr.bf16.mxu0 0
    %1865 = vmatpush1.bf16.msra.mxu0 0
    %1866 = vmatprep.subr.bf16.mxu0 0
    %1867 = vmatpush1.bf16.msra.mxu0 0
    %1868 = vmatprep.subr.bf16.mxu0 0
    %1869 = vmatpush1.bf16.msra.mxu0 0
    %1870 = vmatprep.subr.bf16.mxu0 0
    %1871 = vmatpush1.bf16.msra.mxu0 0
    %1872 = vmatprep.mubr.bf16.mxu0 0
    %1873 = vmatmul.mubr.bf16.gmra.mrb[0].mxu0 %v1838
    %v1874 = vpop.f32.mrb[0].mxu0
    %v1875 = vadd.f32 0.0, %v1874
    %v1876 = vpop.f32.mrb[0].mxu0
    %v1877 = vadd.f32 0.0, %v1876
    %v1878 = vpop.f32.mrb[0].mxu0
    %v1879 = vpop.f32.mrb[0].mxu0
    %1880 = vdwg.mxu0
    %v1881 = vpack.c.bf16 %v1875, %v1875
    %v1882 = vpack.c.bf16 %v1877, %v1877
    %s1883 = scalar_lea.vmem %s3, 1200
    %v1884 = vld [vmem:[%s1883] sm:$0xff]
    %v1885 = vld [vmem:[%s1883 + $0x8] sm:$0xff]
    %v1886 = vld [vmem:[%s1883 + $0x10] sm:$0xff]
    %v1887 = vld [vmem:[%s1883 + $0x18] sm:$0xff]
    %v1888 = vld [vmem:[%s1883 + $0x20] sm:$0xff]
    %v1889 = vld [vmem:[%s1883 + $0x28] sm:$0xff]
    %v1890 = vld [vmem:[%s1883 + $0x30] sm:$0xff]
    %v1891 = vld [vmem:[%s1883 + $0x38] sm:$0xff]
    %v1892 = vld [vmem:[%s1883 + $0x40] sm:$0xff]
    %v1893 = vld [vmem:[%s1883 + $0x48] sm:$0xff]
    %v1894 = vld [vmem:[%s1883 + $0x50] sm:$0xff]
    %v1895 = vld [vmem:[%s1883 + $0x58] sm:$0xff]
    %v1896 = vld [vmem:[%s1883 + $0x60] sm:$0xff]
    %v1897 = vld [vmem:[%s1883 + $0x68] sm:$0xff]
    %v1898 = vld [vmem:[%s1883 + $0x70] sm:$0xff]
    %v1899 = vld [vmem:[%s1883 + $0x78] sm:$0xff]
    %v1900 = vld [vmem:[%s1883 + $0x80] sm:$0xff]
    %v1901 = vld [vmem:[%s1883 + $0x88] sm:$0xff]
    %v1902 = vld [vmem:[%s1883 + $0x90] sm:$0xff]
    %v1903 = vld [vmem:[%s1883 + $0x98] sm:$0xff]
    %v1904 = vld [vmem:[%s1883 + $0xa0] sm:$0xff]
    %v1905 = vld [vmem:[%s1883 + $0xa8] sm:$0xff]
    %v1906 = vld [vmem:[%s1883 + $0xb0] sm:$0xff]
    %v1907 = vld [vmem:[%s1883 + $0xb8] sm:$0xff]
    %v1908 = vld [vmem:[%s1883 + $0xc0] sm:$0x33]
    %v1934 = vunpack.c.l.b16 %v1884
    %v1935 = vunpack.c.h.b16 %v1884
    %v1936 = vunpack.c.l.b16 %v1885
    %v1937 = vunpack.c.h.b16 %v1885
    %v1938 = vunpack.c.l.b16 %v1886
    %v1939 = vunpack.c.h.b16 %v1886
    %v1940 = vunpack.c.l.b16 %v1887
    %v1941 = vunpack.c.h.b16 %v1887
    %v1942 = vunpack.c.l.b16 %v1888
    %v1943 = vunpack.c.h.b16 %v1888
    %v1944 = vunpack.c.l.b16 %v1889
    %v1945 = vunpack.c.h.b16 %v1889
    %v1946 = vunpack.c.l.b16 %v1890
    %v1947 = vunpack.c.h.b16 %v1890
    %v1948 = vunpack.c.l.b16 %v1891
    %v1949 = vunpack.c.h.b16 %v1891
    %v1950 = vunpack.c.l.b16 %v1892
    %v1951 = vunpack.c.h.b16 %v1892
    %v1952 = vunpack.c.l.b16 %v1893
    %v1953 = vunpack.c.h.b16 %v1893
    %v1954 = vunpack.c.l.b16 %v1894
    %v1955 = vunpack.c.h.b16 %v1894
    %v1956 = vunpack.c.l.b16 %v1895
    %v1957 = vunpack.c.h.b16 %v1895
    %v1958 = vunpack.c.l.b16 %v1896
    %v1959 = vunpack.c.h.b16 %v1896
    %v1960 = vunpack.c.l.b16 %v1897
    %v1961 = vunpack.c.h.b16 %v1897
    %v1962 = vunpack.c.l.b16 %v1898
    %v1963 = vunpack.c.h.b16 %v1898
    %v1964 = vunpack.c.l.b16 %v1899
    %v1965 = vunpack.c.h.b16 %v1899
    %v1966 = vunpack.c.l.b16 %v1900
    %v1967 = vunpack.c.h.b16 %v1900
    %v1968 = vunpack.c.l.b16 %v1901
    %v1969 = vunpack.c.h.b16 %v1901
    %v1970 = vunpack.c.l.b16 %v1902
    %v1971 = vunpack.c.h.b16 %v1902
    %v1972 = vunpack.c.l.b16 %v1903
    %v1973 = vunpack.c.h.b16 %v1903
    %v1974 = vunpack.c.l.b16 %v1904
    %v1975 = vunpack.c.h.b16 %v1904
    %v1976 = vunpack.c.l.b16 %v1905
    %v1977 = vunpack.c.h.b16 %v1905
    %v1978 = vunpack.c.l.b16 %v1906
    %v1979 = vunpack.c.h.b16 %v1906
    %v1980 = vunpack.c.l.b16 %v1907
    %v1981 = vunpack.c.h.b16 %v1907
    %v1982 = vunpack.c.l.b16 %v1908
    %v1983 = vunpack.c.h.b16 %v1908
    %v1984 = vpack.c.b16 %v1936, %v1934
    %v1985 = vpack.c.b16 %v1937, %v1935
    %v1986 = vpack.c.b16 %v1940, %v1938
    %v1987 = vpack.c.b16 %v1941, %v1939
    %v1988 = vpack.c.b16 %v1944, %v1942
    %v1989 = vpack.c.b16 %v1945, %v1943
    %v1990 = vpack.c.b16 %v1948, %v1946
    %v1991 = vpack.c.b16 %v1949, %v1947
    %v1992 = vpack.c.b16 %v1952, %v1950
    %v1993 = vpack.c.b16 %v1953, %v1951
    %v1994 = vpack.c.b16 %v1956, %v1954
    %v1995 = vpack.c.b16 %v1957, %v1955
    %v1996 = vpack.c.b16 %v1960, %v1958
    %v1997 = vpack.c.b16 %v1961, %v1959
    %v1998 = vpack.c.b16 %v1964, %v1962
    %v1999 = vpack.c.b16 %v1965, %v1963
    %v2000 = vpack.c.b16 %v1968, %v1966
    %v2001 = vpack.c.b16 %v1969, %v1967
    %v2002 = vpack.c.b16 %v1972, %v1970
    %v2003 = vpack.c.b16 %v1973, %v1971
    %v2004 = vpack.c.b16 %v1976, %v1974
    %v2005 = vpack.c.b16 %v1977, %v1975
    %v2006 = vpack.c.b16 %v1980, %v1978
    %v2007 = vpack.c.b16 %v1981, %v1979
    %v2008 = vpack.c.b16 %v1982, %v1982
    %v2009 = vpack.c.b16 %v1983, %v1983
    %v2035 = vsel %vm604, %v1882, 0
    %v2038 = vsel %vm608, %v2008, 0
    %v2041 = vsel %vm608, %v2009, 0
    %2043 = vmatprep.subr.bf16.mxu0 %v1985
    %2044 = vmatpush1.bf16.msra.mxu0 %v1984
    %2045 = vmatprep.subr.bf16.mxu0 %v1987
    %2046 = vmatpush1.bf16.msra.mxu0 %v1986
    %2047 = vmatprep.subr.bf16.mxu0 %v1989
    %2048 = vmatpush1.bf16.msra.mxu0 %v1988
    %2049 = vmatprep.subr.bf16.mxu0 %v1991
    %2050 = vmatpush1.bf16.msra.mxu0 %v1990
    %2051 = vmatprep.subr.bf16.mxu0 %v1993
    %2052 = vmatpush1.bf16.msra.mxu0 %v1992
    %2053 = vmatprep.subr.bf16.mxu0 %v1995
    %2054 = vmatpush1.bf16.msra.mxu0 %v1994
    %2055 = vmatprep.subr.bf16.mxu0 %v1997
    %2056 = vmatpush1.bf16.msra.mxu0 %v1996
    %2057 = vmatprep.subr.bf16.mxu0 %v1999
    %2058 = vmatpush1.bf16.msra.mxu0 %v1998
    %2059 = vmatprep.subr.bf16.mxu0 %v2001
    %2060 = vmatpush1.bf16.msra.mxu0 %v2000
    %2061 = vmatprep.subr.bf16.mxu0 %v2003
    %2062 = vmatpush1.bf16.msra.mxu0 %v2002
    %2063 = vmatprep.subr.bf16.mxu0 %v2005
    %2064 = vmatpush1.bf16.msra.mxu0 %v2004
    %2065 = vmatprep.subr.bf16.mxu0 %v2007
    %2066 = vmatpush1.bf16.msra.mxu0 %v2006
    %2067 = vmatprep.subr.bf16.mxu0 %v2041
    %2068 = vmatpush1.bf16.msra.mxu0 %v2038
    %2069 = vmatprep.subr.bf16.mxu0 0
    %2070 = vmatpush1.bf16.msra.mxu0 0
    %2071 = vmatprep.subr.bf16.mxu0 0
    %2072 = vmatpush1.bf16.msra.mxu0 0
    %2073 = vmatprep.subr.bf16.mxu0 0
    %2074 = vmatpush1.bf16.msra.mxu0 0
    %2075 = vmatprep.mubr.bf16.mxu0 %v2035
    %2076 = vmatmul.mubr.bf16.gmra.mrb[0].mxu0 %v1881
    %v2077 = vpop.f32.mrb[0].mxu0
    %v2078 = vadd.f32 0.0, %v2077
    %v2079 = vpop.f32.mrb[0].mxu0
    %v2080 = vadd.f32 0.0, %v2079
    %v2081 = vpop.f32.mrb[0].mxu0
    %v2082 = vpop.f32.mrb[0].mxu0
    %2083 = vdwg.mxu0
    %v2084 = vadd.f32 %v1833, %v2078
    %v2085 = vadd.f32 %v1834, %v2080
    %s2086 = scalar_lea.vmem %s4, 28
    %v2087 = vld [vmem:[%s2086] sm:$0xf]
    %v2089 = vsel %vm333, %v2087, 0
    %2091 = vmatprep.subr.bf16.mxu0 %v331
    %2092 = vmatpush1.bf16.msra.mxu0 %v330
    %2093 = vmatprep.subr.bf16.mxu0 0
    %2094 = vmatpush1.bf16.msra.mxu0 0
    %2095 = vmatprep.subr.bf16.mxu0 0
    %2096 = vmatpush1.bf16.msra.mxu0 0
    %2097 = vmatprep.subr.bf16.mxu0 0
    %2098 = vmatpush1.bf16.msra.mxu0 0
    %2099 = vmatprep.subr.bf16.mxu0 0
    %2100 = vmatpush1.bf16.msra.mxu0 0
    %2101 = vmatprep.subr.bf16.mxu0 0
    %2102 = vmatpush1.bf16.msra.mxu0 0
    %2103 = vmatprep.subr.bf16.mxu0 0
    %2104 = vmatpush1.bf16.msra.mxu0 0
    %2105 = vmatprep.subr.bf16.mxu0 0
    %2106 = vmatpush1.bf16.msra.mxu0 0
    %2107 = vmatprep.subr.bf16.mxu0 0
    %2108 = vmatpush1.bf16.msra.mxu0 0
    %2109 = vmatprep.subr.bf16.mxu0 0
    %2110 = vmatpush1.bf16.msra.mxu0 0
    %2111 = vmatprep.subr.bf16.mxu0 0
    %2112 = vmatpush1.bf16.msra.mxu0 0
    %2113 = vmatprep.subr.bf16.mxu0 0
    %2114 = vmatpush1.bf16.msra.mxu0 0
    %2115 = vmatprep.subr.bf16.mxu0 0
    %2116 = vmatpush1.bf16.msra.mxu0 0
    %2117 = vmatprep.subr.bf16.mxu0 0
    %2118 = vmatpush1.bf16.msra.mxu0 0
    %2119 = vmatprep.subr.bf16.mxu0 0
    %2120 = vmatpush1.bf16.msra.mxu0 0
    %2121 = vmatprep.subr.bf16.mxu0 0
    %2122 = vmatpush1.bf16.msra.mxu0 0
    %2123 = vmatprep.mubr.bf16.mxu0 0
    %2124 = vmatmul.mubr.bf16.gmra.mrb[0].mxu0 %v2089
    %v2125 = vpop.f32.mrb[0].mxu0
    %v2126 = vadd.f32 0.0, %v2125
    %v2127 = vpop.f32.mrb[0].mxu0
    %v2128 = vadd.f32 0.0, %v2127
    %v2129 = vpop.f32.mrb[0].mxu0
    %v2130 = vpop.f32.mrb[0].mxu0
    %2131 = vdwg.mxu0
    %v2132 = vpack.c.bf16 %v2126, %v2126
    %v2133 = vpack.c.bf16 %v2128, %v2128
    %s2134 = scalar_lea.vmem %s3, 1400
    %v2135 = vld [vmem:[%s2134] sm:$0xff]
    %v2136 = vld [vmem:[%s2134 + $0x8] sm:$0xff]
    %v2137 = vld [vmem:[%s2134 + $0x10] sm:$0xff]
    %v2138 = vld [vmem:[%s2134 + $0x18] sm:$0xff]
    %v2139 = vld [vmem:[%s2134 + $0x20] sm:$0xff]
    %v2140 = vld [vmem:[%s2134 + $0x28] sm:$0xff]
    %v2141 = vld [vmem:[%s2134 + $0x30] sm:$0xff]
    %v2142 = vld [vmem:[%s2134 + $0x38] sm:$0xff]
    %v2143 = vld [vmem:[%s2134 + $0x40] sm:$0xff]
    %v2144 = vld [vmem:[%s2134 + $0x48] sm:$0xff]
    %v2145 = vld [vmem:[%s2134 + $0x50] sm:$0xff]
    %v2146 = vld [vmem:[%s2134 + $0x58] sm:$0xff]
    %v2147 = vld [vmem:[%s2134 + $0x60] sm:$0xff]
    %v2148 = vld [vmem:[%s2134 + $0x68] sm:$0xff]
    %v2149 = vld [vmem:[%s2134 + $0x70] sm:$0xff]
    %v2150 = vld [vmem:[%s2134 + $0x78] sm:$0xff]
    %v2151 = vld [vmem:[%s2134 + $0x80] sm:$0xff]
    %v2152 = vld [vmem:[%s2134 + $0x88] sm:$0xff]
    %v2153 = vld [vmem:[%s2134 + $0x90] sm:$0xff]
    %v2154 = vld [vmem:[%s2134 + $0x98] sm:$0xff]
    %v2155 = vld [vmem:[%s2134 + $0xa0] sm:$0xff]
    %v2156 = vld [vmem:[%s2134 + $0xa8] sm:$0xff]
    %v2157 = vld [vmem:[%s2134 + $0xb0] sm:$0xff]
    %v2158 = vld [vmem:[%s2134 + $0xb8] sm:$0xff]
    %v2159 = vld [vmem:[%s2134 + $0xc0] sm:$0x33]
    %v2185 = vunpack.c.l.b16 %v2135
    %v2186 = vunpack.c.h.b16 %v2135
    %v2187 = vunpack.c.l.b16 %v2136
    %v2188 = vunpack.c.h.b16 %v2136
    %v2189 = vunpack.c.l.b16 %v2137
    %v2190 = vunpack.c.h.b16 %v2137
    %v2191 = vunpack.c.l.b16 %v2138
    %v2192 = vunpack.c.h.b16 %v2138
    %v2193 = vunpack.c.l.b16 %v2139
    %v2194 = vunpack.c.h.b16 %v2139
    %v2195 = vunpack.c.l.b16 %v2140
    %v2196 = vunpack.c.h.b16 %v2140
    %v2197 = vunpack.c.l.b16 %v2141
    %v2198 = vunpack.c.h.b16 %v2141
    %v2199 = vunpack.c.l.b16 %v2142
    %v2200 = vunpack.c.h.b16 %v2142
    %v2201 = vunpack.c.l.b16 %v2143
    %v2202 = vunpack.c.h.b16 %v2143
    %v2203 = vunpack.c.l.b16 %v2144
    %v2204 = vunpack.c.h.b16 %v2144
    %v2205 = vunpack.c.l.b16 %v2145
    %v2206 = vunpack.c.h.b16 %v2145
    %v2207 = vunpack.c.l.b16 %v2146
    %v2208 = vunpack.c.h.b16 %v2146
    %v2209 = vunpack.c.l.b16 %v2147
    %v2210 = vunpack.c.h.b16 %v2147
    %v2211 = vunpack.c.l.b16 %v2148
    %v2212 = vunpack.c.h.b16 %v2148
    %v2213 = vunpack.c.l.b16 %v2149
    %v2214 = vunpack.c.h.b16 %v2149
    %v2215 = vunpack.c.l.b16 %v2150
    %v2216 = vunpack.c.h.b16 %v2150
    %v2217 = vunpack.c.l.b16 %v2151
    %v2218 = vunpack.c.h.b16 %v2151
    %v2219 = vunpack.c.l.b16 %v2152
    %v2220 = vunpack.c.h.b16 %v2152
    %v2221 = vunpack.c.l.b16 %v2153
    %v2222 = vunpack.c.h.b16 %v2153
    %v2223 = vunpack.c.l.b16 %v2154
    %v2224 = vunpack.c.h.b16 %v2154
    %v2225 = vunpack.c.l.b16 %v2155
    %v2226 = vunpack.c.h.b16 %v2155
    %v2227 = vunpack.c.l.b16 %v2156
    %v2228 = vunpack.c.h.b16 %v2156
    %v2229 = vunpack.c.l.b16 %v2157
    %v2230 = vunpack.c.h.b16 %v2157
    %v2231 = vunpack.c.l.b16 %v2158
    %v2232 = vunpack.c.h.b16 %v2158
    %v2233 = vunpack.c.l.b16 %v2159
    %v2234 = vunpack.c.h.b16 %v2159
    %v2235 = vpack.c.b16 %v2187, %v2185
    %v2236 = vpack.c.b16 %v2188, %v2186
    %v2237 = vpack.c.b16 %v2191, %v2189
    %v2238 = vpack.c.b16 %v2192, %v2190
    %v2239 = vpack.c.b16 %v2195, %v2193
    %v2240 = vpack.c.b16 %v2196, %v2194
    %v2241 = vpack.c.b16 %v2199, %v2197
    %v2242 = vpack.c.b16 %v2200, %v2198
    %v2243 = vpack.c.b16 %v2203, %v2201
    %v2244 = vpack.c.b16 %v2204, %v2202
    %v2245 = vpack.c.b16 %v2207, %v2205
    %v2246 = vpack.c.b16 %v2208, %v2206
    %v2247 = vpack.c.b16 %v2211, %v2209
    %v2248 = vpack.c.b16 %v2212, %v2210
    %v2249 = vpack.c.b16 %v2215, %v2213
    %v2250 = vpack.c.b16 %v2216, %v2214
    %v2251 = vpack.c.b16 %v2219, %v2217
    %v2252 = vpack.c.b16 %v2220, %v2218
    %v2253 = vpack.c.b16 %v2223, %v2221
    %v2254 = vpack.c.b16 %v2224, %v2222
    %v2255 = vpack.c.b16 %v2227, %v2225
    %v2256 = vpack.c.b16 %v2228, %v2226
    %v2257 = vpack.c.b16 %v2231, %v2229
    %v2258 = vpack.c.b16 %v2232, %v2230
    %v2259 = vpack.c.b16 %v2233, %v2233
    %v2260 = vpack.c.b16 %v2234, %v2234
    %v2286 = vsel %vm604, %v2133, 0
    %v2289 = vsel %vm608, %v2259, 0
    %v2292 = vsel %vm608, %v2260, 0
    %2294 = vmatprep.subr.bf16.mxu0 %v2236
    %2295 = vmatpush1.bf16.msra.mxu0 %v2235
    %2296 = vmatprep.subr.bf16.mxu0 %v2238
    %2297 = vmatpush1.bf16.msra.mxu0 %v2237
    %2298 = vmatprep.subr.bf16.mxu0 %v2240
    %2299 = vmatpush1.bf16.msra.mxu0 %v2239
    %2300 = vmatprep.subr.bf16.mxu0 %v2242
    %2301 = vmatpush1.bf16.msra.mxu0 %v2241
    %2302 = vmatprep.subr.bf16.mxu0 %v2244
    %2303 = vmatpush1.bf16.msra.mxu0 %v2243
    %2304 = vmatprep.subr.bf16.mxu0 %v2246
    %2305 = vmatpush1.bf16.msra.mxu0 %v2245
    %2306 = vmatprep.subr.bf16.mxu0 %v2248
    %2307 = vmatpush1.bf16.msra.mxu0 %v2247
    %2308 = vmatprep.subr.bf16.mxu0 %v2250
    %2309 = vmatpush1.bf16.msra.mxu0 %v2249
    %2310 = vmatprep.subr.bf16.mxu0 %v2252
    %2311 = vmatpush1.bf16.msra.mxu0 %v2251
    %2312 = vmatprep.subr.bf16.mxu0 %v2254
    %2313 = vmatpush1.bf16.msra.mxu0 %v2253
    %2314 = vmatprep.subr.bf16.mxu0 %v2256
    %2315 = vmatpush1.bf16.msra.mxu0 %v2255
    %2316 = vmatprep.subr.bf16.mxu0 %v2258
    %2317 = vmatpush1.bf16.msra.mxu0 %v2257
    %2318 = vmatprep.subr.bf16.mxu0 %v2292
    %2319 = vmatpush1.bf16.msra.mxu0 %v2289
    %2320 = vmatprep.subr.bf16.mxu0 0
    %2321 = vmatpush1.bf16.msra.mxu0 0
    %2322 = vmatprep.subr.bf16.mxu0 0
    %2323 = vmatpush1.bf16.msra.mxu0 0
    %2324 = vmatprep.subr.bf16.mxu0 0
    %2325 = vmatpush1.bf16.msra.mxu0 0
    %2326 = vmatprep.mubr.bf16.mxu0 %v2286
    %2327 = vmatmul.mubr.bf16.gmra.mrb[0].mxu0 %v2132
    %v2328 = vpop.f32.mrb[0].mxu0
    %v2329 = vadd.f32 0.0, %v2328
    %v2330 = vpop.f32.mrb[0].mxu0
    %v2331 = vadd.f32 0.0, %v2330
    %v2332 = vpop.f32.mrb[0].mxu0
    %v2333 = vpop.f32.mrb[0].mxu0
    %2334 = vdwg.mxu0
    %v2335 = vadd.f32 %v2084, %v2329
    %v2336 = vadd.f32 %v2085, %v2331
    %s2337 = scalar_lea.vmem %s4, 32
    %v2338 = vld [vmem:[%s2337] sm:$0xf]
    %v2340 = vsel %vm333, %v2338, 0
    %2342 = vmatprep.subr.bf16.mxu0 %v331
    %2343 = vmatpush1.bf16.msra.mxu0 %v330
    %2344 = vmatprep.subr.bf16.mxu0 0
    %2345 = vmatpush1.bf16.msra.mxu0 0
    %2346 = vmatprep.subr.bf16.mxu0 0
    %2347 = vmatpush1.bf16.msra.mxu0 0
    %2348 = vmatprep.subr.bf16.mxu0 0
    %2349 = vmatpush1.bf16.msra.mxu0 0
    %2350 = vmatprep.subr.bf16.mxu0 0
    %2351 = vmatpush1.bf16.msra.mxu0 0
    %2352 = vmatprep.subr.bf16.mxu0 0
    %2353 = vmatpush1.bf16.msra.mxu0 0
    %2354 = vmatprep.subr.bf16.mxu0 0
    %2355 = vmatpush1.bf16.msra.mxu0 0
    %2356 = vmatprep.subr.bf16.mxu0 0
    %2357 = vmatpush1.bf16.msra.mxu0 0
    %2358 = vmatprep.subr.bf16.mxu0 0
    %2359 = vmatpush1.bf16.msra.mxu0 0
    %2360 = vmatprep.subr.bf16.mxu0 0
    %2361 = vmatpush1.bf16.msra.mxu0 0
    %2362 = vmatprep.subr.bf16.mxu0 0
    %2363 = vmatpush1.bf16.msra.mxu0 0
    %2364 = vmatprep.subr.bf16.mxu0 0
    %2365 = vmatpush1.bf16.msra.mxu0 0
    %2366 = vmatprep.subr.bf16.mxu0 0
    %2367 = vmatpush1.bf16.msra.mxu0 0
    %2368 = vmatprep.subr.bf16.mxu0 0
    %2369 = vmatpush1.bf16.msra.mxu0 0
    %2370 = vmatprep.subr.bf16.mxu0 0
    %2371 = vmatpush1.bf16.msra.mxu0 0
    %2372 = vmatprep.subr.bf16.mxu0 0
    %2373 = vmatpush1.bf16.msra.mxu0 0
    %2374 = vmatprep.mubr.bf16.mxu0 0
    %2375 = vmatmul.mubr.bf16.gmra.mrb[0].mxu0 %v2340
    %v2376 = vpop.f32.mrb[0].mxu0
    %v2377 = vadd.f32 0.0, %v2376
    %v2378 = vpop.f32.mrb[0].mxu0
    %v2379 = vadd.f32 0.0, %v2378
    %v2380 = vpop.f32.mrb[0].mxu0
    %v2381 = vpop.f32.mrb[0].mxu0
    %2382 = vdwg.mxu0
    %v2383 = vpack.c.bf16 %v2377, %v2377
    %v2384 = vpack.c.bf16 %v2379, %v2379
    %s2385 = scalar_lea.vmem %s3, 1600
    %v2386 = vld [vmem:[%s2385] sm:$0xff]
    %v2387 = vld [vmem:[%s2385 + $0x8] sm:$0xff]
    %v2388 = vld [vmem:[%s2385 + $0x10] sm:$0xff]
    %v2389 = vld [vmem:[%s2385 + $0x18] sm:$0xff]
    %v2390 = vld [vmem:[%s2385 + $0x20] sm:$0xff]
    %v2391 = vld [vmem:[%s2385 + $0x28] sm:$0xff]
    %v2392 = vld [vmem:[%s2385 + $0x30] sm:$0xff]
    %v2393 = vld [vmem:[%s2385 + $0x38] sm:$0xff]
    %v2394 = vld [vmem:[%s2385 + $0x40] sm:$0xff]
    %v2395 = vld [vmem:[%s2385 + $0x48] sm:$0xff]
    %v2396 = vld [vmem:[%s2385 + $0x50] sm:$0xff]
    %v2397 = vld [vmem:[%s2385 + $0x58] sm:$0xff]
    %v2398 = vld [vmem:[%s2385 + $0x60] sm:$0xff]
    %v2399 = vld [vmem:[%s2385 + $0x68] sm:$0xff]
    %v2400 = vld [vmem:[%s2385 + $0x70] sm:$0xff]
    %v2401 = vld [vmem:[%s2385 + $0x78] sm:$0xff]
    %v2402 = vld [vmem:[%s2385 + $0x80] sm:$0xff]
    %v2403 = vld [vmem:[%s2385 + $0x88] sm:$0xff]
    %v2404 = vld [vmem:[%s2385 + $0x90] sm:$0xff]
    %v2405 = vld [vmem:[%s2385 + $0x98] sm:$0xff]
    %v2406 = vld [vmem:[%s2385 + $0xa0] sm:$0xff]
    %v2407 = vld [vmem:[%s2385 + $0xa8] sm:$0xff]
    %v2408 = vld [vmem:[%s2385 + $0xb0] sm:$0xff]
    %v2409 = vld [vmem:[%s2385 + $0xb8] sm:$0xff]
    %v2410 = vld [vmem:[%s2385 + $0xc0] sm:$0x33]
    %v2436 = vunpack.c.l.b16 %v2386
    %v2437 = vunpack.c.h.b16 %v2386
    %v2438 = vunpack.c.l.b16 %v2387
    %v2439 = vunpack.c.h.b16 %v2387
    %v2440 = vunpack.c.l.b16 %v2388
    %v2441 = vunpack.c.h.b16 %v2388
    %v2442 = vunpack.c.l.b16 %v2389
    %v2443 = vunpack.c.h.b16 %v2389
    %v2444 = vunpack.c.l.b16 %v2390
    %v2445 = vunpack.c.h.b16 %v2390
    %v2446 = vunpack.c.l.b16 %v2391
    %v2447 = vunpack.c.h.b16 %v2391
    %v2448 = vunpack.c.l.b16 %v2392
    %v2449 = vunpack.c.h.b16 %v2392
    %v2450 = vunpack.c.l.b16 %v2393
    %v2451 = vunpack.c.h.b16 %v2393
    %v2452 = vunpack.c.l.b16 %v2394
    %v2453 = vunpack.c.h.b16 %v2394
    %v2454 = vunpack.c.l.b16 %v2395
    %v2455 = vunpack.c.h.b16 %v2395
    %v2456 = vunpack.c.l.b16 %v2396
    %v2457 = vunpack.c.h.b16 %v2396
    %v2458 = vunpack.c.l.b16 %v2397
    %v2459 = vunpack.c.h.b16 %v2397
    %v2460 = vunpack.c.l.b16 %v2398
    %v2461 = vunpack.c.h.b16 %v2398
    %v2462 = vunpack.c.l.b16 %v2399
    %v2463 = vunpack.c.h.b16 %v2399
    %v2464 = vunpack.c.l.b16 %v2400
    %v2465 = vunpack.c.h.b16 %v2400
    %v2466 = vunpack.c.l.b16 %v2401
    %v2467 = vunpack.c.h.b16 %v2401
    %v2468 = vunpack.c.l.b16 %v2402
    %v2469 = vunpack.c.h.b16 %v2402
    %v2470 = vunpack.c.l.b16 %v2403
    %v2471 = vunpack.c.h.b16 %v2403
    %v2472 = vunpack.c.l.b16 %v2404
    %v2473 = vunpack.c.h.b16 %v2404
    %v2474 = vunpack.c.l.b16 %v2405
    %v2475 = vunpack.c.h.b16 %v2405
    %v2476 = vunpack.c.l.b16 %v2406
    %v2477 = vunpack.c.h.b16 %v2406
    %v2478 = vunpack.c.l.b16 %v2407
    %v2479 = vunpack.c.h.b16 %v2407
    %v2480 = vunpack.c.l.b16 %v2408
    %v2481 = vunpack.c.h.b16 %v2408
    %v2482 = vunpack.c.l.b16 %v2409
    %v2483 = vunpack.c.h.b16 %v2409
    %v2484 = vunpack.c.l.b16 %v2410
    %v2485 = vunpack.c.h.b16 %v2410
    %v2486 = vpack.c.b16 %v2438, %v2436
    %v2487 = vpack.c.b16 %v2439, %v2437
    %v2488 = vpack.c.b16 %v2442, %v2440
    %v2489 = vpack.c.b16 %v2443, %v2441
    %v2490 = vpack.c.b16 %v2446, %v2444
    %v2491 = vpack.c.b16 %v2447, %v2445
    %v2492 = vpack.c.b16 %v2450, %v2448
    %v2493 = vpack.c.b16 %v2451, %v2449
    %v2494 = vpack.c.b16 %v2454, %v2452
    %v2495 = vpack.c.b16 %v2455, %v2453
    %v2496 = vpack.c.b16 %v2458, %v2456
    %v2497 = vpack.c.b16 %v2459, %v2457
    %v2498 = vpack.c.b16 %v2462, %v2460
    %v2499 = vpack.c.b16 %v2463, %v2461
    %v2500 = vpack.c.b16 %v2466, %v2464
    %v2501 = vpack.c.b16 %v2467, %v2465
    %v2502 = vpack.c.b16 %v2470, %v2468
    %v2503 = vpack.c.b16 %v2471, %v2469
    %v2504 = vpack.c.b16 %v2474, %v2472
    %v2505 = vpack.c.b16 %v2475, %v2473
    %v2506 = vpack.c.b16 %v2478, %v2476
    %v2507 = vpack.c.b16 %v2479, %v2477
    %v2508 = vpack.c.b16 %v2482, %v2480
    %v2509 = vpack.c.b16 %v2483, %v2481
    %v2510 = vpack.c.b16 %v2484, %v2484
    %v2511 = vpack.c.b16 %v2485, %v2485
    %v2537 = vsel %vm604, %v2384, 0
    %v2540 = vsel %vm608, %v2510, 0
    %v2543 = vsel %vm608, %v2511, 0
    %2545 = vmatprep.subr.bf16.mxu0 %v2487
    %2546 = vmatpush1.bf16.msra.mxu0 %v2486
    %2547 = vmatprep.subr.bf16.mxu0 %v2489
    %2548 = vmatpush1.bf16.msra.mxu0 %v2488
    %2549 = vmatprep.subr.bf16.mxu0 %v2491
    %2550 = vmatpush1.bf16.msra.mxu0 %v2490
    %2551 = vmatprep.subr.bf16.mxu0 %v2493
    %2552 = vmatpush1.bf16.msra.mxu0 %v2492
    %2553 = vmatprep.subr.bf16.mxu0 %v2495
    %2554 = vmatpush1.bf16.msra.mxu0 %v2494
    %2555 = vmatprep.subr.bf16.mxu0 %v2497
    %2556 = vmatpush1.bf16.msra.mxu0 %v2496
    %2557 = vmatprep.subr.bf16.mxu0 %v2499
    %2558 = vmatpush1.bf16.msra.mxu0 %v2498
    %2559 = vmatprep.subr.bf16.mxu0 %v2501
    %2560 = vmatpush1.bf16.msra.mxu0 %v2500
    %2561 = vmatprep.subr.bf16.mxu0 %v2503
    %2562 = vmatpush1.bf16.msra.mxu0 %v2502
    %2563 = vmatprep.subr.bf16.mxu0 %v2505
    %2564 = vmatpush1.bf16.msra.mxu0 %v2504
    %2565 = vmatprep.subr.bf16.mxu0 %v2507
    %2566 = vmatpush1.bf16.msra.mxu0 %v2506
    %2567 = vmatprep.subr.bf16.mxu0 %v2509
    %2568 = vmatpush1.bf16.msra.mxu0 %v2508
    %2569 = vmatprep.subr.bf16.mxu0 %v2543
    %2570 = vmatpush1.bf16.msra.mxu0 %v2540
    %2571 = vmatprep.subr.bf16.mxu0 0
    %2572 = vmatpush1.bf16.msra.mxu0 0
    %2573 = vmatprep.subr.bf16.mxu0 0
    %2574 = vmatpush1.bf16.msra.mxu0 0
    %2575 = vmatprep.subr.bf16.mxu0 0
    %2576 = vmatpush1.bf16.msra.mxu0 0
    %2577 = vmatprep.mubr.bf16.mxu0 %v2537
    %2578 = vmatmul.mubr.bf16.gmra.mrb[0].mxu0 %v2383
    %v2579 = vpop.f32.mrb[0].mxu0
    %v2580 = vadd.f32 0.0, %v2579
    %v2581 = vpop.f32.mrb[0].mxu0
    %v2582 = vadd.f32 0.0, %v2581
    %v2583 = vpop.f32.mrb[0].mxu0
    %v2584 = vpop.f32.mrb[0].mxu0
    %2585 = vdwg.mxu0
    %v2586 = vadd.f32 %v2335, %v2580
    %v2587 = vadd.f32 %v2336, %v2582
    %2589 = vset.pattern.permute.xlu0 0
    %2590 = vperm.xlu0 %2589, %v45
    %v2591 = vpop.permute.xlu0 %2590
    %v2593 = vadd.f32 %v2586, %v2591
    %v2594 = vadd.f32 %v2587, %v2591
    %v2595 = vmax.f32 %v2593, 0.0
    %v2596 = vmax.f32 %v2594, 0.0
    %v2597 = vpack.c.bf16 %v2595, %v2595
    %v2598 = vpack.c.bf16 %v2596, %v2596
    %v2599 = vld [vmem:[%s6] sm:$0xff]
    %v2600 = vld [vmem:[%s6 + $0x8] sm:$0xff]
    %v2601 = vld [vmem:[%s6 + $0x10] sm:$0xff]
    %v2602 = vld [vmem:[%s6 + $0x18] sm:$0xff]
    %v2603 = vld [vmem:[%s6 + $0x20] sm:$0xff]
    %v2604 = vld [vmem:[%s6 + $0x28] sm:$0xff]
    %v2605 = vld [vmem:[%s6 + $0x30] sm:$0xff]
    %v2606 = vld [vmem:[%s6 + $0x38] sm:$0xff]
    %v2607 = vld [vmem:[%s6 + $0x40] sm:$0xff]
    %v2608 = vld [vmem:[%s6 + $0x48] sm:$0xff]
    %v2609 = vld [vmem:[%s6 + $0x50] sm:$0xff]
    %v2610 = vld [vmem:[%s6 + $0x58] sm:$0xff]
    %v2611 = vld [vmem:[%s6 + $0x60] sm:$0xff]
    %v2612 = vld [vmem:[%s6 + $0x68] sm:$0xff]
    %v2613 = vld [vmem:[%s6 + $0x70] sm:$0xff]
    %v2614 = vld [vmem:[%s6 + $0x78] sm:$0xff]
    %v2615 = vld [vmem:[%s6 + $0x80] sm:$0xff]
    %v2616 = vld [vmem:[%s6 + $0x88] sm:$0xff]
    %v2617 = vld [vmem:[%s6 + $0x90] sm:$0xff]
    %v2618 = vld [vmem:[%s6 + $0x98] sm:$0xff]
    %v2619 = vld [vmem:[%s6 + $0xa0] sm:$0xff]
    %v2620 = vld [vmem:[%s6 + $0xa8] sm:$0xff]
    %v2621 = vld [vmem:[%s6 + $0xb0] sm:$0xff]
    %v2622 = vld [vmem:[%s6 + $0xb8] sm:$0xff]
    %v2623 = vld [vmem:[%s6 + $0xc0] sm:$0x33]
    %v2649 = vunpack.c.l.b16 %v2599
    %v2650 = vunpack.c.h.b16 %v2599
    %v2651 = vunpack.c.l.b16 %v2600
    %v2652 = vunpack.c.h.b16 %v2600
    %v2653 = vunpack.c.l.b16 %v2601
    %v2654 = vunpack.c.h.b16 %v2601
    %v2655 = vunpack.c.l.b16 %v2602
    %v2656 = vunpack.c.h.b16 %v2602
    %v2657 = vunpack.c.l.b16 %v2603
    %v2658 = vunpack.c.h.b16 %v2603
    %v2659 = vunpack.c.l.b16 %v2604
    %v2660 = vunpack.c.h.b16 %v2604
    %v2661 = vunpack.c.l.b16 %v2605
    %v2662 = vunpack.c.h.b16 %v2605
    %v2663 = vunpack.c.l.b16 %v2606
    %v2664 = vunpack.c.h.b16 %v2606
    %v2665 = vunpack.c.l.b16 %v2607
    %v2666 = vunpack.c.h.b16 %v2607
    %v2667 = vunpack.c.l.b16 %v2608
    %v2668 = vunpack.c.h.b16 %v2608
    %v2669 = vunpack.c.l.b16 %v2609
    %v2670 = vunpack.c.h.b16 %v2609
    %v2671 = vunpack.c.l.b16 %v2610
    %v2672 = vunpack.c.h.b16 %v2610
    %v2673 = vunpack.c.l.b16 %v2611
    %v2674 = vunpack.c.h.b16 %v2611
    %v2675 = vunpack.c.l.b16 %v2612
    %v2676 = vunpack.c.h.b16 %v2612
    %v2677 = vunpack.c.l.b16 %v2613
    %v2678 = vunpack.c.h.b16 %v2613
    %v2679 = vunpack.c.l.b16 %v2614
    %v2680 = vunpack.c.h.b16 %v2614
    %v2681 = vunpack.c.l.b16 %v2615
    %v2682 = vunpack.c.h.b16 %v2615
    %v2683 = vunpack.c.l.b16 %v2616
    %v2684 = vunpack.c.h.b16 %v2616
    %v2685 = vunpack.c.l.b16 %v2617
    %v2686 = vunpack.c.h.b16 %v2617
    %v2687 = vunpack.c.l.b16 %v2618
    %v2688 = vunpack.c.h.b16 %v2618
    %v2689 = vunpack.c.l.b16 %v2619
    %v2690 = vunpack.c.h.b16 %v2619
    %v2691 = vunpack.c.l.b16 %v2620
    %v2692 = vunpack.c.h.b16 %v2620
    %v2693 = vunpack.c.l.b16 %v2621
    %v2694 = vunpack.c.h.b16 %v2621
    %v2695 = vunpack.c.l.b16 %v2622
    %v2696 = vunpack.c.h.b16 %v2622
    %v2697 = vunpack.c.l.b16 %v2623
    %v2698 = vunpack.c.h.b16 %v2623
    %v2699 = vpack.c.b16 %v2651, %v2649
    %v2700 = vpack.c.b16 %v2652, %v2650
    %v2701 = vpack.c.b16 %v2655, %v2653
    %v2702 = vpack.c.b16 %v2656, %v2654
    %v2703 = vpack.c.b16 %v2659, %v2657
    %v2704 = vpack.c.b16 %v2660, %v2658
    %v2705 = vpack.c.b16 %v2663, %v2661
    %v2706 = vpack.c.b16 %v2664, %v2662
    %v2707 = vpack.c.b16 %v2667, %v2665
    %v2708 = vpack.c.b16 %v2668, %v2666
    %v2709 = vpack.c.b16 %v2671, %v2669
    %v2710 = vpack.c.b16 %v2672, %v2670
    %v2711 = vpack.c.b16 %v2675, %v2673
    %v2712 = vpack.c.b16 %v2676, %v2674
    %v2713 = vpack.c.b16 %v2679, %v2677
    %v2714 = vpack.c.b16 %v2680, %v2678
    %v2715 = vpack.c.b16 %v2683, %v2681
    %v2716 = vpack.c.b16 %v2684, %v2682
    %v2717 = vpack.c.b16 %v2687, %v2685
    %v2718 = vpack.c.b16 %v2688, %v2686
    %v2719 = vpack.c.b16 %v2691, %v2689
    %v2720 = vpack.c.b16 %v2692, %v2690
    %v2721 = vpack.c.b16 %v2695, %v2693
    %v2722 = vpack.c.b16 %v2696, %v2694
    %v2723 = vpack.c.b16 %v2697, %v2697
    %v2724 = vpack.c.b16 %v2698, %v2698
    %v2750 = vsel %vm604, %v2598, 0
    %v2753 = vsel %vm608, %v2723, 0
    %v2756 = vsel %vm608, %v2724, 0
    %2758 = vmatprep.subr.bf16.mxu0 %v2700
    %2759 = vmatpush1.bf16.msra.mxu0 %v2699
    %2760 = vmatprep.subr.bf16.mxu0 %v2702
    %2761 = vmatpush1.bf16.msra.mxu0 %v2701
    %2762 = vmatprep.subr.bf16.mxu0 %v2704
    %2763 = vmatpush1.bf16.msra.mxu0 %v2703
    %2764 = vmatprep.subr.bf16.mxu0 %v2706
    %2765 = vmatpush1.bf16.msra.mxu0 %v2705
    %2766 = vmatprep.subr.bf16.mxu0 %v2708
    %2767 = vmatpush1.bf16.msra.mxu0 %v2707
    %2768 = vmatprep.subr.bf16.mxu0 %v2710
    %2769 = vmatpush1.bf16.msra.mxu0 %v2709
    %2770 = vmatprep.subr.bf16.mxu0 %v2712
    %2771 = vmatpush1.bf16.msra.mxu0 %v2711
    %2772 = vmatprep.subr.bf16.mxu0 %v2714
    %2773 = vmatpush1.bf16.msra.mxu0 %v2713
    %2774 = vmatprep.subr.bf16.mxu0 %v2716
    %2775 = vmatpush1.bf16.msra.mxu0 %v2715
    %2776 = vmatprep.subr.bf16.mxu0 %v2718
    %2777 = vmatpush1.bf16.msra.mxu0 %v2717
    %2778 = vmatprep.subr.bf16.mxu0 %v2720
    %2779 = vmatpush1.bf16.msra.mxu0 %v2719
    %2780 = vmatprep.subr.bf16.mxu0 %v2722
    %2781 = vmatpush1.bf16.msra.mxu0 %v2721
    %2782 = vmatprep.subr.bf16.mxu0 %v2756
    %2783 = vmatpush1.bf16.msra.mxu0 %v2753
    %2784 = vmatprep.subr.bf16.mxu0 0
    %2785 = vmatpush1.bf16.msra.mxu0 0
    %2786 = vmatprep.subr.bf16.mxu0 0
    %2787 = vmatpush1.bf16.msra.mxu0 0
    %2788 = vmatprep.subr.bf16.mxu0 0
    %2789 = vmatpush1.bf16.msra.mxu0 0
    %2790 = vmatprep.mubr.bf16.mxu0 %v2750
    %2791 = vmatmul.mubr.bf16.gmra.mrb[0].mxu0 %v2597
    %v2792 = vpop.f32.mrb[0].mxu0
    %v2793 = vadd.f32 0.0, %v2792
    %v2794 = vpop.f32.mrb[0].mxu0
    %v2795 = vadd.f32 0.0, %v2794
    %v2796 = vpop.f32.mrb[0].mxu0
    %v2797 = vpop.f32.mrb[0].mxu0
    %2798 = vdwg.mxu0
    %v2799 = vmax.f32 %v2595, %v2793
    %v2800 = vmax.f32 %v2596, %v2795
    %s2801 = scalar_lea.vmem %s6, 200
    %v2802 = vld [vmem:[%s2801] sm:$0xff]
    %v2803 = vld [vmem:[%s2801 + $0x8] sm:$0xff]
    %v2804 = vld [vmem:[%s2801 + $0x10] sm:$0xff]
    %v2805 = vld [vmem:[%s2801 + $0x18] sm:$0xff]
    %v2806 = vld [vmem:[%s2801 + $0x20] sm:$0xff]
    %v2807 = vld [vmem:[%s2801 + $0x28] sm:$0xff]
    %v2808 = vld [vmem:[%s2801 + $0x30] sm:$0xff]
    %v2809 = vld [vmem:[%s2801 + $0x38] sm:$0xff]
    %v2810 = vld [vmem:[%s2801 + $0x40] sm:$0xff]
    %v2811 = vld [vmem:[%s2801 + $0x48] sm:$0xff]
    %v2812 = vld [vmem:[%s2801 + $0x50] sm:$0xff]
    %v2813 = vld [vmem:[%s2801 + $0x58] sm:$0xff]
    %v2814 = vld [vmem:[%s2801 + $0x60] sm:$0xff]
    %v2815 = vld [vmem:[%s2801 + $0x68] sm:$0xff]
    %v2816 = vld [vmem:[%s2801 + $0x70] sm:$0xff]
    %v2817 = vld [vmem:[%s2801 + $0x78] sm:$0xff]
    %v2818 = vld [vmem:[%s2801 + $0x80] sm:$0xff]
    %v2819 = vld [vmem:[%s2801 + $0x88] sm:$0xff]
    %v2820 = vld [vmem:[%s2801 + $0x90] sm:$0xff]
    %v2821 = vld [vmem:[%s2801 + $0x98] sm:$0xff]
    %v2822 = vld [vmem:[%s2801 + $0xa0] sm:$0xff]
    %v2823 = vld [vmem:[%s2801 + $0xa8] sm:$0xff]
    %v2824 = vld [vmem:[%s2801 + $0xb0] sm:$0xff]
    %v2825 = vld [vmem:[%s2801 + $0xb8] sm:$0xff]
    %v2826 = vld [vmem:[%s2801 + $0xc0] sm:$0x33]
    %v2852 = vunpack.c.l.b16 %v2802
    %v2853 = vunpack.c.h.b16 %v2802
    %v2854 = vunpack.c.l.b16 %v2803
    %v2855 = vunpack.c.h.b16 %v2803
    %v2856 = vunpack.c.l.b16 %v2804
    %v2857 = vunpack.c.h.b16 %v2804
    %v2858 = vunpack.c.l.b16 %v2805
    %v2859 = vunpack.c.h.b16 %v2805
    %v2860 = vunpack.c.l.b16 %v2806
    %v2861 = vunpack.c.h.b16 %v2806
    %v2862 = vunpack.c.l.b16 %v2807
    %v2863 = vunpack.c.h.b16 %v2807
    %v2864 = vunpack.c.l.b16 %v2808
    %v2865 = vunpack.c.h.b16 %v2808
    %v2866 = vunpack.c.l.b16 %v2809
    %v2867 = vunpack.c.h.b16 %v2809
    %v2868 = vunpack.c.l.b16 %v2810
    %v2869 = vunpack.c.h.b16 %v2810
    %v2870 = vunpack.c.l.b16 %v2811
    %v2871 = vunpack.c.h.b16 %v2811
    %v2872 = vunpack.c.l.b16 %v2812
    %v2873 = vunpack.c.h.b16 %v2812
    %v2874 = vunpack.c.l.b16 %v2813
    %v2875 = vunpack.c.h.b16 %v2813
    %v2876 = vunpack.c.l.b16 %v2814
    %v2877 = vunpack.c.h.b16 %v2814
    %v2878 = vunpack.c.l.b16 %v2815
    %v2879 = vunpack.c.h.b16 %v2815
    %v2880 = vunpack.c.l.b16 %v2816
    %v2881 = vunpack.c.h.b16 %v2816
    %v2882 = vunpack.c.l.b16 %v2817
    %v2883 = vunpack.c.h.b16 %v2817
    %v2884 = vunpack.c.l.b16 %v2818
    %v2885 = vunpack.c.h.b16 %v2818
    %v2886 = vunpack.c.l.b16 %v2819
    %v2887 = vunpack.c.h.b16 %v2819
    %v2888 = vunpack.c.l.b16 %v2820
    %v2889 = vunpack.c.h.b16 %v2820
    %v2890 = vunpack.c.l.b16 %v2821
    %v2891 = vunpack.c.h.b16 %v2821
    %v2892 = vunpack.c.l.b16 %v2822
    %v2893 = vunpack.c.h.b16 %v2822
    %v2894 = vunpack.c.l.b16 %v2823
    %v2895 = vunpack.c.h.b16 %v2823
    %v2896 = vunpack.c.l.b16 %v2824
    %v2897 = vunpack.c.h.b16 %v2824
    %v2898 = vunpack.c.l.b16 %v2825
    %v2899 = vunpack.c.h.b16 %v2825
    %v2900 = vunpack.c.l.b16 %v2826
    %v2901 = vunpack.c.h.b16 %v2826
    %v2902 = vpack.c.b16 %v2854, %v2852
    %v2903 = vpack.c.b16 %v2855, %v2853
    %v2904 = vpack.c.b16 %v2858, %v2856
    %v2905 = vpack.c.b16 %v2859, %v2857
    %v2906 = vpack.c.b16 %v2862, %v2860
    %v2907 = vpack.c.b16 %v2863, %v2861
    %v2908 = vpack.c.b16 %v2866, %v2864
    %v2909 = vpack.c.b16 %v2867, %v2865
    %v2910 = vpack.c.b16 %v2870, %v2868
    %v2911 = vpack.c.b16 %v2871, %v2869
    %v2912 = vpack.c.b16 %v2874, %v2872
    %v2913 = vpack.c.b16 %v2875, %v2873
    %v2914 = vpack.c.b16 %v2878, %v2876
    %v2915 = vpack.c.b16 %v2879, %v2877
    %v2916 = vpack.c.b16 %v2882, %v2880
    %v2917 = vpack.c.b16 %v2883, %v2881
    %v2918 = vpack.c.b16 %v2886, %v2884
    %v2919 = vpack.c.b16 %v2887, %v2885
    %v2920 = vpack.c.b16 %v2890, %v2888
    %v2921 = vpack.c.b16 %v2891, %v2889
    %v2922 = vpack.c.b16 %v2894, %v2892
    %v2923 = vpack.c.b16 %v2895, %v2893
    %v2924 = vpack.c.b16 %v2898, %v2896
    %v2925 = vpack.c.b16 %v2899, %v2897
    %v2926 = vpack.c.b16 %v2900, %v2900
    %v2927 = vpack.c.b16 %v2901, %v2901
    %v2953 = vsel %vm608, %v2926, 0
    %v2956 = vsel %vm608, %v2927, 0
    %2958 = vmatprep.subr.bf16.mxu0 %v2903
    %2959 = vmatpush1.bf16.msra.mxu0 %v2902
    %2960 = vmatprep.subr.bf16.mxu0 %v2905
    %2961 = vmatpush1.bf16.msra.mxu0 %v2904
    %2962 = vmatprep.subr.bf16.mxu0 %v2907
    %2963 = vmatpush1.bf16.msra.mxu0 %v2906
    %2964 = vmatprep.subr.bf16.mxu0 %v2909
    %2965 = vmatpush1.bf16.msra.mxu0 %v2908
    %2966 = vmatprep.subr.bf16.mxu0 %v2911
    %2967 = vmatpush1.bf16.msra.mxu0 %v2910
    %2968 = vmatprep.subr.bf16.mxu0 %v2913
    %2969 = vmatpush1.bf16.msra.mxu0 %v2912
    %2970 = vmatprep.subr.bf16.mxu0 %v2915
    %2971 = vmatpush1.bf16.msra.mxu0 %v2914
    %2972 = vmatprep.subr.bf16.mxu0 %v2917
    %2973 = vmatpush1.bf16.msra.mxu0 %v2916
    %2974 = vmatprep.subr.bf16.mxu0 %v2919
    %2975 = vmatpush1.bf16.msra.mxu0 %v2918
    %2976 = vmatprep.subr.bf16.mxu0 %v2921
    %2977 = vmatpush1.bf16.msra.mxu0 %v2920
    %2978 = vmatprep.subr.bf16.mxu0 %v2923
    %2979 = vmatpush1.bf16.msra.mxu0 %v2922
    %2980 = vmatprep.subr.bf16.mxu0 %v2925
    %2981 = vmatpush1.bf16.msra.mxu0 %v2924
    %2982 = vmatprep.subr.bf16.mxu0 %v2956
    %2983 = vmatpush1.bf16.msra.mxu0 %v2953
    %2984 = vmatprep.subr.bf16.mxu0 0
    %2985 = vmatpush1.bf16.msra.mxu0 0
    %2986 = vmatprep.subr.bf16.mxu0 0
    %2987 = vmatpush1.bf16.msra.mxu0 0
    %2988 = vmatprep.subr.bf16.mxu0 0
    %2989 = vmatpush1.bf16.msra.mxu0 0
    %2990 = vmatprep.mubr.bf16.mxu0 %v2750
    %2991 = vmatmul.mubr.bf16.gmra.mrb[0].mxu0 %v2597
    %v2992 = vpop.f32.mrb[0].mxu0
    %v2993 = vadd.f32 0.0, %v2992
    %v2994 = vpop.f32.mrb[0].mxu0
    %v2995 = vadd.f32 0.0, %v2994
    %v2996 = vpop.f32.mrb[0].mxu0
    %v2997 = vpop.f32.mrb[0].mxu0
    %2998 = vdwg.mxu0
    %v2999 = vmax.f32 %v2799, %v2993
    %v3000 = vmax.f32 %v2800, %v2995
    %s3001 = scalar_lea.vmem %s6, 400
    %v3002 = vld [vmem:[%s3001] sm:$0xff]
    %v3003 = vld [vmem:[%s3001 + $0x8] sm:$0xff]
    %v3004 = vld [vmem:[%s3001 + $0x10] sm:$0xff]
    %v3005 = vld [vmem:[%s3001 + $0x18] sm:$0xff]
    %v3006 = vld [vmem:[%s3001 + $0x20] sm:$0xff]
    %v3007 = vld [vmem:[%s3001 + $0x28] sm:$0xff]
    %v3008 = vld [vmem:[%s3001 + $0x30] sm:$0xff]
    %v3009 = vld [vmem:[%s3001 + $0x38] sm:$0xff]
    %v3010 = vld [vmem:[%s3001 + $0x40] sm:$0xff]
    %v3011 = vld [vmem:[%s3001 + $0x48] sm:$0xff]
    %v3012 = vld [vmem:[%s3001 + $0x50] sm:$0xff]
    %v3013 = vld [vmem:[%s3001 + $0x58] sm:$0xff]
    %v3014 = vld [vmem:[%s3001 + $0x60] sm:$0xff]
    %v3015 = vld [vmem:[%s3001 + $0x68] sm:$0xff]
    %v3016 = vld [vmem:[%s3001 + $0x70] sm:$0xff]
    %v3017 = vld [vmem:[%s3001 + $0x78] sm:$0xff]
    %v3018 = vld [vmem:[%s3001 + $0x80] sm:$0xff]
    %v3019 = vld [vmem:[%s3001 + $0x88] sm:$0xff]
    %v3020 = vld [vmem:[%s3001 + $0x90] sm:$0xff]
    %v3021 = vld [vmem:[%s3001 + $0x98] sm:$0xff]
    %v3022 = vld [vmem:[%s3001 + $0xa0] sm:$0xff]
    %v3023 = vld [vmem:[%s3001 + $0xa8] sm:$0xff]
    %v3024 = vld [vmem:[%s3001 + $0xb0] sm:$0xff]
    %v3025 = vld [vmem:[%s3001 + $0xb8] sm:$0xff]
    %v3026 = vld [vmem:[%s3001 + $0xc0] sm:$0x33]
    %v3052 = vunpack.c.l.b16 %v3002
    %v3053 = vunpack.c.h.b16 %v3002
    %v3054 = vunpack.c.l.b16 %v3003
    %v3055 = vunpack.c.h.b16 %v3003
    %v3056 = vunpack.c.l.b16 %v3004
    %v3057 = vunpack.c.h.b16 %v3004
    %v3058 = vunpack.c.l.b16 %v3005
    %v3059 = vunpack.c.h.b16 %v3005
    %v3060 = vunpack.c.l.b16 %v3006
    %v3061 = vunpack.c.h.b16 %v3006
    %v3062 = vunpack.c.l.b16 %v3007
    %v3063 = vunpack.c.h.b16 %v3007
    %v3064 = vunpack.c.l.b16 %v3008
    %v3065 = vunpack.c.h.b16 %v3008
    %v3066 = vunpack.c.l.b16 %v3009
    %v3067 = vunpack.c.h.b16 %v3009
    %v3068 = vunpack.c.l.b16 %v3010
    %v3069 = vunpack.c.h.b16 %v3010
    %v3070 = vunpack.c.l.b16 %v3011
    %v3071 = vunpack.c.h.b16 %v3011
    %v3072 = vunpack.c.l.b16 %v3012
    %v3073 = vunpack.c.h.b16 %v3012
    %v3074 = vunpack.c.l.b16 %v3013
    %v3075 = vunpack.c.h.b16 %v3013
    %v3076 = vunpack.c.l.b16 %v3014
    %v3077 = vunpack.c.h.b16 %v3014
    %v3078 = vunpack.c.l.b16 %v3015
    %v3079 = vunpack.c.h.b16 %v3015
    %v3080 = vunpack.c.l.b16 %v3016
    %v3081 = vunpack.c.h.b16 %v3016
    %v3082 = vunpack.c.l.b16 %v3017
    %v3083 = vunpack.c.h.b16 %v3017
    %v3084 = vunpack.c.l.b16 %v3018
    %v3085 = vunpack.c.h.b16 %v3018
    %v3086 = vunpack.c.l.b16 %v3019
    %v3087 = vunpack.c.h.b16 %v3019
    %v3088 = vunpack.c.l.b16 %v3020
    %v3089 = vunpack.c.h.b16 %v3020
    %v3090 = vunpack.c.l.b16 %v3021
    %v3091 = vunpack.c.h.b16 %v3021
    %v3092 = vunpack.c.l.b16 %v3022
    %v3093 = vunpack.c.h.b16 %v3022
    %v3094 = vunpack.c.l.b16 %v3023
    %v3095 = vunpack.c.h.b16 %v3023
    %v3096 = vunpack.c.l.b16 %v3024
    %v3097 = vunpack.c.h.b16 %v3024
    %v3098 = vunpack.c.l.b16 %v3025
    %v3099 = vunpack.c.h.b16 %v3025
    %v3100 = vunpack.c.l.b16 %v3026
    %v3101 = vunpack.c.h.b16 %v3026
    %v3102 = vpack.c.b16 %v3054, %v3052
    %v3103 = vpack.c.b16 %v3055, %v3053
    %v3104 = vpack.c.b16 %v3058, %v3056
    %v3105 = vpack.c.b16 %v3059, %v3057
    %v3106 = vpack.c.b16 %v3062, %v3060
    %v3107 = vpack.c.b16 %v3063, %v3061
    %v3108 = vpack.c.b16 %v3066, %v3064
    %v3109 = vpack.c.b16 %v3067, %v3065
    %v3110 = vpack.c.b16 %v3070, %v3068
    %v3111 = vpack.c.b16 %v3071, %v3069
    %v3112 = vpack.c.b16 %v3074, %v3072
    %v3113 = vpack.c.b16 %v3075, %v3073
    %v3114 = vpack.c.b16 %v3078, %v3076
    %v3115 = vpack.c.b16 %v3079, %v3077
    %v3116 = vpack.c.b16 %v3082, %v3080
    %v3117 = vpack.c.b16 %v3083, %v3081
    %v3118 = vpack.c.b16 %v3086, %v3084
    %v3119 = vpack.c.b16 %v3087, %v3085
    %v3120 = vpack.c.b16 %v3090, %v3088
    %v3121 = vpack.c.b16 %v3091, %v3089
    %v3122 = vpack.c.b16 %v3094, %v3092
    %v3123 = vpack.c.b16 %v3095, %v3093
    %v3124 = vpack.c.b16 %v3098, %v3096
    %v3125 = vpack.c.b16 %v3099, %v3097
    %v3126 = vpack.c.b16 %v3100, %v3100
    %v3127 = vpack.c.b16 %v3101, %v3101
    %v3153 = vsel %vm608, %v3126, 0
    %v3156 = vsel %vm608, %v3127, 0
    %3158 = vmatprep.subr.bf16.mxu0 %v3103
    %3159 = vmatpush1.bf16.msra.mxu0 %v3102
    %3160 = vmatprep.subr.bf16.mxu0 %v3105
    %3161 = vmatpush1.bf16.msra.mxu0 %v3104
    %3162 = vmatprep.subr.bf16.mxu0 %v3107
    %3163 = vmatpush1.bf16.msra.mxu0 %v3106
    %3164 = vmatprep.subr.bf16.mxu0 %v3109
    %3165 = vmatpush1.bf16.msra.mxu0 %v3108
    %3166 = vmatprep.subr.bf16.mxu0 %v3111
    %3167 = vmatpush1.bf16.msra.mxu0 %v3110
    %3168 = vmatprep.subr.bf16.mxu0 %v3113
    %3169 = vmatpush1.bf16.msra.mxu0 %v3112
    %3170 = vmatprep.subr.bf16.mxu0 %v3115
    %3171 = vmatpush1.bf16.msra.mxu0 %v3114
    %3172 = vmatprep.subr.bf16.mxu0 %v3117
    %3173 = vmatpush1.bf16.msra.mxu0 %v3116
    %3174 = vmatprep.subr.bf16.mxu0 %v3119
    %3175 = vmatpush1.bf16.msra.mxu0 %v3118
    %3176 = vmatprep.subr.bf16.mxu0 %v3121
    %3177 = vmatpush1.bf16.msra.mxu0 %v3120
    %3178 = vmatprep.subr.bf16.mxu0 %v3123
    %3179 = vmatpush1.bf16.msra.mxu0 %v3122
    %3180 = vmatprep.subr.bf16.mxu0 %v3125
    %3181 = vmatpush1.bf16.msra.mxu0 %v3124
    %3182 = vmatprep.subr.bf16.mxu0 %v3156
    %3183 = vmatpush1.bf16.msra.mxu0 %v3153
    %3184 = vmatprep.subr.bf16.mxu0 0
    %3185 = vmatpush1.bf16.msra.mxu0 0
    %3186 = vmatprep.subr.bf16.mxu0 0
    %3187 = vmatpush1.bf16.msra.mxu0 0
    %3188 = vmatprep.subr.bf16.mxu0 0
    %3189 = vmatpush1.bf16.msra.mxu0 0
    %3190 = vmatprep.mubr.bf16.mxu0 %v2750
    %3191 = vmatmul.mubr.bf16.gmra.mrb[0].mxu0 %v2597
    %v3192 = vpop.f32.mrb[0].mxu0
    %v3193 = vadd.f32 0.0, %v3192
    %v3194 = vpop.f32.mrb[0].mxu0
    %v3195 = vadd.f32 0.0, %v3194
    %v3196 = vpop.f32.mrb[0].mxu0
    %v3197 = vpop.f32.mrb[0].mxu0
    %3198 = vdwg.mxu0
    %v3199 = vmax.f32 %v2999, %v3193
    %v3200 = vmax.f32 %v3000, %v3195
    %v3201 = vpack.c.bf16 %v3199, %v3199
    %v3202 = vpack.c.bf16 %v3200, %v3200
    %v3203 = vld [vmem:[%s7] sm:$0xf]
    %v3204 = vld [vmem:[%s7 + $0x4] sm:$0xf]
    %v3205 = vld [vmem:[%s7 + $0x8] sm:$0xf]
    %v3206 = vld [vmem:[%s7 + $0xc] sm:$0xf]
    %v3207 = vld [vmem:[%s7 + $0x10] sm:$0xf]
    %v3208 = vld [vmem:[%s7 + $0x14] sm:$0xf]
    %v3209 = vld [vmem:[%s7 + $0x18] sm:$0xf]
    %v3210 = vld [vmem:[%s7 + $0x1c] sm:$0xf]
    %v3211 = vld [vmem:[%s7 + $0x20] sm:$0xf]
    %v3212 = vld [vmem:[%s7 + $0x24] sm:$0xf]
    %v3213 = vld [vmem:[%s7 + $0x28] sm:$0xf]
    %v3214 = vld [vmem:[%s7 + $0x2c] sm:$0xf]
    %v3215 = vld [vmem:[%s7 + $0x30] sm:$0xf]
    %v3216 = vld [vmem:[%s7 + $0x34] sm:$0xf]
    %v3217 = vld [vmem:[%s7 + $0x38] sm:$0xf]
    %v3218 = vld [vmem:[%s7 + $0x3c] sm:$0xf]
    %v3219 = vld [vmem:[%s7 + $0x40] sm:$0xf]
    %v3220 = vld [vmem:[%s7 + $0x44] sm:$0xf]
    %v3221 = vld [vmem:[%s7 + $0x48] sm:$0xf]
    %v3222 = vld [vmem:[%s7 + $0x4c] sm:$0xf]
    %v3223 = vld [vmem:[%s7 + $0x50] sm:$0xf]
    %v3224 = vld [vmem:[%s7 + $0x54] sm:$0xf]
    %v3225 = vld [vmem:[%s7 + $0x58] sm:$0xf]
    %v3226 = vld [vmem:[%s7 + $0x5c] sm:$0xf]
    %v3227 = vld [vmem:[%s7 + $0x60] sm:$0x3]
    %v3253 = vunpack.c.l.b16 %v3203
    %v3254 = vunpack.c.l.b16 %v3204
    %v3255 = vunpack.c.l.b16 %v3205
    %v3256 = vunpack.c.l.b16 %v3206
    %v3257 = vunpack.c.l.b16 %v3207
    %v3258 = vunpack.c.l.b16 %v3208
    %v3259 = vunpack.c.l.b16 %v3209
    %v3260 = vunpack.c.l.b16 %v3210
    %v3261 = vunpack.c.l.b16 %v3211
    %v3262 = vunpack.c.l.b16 %v3212
    %v3263 = vunpack.c.l.b16 %v3213
    %v3264 = vunpack.c.l.b16 %v3214
    %v3265 = vunpack.c.l.b16 %v3215
    %v3266 = vunpack.c.l.b16 %v3216
    %v3267 = vunpack.c.l.b16 %v3217
    %v3268 = vunpack.c.l.b16 %v3218
    %v3269 = vunpack.c.l.b16 %v3219
    %v3270 = vunpack.c.l.b16 %v3220
    %v3271 = vunpack.c.l.b16 %v3221
    %v3272 = vunpack.c.l.b16 %v3222
    %v3273 = vunpack.c.l.b16 %v3223
    %v3274 = vunpack.c.l.b16 %v3224
    %v3275 = vunpack.c.l.b16 %v3225
    %v3276 = vunpack.c.l.b16 %v3226
    %v3277 = vunpack.c.l.b16 %v3227
    %v3278 = vpack.c.b16 %v3254, %v3253
    %v3279 = vpack.c.b16 %v3256, %v3255
    %v3280 = vpack.c.b16 %v3258, %v3257
    %v3281 = vpack.c.b16 %v3260, %v3259
    %v3282 = vpack.c.b16 %v3262, %v3261
    %v3283 = vpack.c.b16 %v3264, %v3263
    %v3284 = vpack.c.b16 %v3266, %v3265
    %v3285 = vpack.c.b16 %v3268, %v3267
    %v3286 = vpack.c.b16 %v3270, %v3269
    %v3287 = vpack.c.b16 %v3272, %v3271
    %v3288 = vpack.c.b16 %v3274, %v3273
    %v3289 = vpack.c.b16 %v3276, %v3275
    %v3290 = vpack.c.b16 %v3277, %v3277
    %v3304 = vsel %vm604, %v3202, 0
    %v3307 = vsel %vm608, %v3290, 0
    %3309 = vmatprep.subr.bf16.mxu0 0
    %3310 = vmatpush1.bf16.msra.mxu0 %v3278
    %3311 = vmatprep.subr.bf16.mxu0 0
    %3312 = vmatpush1.bf16.msra.mxu0 %v3279
    %3313 = vmatprep.subr.bf16.mxu0 0
    %3314 = vmatpush1.bf16.msra.mxu0 %v3280
    %3315 = vmatprep.subr.bf16.mxu0 0
    %3316 = vmatpush1.bf16.msra.mxu0 %v3281
    %3317 = vmatprep.subr.bf16.mxu0 0
    %3318 = vmatpush1.bf16.msra.mxu0 %v3282
    %3319 = vmatprep.subr.bf16.mxu0 0
    %3320 = vmatpush1.bf16.msra.mxu0 %v3283
    %3321 = vmatprep.subr.bf16.mxu0 0
    %3322 = vmatpush1.bf16.msra.mxu0 %v3284
    %3323 = vmatprep.subr.bf16.mxu0 0
    %3324 = vmatpush1.bf16.msra.mxu0 %v3285
    %3325 = vmatprep.subr.bf16.mxu0 0
    %3326 = vmatpush1.bf16.msra.mxu0 %v3286
    %3327 = vmatprep.subr.bf16.mxu0 0
    %3328 = vmatpush1.bf16.msra.mxu0 %v3287
    %3329 = vmatprep.subr.bf16.mxu0 0
    %3330 = vmatpush1.bf16.msra.mxu0 %v3288
    %3331 = vmatprep.subr.bf16.mxu0 0
    %3332 = vmatpush1.bf16.msra.mxu0 %v3289
    %3333 = vmatprep.subr.bf16.mxu0 0
    %3334 = vmatpush1.bf16.msra.mxu0 %v3307
    %3335 = vmatprep.subr.bf16.mxu0 0
    %3336 = vmatpush1.bf16.msra.mxu0 0
    %3337 = vmatprep.subr.bf16.mxu0 0
    %3338 = vmatpush1.bf16.msra.mxu0 0
    %3339 = vmatprep.subr.bf16.mxu0 0
    %3340 = vmatpush1.bf16.msra.mxu0 0
    %3341 = vmatprep.mubr.bf16.mxu0 %v3304
    %3342 = vmatmul.mubr.bf16.gmra.mrb[0].mxu0 %v3201
    %v3343 = vpop.f32.mrb[0].mxu0
    %v3344 = vadd.f32 0.0, %v3343
    %v3345 = vpop.f32.mrb[0].mxu0
    %v3346 = vpop.f32.mrb[0].mxu0
    %v3347 = vpop.f32.mrb[0].mxu0
    %3348 = vdwg.mxu0
    %s3349 = scalar_lea.vmem %s0, 64
    %v3350 = vld [vmem:[%s3349] sm:$0xff]
    %v3351 = vld [vmem:[%s3349 + $0x8] sm:$0x11]
    %v3354 = vunpack.c.l.b16 %v3350
    %v3355 = vunpack.c.h.b16 %v3350
    %v3356 = vunpack.c.l.b16 %v3351
    %v3357 = vunpack.c.h.b16 %v3351
    %v3358 = vpack.c.b16 %v3356, %v3354
    %v3359 = vpack.c.b16 %v3357, %v3355
    %v3361 = vand.u32 %v3358, %v70
    %v3364 = vand.u32 %v3359, %v70
    %3366 = vmatprep.subr.bf16.mxu0 %v3364
    %3367 = vmatpush1.bf16.msra.mxu0 %v3361
    %3368 = vmatprep.subr.bf16.mxu0 0
    %3369 = vmatpush1.bf16.msra.mxu0 0
    %3370 = vmatprep.subr.bf16.mxu0 0
    %3371 = vmatpush1.bf16.msra.mxu0 0
    %3372 = vmatprep.subr.bf16.mxu0 0
    %3373 = vmatpush1.bf16.msra.mxu0 0
    %3374 = vmatprep.subr.bf16.mxu0 0
    %3375 = vmatpush1.bf16.msra.mxu0 0
    %3376 = vmatprep.subr.bf16.mxu0 0
    %3377 = vmatpush1.bf16.msra.mxu0 0
    %3378 = vmatprep.subr.bf16.mxu0 0
    %3379 = vmatpush1.bf16.msra.mxu0 0
    %3380 = vmatprep.subr.bf16.mxu0 0
    %3381 = vmatpush1.bf16.msra.mxu0 0
    %3382 = vmatprep.subr.bf16.mxu0 0
    %3383 = vmatpush1.bf16.msra.mxu0 0
    %3384 = vmatprep.subr.bf16.mxu0 0
    %3385 = vmatpush1.bf16.msra.mxu0 0
    %3386 = vmatprep.subr.bf16.mxu0 0
    %3387 = vmatpush1.bf16.msra.mxu0 0
    %3388 = vmatprep.subr.bf16.mxu0 0
    %3389 = vmatpush1.bf16.msra.mxu0 0
    %3390 = vmatprep.subr.bf16.mxu0 0
    %3391 = vmatpush1.bf16.msra.mxu0 0
    %3392 = vmatprep.subr.bf16.mxu0 0
    %3393 = vmatpush1.bf16.msra.mxu0 0
    %3394 = vmatprep.subr.bf16.mxu0 0
    %3395 = vmatpush1.bf16.msra.mxu0 0
    %3396 = vmatprep.subr.bf16.mxu0 0
    %3397 = vmatpush1.bf16.msra.mxu0 0
    %3398 = vmatprep.mubr.bf16.mxu0 0
    %3399 = vmatmul.mubr.bf16.gmra.mrb[0].mxu0 %v65
    %v3400 = vpop.f32.mrb[0].mxu0
    %v3401 = vadd.f32 0.0, %v3400
    %v3402 = vpop.f32.mrb[0].mxu0
    %v3403 = vadd.f32 0.0, %v3402
    %v3404 = vpop.f32.mrb[0].mxu0
    %v3405 = vadd.f32 0.0, %v3404
    %v3406 = vpop.f32.mrb[0].mxu0
    %v3407 = vadd.f32 0.0, %v3406
    %3408 = vdwg.mxu0
    %s3409 = scalar_lea.vmem %s0, 80
    %v3410 = vld [vmem:[%s3409] sm:$0xff]
    %v3411 = vld [vmem:[%s3409 + $0x8] sm:$0x11]
    %v3414 = vunpack.c.l.b16 %v3410
    %v3415 = vunpack.c.h.b16 %v3410
    %v3416 = vunpack.c.l.b16 %v3411
    %v3417 = vunpack.c.h.b16 %v3411
    %v3418 = vpack.c.b16 %v3416, %v3414
    %v3419 = vpack.c.b16 %v3417, %v3415
    %v3421 = vand.u32 %v3418, %v70
    %v3424 = vand.u32 %v3419, %v70
    %3426 = vmatprep.subr.bf16.mxu0 %v3424
    %3427 = vmatpush1.bf16.msra.mxu0 %v3421
    %3428 = vmatprep.subr.bf16.mxu0 0
    %3429 = vmatpush1.bf16.msra.mxu0 0
    %3430 = vmatprep.subr.bf16.mxu0 0
    %3431 = vmatpush1.bf16.msra.mxu0 0
    %3432 = vmatprep.subr.bf16.mxu0 0
    %3433 = vmatpush1.bf16.msra.mxu0 0
    %3434 = vmatprep.subr.bf16.mxu0 0
    %3435 = vmatpush1.bf16.msra.mxu0 0
    %3436 = vmatprep.subr.bf16.mxu0 0
    %3437 = vmatpush1.bf16.msra.mxu0 0
    %3438 = vmatprep.subr.bf16.mxu0 0
    %3439 = vmatpush1.bf16.msra.mxu0 0
    %3440 = vmatprep.subr.bf16.mxu0 0
    %3441 = vmatpush1.bf16.msra.mxu0 0
    %3442 = vmatprep.subr.bf16.mxu0 0
    %3443 = vmatpush1.bf16.msra.mxu0 0
    %3444 = vmatprep.subr.bf16.mxu0 0
    %3445 = vmatpush1.bf16.msra.mxu0 0
    %3446 = vmatprep.subr.bf16.mxu0 0
    %3447 = vmatpush1.bf16.msra.mxu0 0
    %3448 = vmatprep.subr.bf16.mxu0 0
    %3449 = vmatpush1.bf16.msra.mxu0 0
    %3450 = vmatprep.subr.bf16.mxu0 0
    %3451 = vmatpush1.bf16.msra.mxu0 0
    %3452 = vmatprep.subr.bf16.mxu0 0
    %3453 = vmatpush1.bf16.msra.mxu0 0
    %3454 = vmatprep.subr.bf16.mxu0 0
    %3455 = vmatpush1.bf16.msra.mxu0 0
    %3456 = vmatprep.subr.bf16.mxu0 0
    %3457 = vmatpush1.bf16.msra.mxu0 0
    %3458 = vmatprep.mubr.bf16.mxu0 0
    %3459 = vmatmul.mubr.bf16.gmra.mrb[0].mxu0 %v65
    %v3460 = vpop.f32.mrb[0].mxu0
    %v3461 = vadd.f32 0.0, %v3460
    %v3462 = vpop.f32.mrb[0].mxu0
    %v3463 = vadd.f32 0.0, %v3462
    %v3464 = vpop.f32.mrb[0].mxu0
    %v3465 = vadd.f32 0.0, %v3464
    %v3466 = vpop.f32.mrb[0].mxu0
    %v3467 = vadd.f32 0.0, %v3466
    %3468 = vdwg.mxu0
    %v3469 = vmax.f32 %v3401, %v3461
    %v3470 = vmax.f32 %v3403, %v3463
    %v3471 = vmax.f32 %v3405, %v3465
    %v3472 = vmax.f32 %v3407, %v3467
    %s3473 = scalar_lea.vmem %s0, 96
    %v3474 = vld [vmem:[%s3473] sm:$0xff]
    %v3475 = vld [vmem:[%s3473 + $0x8] sm:$0x11]
    %v3478 = vunpack.c.l.b16 %v3474
    %v3479 = vunpack.c.h.b16 %v3474
    %v3480 = vunpack.c.l.b16 %v3475
    %v3481 = vunpack.c.h.b16 %v3475
    %v3482 = vpack.c.b16 %v3480, %v3478
    %v3483 = vpack.c.b16 %v3481, %v3479
    %v3485 = vand.u32 %v3482, %v70
    %v3488 = vand.u32 %v3483, %v70
    %3490 = vmatprep.subr.bf16.mxu0 %v3488
    %3491 = vmatpush1.bf16.msra.mxu0 %v3485
    %3492 = vmatprep.subr.bf16.mxu0 0
    %3493 = vmatpush1.bf16.msra.mxu0 0
    %3494 = vmatprep.subr.bf16.mxu0 0
    %3495 = vmatpush1.bf16.msra.mxu0 0
    %3496 = vmatprep.subr.bf16.mxu0 0
    %3497 = vmatpush1.bf16.msra.mxu0 0
    %3498 = vmatprep.subr.bf16.mxu0 0
    %3499 = vmatpush1.bf16.msra.mxu0 0
    %3500 = vmatprep.subr.bf16.mxu0 0
    %3501 = vmatpush1.bf16.msra.mxu0 0
    %3502 = vmatprep.subr.bf16.mxu0 0
    %3503 = vmatpush1.bf16.msra.mxu0 0
    %3504 = vmatprep.subr.bf16.mxu0 0
    %3505 = vmatpush1.bf16.msra.mxu0 0
    %3506 = vmatprep.subr.bf16.mxu0 0
    %3507 = vmatpush1.bf16.msra.mxu0 0
    %3508 = vmatprep.subr.bf16.mxu0 0
    %3509 = vmatpush1.bf16.msra.mxu0 0
    %3510 = vmatprep.subr.bf16.mxu0 0
    %3511 = vmatpush1.bf16.msra.mxu0 0
    %3512 = vmatprep.subr.bf16.mxu0 0
    %3513 = vmatpush1.bf16.msra.mxu0 0
    %3514 = vmatprep.subr.bf16.mxu0 0
    %3515 = vmatpush1.bf16.msra.mxu0 0
    %3516 = vmatprep.subr.bf16.mxu0 0
    %3517 = vmatpush1.bf16.msra.mxu0 0
    %3518 = vmatprep.subr.bf16.mxu0 0
    %3519 = vmatpush1.bf16.msra.mxu0 0
    %3520 = vmatprep.subr.bf16.mxu0 0
    %3521 = vmatpush1.bf16.msra.mxu0 0
    %3522 = vmatprep.mubr.bf16.mxu0 0
    %3523 = vmatmul.mubr.bf16.gmra.mrb[0].mxu0 %v65
    %v3524 = vpop.f32.mrb[0].mxu0
    %v3525 = vadd.f32 0.0, %v3524
    %v3526 = vpop.f32.mrb[0].mxu0
    %v3527 = vadd.f32 0.0, %v3526
    %v3528 = vpop.f32.mrb[0].mxu0
    %v3529 = vadd.f32 0.0, %v3528
    %v3530 = vpop.f32.mrb[0].mxu0
    %v3531 = vadd.f32 0.0, %v3530
    %3532 = vdwg.mxu0
    %v3533 = vmax.f32 %v3469, %v3525
    %v3534 = vmax.f32 %v3470, %v3527
    %v3535 = vmax.f32 %v3471, %v3529
    %v3536 = vmax.f32 %v3472, %v3531
    %s3537 = scalar_lea.vmem %s0, 112
    %v3538 = vld [vmem:[%s3537] sm:$0xff]
    %v3539 = vld [vmem:[%s3537 + $0x8] sm:$0x11]
    %v3542 = vunpack.c.l.b16 %v3538
    %v3543 = vunpack.c.h.b16 %v3538
    %v3544 = vunpack.c.l.b16 %v3539
    %v3545 = vunpack.c.h.b16 %v3539
    %v3546 = vpack.c.b16 %v3544, %v3542
    %v3547 = vpack.c.b16 %v3545, %v3543
    %v3549 = vand.u32 %v3546, %v70
    %v3552 = vand.u32 %v3547, %v70
    %3554 = vmatprep.subr.bf16.mxu0 %v3552
    %3555 = vmatpush1.bf16.msra.mxu0 %v3549
    %3556 = vmatprep.subr.bf16.mxu0 0
    %3557 = vmatpush1.bf16.msra.mxu0 0
    %3558 = vmatprep.subr.bf16.mxu0 0
    %3559 = vmatpush1.bf16.msra.mxu0 0
    %3560 = vmatprep.subr.bf16.mxu0 0
    %3561 = vmatpush1.bf16.msra.mxu0 0
    %3562 = vmatprep.subr.bf16.mxu0 0
    %3563 = vmatpush1.bf16.msra.mxu0 0
    %3564 = vmatprep.subr.bf16.mxu0 0
    %3565 = vmatpush1.bf16.msra.mxu0 0
    %3566 = vmatprep.subr.bf16.mxu0 0
    %3567 = vmatpush1.bf16.msra.mxu0 0
    %3568 = vmatprep.subr.bf16.mxu0 0
    %3569 = vmatpush1.bf16.msra.mxu0 0
    %3570 = vmatprep.subr.bf16.mxu0 0
    %3571 = vmatpush1.bf16.msra.mxu0 0
    %3572 = vmatprep.subr.bf16.mxu0 0
    %3573 = vmatpush1.bf16.msra.mxu0 0
    %3574 = vmatprep.subr.bf16.mxu0 0
    %3575 = vmatpush1.bf16.msra.mxu0 0
    %3576 = vmatprep.subr.bf16.mxu0 0
    %3577 = vmatpush1.bf16.msra.mxu0 0
    %3578 = vmatprep.subr.bf16.mxu0 0
    %3579 = vmatpush1.bf16.msra.mxu0 0
    %3580 = vmatprep.subr.bf16.mxu0 0
    %3581 = vmatpush1.bf16.msra.mxu0 0
    %3582 = vmatprep.subr.bf16.mxu0 0
    %3583 = vmatpush1.bf16.msra.mxu0 0
    %3584 = vmatprep.subr.bf16.mxu0 0
    %3585 = vmatpush1.bf16.msra.mxu0 0
    %3586 = vmatprep.mubr.bf16.mxu0 0
    %3587 = vmatmul.mubr.bf16.gmra.mrb[0].mxu0 %v65
    %v3588 = vpop.f32.mrb[0].mxu0
    %v3589 = vadd.f32 0.0, %v3588
    %v3590 = vpop.f32.mrb[0].mxu0
    %v3591 = vadd.f32 0.0, %v3590
    %v3592 = vpop.f32.mrb[0].mxu0
    %v3593 = vadd.f32 0.0, %v3592
    %v3594 = vpop.f32.mrb[0].mxu0
    %v3595 = vadd.f32 0.0, %v3594
    %3596 = vdwg.mxu0
    %v3597 = vmax.f32 %v3533, %v3589
    %v3598 = vmax.f32 %v3534, %v3591
    %v3599 = vmax.f32 %v3535, %v3593
    %v3600 = vmax.f32 %v3536, %v3595
    %v3601 = vadd.f32 %v3597, %v315
    %v3602 = vadd.f32 %v3598, %v315
    %v3603 = vadd.f32 %v3599, %v320
    %v3604 = vadd.f32 %v3600, %v320
    %v3605 = vmax.f32 %v3601, 0.0
    %v3606 = vmax.f32 %v3602, 0.0
    %v3607 = vmax.f32 %v3603, 0.0
    %v3608 = vmax.f32 %v3604, 0.0
    %v3609 = vpack.c.bf16 %v3607, %v3605
    %v3610 = vpack.c.bf16 %v3608, %v3606
    %3611 = vmatprep.subr.bf16.mxu0 %v3610
    %3612 = vmatpush1.bf16.msra.mxu0 %v3609
    %3613 = vmatprep.subr.bf16.mxu0 0
    %3614 = vmatpush1.bf16.msra.mxu0 0
    %3615 = vmatprep.subr.bf16.mxu0 0
    %3616 = vmatpush1.bf16.msra.mxu0 0
    %3617 = vmatprep.subr.bf16.mxu0 0
    %3618 = vmatpush1.bf16.msra.mxu0 0
    %3619 = vmatprep.subr.bf16.mxu0 0
    %3620 = vmatpush1.bf16.msra.mxu0 0
    %3621 = vmatprep.subr.bf16.mxu0 0
    %3622 = vmatpush1.bf16.msra.mxu0 0
    %3623 = vmatprep.subr.bf16.mxu0 0
    %3624 = vmatpush1.bf16.msra.mxu0 0
    %3625 = vmatprep.subr.bf16.mxu0 0
    %3626 = vmatpush1.bf16.msra.mxu0 0
    %3627 = vmatprep.subr.bf16.mxu0 0
    %3628 = vmatpush1.bf16.msra.mxu0 0
    %3629 = vmatprep.subr.bf16.mxu0 0
    %3630 = vmatpush1.bf16.msra.mxu0 0
    %3631 = vmatprep.subr.bf16.mxu0 0
    %3632 = vmatpush1.bf16.msra.mxu0 0
    %3633 = vmatprep.subr.bf16.mxu0 0
    %3634 = vmatpush1.bf16.msra.mxu0 0
    %3635 = vmatprep.subr.bf16.mxu0 0
    %3636 = vmatpush1.bf16.msra.mxu0 0
    %3637 = vmatprep.subr.bf16.mxu0 0
    %3638 = vmatpush1.bf16.msra.mxu0 0
    %3639 = vmatprep.subr.bf16.mxu0 0
    %3640 = vmatpush1.bf16.msra.mxu0 0
    %3641 = vmatprep.subr.bf16.mxu0 0
    %3642 = vmatpush1.bf16.msra.mxu0 0
    %3643 = vmatprep.mubr.bf16.mxu0 0
    %3644 = vmatmul.mubr.bf16.gmra.mrb[0].mxu0 %v335
    %v3645 = vpop.f32.mrb[0].mxu0
    %v3646 = vadd.f32 0.0, %v3645
    %v3647 = vpop.f32.mrb[0].mxu0
    %v3648 = vadd.f32 0.0, %v3647
    %v3649 = vpop.f32.mrb[0].mxu0
    %v3650 = vpop.f32.mrb[0].mxu0
    %3651 = vdwg.mxu0
    %v3652 = vpack.c.bf16 %v3646, %v3646
    %v3653 = vpack.c.bf16 %v3648, %v3648
    %3654 = vmatprep.subr.bf16.mxu0 %v3610
    %3655 = vmatpush1.bf16.msra.mxu0 %v3609
    %3656 = vmatprep.subr.bf16.mxu0 0
    %3657 = vmatpush1.bf16.msra.mxu0 0
    %3658 = vmatprep.subr.bf16.mxu0 0
    %3659 = vmatpush1.bf16.msra.mxu0 0
    %3660 = vmatprep.subr.bf16.mxu0 0
    %3661 = vmatpush1.bf16.msra.mxu0 0
    %3662 = vmatprep.subr.bf16.mxu0 0
    %3663 = vmatpush1.bf16.msra.mxu0 0
    %3664 = vmatprep.subr.bf16.mxu0 0
    %3665 = vmatpush1.bf16.msra.mxu0 0
    %3666 = vmatprep.subr.bf16.mxu0 0
    %3667 = vmatpush1.bf16.msra.mxu0 0
    %3668 = vmatprep.subr.bf16.mxu0 0
    %3669 = vmatpush1.bf16.msra.mxu0 0
    %3670 = vmatprep.subr.bf16.mxu0 0
    %3671 = vmatpush1.bf16.msra.mxu0 0
    %3672 = vmatprep.subr.bf16.mxu0 0
    %3673 = vmatpush1.bf16.msra.mxu0 0
    %3674 = vmatprep.subr.bf16.mxu0 0
    %3675 = vmatpush1.bf16.msra.mxu0 0
    %3676 = vmatprep.subr.bf16.mxu0 0
    %3677 = vmatpush1.bf16.msra.mxu0 0
    %3678 = vmatprep.subr.bf16.mxu0 0
    %3679 = vmatpush1.bf16.msra.mxu0 0
    %3680 = vmatprep.subr.bf16.mxu0 0
    %3681 = vmatpush1.bf16.msra.mxu0 0
    %3682 = vmatprep.subr.bf16.mxu0 0
    %3683 = vmatpush1.bf16.msra.mxu0 0
    %3684 = vmatprep.subr.bf16.mxu0 0
    %3685 = vmatpush1.bf16.msra.mxu0 0
    %3686 = vmatprep.mubr.bf16.mxu0 0
    %3687 = vmatmul.mubr.bf16.gmra.mrb[0].mxu0 %v408
    %v3688 = vpop.f32.mrb[0].mxu0
    %v3689 = vadd.f32 0.0, %v3688
    %v3690 = vpop.f32.mrb[0].mxu0
    %v3691 = vadd.f32 0.0, %v3690
    %v3692 = vpop.f32.mrb[0].mxu0
    %v3693 = vpop.f32.mrb[0].mxu0
    %3694 = vdwg.mxu0
    %v3695 = vpack.c.bf16 %v3689, %v3689
    %v3696 = vpack.c.bf16 %v3691, %v3691
    %v3698 = vsel %vm604, %v3696, 0
    %3700 = vmatprep.subr.bf16.mxu0 %v555
    %3701 = vmatpush1.bf16.msra.mxu0 %v554
    %3702 = vmatprep.subr.bf16.mxu0 %v557
    %3703 = vmatpush1.bf16.msra.mxu0 %v556
    %3704 = vmatprep.subr.bf16.mxu0 %v559
    %3705 = vmatpush1.bf16.msra.mxu0 %v558
    %3706 = vmatprep.subr.bf16.mxu0 %v561
    %3707 = vmatpush1.bf16.msra.mxu0 %v560
    %3708 = vmatprep.subr.bf16.mxu0 %v563
    %3709 = vmatpush1.bf16.msra.mxu0 %v562
    %3710 = vmatprep.subr.bf16.mxu0 %v565
    %3711 = vmatpush1.bf16.msra.mxu0 %v564
    %3712 = vmatprep.subr.bf16.mxu0 %v567
    %3713 = vmatpush1.bf16.msra.mxu0 %v566
    %3714 = vmatprep.subr.bf16.mxu0 %v569
    %3715 = vmatpush1.bf16.msra.mxu0 %v568
    %3716 = vmatprep.subr.bf16.mxu0 %v571
    %3717 = vmatpush1.bf16.msra.mxu0 %v570
    %3718 = vmatprep.subr.bf16.mxu0 %v573
    %3719 = vmatpush1.bf16.msra.mxu0 %v572
    %3720 = vmatprep.subr.bf16.mxu0 %v575
    %3721 = vmatpush1.bf16.msra.mxu0 %v574
    %3722 = vmatprep.subr.bf16.mxu0 %v577
    %3723 = vmatpush1.bf16.msra.mxu0 %v576
    %3724 = vmatprep.subr.bf16.mxu0 %v613
    %3725 = vmatpush1.bf16.msra.mxu0 %v610
    %3726 = vmatprep.subr.bf16.mxu0 0
    %3727 = vmatpush1.bf16.msra.mxu0 0
    %3728 = vmatprep.subr.bf16.mxu0 0
    %3729 = vmatpush1.bf16.msra.mxu0 0
    %3730 = vmatprep.subr.bf16.mxu0 0
    %3731 = vmatpush1.bf16.msra.mxu0 0
    %3732 = vmatprep.mubr.bf16.mxu0 %v3698
    %3733 = vmatmul.mubr.bf16.gmra.mrb[0].mxu0 %v3695
    %v3734 = vpop.f32.mrb[0].mxu0
    %v3735 = vadd.f32 0.0, %v3734
    %v3736 = vpop.f32.mrb[0].mxu0
    %v3737 = vadd.f32 0.0, %v3736
    %v3738 = vpop.f32.mrb[0].mxu0
    %v3739 = vpop.f32.mrb[0].mxu0
    %3740 = vdwg.mxu0
    %v3742 = vsel %vm604, %v3653, 0
    %3744 = vmatprep.subr.bf16.mxu0 %v732
    %3745 = vmatpush1.bf16.msra.mxu0 %v731
    %3746 = vmatprep.subr.bf16.mxu0 %v734
    %3747 = vmatpush1.bf16.msra.mxu0 %v733
    %3748 = vmatprep.subr.bf16.mxu0 %v736
    %3749 = vmatpush1.bf16.msra.mxu0 %v735
    %3750 = vmatprep.subr.bf16.mxu0 %v738
    %3751 = vmatpush1.bf16.msra.mxu0 %v737
    %3752 = vmatprep.subr.bf16.mxu0 %v740
    %3753 = vmatpush1.bf16.msra.mxu0 %v739
    %3754 = vmatprep.subr.bf16.mxu0 %v742
    %3755 = vmatpush1.bf16.msra.mxu0 %v741
    %3756 = vmatprep.subr.bf16.mxu0 %v744
    %3757 = vmatpush1.bf16.msra.mxu0 %v743
    %3758 = vmatprep.subr.bf16.mxu0 %v746
    %3759 = vmatpush1.bf16.msra.mxu0 %v745
    %3760 = vmatprep.subr.bf16.mxu0 %v748
    %3761 = vmatpush1.bf16.msra.mxu0 %v747
    %3762 = vmatprep.subr.bf16.mxu0 %v750
    %3763 = vmatpush1.bf16.msra.mxu0 %v749
    %3764 = vmatprep.subr.bf16.mxu0 %v752
    %3765 = vmatpush1.bf16.msra.mxu0 %v751
    %3766 = vmatprep.subr.bf16.mxu0 %v754
    %3767 = vmatpush1.bf16.msra.mxu0 %v753
    %3768 = vmatprep.subr.bf16.mxu0 %v788
    %3769 = vmatpush1.bf16.msra.mxu0 %v785
    %3770 = vmatprep.subr.bf16.mxu0 0
    %3771 = vmatpush1.bf16.msra.mxu0 0
    %3772 = vmatprep.subr.bf16.mxu0 0
    %3773 = vmatpush1.bf16.msra.mxu0 0
    %3774 = vmatprep.subr.bf16.mxu0 0
    %3775 = vmatpush1.bf16.msra.mxu0 0
    %3776 = vmatprep.mubr.bf16.mxu0 %v3742
    %3777 = vmatmul.mubr.bf16.gmra.mrb[0].mxu0 %v3652
    %v3778 = vpop.f32.mrb[0].mxu0
    %v3779 = vadd.f32 %v3735, %v3778
    %v3780 = vpop.f32.mrb[0].mxu0
    %v3781 = vadd.f32 %v3737, %v3780
    %v3782 = vpop.f32.mrb[0].mxu0
    %v3783 = vpop.f32.mrb[0].mxu0
    %3784 = vdwg.mxu0
    %3785 = vmatprep.subr.bf16.mxu0 %v3610
    %3786 = vmatpush1.bf16.msra.mxu0 %v3609
    %3787 = vmatprep.subr.bf16.mxu0 0
    %3788 = vmatpush1.bf16.msra.mxu0 0
    %3789 = vmatprep.subr.bf16.mxu0 0
    %3790 = vmatpush1.bf16.msra.mxu0 0
    %3791 = vmatprep.subr.bf16.mxu0 0
    %3792 = vmatpush1.bf16.msra.mxu0 0
    %3793 = vmatprep.subr.bf16.mxu0 0
    %3794 = vmatpush1.bf16.msra.mxu0 0
    %3795 = vmatprep.subr.bf16.mxu0 0
    %3796 = vmatpush1.bf16.msra.mxu0 0
    %3797 = vmatprep.subr.bf16.mxu0 0
    %3798 = vmatpush1.bf16.msra.mxu0 0
    %3799 = vmatprep.subr.bf16.mxu0 0
    %3800 = vmatpush1.bf16.msra.mxu0 0
    %3801 = vmatprep.subr.bf16.mxu0 0
    %3802 = vmatpush1.bf16.msra.mxu0 0
    %3803 = vmatprep.subr.bf16.mxu0 0
    %3804 = vmatpush1.bf16.msra.mxu0 0
    %3805 = vmatprep.subr.bf16.mxu0 0
    %3806 = vmatpush1.bf16.msra.mxu0 0
    %3807 = vmatprep.subr.bf16.mxu0 0
    %3808 = vmatpush1.bf16.msra.mxu0 0
    %3809 = vmatprep.subr.bf16.mxu0 0
    %3810 = vmatpush1.bf16.msra.mxu0 0
    %3811 = vmatprep.subr.bf16.mxu0 0
    %3812 = vmatpush1.bf16.msra.mxu0 0
    %3813 = vmatprep.subr.bf16.mxu0 0
    %3814 = vmatpush1.bf16.msra.mxu0 0
    %3815 = vmatprep.subr.bf16.mxu0 0
    %3816 = vmatpush1.bf16.msra.mxu0 0
    %3817 = vmatprep.mubr.bf16.mxu0 0
    %3818 = vmatmul.mubr.bf16.gmra.mrb[0].mxu0 %v834
    %v3819 = vpop.f32.mrb[0].mxu0
    %v3820 = vadd.f32 0.0, %v3819
    %v3821 = vpop.f32.mrb[0].mxu0
    %v3822 = vadd.f32 0.0, %v3821
    %v3823 = vpop.f32.mrb[0].mxu0
    %v3824 = vpop.f32.mrb[0].mxu0
    %3825 = vdwg.mxu0
    %v3826 = vpack.c.bf16 %v3820, %v3820
    %v3827 = vpack.c.bf16 %v3822, %v3822
    %v3829 = vsel %vm604, %v3827, 0
    %3831 = vmatprep.subr.bf16.mxu0 %v981
    %3832 = vmatpush1.bf16.msra.mxu0 %v980
    %3833 = vmatprep.subr.bf16.mxu0 %v983
    %3834 = vmatpush1.bf16.msra.mxu0 %v982
    %3835 = vmatprep.subr.bf16.mxu0 %v985
    %3836 = vmatpush1.bf16.msra.mxu0 %v984
    %3837 = vmatprep.subr.bf16.mxu0 %v987
    %3838 = vmatpush1.bf16.msra.mxu0 %v986
    %3839 = vmatprep.subr.bf16.mxu0 %v989
    %3840 = vmatpush1.bf16.msra.mxu0 %v988
    %3841 = vmatprep.subr.bf16.mxu0 %v991
    %3842 = vmatpush1.bf16.msra.mxu0 %v990
    %3843 = vmatprep.subr.bf16.mxu0 %v993
    %3844 = vmatpush1.bf16.msra.mxu0 %v992
    %3845 = vmatprep.subr.bf16.mxu0 %v995
    %3846 = vmatpush1.bf16.msra.mxu0 %v994
    %3847 = vmatprep.subr.bf16.mxu0 %v997
    %3848 = vmatpush1.bf16.msra.mxu0 %v996
    %3849 = vmatprep.subr.bf16.mxu0 %v999
    %3850 = vmatpush1.bf16.msra.mxu0 %v998
    %3851 = vmatprep.subr.bf16.mxu0 %v1001
    %3852 = vmatpush1.bf16.msra.mxu0 %v1000
    %3853 = vmatprep.subr.bf16.mxu0 %v1003
    %3854 = vmatpush1.bf16.msra.mxu0 %v1002
    %3855 = vmatprep.subr.bf16.mxu0 %v1037
    %3856 = vmatpush1.bf16.msra.mxu0 %v1034
    %3857 = vmatprep.subr.bf16.mxu0 0
    %3858 = vmatpush1.bf16.msra.mxu0 0
    %3859 = vmatprep.subr.bf16.mxu0 0
    %3860 = vmatpush1.bf16.msra.mxu0 0
    %3861 = vmatprep.subr.bf16.mxu0 0
    %3862 = vmatpush1.bf16.msra.mxu0 0
    %3863 = vmatprep.mubr.bf16.mxu0 %v3829
    %3864 = vmatmul.mubr.bf16.gmra.mrb[0].mxu0 %v3826
    %v3865 = vpop.f32.mrb[0].mxu0
    %v3866 = vadd.f32 0.0, %v3865
    %v3867 = vpop.f32.mrb[0].mxu0
    %v3868 = vadd.f32 0.0, %v3867
    %v3869 = vpop.f32.mrb[0].mxu0
    %v3870 = vpop.f32.mrb[0].mxu0
    %3871 = vdwg.mxu0
    %v3872 = vadd.f32 %v3779, %v3866
    %v3873 = vadd.f32 %v3781, %v3868
    %3874 = vmatprep.subr.bf16.mxu0 %v3610
    %3875 = vmatpush1.bf16.msra.mxu0 %v3609
    %3876 = vmatprep.subr.bf16.mxu0 0
    %3877 = vmatpush1.bf16.msra.mxu0 0
    %3878 = vmatprep.subr.bf16.mxu0 0
    %3879 = vmatpush1.bf16.msra.mxu0 0
    %3880 = vmatprep.subr.bf16.mxu0 0
    %3881 = vmatpush1.bf16.msra.mxu0 0
    %3882 = vmatprep.subr.bf16.mxu0 0
    %3883 = vmatpush1.bf16.msra.mxu0 0
    %3884 = vmatprep.subr.bf16.mxu0 0
    %3885 = vmatpush1.bf16.msra.mxu0 0
    %3886 = vmatprep.subr.bf16.mxu0 0
    %3887 = vmatpush1.bf16.msra.mxu0 0
    %3888 = vmatprep.subr.bf16.mxu0 0
    %3889 = vmatpush1.bf16.msra.mxu0 0
    %3890 = vmatprep.subr.bf16.mxu0 0
    %3891 = vmatpush1.bf16.msra.mxu0 0
    %3892 = vmatprep.subr.bf16.mxu0 0
    %3893 = vmatpush1.bf16.msra.mxu0 0
    %3894 = vmatprep.subr.bf16.mxu0 0
    %3895 = vmatpush1.bf16.msra.mxu0 0
    %3896 = vmatprep.subr.bf16.mxu0 0
    %3897 = vmatpush1.bf16.msra.mxu0 0
    %3898 = vmatprep.subr.bf16.mxu0 0
    %3899 = vmatpush1.bf16.msra.mxu0 0
    %3900 = vmatprep.subr.bf16.mxu0 0
    %3901 = vmatpush1.bf16.msra.mxu0 0
    %3902 = vmatprep.subr.bf16.mxu0 0
    %3903 = vmatpush1.bf16.msra.mxu0 0
    %3904 = vmatprep.subr.bf16.mxu0 0
    %3905 = vmatpush1.bf16.msra.mxu0 0
    %3906 = vmatprep.mubr.bf16.mxu0 0
    %3907 = vmatmul.mubr.bf16.gmra.mrb[0].mxu0 %v1085
    %v3908 = vpop.f32.mrb[0].mxu0
    %v3909 = vadd.f32 0.0, %v3908
    %v3910 = vpop.f32.mrb[0].mxu0
    %v3911 = vadd.f32 0.0, %v3910
    %v3912 = vpop.f32.mrb[0].mxu0
    %v3913 = vpop.f32.mrb[0].mxu0
    %3914 = vdwg.mxu0
    %v3915 = vpack.c.bf16 %v3909, %v3909
    %v3916 = vpack.c.bf16 %v3911, %v3911
    %v3918 = vsel %vm604, %v3916, 0
    %3920 = vmatprep.subr.bf16.mxu0 %v1232
    %3921 = vmatpush1.bf16.msra.mxu0 %v1231
    %3922 = vmatprep.subr.bf16.mxu0 %v1234
    %3923 = vmatpush1.bf16.msra.mxu0 %v1233
    %3924 = vmatprep.subr.bf16.mxu0 %v1236
    %3925 = vmatpush1.bf16.msra.mxu0 %v1235
    %3926 = vmatprep.subr.bf16.mxu0 %v1238
    %3927 = vmatpush1.bf16.msra.mxu0 %v1237
    %3928 = vmatprep.subr.bf16.mxu0 %v1240
    %3929 = vmatpush1.bf16.msra.mxu0 %v1239
    %3930 = vmatprep.subr.bf16.mxu0 %v1242
    %3931 = vmatpush1.bf16.msra.mxu0 %v1241
    %3932 = vmatprep.subr.bf16.mxu0 %v1244
    %3933 = vmatpush1.bf16.msra.mxu0 %v1243
    %3934 = vmatprep.subr.bf16.mxu0 %v1246
    %3935 = vmatpush1.bf16.msra.mxu0 %v1245
    %3936 = vmatprep.subr.bf16.mxu0 %v1248
    %3937 = vmatpush1.bf16.msra.mxu0 %v1247
    %3938 = vmatprep.subr.bf16.mxu0 %v1250
    %3939 = vmatpush1.bf16.msra.mxu0 %v1249
    %3940 = vmatprep.subr.bf16.mxu0 %v1252
    %3941 = vmatpush1.bf16.msra.mxu0 %v1251
    %3942 = vmatprep.subr.bf16.mxu0 %v1254
    %3943 = vmatpush1.bf16.msra.mxu0 %v1253
    %3944 = vmatprep.subr.bf16.mxu0 %v1288
    %3945 = vmatpush1.bf16.msra.mxu0 %v1285
    %3946 = vmatprep.subr.bf16.mxu0 0
    %3947 = vmatpush1.bf16.msra.mxu0 0
    %3948 = vmatprep.subr.bf16.mxu0 0
    %3949 = vmatpush1.bf16.msra.mxu0 0
    %3950 = vmatprep.subr.bf16.mxu0 0
    %3951 = vmatpush1.bf16.msra.mxu0 0
    %3952 = vmatprep.mubr.bf16.mxu0 %v3918
    %3953 = vmatmul.mubr.bf16.gmra.mrb[0].mxu0 %v3915
    %v3954 = vpop.f32.mrb[0].mxu0
    %v3955 = vadd.f32 0.0, %v3954
    %v3956 = vpop.f32.mrb[0].mxu0
    %v3957 = vadd.f32 0.0, %v3956
    %v3958 = vpop.f32.mrb[0].mxu0
    %v3959 = vpop.f32.mrb[0].mxu0
    %3960 = vdwg.mxu0
    %v3961 = vadd.f32 %v3872, %v3955
    %v3962 = vadd.f32 %v3873, %v3957
    %3963 = vmatprep.subr.bf16.mxu0 %v3610
    %3964 = vmatpush1.bf16.msra.mxu0 %v3609
    %3965 = vmatprep.subr.bf16.mxu0 0
    %3966 = vmatpush1.bf16.msra.mxu0 0
    %3967 = vmatprep.subr.bf16.mxu0 0
    %3968 = vmatpush1.bf16.msra.mxu0 0
    %3969 = vmatprep.subr.bf16.mxu0 0
    %3970 = vmatpush1.bf16.msra.mxu0 0
    %3971 = vmatprep.subr.bf16.mxu0 0
    %3972 = vmatpush1.bf16.msra.mxu0 0
    %3973 = vmatprep.subr.bf16.mxu0 0
    %3974 = vmatpush1.bf16.msra.mxu0 0
    %3975 = vmatprep.subr.bf16.mxu0 0
    %3976 = vmatpush1.bf16.msra.mxu0 0
    %3977 = vmatprep.subr.bf16.mxu0 0
    %3978 = vmatpush1.bf16.msra.mxu0 0
    %3979 = vmatprep.subr.bf16.mxu0 0
    %3980 = vmatpush1.bf16.msra.mxu0 0
    %3981 = vmatprep.subr.bf16.mxu0 0
    %3982 = vmatpush1.bf16.msra.mxu0 0
    %3983 = vmatprep.subr.bf16.mxu0 0
    %3984 = vmatpush1.bf16.msra.mxu0 0
    %3985 = vmatprep.subr.bf16.mxu0 0
    %3986 = vmatpush1.bf16.msra.mxu0 0
    %3987 = vmatprep.subr.bf16.mxu0 0
    %3988 = vmatpush1.bf16.msra.mxu0 0
    %3989 = vmatprep.subr.bf16.mxu0 0
    %3990 = vmatpush1.bf16.msra.mxu0 0
    %3991 = vmatprep.subr.bf16.mxu0 0
    %3992 = vmatpush1.bf16.msra.mxu0 0
    %3993 = vmatprep.subr.bf16.mxu0 0
    %3994 = vmatpush1.bf16.msra.mxu0 0
    %3995 = vmatprep.mubr.bf16.mxu0 0
    %3996 = vmatmul.mubr.bf16.gmra.mrb[0].mxu0 %v1336
    %v3997 = vpop.f32.mrb[0].mxu0
    %v3998 = vadd.f32 0.0, %v3997
    %v3999 = vpop.f32.mrb[0].mxu0
    %v4000 = vadd.f32 0.0, %v3999
    %v4001 = vpop.f32.mrb[0].mxu0
    %v4002 = vpop.f32.mrb[0].mxu0
    %4003 = vdwg.mxu0
    %v4004 = vpack.c.bf16 %v3998, %v3998
    %v4005 = vpack.c.bf16 %v4000, %v4000
    %v4007 = vsel %vm604, %v4005, 0
    %4009 = vmatprep.subr.bf16.mxu0 %v1483
    %4010 = vmatpush1.bf16.msra.mxu0 %v1482
    %4011 = vmatprep.subr.bf16.mxu0 %v1485
    %4012 = vmatpush1.bf16.msra.mxu0 %v1484
    %4013 = vmatprep.subr.bf16.mxu0 %v1487
    %4014 = vmatpush1.bf16.msra.mxu0 %v1486
    %4015 = vmatprep.subr.bf16.mxu0 %v1489
    %4016 = vmatpush1.bf16.msra.mxu0 %v1488
    %4017 = vmatprep.subr.bf16.mxu0 %v1491
    %4018 = vmatpush1.bf16.msra.mxu0 %v1490
    %4019 = vmatprep.subr.bf16.mxu0 %v1493
    %4020 = vmatpush1.bf16.msra.mxu0 %v1492
    %4021 = vmatprep.subr.bf16.mxu0 %v1495
    %4022 = vmatpush1.bf16.msra.mxu0 %v1494
    %4023 = vmatprep.subr.bf16.mxu0 %v1497
    %4024 = vmatpush1.bf16.msra.mxu0 %v1496
    %4025 = vmatprep.subr.bf16.mxu0 %v1499
    %4026 = vmatpush1.bf16.msra.mxu0 %v1498
    %4027 = vmatprep.subr.bf16.mxu0 %v1501
    %4028 = vmatpush1.bf16.msra.mxu0 %v1500
    %4029 = vmatprep.subr.bf16.mxu0 %v1503
    %4030 = vmatpush1.bf16.msra.mxu0 %v1502
    %4031 = vmatprep.subr.bf16.mxu0 %v1505
    %4032 = vmatpush1.bf16.msra.mxu0 %v1504
    %4033 = vmatprep.subr.bf16.mxu0 %v1539
    %4034 = vmatpush1.bf16.msra.mxu0 %v1536
    %4035 = vmatprep.subr.bf16.mxu0 0
    %4036 = vmatpush1.bf16.msra.mxu0 0
    %4037 = vmatprep.subr.bf16.mxu0 0
    %4038 = vmatpush1.bf16.msra.mxu0 0
    %4039 = vmatprep.subr.bf16.mxu0 0
    %4040 = vmatpush1.bf16.msra.mxu0 0
    %4041 = vmatprep.mubr.bf16.mxu0 %v4007
    %4042 = vmatmul.mubr.bf16.gmra.mrb[0].mxu0 %v4004
    %v4043 = vpop.f32.mrb[0].mxu0
    %v4044 = vadd.f32 0.0, %v4043
    %v4045 = vpop.f32.mrb[0].mxu0
    %v4046 = vadd.f32 0.0, %v4045
    %v4047 = vpop.f32.mrb[0].mxu0
    %v4048 = vpop.f32.mrb[0].mxu0
    %4049 = vdwg.mxu0
    %v4050 = vadd.f32 %v3961, %v4044
    %v4051 = vadd.f32 %v3962, %v4046
    %4052 = vmatprep.subr.bf16.mxu0 %v3610
    %4053 = vmatpush1.bf16.msra.mxu0 %v3609
    %4054 = vmatprep.subr.bf16.mxu0 0
    %4055 = vmatpush1.bf16.msra.mxu0 0
    %4056 = vmatprep.subr.bf16.mxu0 0
    %4057 = vmatpush1.bf16.msra.mxu0 0
    %4058 = vmatprep.subr.bf16.mxu0 0
    %4059 = vmatpush1.bf16.msra.mxu0 0
    %4060 = vmatprep.subr.bf16.mxu0 0
    %4061 = vmatpush1.bf16.msra.mxu0 0
    %4062 = vmatprep.subr.bf16.mxu0 0
    %4063 = vmatpush1.bf16.msra.mxu0 0
    %4064 = vmatprep.subr.bf16.mxu0 0
    %4065 = vmatpush1.bf16.msra.mxu0 0
    %4066 = vmatprep.subr.bf16.mxu0 0
    %4067 = vmatpush1.bf16.msra.mxu0 0
    %4068 = vmatprep.subr.bf16.mxu0 0
    %4069 = vmatpush1.bf16.msra.mxu0 0
    %4070 = vmatprep.subr.bf16.mxu0 0
    %4071 = vmatpush1.bf16.msra.mxu0 0
    %4072 = vmatprep.subr.bf16.mxu0 0
    %4073 = vmatpush1.bf16.msra.mxu0 0
    %4074 = vmatprep.subr.bf16.mxu0 0
    %4075 = vmatpush1.bf16.msra.mxu0 0
    %4076 = vmatprep.subr.bf16.mxu0 0
    %4077 = vmatpush1.bf16.msra.mxu0 0
    %4078 = vmatprep.subr.bf16.mxu0 0
    %4079 = vmatpush1.bf16.msra.mxu0 0
    %4080 = vmatprep.subr.bf16.mxu0 0
    %4081 = vmatpush1.bf16.msra.mxu0 0
    %4082 = vmatprep.subr.bf16.mxu0 0
    %4083 = vmatpush1.bf16.msra.mxu0 0
    %4084 = vmatprep.mubr.bf16.mxu0 0
    %4085 = vmatmul.mubr.bf16.gmra.mrb[0].mxu0 %v1587
    %v4086 = vpop.f32.mrb[0].mxu0
    %v4087 = vadd.f32 0.0, %v4086
    %v4088 = vpop.f32.mrb[0].mxu0
    %v4089 = vadd.f32 0.0, %v4088
    %v4090 = vpop.f32.mrb[0].mxu0
    %v4091 = vpop.f32.mrb[0].mxu0
    %4092 = vdwg.mxu0
    %v4093 = vpack.c.bf16 %v4087, %v4087
    %v4094 = vpack.c.bf16 %v4089, %v4089
    %v4096 = vsel %vm604, %v4094, 0
    %4098 = vmatprep.subr.bf16.mxu0 %v1734
    %4099 = vmatpush1.bf16.msra.mxu0 %v1733
    %4100 = vmatprep.subr.bf16.mxu0 %v1736
    %4101 = vmatpush1.bf16.msra.mxu0 %v1735
    %4102 = vmatprep.subr.bf16.mxu0 %v1738
    %4103 = vmatpush1.bf16.msra.mxu0 %v1737
    %4104 = vmatprep.subr.bf16.mxu0 %v1740
    %4105 = vmatpush1.bf16.msra.mxu0 %v1739
    %4106 = vmatprep.subr.bf16.mxu0 %v1742
    %4107 = vmatpush1.bf16.msra.mxu0 %v1741
    %4108 = vmatprep.subr.bf16.mxu0 %v1744
    %4109 = vmatpush1.bf16.msra.mxu0 %v1743
    %4110 = vmatprep.subr.bf16.mxu0 %v1746
    %4111 = vmatpush1.bf16.msra.mxu0 %v1745
    %4112 = vmatprep.subr.bf16.mxu0 %v1748
    %4113 = vmatpush1.bf16.msra.mxu0 %v1747
    %4114 = vmatprep.subr.bf16.mxu0 %v1750
    %4115 = vmatpush1.bf16.msra.mxu0 %v1749
    %4116 = vmatprep.subr.bf16.mxu0 %v1752
    %4117 = vmatpush1.bf16.msra.mxu0 %v1751
    %4118 = vmatprep.subr.bf16.mxu0 %v1754
    %4119 = vmatpush1.bf16.msra.mxu0 %v1753
    %4120 = vmatprep.subr.bf16.mxu0 %v1756
    %4121 = vmatpush1.bf16.msra.mxu0 %v1755
    %4122 = vmatprep.subr.bf16.mxu0 %v1790
    %4123 = vmatpush1.bf16.msra.mxu0 %v1787
    %4124 = vmatprep.subr.bf16.mxu0 0
    %4125 = vmatpush1.bf16.msra.mxu0 0
    %4126 = vmatprep.subr.bf16.mxu0 0
    %4127 = vmatpush1.bf16.msra.mxu0 0
    %4128 = vmatprep.subr.bf16.mxu0 0
    %4129 = vmatpush1.bf16.msra.mxu0 0
    %4130 = vmatprep.mubr.bf16.mxu0 %v4096
    %4131 = vmatmul.mubr.bf16.gmra.mrb[0].mxu0 %v4093
    %v4132 = vpop.f32.mrb[0].mxu0
    %v4133 = vadd.f32 0.0, %v4132
    %v4134 = vpop.f32.mrb[0].mxu0
    %v4135 = vadd.f32 0.0, %v4134
    %v4136 = vpop.f32.mrb[0].mxu0
    %v4137 = vpop.f32.mrb[0].mxu0
    %4138 = vdwg.mxu0
    %v4139 = vadd.f32 %v4050, %v4133
    %v4140 = vadd.f32 %v4051, %v4135
    %4141 = vmatprep.subr.bf16.mxu0 %v3610
    %4142 = vmatpush1.bf16.msra.mxu0 %v3609
    %4143 = vmatprep.subr.bf16.mxu0 0
    %4144 = vmatpush1.bf16.msra.mxu0 0
    %4145 = vmatprep.subr.bf16.mxu0 0
    %4146 = vmatpush1.bf16.msra.mxu0 0
    %4147 = vmatprep.subr.bf16.mxu0 0
    %4148 = vmatpush1.bf16.msra.mxu0 0
    %4149 = vmatprep.subr.bf16.mxu0 0
    %4150 = vmatpush1.bf16.msra.mxu0 0
    %4151 = vmatprep.subr.bf16.mxu0 0
    %4152 = vmatpush1.bf16.msra.mxu0 0
    %4153 = vmatprep.subr.bf16.mxu0 0
    %4154 = vmatpush1.bf16.msra.mxu0 0
    %4155 = vmatprep.subr.bf16.mxu0 0
    %4156 = vmatpush1.bf16.msra.mxu0 0
    %4157 = vmatprep.subr.bf16.mxu0 0
    %4158 = vmatpush1.bf16.msra.mxu0 0
    %4159 = vmatprep.subr.bf16.mxu0 0
    %4160 = vmatpush1.bf16.msra.mxu0 0
    %4161 = vmatprep.subr.bf16.mxu0 0
    %4162 = vmatpush1.bf16.msra.mxu0 0
    %4163 = vmatprep.subr.bf16.mxu0 0
    %4164 = vmatpush1.bf16.msra.mxu0 0
    %4165 = vmatprep.subr.bf16.mxu0 0
    %4166 = vmatpush1.bf16.msra.mxu0 0
    %4167 = vmatprep.subr.bf16.mxu0 0
    %4168 = vmatpush1.bf16.msra.mxu0 0
    %4169 = vmatprep.subr.bf16.mxu0 0
    %4170 = vmatpush1.bf16.msra.mxu0 0
    %4171 = vmatprep.subr.bf16.mxu0 0
    %4172 = vmatpush1.bf16.msra.mxu0 0
    %4173 = vmatprep.mubr.bf16.mxu0 0
    %4174 = vmatmul.mubr.bf16.gmra.mrb[0].mxu0 %v1838
    %v4175 = vpop.f32.mrb[0].mxu0
    %v4176 = vadd.f32 0.0, %v4175
    %v4177 = vpop.f32.mrb[0].mxu0
    %v4178 = vadd.f32 0.0, %v4177
    %v4179 = vpop.f32.mrb[0].mxu0
    %v4180 = vpop.f32.mrb[0].mxu0
    %4181 = vdwg.mxu0
    %v4182 = vpack.c.bf16 %v4176, %v4176
    %v4183 = vpack.c.bf16 %v4178, %v4178
    %v4185 = vsel %vm604, %v4183, 0
    %4187 = vmatprep.subr.bf16.mxu0 %v1985
    %4188 = vmatpush1.bf16.msra.mxu0 %v1984
    %4189 = vmatprep.subr.bf16.mxu0 %v1987
    %4190 = vmatpush1.bf16.msra.mxu0 %v1986
    %4191 = vmatprep.subr.bf16.mxu0 %v1989
    %4192 = vmatpush1.bf16.msra.mxu0 %v1988
    %4193 = vmatprep.subr.bf16.mxu0 %v1991
    %4194 = vmatpush1.bf16.msra.mxu0 %v1990
    %4195 = vmatprep.subr.bf16.mxu0 %v1993
    %4196 = vmatpush1.bf16.msra.mxu0 %v1992
    %4197 = vmatprep.subr.bf16.mxu0 %v1995
    %4198 = vmatpush1.bf16.msra.mxu0 %v1994
    %4199 = vmatprep.subr.bf16.mxu0 %v1997
    %4200 = vmatpush1.bf16.msra.mxu0 %v1996
    %4201 = vmatprep.subr.bf16.mxu0 %v1999
    %4202 = vmatpush1.bf16.msra.mxu0 %v1998
    %4203 = vmatprep.subr.bf16.mxu0 %v2001
    %4204 = vmatpush1.bf16.msra.mxu0 %v2000
    %4205 = vmatprep.subr.bf16.mxu0 %v2003
    %4206 = vmatpush1.bf16.msra.mxu0 %v2002
    %4207 = vmatprep.subr.bf16.mxu0 %v2005
    %4208 = vmatpush1.bf16.msra.mxu0 %v2004
    %4209 = vmatprep.subr.bf16.mxu0 %v2007
    %4210 = vmatpush1.bf16.msra.mxu0 %v2006
    %4211 = vmatprep.subr.bf16.mxu0 %v2041
    %4212 = vmatpush1.bf16.msra.mxu0 %v2038
    %4213 = vmatprep.subr.bf16.mxu0 0
    %4214 = vmatpush1.bf16.msra.mxu0 0
    %4215 = vmatprep.subr.bf16.mxu0 0
    %4216 = vmatpush1.bf16.msra.mxu0 0
    %4217 = vmatprep.subr.bf16.mxu0 0
    %4218 = vmatpush1.bf16.msra.mxu0 0
    %4219 = vmatprep.mubr.bf16.mxu0 %v4185
    %4220 = vmatmul.mubr.bf16.gmra.mrb[0].mxu0 %v4182
    %v4221 = vpop.f32.mrb[0].mxu0
    %v4222 = vadd.f32 0.0, %v4221
    %v4223 = vpop.f32.mrb[0].mxu0
    %v4224 = vadd.f32 0.0, %v4223
    %v4225 = vpop.f32.mrb[0].mxu0
    %v4226 = vpop.f32.mrb[0].mxu0
    %4227 = vdwg.mxu0
    %v4228 = vadd.f32 %v4139, %v4222
    %v4229 = vadd.f32 %v4140, %v4224
    %4230 = vmatprep.subr.bf16.mxu0 %v3610
    %4231 = vmatpush1.bf16.msra.mxu0 %v3609
    %4232 = vmatprep.subr.bf16.mxu0 0
    %4233 = vmatpush1.bf16.msra.mxu0 0
    %4234 = vmatprep.subr.bf16.mxu0 0
    %4235 = vmatpush1.bf16.msra.mxu0 0
    %4236 = vmatprep.subr.bf16.mxu0 0
    %4237 = vmatpush1.bf16.msra.mxu0 0
    %4238 = vmatprep.subr.bf16.mxu0 0
    %4239 = vmatpush1.bf16.msra.mxu0 0
    %4240 = vmatprep.subr.bf16.mxu0 0
    %4241 = vmatpush1.bf16.msra.mxu0 0
    %4242 = vmatprep.subr.bf16.mxu0 0
    %4243 = vmatpush1.bf16.msra.mxu0 0
    %4244 = vmatprep.subr.bf16.mxu0 0
    %4245 = vmatpush1.bf16.msra.mxu0 0
    %4246 = vmatprep.subr.bf16.mxu0 0
    %4247 = vmatpush1.bf16.msra.mxu0 0
    %4248 = vmatprep.subr.bf16.mxu0 0
    %4249 = vmatpush1.bf16.msra.mxu0 0
    %4250 = vmatprep.subr.bf16.mxu0 0
    %4251 = vmatpush1.bf16.msra.mxu0 0
    %4252 = vmatprep.subr.bf16.mxu0 0
    %4253 = vmatpush1.bf16.msra.mxu0 0
    %4254 = vmatprep.subr.bf16.mxu0 0
    %4255 = vmatpush1.bf16.msra.mxu0 0
    %4256 = vmatprep.subr.bf16.mxu0 0
    %4257 = vmatpush1.bf16.msra.mxu0 0
    %4258 = vmatprep.subr.bf16.mxu0 0
    %4259 = vmatpush1.bf16.msra.mxu0 0
    %4260 = vmatprep.subr.bf16.mxu0 0
    %4261 = vmatpush1.bf16.msra.mxu0 0
    %4262 = vmatprep.mubr.bf16.mxu0 0
    %4263 = vmatmul.mubr.bf16.gmra.mrb[0].mxu0 %v2089
    %v4264 = vpop.f32.mrb[0].mxu0
    %v4265 = vadd.f32 0.0, %v4264
    %v4266 = vpop.f32.mrb[0].mxu0
    %v4267 = vadd.f32 0.0, %v4266
    %v4268 = vpop.f32.mrb[0].mxu0
    %v4269 = vpop.f32.mrb[0].mxu0
    %4270 = vdwg.mxu0
    %v4271 = vpack.c.bf16 %v4265, %v4265
    %v4272 = vpack.c.bf16 %v4267, %v4267
    %v4274 = vsel %vm604, %v4272, 0
    %4276 = vmatprep.subr.bf16.mxu0 %v2236
    %4277 = vmatpush1.bf16.msra.mxu0 %v2235
    %4278 = vmatprep.subr.bf16.mxu0 %v2238
    %4279 = vmatpush1.bf16.msra.mxu0 %v2237
    %4280 = vmatprep.subr.bf16.mxu0 %v2240
    %4281 = vmatpush1.bf16.msra.mxu0 %v2239
    %4282 = vmatprep.subr.bf16.mxu0 %v2242
    %4283 = vmatpush1.bf16.msra.mxu0 %v2241
    %4284 = vmatprep.subr.bf16.mxu0 %v2244
    %4285 = vmatpush1.bf16.msra.mxu0 %v2243
    %4286 = vmatprep.subr.bf16.mxu0 %v2246
    %4287 = vmatpush1.bf16.msra.mxu0 %v2245
    %4288 = vmatprep.subr.bf16.mxu0 %v2248
    %4289 = vmatpush1.bf16.msra.mxu0 %v2247
    %4290 = vmatprep.subr.bf16.mxu0 %v2250
    %4291 = vmatpush1.bf16.msra.mxu0 %v2249
    %4292 = vmatprep.subr.bf16.mxu0 %v2252
    %4293 = vmatpush1.bf16.msra.mxu0 %v2251
    %4294 = vmatprep.subr.bf16.mxu0 %v2254
    %4295 = vmatpush1.bf16.msra.mxu0 %v2253
    %4296 = vmatprep.subr.bf16.mxu0 %v2256
    %4297 = vmatpush1.bf16.msra.mxu0 %v2255
    %4298 = vmatprep.subr.bf16.mxu0 %v2258
    %4299 = vmatpush1.bf16.msra.mxu0 %v2257
    %4300 = vmatprep.subr.bf16.mxu0 %v2292
    %4301 = vmatpush1.bf16.msra.mxu0 %v2289
    %4302 = vmatprep.subr.bf16.mxu0 0
    %4303 = vmatpush1.bf16.msra.mxu0 0
    %4304 = vmatprep.subr.bf16.mxu0 0
    %4305 = vmatpush1.bf16.msra.mxu0 0
    %4306 = vmatprep.subr.bf16.mxu0 0
    %4307 = vmatpush1.bf16.msra.mxu0 0
    %4308 = vmatprep.mubr.bf16.mxu0 %v4274
    %4309 = vmatmul.mubr.bf16.gmra.mrb[0].mxu0 %v4271
    %v4310 = vpop.f32.mrb[0].mxu0
    %v4311 = vadd.f32 0.0, %v4310
    %v4312 = vpop.f32.mrb[0].mxu0
    %v4313 = vadd.f32 0.0, %v4312
    %v4314 = vpop.f32.mrb[0].mxu0
    %v4315 = vpop.f32.mrb[0].mxu0
    %4316 = vdwg.mxu0
    %v4317 = vadd.f32 %v4228, %v4311
    %v4318 = vadd.f32 %v4229, %v4313
    %4319 = vmatprep.subr.bf16.mxu0 %v3610
    %4320 = vmatpush1.bf16.msra.mxu0 %v3609
    %4321 = vmatprep.subr.bf16.mxu0 0
    %4322 = vmatpush1.bf16.msra.mxu0 0
    %4323 = vmatprep.subr.bf16.mxu0 0
    %4324 = vmatpush1.bf16.msra.mxu0 0
    %4325 = vmatprep.subr.bf16.mxu0 0
    %4326 = vmatpush1.bf16.msra.mxu0 0
    %4327 = vmatprep.subr.bf16.mxu0 0
    %4328 = vmatpush1.bf16.msra.mxu0 0
    %4329 = vmatprep.subr.bf16.mxu0 0
    %4330 = vmatpush1.bf16.msra.mxu0 0
    %4331 = vmatprep.subr.bf16.mxu0 0
    %4332 = vmatpush1.bf16.msra.mxu0 0
    %4333 = vmatprep.subr.bf16.mxu0 0
    %4334 = vmatpush1.bf16.msra.mxu0 0
    %4335 = vmatprep.subr.bf16.mxu0 0
    %4336 = vmatpush1.bf16.msra.mxu0 0
    %4337 = vmatprep.subr.bf16.mxu0 0
    %4338 = vmatpush1.bf16.msra.mxu0 0
    %4339 = vmatprep.subr.bf16.mxu0 0
    %4340 = vmatpush1.bf16.msra.mxu0 0
    %4341 = vmatprep.subr.bf16.mxu0 0
    %4342 = vmatpush1.bf16.msra.mxu0 0
    %4343 = vmatprep.subr.bf16.mxu0 0
    %4344 = vmatpush1.bf16.msra.mxu0 0
    %4345 = vmatprep.subr.bf16.mxu0 0
    %4346 = vmatpush1.bf16.msra.mxu0 0
    %4347 = vmatprep.subr.bf16.mxu0 0
    %4348 = vmatpush1.bf16.msra.mxu0 0
    %4349 = vmatprep.subr.bf16.mxu0 0
    %4350 = vmatpush1.bf16.msra.mxu0 0
    %4351 = vmatprep.mubr.bf16.mxu0 0
    %4352 = vmatmul.mubr.bf16.gmra.mrb[0].mxu0 %v2340
    %v4353 = vpop.f32.mrb[0].mxu0
    %v4354 = vadd.f32 0.0, %v4353
    %v4355 = vpop.f32.mrb[0].mxu0
    %v4356 = vadd.f32 0.0, %v4355
    %v4357 = vpop.f32.mrb[0].mxu0
    %v4358 = vpop.f32.mrb[0].mxu0
    %4359 = vdwg.mxu0
    %v4360 = vpack.c.bf16 %v4354, %v4354
    %v4361 = vpack.c.bf16 %v4356, %v4356
    %v4363 = vsel %vm604, %v4361, 0
    %4365 = vmatprep.subr.bf16.mxu0 %v2487
    %4366 = vmatpush1.bf16.msra.mxu0 %v2486
    %4367 = vmatprep.subr.bf16.mxu0 %v2489
    %4368 = vmatpush1.bf16.msra.mxu0 %v2488
    %4369 = vmatprep.subr.bf16.mxu0 %v2491
    %4370 = vmatpush1.bf16.msra.mxu0 %v2490
    %4371 = vmatprep.subr.bf16.mxu0 %v2493
    %4372 = vmatpush1.bf16.msra.mxu0 %v2492
    %4373 = vmatprep.subr.bf16.mxu0 %v2495
    %4374 = vmatpush1.bf16.msra.mxu0 %v2494
    %4375 = vmatprep.subr.bf16.mxu0 %v2497
    %4376 = vmatpush1.bf16.msra.mxu0 %v2496
    %4377 = vmatprep.subr.bf16.mxu0 %v2499
    %4378 = vmatpush1.bf16.msra.mxu0 %v2498
    %4379 = vmatprep.subr.bf16.mxu0 %v2501
    %4380 = vmatpush1.bf16.msra.mxu0 %v2500
    %4381 = vmatprep.subr.bf16.mxu0 %v2503
    %4382 = vmatpush1.bf16.msra.mxu0 %v2502
    %4383 = vmatprep.subr.bf16.mxu0 %v2505
    %4384 = vmatpush1.bf16.msra.mxu0 %v2504
    %4385 = vmatprep.subr.bf16.mxu0 %v2507
    %4386 = vmatpush1.bf16.msra.mxu0 %v2506
    %4387 = vmatprep.subr.bf16.mxu0 %v2509
    %4388 = vmatpush1.bf16.msra.mxu0 %v2508
    %4389 = vmatprep.subr.bf16.mxu0 %v2543
    %4390 = vmatpush1.bf16.msra.mxu0 %v2540
    %4391 = vmatprep.subr.bf16.mxu0 0
    %4392 = vmatpush1.bf16.msra.mxu0 0
    %4393 = vmatprep.subr.bf16.mxu0 0
    %4394 = vmatpush1.bf16.msra.mxu0 0
    %4395 = vmatprep.subr.bf16.mxu0 0
    %4396 = vmatpush1.bf16.msra.mxu0 0
    %4397 = vmatprep.mubr.bf16.mxu0 %v4363
    %4398 = vmatmul.mubr.bf16.gmra.mrb[0].mxu0 %v4360
    %v4399 = vpop.f32.mrb[0].mxu0
    %v4400 = vadd.f32 0.0, %v4399
    %v4401 = vpop.f32.mrb[0].mxu0
    %v4402 = vadd.f32 0.0, %v4401
    %v4403 = vpop.f32.mrb[0].mxu0
    %v4404 = vpop.f32.mrb[0].mxu0
    %4405 = vdwg.mxu0
    %v4406 = vadd.f32 %v4317, %v4400
    %v4407 = vadd.f32 %v4318, %v4402
    %v4408 = vadd.f32 %v4406, %v2591
    %v4409 = vadd.f32 %v4407, %v2591
    %v4410 = vmax.f32 %v4408, 0.0
    %v4411 = vmax.f32 %v4409, 0.0
    %v4412 = vpack.c.bf16 %v4410, %v4410
    %v4413 = vpack.c.bf16 %v4411, %v4411
    %v4415 = vsel %vm604, %v4413, 0
    %4417 = vmatprep.subr.bf16.mxu0 %v2700
    %4418 = vmatpush1.bf16.msra.mxu0 %v2699
    %4419 = vmatprep.subr.bf16.mxu0 %v2702
    %4420 = vmatpush1.bf16.msra.mxu0 %v2701
    %4421 = vmatprep.subr.bf16.mxu0 %v2704
    %4422 = vmatpush1.bf16.msra.mxu0 %v2703
    %4423 = vmatprep.subr.bf16.mxu0 %v2706
    %4424 = vmatpush1.bf16.msra.mxu0 %v2705
    %4425 = vmatprep.subr.bf16.mxu0 %v2708
    %4426 = vmatpush1.bf16.msra.mxu0 %v2707
    %4427 = vmatprep.subr.bf16.mxu0 %v2710
    %4428 = vmatpush1.bf16.msra.mxu0 %v2709
    %4429 = vmatprep.subr.bf16.mxu0 %v2712
    %4430 = vmatpush1.bf16.msra.mxu0 %v2711
    %4431 = vmatprep.subr.bf16.mxu0 %v2714
    %4432 = vmatpush1.bf16.msra.mxu0 %v2713
    %4433 = vmatprep.subr.bf16.mxu0 %v2716
    %4434 = vmatpush1.bf16.msra.mxu0 %v2715
    %4435 = vmatprep.subr.bf16.mxu0 %v2718
    %4436 = vmatpush1.bf16.msra.mxu0 %v2717
    %4437 = vmatprep.subr.bf16.mxu0 %v2720
    %4438 = vmatpush1.bf16.msra.mxu0 %v2719
    %4439 = vmatprep.subr.bf16.mxu0 %v2722
    %4440 = vmatpush1.bf16.msra.mxu0 %v2721
    %4441 = vmatprep.subr.bf16.mxu0 %v2756
    %4442 = vmatpush1.bf16.msra.mxu0 %v2753
    %4443 = vmatprep.subr.bf16.mxu0 0
    %4444 = vmatpush1.bf16.msra.mxu0 0
    %4445 = vmatprep.subr.bf16.mxu0 0
    %4446 = vmatpush1.bf16.msra.mxu0 0
    %4447 = vmatprep.subr.bf16.mxu0 0
    %4448 = vmatpush1.bf16.msra.mxu0 0
    %4449 = vmatprep.mubr.bf16.mxu0 %v4415
    %4450 = vmatmul.mubr.bf16.gmra.mrb[0].mxu0 %v4412
    %v4451 = vpop.f32.mrb[0].mxu0
    %v4452 = vadd.f32 0.0, %v4451
    %v4453 = vpop.f32.mrb[0].mxu0
    %v4454 = vadd.f32 0.0, %v4453
    %v4455 = vpop.f32.mrb[0].mxu0
    %v4456 = vpop.f32.mrb[0].mxu0
    %4457 = vdwg.mxu0
    %v4458 = vmax.f32 %v4410, %v4452
    %v4459 = vmax.f32 %v4411, %v4454
    %4460 = vmatprep.subr.bf16.mxu0 %v2903
    %4461 = vmatpush1.bf16.msra.mxu0 %v2902
    %4462 = vmatprep.subr.bf16.mxu0 %v2905
    %4463 = vmatpush1.bf16.msra.mxu0 %v2904
    %4464 = vmatprep.subr.bf16.mxu0 %v2907
    %4465 = vmatpush1.bf16.msra.mxu0 %v2906
    %4466 = vmatprep.subr.bf16.mxu0 %v2909
    %4467 = vmatpush1.bf16.msra.mxu0 %v2908
    %4468 = vmatprep.subr.bf16.mxu0 %v2911
    %4469 = vmatpush1.bf16.msra.mxu0 %v2910
    %4470 = vmatprep.subr.bf16.mxu0 %v2913
    %4471 = vmatpush1.bf16.msra.mxu0 %v2912
    %4472 = vmatprep.subr.bf16.mxu0 %v2915
    %4473 = vmatpush1.bf16.msra.mxu0 %v2914
    %4474 = vmatprep.subr.bf16.mxu0 %v2917
    %4475 = vmatpush1.bf16.msra.mxu0 %v2916
    %4476 = vmatprep.subr.bf16.mxu0 %v2919
    %4477 = vmatpush1.bf16.msra.mxu0 %v2918
    %4478 = vmatprep.subr.bf16.mxu0 %v2921
    %4479 = vmatpush1.bf16.msra.mxu0 %v2920
    %4480 = vmatprep.subr.bf16.mxu0 %v2923
    %4481 = vmatpush1.bf16.msra.mxu0 %v2922
    %4482 = vmatprep.subr.bf16.mxu0 %v2925
    %4483 = vmatpush1.bf16.msra.mxu0 %v2924
    %4484 = vmatprep.subr.bf16.mxu0 %v2956
    %4485 = vmatpush1.bf16.msra.mxu0 %v2953
    %4486 = vmatprep.subr.bf16.mxu0 0
    %4487 = vmatpush1.bf16.msra.mxu0 0
    %4488 = vmatprep.subr.bf16.mxu0 0
    %4489 = vmatpush1.bf16.msra.mxu0 0
    %4490 = vmatprep.subr.bf16.mxu0 0
    %4491 = vmatpush1.bf16.msra.mxu0 0
    %4492 = vmatprep.mubr.bf16.mxu0 %v4415
    %4493 = vmatmul.mubr.bf16.gmra.mrb[0].mxu0 %v4412
    %v4494 = vpop.f32.mrb[0].mxu0
    %v4495 = vadd.f32 0.0, %v4494
    %v4496 = vpop.f32.mrb[0].mxu0
    %v4497 = vadd.f32 0.0, %v4496
    %v4498 = vpop.f32.mrb[0].mxu0
    %v4499 = vpop.f32.mrb[0].mxu0
    %4500 = vdwg.mxu0
    %v4501 = vmax.f32 %v4458, %v4495
    %v4502 = vmax.f32 %v4459, %v4497
    %4503 = vmatprep.subr.bf16.mxu0 %v3103
    %4504 = vmatpush1.bf16.msra.mxu0 %v3102
    %4505 = vmatprep.subr.bf16.mxu0 %v3105
    %4506 = vmatpush1.bf16.msra.mxu0 %v3104
    %4507 = vmatprep.subr.bf16.mxu0 %v3107
    %4508 = vmatpush1.bf16.msra.mxu0 %v3106
    %4509 = vmatprep.subr.bf16.mxu0 %v3109
    %4510 = vmatpush1.bf16.msra.mxu0 %v3108
    %4511 = vmatprep.subr.bf16.mxu0 %v3111
    %4512 = vmatpush1.bf16.msra.mxu0 %v3110
    %4513 = vmatprep.subr.bf16.mxu0 %v3113
    %4514 = vmatpush1.bf16.msra.mxu0 %v3112
    %4515 = vmatprep.subr.bf16.mxu0 %v3115
    %4516 = vmatpush1.bf16.msra.mxu0 %v3114
    %4517 = vmatprep.subr.bf16.mxu0 %v3117
    %4518 = vmatpush1.bf16.msra.mxu0 %v3116
    %4519 = vmatprep.subr.bf16.mxu0 %v3119
    %4520 = vmatpush1.bf16.msra.mxu0 %v3118
    %4521 = vmatprep.subr.bf16.mxu0 %v3121
    %4522 = vmatpush1.bf16.msra.mxu0 %v3120
    %4523 = vmatprep.subr.bf16.mxu0 %v3123
    %4524 = vmatpush1.bf16.msra.mxu0 %v3122
    %4525 = vmatprep.subr.bf16.mxu0 %v3125
    %4526 = vmatpush1.bf16.msra.mxu0 %v3124
    %4527 = vmatprep.subr.bf16.mxu0 %v3156
    %4528 = vmatpush1.bf16.msra.mxu0 %v3153
    %4529 = vmatprep.subr.bf16.mxu0 0
    %4530 = vmatpush1.bf16.msra.mxu0 0
    %4531 = vmatprep.subr.bf16.mxu0 0
    %4532 = vmatpush1.bf16.msra.mxu0 0
    %4533 = vmatprep.subr.bf16.mxu0 0
    %4534 = vmatpush1.bf16.msra.mxu0 0
    %4535 = vmatprep.mubr.bf16.mxu0 %v4415
    %4536 = vmatmul.mubr.bf16.gmra.mrb[0].mxu0 %v4412
    %v4537 = vpop.f32.mrb[0].mxu0
    %v4538 = vadd.f32 0.0, %v4537
    %v4539 = vpop.f32.mrb[0].mxu0
    %v4540 = vadd.f32 0.0, %v4539
    %v4541 = vpop.f32.mrb[0].mxu0
    %v4542 = vpop.f32.mrb[0].mxu0
    %4543 = vdwg.mxu0
    %v4544 = vmax.f32 %v4501, %v4538
    %v4545 = vmax.f32 %v4502, %v4540
    %v4546 = vpack.c.bf16 %v4544, %v4544
    %v4547 = vpack.c.bf16 %v4545, %v4545
    %v4549 = vsel %vm604, %v4547, 0
    %4551 = vmatprep.subr.bf16.mxu0 0
    %4552 = vmatpush1.bf16.msra.mxu0 %v3278
    %4553 = vmatprep.subr.bf16.mxu0 0
    %4554 = vmatpush1.bf16.msra.mxu0 %v3279
    %4555 = vmatprep.subr.bf16.mxu0 0
    %4556 = vmatpush1.bf16.msra.mxu0 %v3280
    %4557 = vmatprep.subr.bf16.mxu0 0
    %4558 = vmatpush1.bf16.msra.mxu0 %v3281
    %4559 = vmatprep.subr.bf16.mxu0 0
    %4560 = vmatpush1.bf16.msra.mxu0 %v3282
    %4561 = vmatprep.subr.bf16.mxu0 0
    %4562 = vmatpush1.bf16.msra.mxu0 %v3283
    %4563 = vmatprep.subr.bf16.mxu0 0
    %4564 = vmatpush1.bf16.msra.mxu0 %v3284
    %4565 = vmatprep.subr.bf16.mxu0 0
    %4566 = vmatpush1.bf16.msra.mxu0 %v3285
    %4567 = vmatprep.subr.bf16.mxu0 0
    %4568 = vmatpush1.bf16.msra.mxu0 %v3286
    %4569 = vmatprep.subr.bf16.mxu0 0
    %4570 = vmatpush1.bf16.msra.mxu0 %v3287
    %4571 = vmatprep.subr.bf16.mxu0 0
    %4572 = vmatpush1.bf16.msra.mxu0 %v3288
    %4573 = vmatprep.subr.bf16.mxu0 0
    %4574 = vmatpush1.bf16.msra.mxu0 %v3289
    %4575 = vmatprep.subr.bf16.mxu0 0
    %4576 = vmatpush1.bf16.msra.mxu0 %v3307
    %4577 = vmatprep.subr.bf16.mxu0 0
    %4578 = vmatpush1.bf16.msra.mxu0 0
    %4579 = vmatprep.subr.bf16.mxu0 0
    %4580 = vmatpush1.bf16.msra.mxu0 0
    %4581 = vmatprep.subr.bf16.mxu0 0
    %4582 = vmatpush1.bf16.msra.mxu0 0
    %4583 = vmatprep.mubr.bf16.mxu0 %v4549
    %4584 = vmatmul.mubr.bf16.gmra.mrb[0].mxu0 %v4546
    %v4585 = vpop.f32.mrb[0].mxu0
    %v4586 = vadd.f32 0.0, %v4585
    %v4587 = vpop.f32.mrb[0].mxu0
    %v4588 = vpop.f32.mrb[0].mxu0
    %v4589 = vpop.f32.mrb[0].mxu0
    %4590 = vdwg.mxu0
    %v4592 = vrot.slane %v4586, 7
    %vm4594 = vcmask 1040384
    %v4595 = vsel %vm4594, %v3344, %v4592
    %v4596 = vpack.c.bf16 %v4595, %v4595
    %v4597 = vld [vmem:[%s8] sm:$0xff]
    %v4598 = vld [vmem:[%s8 + $0x8] sm:$0xff]
    %v4599 = vld [vmem:[%s8 + $0x10] sm:$0xff]
    %v4600 = vld [vmem:[%s8 + $0x18] sm:$0xff]
    %v4601 = vld [vmem:[%s8 + $0x20] sm:$0xff]
    %v4602 = vld [vmem:[%s8 + $0x28] sm:$0xff]
    %v4603 = vld [vmem:[%s8 + $0x30] sm:$0xff]
    %v4604 = vld [vmem:[%s8 + $0x38] sm:$0xff]
    %v4605 = vld [vmem:[%s8 + $0x40] sm:$0xff]
    %v4606 = vld [vmem:[%s8 + $0x48] sm:$0xff]
    %v4607 = vld [vmem:[%s8 + $0x50] sm:$0xff]
    %v4608 = vld [vmem:[%s8 + $0x58] sm:$0xff]
    %v4609 = vld [vmem:[%s8 + $0x60] sm:$0x11]
    %v4610 = vld [vmem:[%s8 + $0x68] sm:$0x11]
    %v4612 = vrot.slane %v3344, 1
    %v4614 = vsel %vm4594, %v4612, %v4586
    %v4615 = vpack.c.bf16 %v4614, %v4614
    %s4616 = scalar_lea.vmem %s8, 112
    %v4617 = vld [vmem:[%s4616] sm:$0xff]
    %v4618 = vld [vmem:[%s4616 + $0x8] sm:$0xff]
    %v4619 = vld [vmem:[%s4616 + $0x10] sm:$0xff]
    %v4620 = vld [vmem:[%s4616 + $0x18] sm:$0xff]
    %v4621 = vld [vmem:[%s4616 + $0x20] sm:$0xff]
    %v4622 = vld [vmem:[%s4616 + $0x28] sm:$0xff]
    %v4623 = vld [vmem:[%s4616 + $0x30] sm:$0xff]
    %v4624 = vld [vmem:[%s4616 + $0x38] sm:$0xff]
    %v4625 = vld [vmem:[%s4616 + $0x40] sm:$0xff]
    %v4626 = vld [vmem:[%s4616 + $0x48] sm:$0xff]
    %v4627 = vld [vmem:[%s4616 + $0x50] sm:$0xff]
    %v4628 = vld [vmem:[%s4616 + $0x58] sm:$0xff]
    %v4629 = vld [vmem:[%s4616 + $0x60] sm:$0x11]
    %v4630 = vld [vmem:[%s4616 + $0x68] sm:$0x11]
    %v4645 = vunpack.c.l.b16 %v4617
    %v4646 = vunpack.c.h.b16 %v4617
    %v4647 = vunpack.c.l.b16 %v4618
    %v4648 = vunpack.c.h.b16 %v4618
    %v4649 = vunpack.c.l.b16 %v4619
    %v4650 = vunpack.c.h.b16 %v4619
    %v4651 = vunpack.c.l.b16 %v4620
    %v4652 = vunpack.c.h.b16 %v4620
    %v4653 = vunpack.c.l.b16 %v4621
    %v4654 = vunpack.c.h.b16 %v4621
    %v4655 = vunpack.c.l.b16 %v4622
    %v4656 = vunpack.c.h.b16 %v4622
    %v4657 = vunpack.c.l.b16 %v4623
    %v4658 = vunpack.c.h.b16 %v4623
    %v4659 = vunpack.c.l.b16 %v4624
    %v4660 = vunpack.c.h.b16 %v4624
    %v4661 = vunpack.c.l.b16 %v4625
    %v4662 = vunpack.c.h.b16 %v4625
    %v4663 = vunpack.c.l.b16 %v4626
    %v4664 = vunpack.c.h.b16 %v4626
    %v4665 = vunpack.c.l.b16 %v4627
    %v4666 = vunpack.c.h.b16 %v4627
    %v4667 = vunpack.c.l.b16 %v4628
    %v4668 = vunpack.c.h.b16 %v4628
    %v4669 = vunpack.c.l.b16 %v4629
    %v4670 = vunpack.c.h.b16 %v4629
    %v4671 = vunpack.c.l.b16 %v4630
    %v4672 = vunpack.c.h.b16 %v4630
    %v4673 = vpack.c.b16 %v4649, %v4645
    %v4674 = vpack.c.b16 %v4650, %v4646
    %v4675 = vpack.c.b16 %v4651, %v4647
    %v4676 = vpack.c.b16 %v4652, %v4648
    %v4677 = vpack.c.b16 %v4657, %v4653
    %v4678 = vpack.c.b16 %v4658, %v4654
    %v4679 = vpack.c.b16 %v4659, %v4655
    %v4680 = vpack.c.b16 %v4660, %v4656
    %v4681 = vpack.c.b16 %v4665, %v4661
    %v4682 = vpack.c.b16 %v4666, %v4662
    %v4683 = vpack.c.b16 %v4667, %v4663
    %v4684 = vpack.c.b16 %v4668, %v4664
    %v4685 = vpack.c.b16 %v4669, %v4669
    %v4686 = vpack.c.b16 %v4670, %v4670
    %v4687 = vpack.c.b16 %v4671, %v4671
    %v4688 = vpack.c.b16 %v4672, %v4672
    %vm4701 = vcmask 400384
    %v4703 = vsel %vm4701, %v4615, 0
    %v4705 = vsel 0, 4294967295, 65535
    %v4706 = vsel %vm4594, %v4705, 0
    %v4708 = vand.u32 %v4685, %v4706
    %v4711 = vand.u32 %v4686, %v4706
    %v4714 = vand.u32 %v4687, %v4706
    %v4717 = vand.u32 %v4688, %v4706
    %4719 = vmatprep.subr.bf16.mxu0 %v4674
    %4720 = vmatpush1.bf16.msra.mxu0 %v4673
    %4721 = vmatprep.subr.bf16.mxu0 %v4678
    %4722 = vmatpush1.bf16.msra.mxu0 %v4677
    %4723 = vmatprep.subr.bf16.mxu0 %v4682
    %4724 = vmatpush1.bf16.msra.mxu0 %v4681
    %4725 = vmatprep.subr.bf16.mxu0 %v4711
    %4726 = vmatpush1.bf16.msra.mxu0 %v4708
    %4727 = vmatprep.subr.bf16.mxu0 0
    %4728 = vmatpush1.bf16.msra.mxu0 0
    %4729 = vmatprep.subr.bf16.mxu0 0
    %4730 = vmatpush1.bf16.msra.mxu0 0
    %4731 = vmatprep.subr.bf16.mxu0 0
    %4732 = vmatpush1.bf16.msra.mxu0 0
    %4733 = vmatprep.subr.bf16.mxu0 0
    %4734 = vmatpush1.bf16.msra.mxu0 0
    %4735 = vmatprep.subr.bf16.mxu0 0
    %4736 = vmatpush1.bf16.msra.mxu0 0
    %4737 = vmatprep.subr.bf16.mxu0 0
    %4738 = vmatpush1.bf16.msra.mxu0 0
    %4739 = vmatprep.subr.bf16.mxu0 0
    %4740 = vmatpush1.bf16.msra.mxu0 0
    %4741 = vmatprep.subr.bf16.mxu0 0
    %4742 = vmatpush1.bf16.msra.mxu0 0
    %4743 = vmatprep.subr.bf16.mxu0 0
    %4744 = vmatpush1.bf16.msra.mxu0 0
    %4745 = vmatprep.subr.bf16.mxu0 0
    %4746 = vmatpush1.bf16.msra.mxu0 0
    %4747 = vmatprep.subr.bf16.mxu0 0
    %4748 = vmatpush1.bf16.msra.mxu0 0
    %4749 = vmatprep.subr.bf16.mxu0 0
    %4750 = vmatpush1.bf16.msra.mxu0 0
    %4751 = vmatprep.mubr.bf16.mxu0 0
    %4752 = vmatmul.mubr.bf16.gmra.mrb[0].mxu0 %v4703
    %v4753 = vpop.f32.mrb[0].mxu0
    %v4754 = vadd.f32 0.0, %v4753
    %v4755 = vpop.f32.mrb[0].mxu0
    %v4756 = vadd.f32 0.0, %v4755
    %v4757 = vpop.f32.mrb[0].mxu0
    %v4758 = vpop.f32.mrb[0].mxu0
    %4759 = vdwg.mxu0
    %4760 = vmatprep.subr.bf16.mxu0 %v4676
    %4761 = vmatpush1.bf16.msra.mxu0 %v4675
    %4762 = vmatprep.subr.bf16.mxu0 %v4680
    %4763 = vmatpush1.bf16.msra.mxu0 %v4679
    %4764 = vmatprep.subr.bf16.mxu0 %v4684
    %4765 = vmatpush1.bf16.msra.mxu0 %v4683
    %4766 = vmatprep.subr.bf16.mxu0 %v4717
    %4767 = vmatpush1.bf16.msra.mxu0 %v4714
    %4768 = vmatprep.subr.bf16.mxu0 0
    %4769 = vmatpush1.bf16.msra.mxu0 0
    %4770 = vmatprep.subr.bf16.mxu0 0
    %4771 = vmatpush1.bf16.msra.mxu0 0
    %4772 = vmatprep.subr.bf16.mxu0 0
    %4773 = vmatpush1.bf16.msra.mxu0 0
    %4774 = vmatprep.subr.bf16.mxu0 0
    %4775 = vmatpush1.bf16.msra.mxu0 0
    %4776 = vmatprep.subr.bf16.mxu0 0
    %4777 = vmatpush1.bf16.msra.mxu0 0
    %4778 = vmatprep.subr.bf16.mxu0 0
    %4779 = vmatpush1.bf16.msra.mxu0 0
    %4780 = vmatprep.subr.bf16.mxu0 0
    %4781 = vmatpush1.bf16.msra.mxu0 0
    %4782 = vmatprep.subr.bf16.mxu0 0
    %4783 = vmatpush1.bf16.msra.mxu0 0
    %4784 = vmatprep.subr.bf16.mxu0 0
    %4785 = vmatpush1.bf16.msra.mxu0 0
    %4786 = vmatprep.subr.bf16.mxu0 0
    %4787 = vmatpush1.bf16.msra.mxu0 0
    %4788 = vmatprep.subr.bf16.mxu0 0
    %4789 = vmatpush1.bf16.msra.mxu0 0
    %4790 = vmatprep.subr.bf16.mxu0 0
    %4791 = vmatpush1.bf16.msra.mxu0 0
    %4792 = vmatprep.mubr.bf16.mxu0 0
    %4793 = vmatmul.mubr.bf16.gmra.mrb[0].mxu0 %v4703
    %v4794 = vpop.f32.mrb[0].mxu0
    %v4795 = vadd.f32 0.0, %v4794
    %v4796 = vpop.f32.mrb[0].mxu0
    %v4797 = vadd.f32 0.0, %v4796
    %v4798 = vpop.f32.mrb[0].mxu0
    %v4799 = vpop.f32.mrb[0].mxu0
    %4800 = vdwg.mxu0
    %v4815 = vunpack.c.l.b16 %v4597
    %v4816 = vunpack.c.h.b16 %v4597
    %v4817 = vunpack.c.l.b16 %v4598
    %v4818 = vunpack.c.h.b16 %v4598
    %v4819 = vunpack.c.l.b16 %v4599
    %v4820 = vunpack.c.h.b16 %v4599
    %v4821 = vunpack.c.l.b16 %v4600
    %v4822 = vunpack.c.h.b16 %v4600
    %v4823 = vunpack.c.l.b16 %v4601
    %v4824 = vunpack.c.h.b16 %v4601
    %v4825 = vunpack.c.l.b16 %v4602
    %v4826 = vunpack.c.h.b16 %v4602
    %v4827 = vunpack.c.l.b16 %v4603
    %v4828 = vunpack.c.h.b16 %v4603
    %v4829 = vunpack.c.l.b16 %v4604
    %v4830 = vunpack.c.h.b16 %v4604
    %v4831 = vunpack.c.l.b16 %v4605
    %v4832 = vunpack.c.h.b16 %v4605
    %v4833 = vunpack.c.l.b16 %v4606
    %v4834 = vunpack.c.h.b16 %v4606
    %v4835 = vunpack.c.l.b16 %v4607
    %v4836 = vunpack.c.h.b16 %v4607
    %v4837 = vunpack.c.l.b16 %v4608
    %v4838 = vunpack.c.h.b16 %v4608
    %v4839 = vunpack.c.l.b16 %v4609
    %v4840 = vunpack.c.h.b16 %v4609
    %v4841 = vunpack.c.l.b16 %v4610
    %v4842 = vunpack.c.h.b16 %v4610
    %v4843 = vpack.c.b16 %v4819, %v4815
    %v4844 = vpack.c.b16 %v4820, %v4816
    %v4845 = vpack.c.b16 %v4821, %v4817
    %v4846 = vpack.c.b16 %v4822, %v4818
    %v4847 = vpack.c.b16 %v4827, %v4823
    %v4848 = vpack.c.b16 %v4828, %v4824
    %v4849 = vpack.c.b16 %v4829, %v4825
    %v4850 = vpack.c.b16 %v4830, %v4826
    %v4851 = vpack.c.b16 %v4835, %v4831
    %v4852 = vpack.c.b16 %v4836, %v4832
    %v4853 = vpack.c.b16 %v4837, %v4833
    %v4854 = vpack.c.b16 %v4838, %v4834
    %v4855 = vpack.c.b16 %v4839, %v4839
    %v4856 = vpack.c.b16 %v4840, %v4840
    %v4857 = vpack.c.b16 %v4841, %v4841
    %v4858 = vpack.c.b16 %v4842, %v4842
    %v4872 = vsel %vm4701, %v4596, 0
    %v4875 = vand.u32 %v4855, %v4706
    %v4878 = vand.u32 %v4856, %v4706
    %v4881 = vand.u32 %v4857, %v4706
    %v4884 = vand.u32 %v4858, %v4706
    %4886 = vmatprep.subr.bf16.mxu0 %v4844
    %4887 = vmatpush1.bf16.msra.mxu0 %v4843
    %4888 = vmatprep.subr.bf16.mxu0 %v4848
    %4889 = vmatpush1.bf16.msra.mxu0 %v4847
    %4890 = vmatprep.subr.bf16.mxu0 %v4852
    %4891 = vmatpush1.bf16.msra.mxu0 %v4851
    %4892 = vmatprep.subr.bf16.mxu0 %v4878
    %4893 = vmatpush1.bf16.msra.mxu0 %v4875
    %4894 = vmatprep.subr.bf16.mxu0 0
    %4895 = vmatpush1.bf16.msra.mxu0 0
    %4896 = vmatprep.subr.bf16.mxu0 0
    %4897 = vmatpush1.bf16.msra.mxu0 0
    %4898 = vmatprep.subr.bf16.mxu0 0
    %4899 = vmatpush1.bf16.msra.mxu0 0
    %4900 = vmatprep.subr.bf16.mxu0 0
    %4901 = vmatpush1.bf16.msra.mxu0 0
    %4902 = vmatprep.subr.bf16.mxu0 0
    %4903 = vmatpush1.bf16.msra.mxu0 0
    %4904 = vmatprep.subr.bf16.mxu0 0
    %4905 = vmatpush1.bf16.msra.mxu0 0
    %4906 = vmatprep.subr.bf16.mxu0 0
    %4907 = vmatpush1.bf16.msra.mxu0 0
    %4908 = vmatprep.subr.bf16.mxu0 0
    %4909 = vmatpush1.bf16.msra.mxu0 0
    %4910 = vmatprep.subr.bf16.mxu0 0
    %4911 = vmatpush1.bf16.msra.mxu0 0
    %4912 = vmatprep.subr.bf16.mxu0 0
    %4913 = vmatpush1.bf16.msra.mxu0 0
    %4914 = vmatprep.subr.bf16.mxu0 0
    %4915 = vmatpush1.bf16.msra.mxu0 0
    %4916 = vmatprep.subr.bf16.mxu0 0
    %4917 = vmatpush1.bf16.msra.mxu0 0
    %4918 = vmatprep.mubr.bf16.mxu0 0
    %4919 = vmatmul.mubr.bf16.gmra.mrb[0].mxu0 %v4872
    %v4920 = vpop.f32.mrb[0].mxu0
    %v4921 = vadd.f32 %v4754, %v4920
    %v4922 = vpop.f32.mrb[0].mxu0
    %v4923 = vadd.f32 %v4756, %v4922
    %v4924 = vpop.f32.mrb[0].mxu0
    %v4925 = vpop.f32.mrb[0].mxu0
    %4926 = vdwg.mxu0
    %4927 = vmatprep.subr.bf16.mxu0 %v4846
    %4928 = vmatpush1.bf16.msra.mxu0 %v4845
    %4929 = vmatprep.subr.bf16.mxu0 %v4850
    %4930 = vmatpush1.bf16.msra.mxu0 %v4849
    %4931 = vmatprep.subr.bf16.mxu0 %v4854
    %4932 = vmatpush1.bf16.msra.mxu0 %v4853
    %4933 = vmatprep.subr.bf16.mxu0 %v4884
    %4934 = vmatpush1.bf16.msra.mxu0 %v4881
    %4935 = vmatprep.subr.bf16.mxu0 0
    %4936 = vmatpush1.bf16.msra.mxu0 0
    %4937 = vmatprep.subr.bf16.mxu0 0
    %4938 = vmatpush1.bf16.msra.mxu0 0
    %4939 = vmatprep.subr.bf16.mxu0 0
    %4940 = vmatpush1.bf16.msra.mxu0 0
    %4941 = vmatprep.subr.bf16.mxu0 0
    %4942 = vmatpush1.bf16.msra.mxu0 0
    %4943 = vmatprep.subr.bf16.mxu0 0
    %4944 = vmatpush1.bf16.msra.mxu0 0
    %4945 = vmatprep.subr.bf16.mxu0 0
    %4946 = vmatpush1.bf16.msra.mxu0 0
    %4947 = vmatprep.subr.bf16.mxu0 0
    %4948 = vmatpush1.bf16.msra.mxu0 0
    %4949 = vmatprep.subr.bf16.mxu0 0
    %4950 = vmatpush1.bf16.msra.mxu0 0
    %4951 = vmatprep.subr.bf16.mxu0 0
    %4952 = vmatpush1.bf16.msra.mxu0 0
    %4953 = vmatprep.subr.bf16.mxu0 0
    %4954 = vmatpush1.bf16.msra.mxu0 0
    %4955 = vmatprep.subr.bf16.mxu0 0
    %4956 = vmatpush1.bf16.msra.mxu0 0
    %4957 = vmatprep.subr.bf16.mxu0 0
    %4958 = vmatpush1.bf16.msra.mxu0 0
    %4959 = vmatprep.mubr.bf16.mxu0 0
    %4960 = vmatmul.mubr.bf16.gmra.mrb[0].mxu0 %v4872
    %v4961 = vpop.f32.mrb[0].mxu0
    %v4962 = vadd.f32 %v4795, %v4961
    %v4963 = vpop.f32.mrb[0].mxu0
    %v4964 = vadd.f32 %v4797, %v4963
    %v4965 = vpop.f32.mrb[0].mxu0
    %v4966 = vpop.f32.mrb[0].mxu0
    %4967 = vdwg.mxu0
    %v4968 = vrot.slane %v3344, 2
    %v4970 = vrot.slane %v4586, 1
    %v4972 = vsel %vm4594, %v4968, %v4970
    %v4973 = vpack.c.bf16 %v4972, %v4972
    %s4974 = scalar_lea.vmem %s8, 224
    %v4975 = vld [vmem:[%s4974] sm:$0xff]
    %v4976 = vld [vmem:[%s4974 + $0x8] sm:$0xff]
    %v4977 = vld [vmem:[%s4974 + $0x10] sm:$0xff]
    %v4978 = vld [vmem:[%s4974 + $0x18] sm:$0xff]
    %v4979 = vld [vmem:[%s4974 + $0x20] sm:$0xff]
    %v4980 = vld [vmem:[%s4974 + $0x28] sm:$0xff]
    %v4981 = vld [vmem:[%s4974 + $0x30] sm:$0xff]
    %v4982 = vld [vmem:[%s4974 + $0x38] sm:$0xff]
    %v4983 = vld [vmem:[%s4974 + $0x40] sm:$0xff]
    %v4984 = vld [vmem:[%s4974 + $0x48] sm:$0xff]
    %v4985 = vld [vmem:[%s4974 + $0x50] sm:$0xff]
    %v4986 = vld [vmem:[%s4974 + $0x58] sm:$0xff]
    %v4987 = vld [vmem:[%s4974 + $0x60] sm:$0x11]
    %v4988 = vld [vmem:[%s4974 + $0x68] sm:$0x11]
    %v5003 = vunpack.c.l.b16 %v4975
    %v5004 = vunpack.c.h.b16 %v4975
    %v5005 = vunpack.c.l.b16 %v4976
    %v5006 = vunpack.c.h.b16 %v4976
    %v5007 = vunpack.c.l.b16 %v4977
    %v5008 = vunpack.c.h.b16 %v4977
    %v5009 = vunpack.c.l.b16 %v4978
    %v5010 = vunpack.c.h.b16 %v4978
    %v5011 = vunpack.c.l.b16 %v4979
    %v5012 = vunpack.c.h.b16 %v4979
    %v5013 = vunpack.c.l.b16 %v4980
    %v5014 = vunpack.c.h.b16 %v4980
    %v5015 = vunpack.c.l.b16 %v4981
    %v5016 = vunpack.c.h.b16 %v4981
    %v5017 = vunpack.c.l.b16 %v4982
    %v5018 = vunpack.c.h.b16 %v4982
    %v5019 = vunpack.c.l.b16 %v4983
    %v5020 = vunpack.c.h.b16 %v4983
    %v5021 = vunpack.c.l.b16 %v4984
    %v5022 = vunpack.c.h.b16 %v4984
    %v5023 = vunpack.c.l.b16 %v4985
    %v5024 = vunpack.c.h.b16 %v4985
    %v5025 = vunpack.c.l.b16 %v4986
    %v5026 = vunpack.c.h.b16 %v4986
    %v5027 = vunpack.c.l.b16 %v4987
    %v5028 = vunpack.c.h.b16 %v4987
    %v5029 = vunpack.c.l.b16 %v4988
    %v5030 = vunpack.c.h.b16 %v4988
    %v5031 = vpack.c.b16 %v5007, %v5003
    %v5032 = vpack.c.b16 %v5008, %v5004
    %v5033 = vpack.c.b16 %v5009, %v5005
    %v5034 = vpack.c.b16 %v5010, %v5006
    %v5035 = vpack.c.b16 %v5015, %v5011
    %v5036 = vpack.c.b16 %v5016, %v5012
    %v5037 = vpack.c.b16 %v5017, %v5013
    %v5038 = vpack.c.b16 %v5018, %v5014
    %v5039 = vpack.c.b16 %v5023, %v5019
    %v5040 = vpack.c.b16 %v5024, %v5020
    %v5041 = vpack.c.b16 %v5025, %v5021
    %v5042 = vpack.c.b16 %v5026, %v5022
    %v5043 = vpack.c.b16 %v5027, %v5027
    %v5044 = vpack.c.b16 %v5028, %v5028
    %v5045 = vpack.c.b16 %v5029, %v5029
    %v5046 = vpack.c.b16 %v5030, %v5030
    %v5060 = vsel %vm4701, %v4973, 0
    %v5063 = vand.u32 %v5043, %v4706
    %v5066 = vand.u32 %v5044, %v4706
    %v5069 = vand.u32 %v5045, %v4706
    %v5072 = vand.u32 %v5046, %v4706
    %5074 = vmatprep.subr.bf16.mxu0 %v5032
    %5075 = vmatpush1.bf16.msra.mxu0 %v5031
    %5076 = vmatprep.subr.bf16.mxu0 %v5036
    %5077 = vmatpush1.bf16.msra.mxu0 %v5035
    %5078 = vmatprep.subr.bf16.mxu0 %v5040
    %5079 = vmatpush1.bf16.msra.mxu0 %v5039
    %5080 = vmatprep.subr.bf16.mxu0 %v5066
    %5081 = vmatpush1.bf16.msra.mxu0 %v5063
    %5082 = vmatprep.subr.bf16.mxu0 0
    %5083 = vmatpush1.bf16.msra.mxu0 0
    %5084 = vmatprep.subr.bf16.mxu0 0
    %5085 = vmatpush1.bf16.msra.mxu0 0
    %5086 = vmatprep.subr.bf16.mxu0 0
    %5087 = vmatpush1.bf16.msra.mxu0 0
    %5088 = vmatprep.subr.bf16.mxu0 0
    %5089 = vmatpush1.bf16.msra.mxu0 0
    %5090 = vmatprep.subr.bf16.mxu0 0
    %5091 = vmatpush1.bf16.msra.mxu0 0
    %5092 = vmatprep.subr.bf16.mxu0 0
    %5093 = vmatpush1.bf16.msra.mxu0 0
    %5094 = vmatprep.subr.bf16.mxu0 0
    %5095 = vmatpush1.bf16.msra.mxu0 0
    %5096 = vmatprep.subr.bf16.mxu0 0
    %5097 = vmatpush1.bf16.msra.mxu0 0
    %5098 = vmatprep.subr.bf16.mxu0 0
    %5099 = vmatpush1.bf16.msra.mxu0 0
    %5100 = vmatprep.subr.bf16.mxu0 0
    %5101 = vmatpush1.bf16.msra.mxu0 0
    %5102 = vmatprep.subr.bf16.mxu0 0
    %5103 = vmatpush1.bf16.msra.mxu0 0
    %5104 = vmatprep.subr.bf16.mxu0 0
    %5105 = vmatpush1.bf16.msra.mxu0 0
    %5106 = vmatprep.mubr.bf16.mxu0 0
    %5107 = vmatmul.mubr.bf16.gmra.mrb[0].mxu0 %v5060
    %v5108 = vpop.f32.mrb[0].mxu0
    %v5109 = vadd.f32 0.0, %v5108
    %v5110 = vpop.f32.mrb[0].mxu0
    %v5111 = vadd.f32 0.0, %v5110
    %v5112 = vpop.f32.mrb[0].mxu0
    %v5113 = vpop.f32.mrb[0].mxu0
    %5114 = vdwg.mxu0
    %5115 = vmatprep.subr.bf16.mxu0 %v5034
    %5116 = vmatpush1.bf16.msra.mxu0 %v5033
    %5117 = vmatprep.subr.bf16.mxu0 %v5038
    %5118 = vmatpush1.bf16.msra.mxu0 %v5037
    %5119 = vmatprep.subr.bf16.mxu0 %v5042
    %5120 = vmatpush1.bf16.msra.mxu0 %v5041
    %5121 = vmatprep.subr.bf16.mxu0 %v5072
    %5122 = vmatpush1.bf16.msra.mxu0 %v5069
    %5123 = vmatprep.subr.bf16.mxu0 0
    %5124 = vmatpush1.bf16.msra.mxu0 0
    %5125 = vmatprep.subr.bf16.mxu0 0
    %5126 = vmatpush1.bf16.msra.mxu0 0
    %5127 = vmatprep.subr.bf16.mxu0 0
    %5128 = vmatpush1.bf16.msra.mxu0 0
    %5129 = vmatprep.subr.bf16.mxu0 0
    %5130 = vmatpush1.bf16.msra.mxu0 0
    %5131 = vmatprep.subr.bf16.mxu0 0
    %5132 = vmatpush1.bf16.msra.mxu0 0
    %5133 = vmatprep.subr.bf16.mxu0 0
    %5134 = vmatpush1.bf16.msra.mxu0 0
    %5135 = vmatprep.subr.bf16.mxu0 0
    %5136 = vmatpush1.bf16.msra.mxu0 0
    %5137 = vmatprep.subr.bf16.mxu0 0
    %5138 = vmatpush1.bf16.msra.mxu0 0
    %5139 = vmatprep.subr.bf16.mxu0 0
    %5140 = vmatpush1.bf16.msra.mxu0 0
    %5141 = vmatprep.subr.bf16.mxu0 0
    %5142 = vmatpush1.bf16.msra.mxu0 0
    %5143 = vmatprep.subr.bf16.mxu0 0
    %5144 = vmatpush1.bf16.msra.mxu0 0
    %5145 = vmatprep.subr.bf16.mxu0 0
    %5146 = vmatpush1.bf16.msra.mxu0 0
    %5147 = vmatprep.mubr.bf16.mxu0 0
    %5148 = vmatmul.mubr.bf16.gmra.mrb[0].mxu0 %v5060
    %v5149 = vpop.f32.mrb[0].mxu0
    %v5150 = vadd.f32 0.0, %v5149
    %v5151 = vpop.f32.mrb[0].mxu0
    %v5152 = vadd.f32 0.0, %v5151
    %v5153 = vpop.f32.mrb[0].mxu0
    %v5154 = vpop.f32.mrb[0].mxu0
    %5155 = vdwg.mxu0
    %v5156 = vadd.f32 %v4921, %v5109
    %v5157 = vadd.f32 %v4923, %v5111
    %v5158 = vadd.f32 %v4962, %v5150
    %v5159 = vadd.f32 %v4964, %v5152
    %v5160 = vrot.slane %v3344, 3
    %v5162 = vrot.slane %v4586, 2
    %v5164 = vsel %vm4594, %v5160, %v5162
    %v5165 = vpack.c.bf16 %v5164, %v5164
    %s5166 = scalar_lea.vmem %s8, 336
    %v5167 = vld [vmem:[%s5166] sm:$0xff]
    %v5168 = vld [vmem:[%s5166 + $0x8] sm:$0xff]
    %v5169 = vld [vmem:[%s5166 + $0x10] sm:$0xff]
    %v5170 = vld [vmem:[%s5166 + $0x18] sm:$0xff]
    %v5171 = vld [vmem:[%s5166 + $0x20] sm:$0xff]
    %v5172 = vld [vmem:[%s5166 + $0x28] sm:$0xff]
    %v5173 = vld [vmem:[%s5166 + $0x30] sm:$0xff]
    %v5174 = vld [vmem:[%s5166 + $0x38] sm:$0xff]
    %v5175 = vld [vmem:[%s5166 + $0x40] sm:$0xff]
    %v5176 = vld [vmem:[%s5166 + $0x48] sm:$0xff]
    %v5177 = vld [vmem:[%s5166 + $0x50] sm:$0xff]
    %v5178 = vld [vmem:[%s5166 + $0x58] sm:$0xff]
    %v5179 = vld [vmem:[%s5166 + $0x60] sm:$0x11]
    %v5180 = vld [vmem:[%s5166 + $0x68] sm:$0x11]
    %v5195 = vunpack.c.l.b16 %v5167
    %v5196 = vunpack.c.h.b16 %v5167
    %v5197 = vunpack.c.l.b16 %v5168
    %v5198 = vunpack.c.h.b16 %v5168
    %v5199 = vunpack.c.l.b16 %v5169
    %v5200 = vunpack.c.h.b16 %v5169
    %v5201 = vunpack.c.l.b16 %v5170
    %v5202 = vunpack.c.h.b16 %v5170
    %v5203 = vunpack.c.l.b16 %v5171
    %v5204 = vunpack.c.h.b16 %v5171
    %v5205 = vunpack.c.l.b16 %v5172
    %v5206 = vunpack.c.h.b16 %v5172
    %v5207 = vunpack.c.l.b16 %v5173
    %v5208 = vunpack.c.h.b16 %v5173
    %v5209 = vunpack.c.l.b16 %v5174
    %v5210 = vunpack.c.h.b16 %v5174
    %v5211 = vunpack.c.l.b16 %v5175
    %v5212 = vunpack.c.h.b16 %v5175
    %v5213 = vunpack.c.l.b16 %v5176
    %v5214 = vunpack.c.h.b16 %v5176
    %v5215 = vunpack.c.l.b16 %v5177
    %v5216 = vunpack.c.h.b16 %v5177
    %v5217 = vunpack.c.l.b16 %v5178
    %v5218 = vunpack.c.h.b16 %v5178
    %v5219 = vunpack.c.l.b16 %v5179
    %v5220 = vunpack.c.h.b16 %v5179
    %v5221 = vunpack.c.l.b16 %v5180
    %v5222 = vunpack.c.h.b16 %v5180
    %v5223 = vpack.c.b16 %v5199, %v5195
    %v5224 = vpack.c.b16 %v5200, %v5196
    %v5225 = vpack.c.b16 %v5201, %v5197
    %v5226 = vpack.c.b16 %v5202, %v5198
    %v5227 = vpack.c.b16 %v5207, %v5203
    %v5228 = vpack.c.b16 %v5208, %v5204
    %v5229 = vpack.c.b16 %v5209, %v5205
    %v5230 = vpack.c.b16 %v5210, %v5206
    %v5231 = vpack.c.b16 %v5215, %v5211
    %v5232 = vpack.c.b16 %v5216, %v5212
    %v5233 = vpack.c.b16 %v5217, %v5213
    %v5234 = vpack.c.b16 %v5218, %v5214
    %v5235 = vpack.c.b16 %v5219, %v5219
    %v5236 = vpack.c.b16 %v5220, %v5220
    %v5237 = vpack.c.b16 %v5221, %v5221
    %v5238 = vpack.c.b16 %v5222, %v5222
    %v5252 = vsel %vm4701, %v5165, 0
    %v5255 = vand.u32 %v5235, %v4706
    %v5258 = vand.u32 %v5236, %v4706
    %v5261 = vand.u32 %v5237, %v4706
    %v5264 = vand.u32 %v5238, %v4706
    %5266 = vmatprep.subr.bf16.mxu0 %v5224
    %5267 = vmatpush1.bf16.msra.mxu0 %v5223
    %5268 = vmatprep.subr.bf16.mxu0 %v5228
    %5269 = vmatpush1.bf16.msra.mxu0 %v5227
    %5270 = vmatprep.subr.bf16.mxu0 %v5232
    %5271 = vmatpush1.bf16.msra.mxu0 %v5231
    %5272 = vmatprep.subr.bf16.mxu0 %v5258
    %5273 = vmatpush1.bf16.msra.mxu0 %v5255
    %5274 = vmatprep.subr.bf16.mxu0 0
    %5275 = vmatpush1.bf16.msra.mxu0 0
    %5276 = vmatprep.subr.bf16.mxu0 0
    %5277 = vmatpush1.bf16.msra.mxu0 0
    %5278 = vmatprep.subr.bf16.mxu0 0
    %5279 = vmatpush1.bf16.msra.mxu0 0
    %5280 = vmatprep.subr.bf16.mxu0 0
    %5281 = vmatpush1.bf16.msra.mxu0 0
    %5282 = vmatprep.subr.bf16.mxu0 0
    %5283 = vmatpush1.bf16.msra.mxu0 0
    %5284 = vmatprep.subr.bf16.mxu0 0
    %5285 = vmatpush1.bf16.msra.mxu0 0
    %5286 = vmatprep.subr.bf16.mxu0 0
    %5287 = vmatpush1.bf16.msra.mxu0 0
    %5288 = vmatprep.subr.bf16.mxu0 0
    %5289 = vmatpush1.bf16.msra.mxu0 0
    %5290 = vmatprep.subr.bf16.mxu0 0
    %5291 = vmatpush1.bf16.msra.mxu0 0
    %5292 = vmatprep.subr.bf16.mxu0 0
    %5293 = vmatpush1.bf16.msra.mxu0 0
    %5294 = vmatprep.subr.bf16.mxu0 0
    %5295 = vmatpush1.bf16.msra.mxu0 0
    %5296 = vmatprep.subr.bf16.mxu0 0
    %5297 = vmatpush1.bf16.msra.mxu0 0
    %5298 = vmatprep.mubr.bf16.mxu0 0
    %5299 = vmatmul.mubr.bf16.gmra.mrb[0].mxu0 %v5252
    %v5300 = vpop.f32.mrb[0].mxu0
    %v5301 = vadd.f32 0.0, %v5300
    %v5302 = vpop.f32.mrb[0].mxu0
    %v5303 = vadd.f32 0.0, %v5302
    %v5304 = vpop.f32.mrb[0].mxu0
    %v5305 = vpop.f32.mrb[0].mxu0
    %5306 = vdwg.mxu0
    %5307 = vmatprep.subr.bf16.mxu0 %v5226
    %5308 = vmatpush1.bf16.msra.mxu0 %v5225
    %5309 = vmatprep.subr.bf16.mxu0 %v5230
    %5310 = vmatpush1.bf16.msra.mxu0 %v5229
    %5311 = vmatprep.subr.bf16.mxu0 %v5234
    %5312 = vmatpush1.bf16.msra.mxu0 %v5233
    %5313 = vmatprep.subr.bf16.mxu0 %v5264
    %5314 = vmatpush1.bf16.msra.mxu0 %v5261
    %5315 = vmatprep.subr.bf16.mxu0 0
    %5316 = vmatpush1.bf16.msra.mxu0 0
    %5317 = vmatprep.subr.bf16.mxu0 0
    %5318 = vmatpush1.bf16.msra.mxu0 0
    %5319 = vmatprep.subr.bf16.mxu0 0
    %5320 = vmatpush1.bf16.msra.mxu0 0
    %5321 = vmatprep.subr.bf16.mxu0 0
    %5322 = vmatpush1.bf16.msra.mxu0 0
    %5323 = vmatprep.subr.bf16.mxu0 0
    %5324 = vmatpush1.bf16.msra.mxu0 0
    %5325 = vmatprep.subr.bf16.mxu0 0
    %5326 = vmatpush1.bf16.msra.mxu0 0
    %5327 = vmatprep.subr.bf16.mxu0 0
    %5328 = vmatpush1.bf16.msra.mxu0 0
    %5329 = vmatprep.subr.bf16.mxu0 0
    %5330 = vmatpush1.bf16.msra.mxu0 0
    %5331 = vmatprep.subr.bf16.mxu0 0
    %5332 = vmatpush1.bf16.msra.mxu0 0
    %5333 = vmatprep.subr.bf16.mxu0 0
    %5334 = vmatpush1.bf16.msra.mxu0 0
    %5335 = vmatprep.subr.bf16.mxu0 0
    %5336 = vmatpush1.bf16.msra.mxu0 0
    %5337 = vmatprep.subr.bf16.mxu0 0
    %5338 = vmatpush1.bf16.msra.mxu0 0
    %5339 = vmatprep.mubr.bf16.mxu0 0
    %5340 = vmatmul.mubr.bf16.gmra.mrb[0].mxu0 %v5252
    %v5341 = vpop.f32.mrb[0].mxu0
    %v5342 = vadd.f32 0.0, %v5341
    %v5343 = vpop.f32.mrb[0].mxu0
    %v5344 = vadd.f32 0.0, %v5343
    %v5345 = vpop.f32.mrb[0].mxu0
    %v5346 = vpop.f32.mrb[0].mxu0
    %5347 = vdwg.mxu0
    %v5348 = vadd.f32 %v5156, %v5301
    %v5349 = vadd.f32 %v5157, %v5303
    %v5350 = vadd.f32 %v5158, %v5342
    %v5351 = vadd.f32 %v5159, %v5344
    %v5352 = vrot.slane %v3344, 4
    %v5354 = vrot.slane %v4586, 3
    %v5356 = vsel %vm4594, %v5352, %v5354
    %v5357 = vpack.c.bf16 %v5356, %v5356
    %s5358 = scalar_lea.vmem %s8, 448
    %v5359 = vld [vmem:[%s5358] sm:$0xff]
    %v5360 = vld [vmem:[%s5358 + $0x8] sm:$0xff]
    %v5361 = vld [vmem:[%s5358 + $0x10] sm:$0xff]
    %v5362 = vld [vmem:[%s5358 + $0x18] sm:$0xff]
    %v5363 = vld [vmem:[%s5358 + $0x20] sm:$0xff]
    %v5364 = vld [vmem:[%s5358 + $0x28] sm:$0xff]
    %v5365 = vld [vmem:[%s5358 + $0x30] sm:$0xff]
    %v5366 = vld [vmem:[%s5358 + $0x38] sm:$0xff]
    %v5367 = vld [vmem:[%s5358 + $0x40] sm:$0xff]
    %v5368 = vld [vmem:[%s5358 + $0x48] sm:$0xff]
    %v5369 = vld [vmem:[%s5358 + $0x50] sm:$0xff]
    %v5370 = vld [vmem:[%s5358 + $0x58] sm:$0xff]
    %v5371 = vld [vmem:[%s5358 + $0x60] sm:$0x11]
    %v5372 = vld [vmem:[%s5358 + $0x68] sm:$0x11]
    %v5387 = vunpack.c.l.b16 %v5359
    %v5388 = vunpack.c.h.b16 %v5359
    %v5389 = vunpack.c.l.b16 %v5360
    %v5390 = vunpack.c.h.b16 %v5360
    %v5391 = vunpack.c.l.b16 %v5361
    %v5392 = vunpack.c.h.b16 %v5361
    %v5393 = vunpack.c.l.b16 %v5362
    %v5394 = vunpack.c.h.b16 %v5362
    %v5395 = vunpack.c.l.b16 %v5363
    %v5396 = vunpack.c.h.b16 %v5363
    %v5397 = vunpack.c.l.b16 %v5364
    %v5398 = vunpack.c.h.b16 %v5364
    %v5399 = vunpack.c.l.b16 %v5365
    %v5400 = vunpack.c.h.b16 %v5365
    %v5401 = vunpack.c.l.b16 %v5366
    %v5402 = vunpack.c.h.b16 %v5366
    %v5403 = vunpack.c.l.b16 %v5367
    %v5404 = vunpack.c.h.b16 %v5367
    %v5405 = vunpack.c.l.b16 %v5368
    %v5406 = vunpack.c.h.b16 %v5368
    %v5407 = vunpack.c.l.b16 %v5369
    %v5408 = vunpack.c.h.b16 %v5369
    %v5409 = vunpack.c.l.b16 %v5370
    %v5410 = vunpack.c.h.b16 %v5370
    %v5411 = vunpack.c.l.b16 %v5371
    %v5412 = vunpack.c.h.b16 %v5371
    %v5413 = vunpack.c.l.b16 %v5372
    %v5414 = vunpack.c.h.b16 %v5372
    %v5415 = vpack.c.b16 %v5391, %v5387
    %v5416 = vpack.c.b16 %v5392, %v5388
    %v5417 = vpack.c.b16 %v5393, %v5389
    %v5418 = vpack.c.b16 %v5394, %v5390
    %v5419 = vpack.c.b16 %v5399, %v5395
    %v5420 = vpack.c.b16 %v5400, %v5396
    %v5421 = vpack.c.b16 %v5401, %v5397
    %v5422 = vpack.c.b16 %v5402, %v5398
    %v5423 = vpack.c.b16 %v5407, %v5403
    %v5424 = vpack.c.b16 %v5408, %v5404
    %v5425 = vpack.c.b16 %v5409, %v5405
    %v5426 = vpack.c.b16 %v5410, %v5406
    %v5427 = vpack.c.b16 %v5411, %v5411
    %v5428 = vpack.c.b16 %v5412, %v5412
    %v5429 = vpack.c.b16 %v5413, %v5413
    %v5430 = vpack.c.b16 %v5414, %v5414
    %v5444 = vsel %vm4701, %v5357, 0
    %v5447 = vand.u32 %v5427, %v4706
    %v5450 = vand.u32 %v5428, %v4706
    %v5453 = vand.u32 %v5429, %v4706
    %v5456 = vand.u32 %v5430, %v4706
    %5458 = vmatprep.subr.bf16.mxu0 %v5416
    %5459 = vmatpush1.bf16.msra.mxu0 %v5415
    %5460 = vmatprep.subr.bf16.mxu0 %v5420
    %5461 = vmatpush1.bf16.msra.mxu0 %v5419
    %5462 = vmatprep.subr.bf16.mxu0 %v5424
    %5463 = vmatpush1.bf16.msra.mxu0 %v5423
    %5464 = vmatprep.subr.bf16.mxu0 %v5450
    %5465 = vmatpush1.bf16.msra.mxu0 %v5447
    %5466 = vmatprep.subr.bf16.mxu0 0
    %5467 = vmatpush1.bf16.msra.mxu0 0
    %5468 = vmatprep.subr.bf16.mxu0 0
    %5469 = vmatpush1.bf16.msra.mxu0 0
    %5470 = vmatprep.subr.bf16.mxu0 0
    %5471 = vmatpush1.bf16.msra.mxu0 0
    %5472 = vmatprep.subr.bf16.mxu0 0
    %5473 = vmatpush1.bf16.msra.mxu0 0
    %5474 = vmatprep.subr.bf16.mxu0 0
    %5475 = vmatpush1.bf16.msra.mxu0 0
    %5476 = vmatprep.subr.bf16.mxu0 0
    %5477 = vmatpush1.bf16.msra.mxu0 0
    %5478 = vmatprep.subr.bf16.mxu0 0
    %5479 = vmatpush1.bf16.msra.mxu0 0
    %5480 = vmatprep.subr.bf16.mxu0 0
    %5481 = vmatpush1.bf16.msra.mxu0 0
    %5482 = vmatprep.subr.bf16.mxu0 0
    %5483 = vmatpush1.bf16.msra.mxu0 0
    %5484 = vmatprep.subr.bf16.mxu0 0
    %5485 = vmatpush1.bf16.msra.mxu0 0
    %5486 = vmatprep.subr.bf16.mxu0 0
    %5487 = vmatpush1.bf16.msra.mxu0 0
    %5488 = vmatprep.subr.bf16.mxu0 0
    %5489 = vmatpush1.bf16.msra.mxu0 0
    %5490 = vmatprep.mubr.bf16.mxu0 0
    %5491 = vmatmul.mubr.bf16.gmra.mrb[0].mxu0 %v5444
    %v5492 = vpop.f32.mrb[0].mxu0
    %v5493 = vadd.f32 0.0, %v5492
    %v5494 = vpop.f32.mrb[0].mxu0
    %v5495 = vadd.f32 0.0, %v5494
    %v5496 = vpop.f32.mrb[0].mxu0
    %v5497 = vpop.f32.mrb[0].mxu0
    %5498 = vdwg.mxu0
    %5499 = vmatprep.subr.bf16.mxu0 %v5418
    %5500 = vmatpush1.bf16.msra.mxu0 %v5417
    %5501 = vmatprep.subr.bf16.mxu0 %v5422
    %5502 = vmatpush1.bf16.msra.mxu0 %v5421
    %5503 = vmatprep.subr.bf16.mxu0 %v5426
    %5504 = vmatpush1.bf16.msra.mxu0 %v5425
    %5505 = vmatprep.subr.bf16.mxu0 %v5456
    %5506 = vmatpush1.bf16.msra.mxu0 %v5453
    %5507 = vmatprep.subr.bf16.mxu0 0
    %5508 = vmatpush1.bf16.msra.mxu0 0
    %5509 = vmatprep.subr.bf16.mxu0 0
    %5510 = vmatpush1.bf16.msra.mxu0 0
    %5511 = vmatprep.subr.bf16.mxu0 0
    %5512 = vmatpush1.bf16.msra.mxu0 0
    %5513 = vmatprep.subr.bf16.mxu0 0
    %5514 = vmatpush1.bf16.msra.mxu0 0
    %5515 = vmatprep.subr.bf16.mxu0 0
    %5516 = vmatpush1.bf16.msra.mxu0 0
    %5517 = vmatprep.subr.bf16.mxu0 0
    %5518 = vmatpush1.bf16.msra.mxu0 0
    %5519 = vmatprep.subr.bf16.mxu0 0
    %5520 = vmatpush1.bf16.msra.mxu0 0
    %5521 = vmatprep.subr.bf16.mxu0 0
    %5522 = vmatpush1.bf16.msra.mxu0 0
    %5523 = vmatprep.subr.bf16.mxu0 0
    %5524 = vmatpush1.bf16.msra.mxu0 0
    %5525 = vmatprep.subr.bf16.mxu0 0
    %5526 = vmatpush1.bf16.msra.mxu0 0
    %5527 = vmatprep.subr.bf16.mxu0 0
    %5528 = vmatpush1.bf16.msra.mxu0 0
    %5529 = vmatprep.subr.bf16.mxu0 0
    %5530 = vmatpush1.bf16.msra.mxu0 0
    %5531 = vmatprep.mubr.bf16.mxu0 0
    %5532 = vmatmul.mubr.bf16.gmra.mrb[0].mxu0 %v5444
    %v5533 = vpop.f32.mrb[0].mxu0
    %v5534 = vadd.f32 0.0, %v5533
    %v5535 = vpop.f32.mrb[0].mxu0
    %v5536 = vadd.f32 0.0, %v5535
    %v5537 = vpop.f32.mrb[0].mxu0
    %v5538 = vpop.f32.mrb[0].mxu0
    %5539 = vdwg.mxu0
    %v5540 = vadd.f32 %v5348, %v5493
    %v5541 = vadd.f32 %v5349, %v5495
    %v5542 = vadd.f32 %v5350, %v5534
    %v5543 = vadd.f32 %v5351, %v5536
    %v5544 = vrot.slane %v3344, 5
    %v5546 = vrot.slane %v4586, 4
    %v5548 = vsel %vm4594, %v5544, %v5546
    %v5549 = vpack.c.bf16 %v5548, %v5548
    %s5550 = scalar_lea.vmem %s8, 560
    %v5551 = vld [vmem:[%s5550] sm:$0xff]
    %v5552 = vld [vmem:[%s5550 + $0x8] sm:$0xff]
    %v5553 = vld [vmem:[%s5550 + $0x10] sm:$0xff]
    %v5554 = vld [vmem:[%s5550 + $0x18] sm:$0xff]
    %v5555 = vld [vmem:[%s5550 + $0x20] sm:$0xff]
    %v5556 = vld [vmem:[%s5550 + $0x28] sm:$0xff]
    %v5557 = vld [vmem:[%s5550 + $0x30] sm:$0xff]
    %v5558 = vld [vmem:[%s5550 + $0x38] sm:$0xff]
    %v5559 = vld [vmem:[%s5550 + $0x40] sm:$0xff]
    %v5560 = vld [vmem:[%s5550 + $0x48] sm:$0xff]
    %v5561 = vld [vmem:[%s5550 + $0x50] sm:$0xff]
    %v5562 = vld [vmem:[%s5550 + $0x58] sm:$0xff]
    %v5563 = vld [vmem:[%s5550 + $0x60] sm:$0x11]
    %v5564 = vld [vmem:[%s5550 + $0x68] sm:$0x11]
    %v5579 = vunpack.c.l.b16 %v5551
    %v5580 = vunpack.c.h.b16 %v5551
    %v5581 = vunpack.c.l.b16 %v5552
    %v5582 = vunpack.c.h.b16 %v5552
    %v5583 = vunpack.c.l.b16 %v5553
    %v5584 = vunpack.c.h.b16 %v5553
    %v5585 = vunpack.c.l.b16 %v5554
    %v5586 = vunpack.c.h.b16 %v5554
    %v5587 = vunpack.c.l.b16 %v5555
    %v5588 = vunpack.c.h.b16 %v5555
    %v5589 = vunpack.c.l.b16 %v5556
    %v5590 = vunpack.c.h.b16 %v5556
    %v5591 = vunpack.c.l.b16 %v5557
    %v5592 = vunpack.c.h.b16 %v5557
    %v5593 = vunpack.c.l.b16 %v5558
    %v5594 = vunpack.c.h.b16 %v5558
    %v5595 = vunpack.c.l.b16 %v5559
    %v5596 = vunpack.c.h.b16 %v5559
    %v5597 = vunpack.c.l.b16 %v5560
    %v5598 = vunpack.c.h.b16 %v5560
    %v5599 = vunpack.c.l.b16 %v5561
    %v5600 = vunpack.c.h.b16 %v5561
    %v5601 = vunpack.c.l.b16 %v5562
    %v5602 = vunpack.c.h.b16 %v5562
    %v5603 = vunpack.c.l.b16 %v5563
    %v5604 = vunpack.c.h.b16 %v5563
    %v5605 = vunpack.c.l.b16 %v5564
    %v5606 = vunpack.c.h.b16 %v5564
    %v5607 = vpack.c.b16 %v5583, %v5579
    %v5608 = vpack.c.b16 %v5584, %v5580
    %v5609 = vpack.c.b16 %v5585, %v5581
    %v5610 = vpack.c.b16 %v5586, %v5582
    %v5611 = vpack.c.b16 %v5591, %v5587
    %v5612 = vpack.c.b16 %v5592, %v5588
    %v5613 = vpack.c.b16 %v5593, %v5589
    %v5614 = vpack.c.b16 %v5594, %v5590
    %v5615 = vpack.c.b16 %v5599, %v5595
    %v5616 = vpack.c.b16 %v5600, %v5596
    %v5617 = vpack.c.b16 %v5601, %v5597
    %v5618 = vpack.c.b16 %v5602, %v5598
    %v5619 = vpack.c.b16 %v5603, %v5603
    %v5620 = vpack.c.b16 %v5604, %v5604
    %v5621 = vpack.c.b16 %v5605, %v5605
    %v5622 = vpack.c.b16 %v5606, %v5606
    %v5636 = vsel %vm4701, %v5549, 0
    %v5639 = vand.u32 %v5619, %v4706
    %v5642 = vand.u32 %v5620, %v4706
    %v5645 = vand.u32 %v5621, %v4706
    %v5648 = vand.u32 %v5622, %v4706
    %5650 = vmatprep.subr.bf16.mxu0 %v5608
    %5651 = vmatpush1.bf16.msra.mxu0 %v5607
    %5652 = vmatprep.subr.bf16.mxu0 %v5612
    %5653 = vmatpush1.bf16.msra.mxu0 %v5611
    %5654 = vmatprep.subr.bf16.mxu0 %v5616
    %5655 = vmatpush1.bf16.msra.mxu0 %v5615
    %5656 = vmatprep.subr.bf16.mxu0 %v5642
    %5657 = vmatpush1.bf16.msra.mxu0 %v5639
    %5658 = vmatprep.subr.bf16.mxu0 0
    %5659 = vmatpush1.bf16.msra.mxu0 0
    %5660 = vmatprep.subr.bf16.mxu0 0
    %5661 = vmatpush1.bf16.msra.mxu0 0
    %5662 = vmatprep.subr.bf16.mxu0 0
    %5663 = vmatpush1.bf16.msra.mxu0 0
    %5664 = vmatprep.subr.bf16.mxu0 0
    %5665 = vmatpush1.bf16.msra.mxu0 0
    %5666 = vmatprep.subr.bf16.mxu0 0
    %5667 = vmatpush1.bf16.msra.mxu0 0
    %5668 = vmatprep.subr.bf16.mxu0 0
    %5669 = vmatpush1.bf16.msra.mxu0 0
    %5670 = vmatprep.subr.bf16.mxu0 0
    %5671 = vmatpush1.bf16.msra.mxu0 0
    %5672 = vmatprep.subr.bf16.mxu0 0
    %5673 = vmatpush1.bf16.msra.mxu0 0
    %5674 = vmatprep.subr.bf16.mxu0 0
    %5675 = vmatpush1.bf16.msra.mxu0 0
    %5676 = vmatprep.subr.bf16.mxu0 0
    %5677 = vmatpush1.bf16.msra.mxu0 0
    %5678 = vmatprep.subr.bf16.mxu0 0
    %5679 = vmatpush1.bf16.msra.mxu0 0
    %5680 = vmatprep.subr.bf16.mxu0 0
    %5681 = vmatpush1.bf16.msra.mxu0 0
    %5682 = vmatprep.mubr.bf16.mxu0 0
    %5683 = vmatmul.mubr.bf16.gmra.mrb[0].mxu0 %v5636
    %v5684 = vpop.f32.mrb[0].mxu0
    %v5685 = vadd.f32 0.0, %v5684
    %v5686 = vpop.f32.mrb[0].mxu0
    %v5687 = vadd.f32 0.0, %v5686
    %v5688 = vpop.f32.mrb[0].mxu0
    %v5689 = vpop.f32.mrb[0].mxu0
    %5690 = vdwg.mxu0
    %5691 = vmatprep.subr.bf16.mxu0 %v5610
    %5692 = vmatpush1.bf16.msra.mxu0 %v5609
    %5693 = vmatprep.subr.bf16.mxu0 %v5614
    %5694 = vmatpush1.bf16.msra.mxu0 %v5613
    %5695 = vmatprep.subr.bf16.mxu0 %v5618
    %5696 = vmatpush1.bf16.msra.mxu0 %v5617
    %5697 = vmatprep.subr.bf16.mxu0 %v5648
    %5698 = vmatpush1.bf16.msra.mxu0 %v5645
    %5699 = vmatprep.subr.bf16.mxu0 0
    %5700 = vmatpush1.bf16.msra.mxu0 0
    %5701 = vmatprep.subr.bf16.mxu0 0
    %5702 = vmatpush1.bf16.msra.mxu0 0
    %5703 = vmatprep.subr.bf16.mxu0 0
    %5704 = vmatpush1.bf16.msra.mxu0 0
    %5705 = vmatprep.subr.bf16.mxu0 0
    %5706 = vmatpush1.bf16.msra.mxu0 0
    %5707 = vmatprep.subr.bf16.mxu0 0
    %5708 = vmatpush1.bf16.msra.mxu0 0
    %5709 = vmatprep.subr.bf16.mxu0 0
    %5710 = vmatpush1.bf16.msra.mxu0 0
    %5711 = vmatprep.subr.bf16.mxu0 0
    %5712 = vmatpush1.bf16.msra.mxu0 0
    %5713 = vmatprep.subr.bf16.mxu0 0
    %5714 = vmatpush1.bf16.msra.mxu0 0
    %5715 = vmatprep.subr.bf16.mxu0 0
    %5716 = vmatpush1.bf16.msra.mxu0 0
    %5717 = vmatprep.subr.bf16.mxu0 0
    %5718 = vmatpush1.bf16.msra.mxu0 0
    %5719 = vmatprep.subr.bf16.mxu0 0
    %5720 = vmatpush1.bf16.msra.mxu0 0
    %5721 = vmatprep.subr.bf16.mxu0 0
    %5722 = vmatpush1.bf16.msra.mxu0 0
    %5723 = vmatprep.mubr.bf16.mxu0 0
    %5724 = vmatmul.mubr.bf16.gmra.mrb[0].mxu0 %v5636
    %v5725 = vpop.f32.mrb[0].mxu0
    %v5726 = vadd.f32 0.0, %v5725
    %v5727 = vpop.f32.mrb[0].mxu0
    %v5728 = vadd.f32 0.0, %v5727
    %v5729 = vpop.f32.mrb[0].mxu0
    %v5730 = vpop.f32.mrb[0].mxu0
    %5731 = vdwg.mxu0
    %v5732 = vadd.f32 %v5540, %v5685
    %v5733 = vadd.f32 %v5541, %v5687
    %v5734 = vadd.f32 %v5542, %v5726
    %v5735 = vadd.f32 %v5543, %v5728
    %v5736 = vrot.slane %v3344, 6
    %v5738 = vrot.slane %v4586, 5
    %v5740 = vsel %vm4594, %v5736, %v5738
    %v5741 = vpack.c.bf16 %v5740, %v5740
    %s5742 = scalar_lea.vmem %s8, 672
    %v5743 = vld [vmem:[%s5742] sm:$0xff]
    %v5744 = vld [vmem:[%s5742 + $0x8] sm:$0xff]
    %v5745 = vld [vmem:[%s5742 + $0x10] sm:$0xff]
    %v5746 = vld [vmem:[%s5742 + $0x18] sm:$0xff]
    %v5747 = vld [vmem:[%s5742 + $0x20] sm:$0xff]
    %v5748 = vld [vmem:[%s5742 + $0x28] sm:$0xff]
    %v5749 = vld [vmem:[%s5742 + $0x30] sm:$0xff]
    %v5750 = vld [vmem:[%s5742 + $0x38] sm:$0xff]
    %v5751 = vld [vmem:[%s5742 + $0x40] sm:$0xff]
    %v5752 = vld [vmem:[%s5742 + $0x48] sm:$0xff]
    %v5753 = vld [vmem:[%s5742 + $0x50] sm:$0xff]
    %v5754 = vld [vmem:[%s5742 + $0x58] sm:$0xff]
    %v5755 = vld [vmem:[%s5742 + $0x60] sm:$0x11]
    %v5756 = vld [vmem:[%s5742 + $0x68] sm:$0x11]
    %v5771 = vunpack.c.l.b16 %v5743
    %v5772 = vunpack.c.h.b16 %v5743
    %v5773 = vunpack.c.l.b16 %v5744
    %v5774 = vunpack.c.h.b16 %v5744
    %v5775 = vunpack.c.l.b16 %v5745
    %v5776 = vunpack.c.h.b16 %v5745
    %v5777 = vunpack.c.l.b16 %v5746
    %v5778 = vunpack.c.h.b16 %v5746
    %v5779 = vunpack.c.l.b16 %v5747
    %v5780 = vunpack.c.h.b16 %v5747
    %v5781 = vunpack.c.l.b16 %v5748
    %v5782 = vunpack.c.h.b16 %v5748
    %v5783 = vunpack.c.l.b16 %v5749
    %v5784 = vunpack.c.h.b16 %v5749
    %v5785 = vunpack.c.l.b16 %v5750
    %v5786 = vunpack.c.h.b16 %v5750
    %v5787 = vunpack.c.l.b16 %v5751
    %v5788 = vunpack.c.h.b16 %v5751
    %v5789 = vunpack.c.l.b16 %v5752
    %v5790 = vunpack.c.h.b16 %v5752
    %v5791 = vunpack.c.l.b16 %v5753
    %v5792 = vunpack.c.h.b16 %v5753
    %v5793 = vunpack.c.l.b16 %v5754
    %v5794 = vunpack.c.h.b16 %v5754
    %v5795 = vunpack.c.l.b16 %v5755
    %v5796 = vunpack.c.h.b16 %v5755
    %v5797 = vunpack.c.l.b16 %v5756
    %v5798 = vunpack.c.h.b16 %v5756
    %v5799 = vpack.c.b16 %v5775, %v5771
    %v5800 = vpack.c.b16 %v5776, %v5772
    %v5801 = vpack.c.b16 %v5777, %v5773
    %v5802 = vpack.c.b16 %v5778, %v5774
    %v5803 = vpack.c.b16 %v5783, %v5779
    %v5804 = vpack.c.b16 %v5784, %v5780
    %v5805 = vpack.c.b16 %v5785, %v5781
    %v5806 = vpack.c.b16 %v5786, %v5782
    %v5807 = vpack.c.b16 %v5791, %v5787
    %v5808 = vpack.c.b16 %v5792, %v5788
    %v5809 = vpack.c.b16 %v5793, %v5789
    %v5810 = vpack.c.b16 %v5794, %v5790
    %v5811 = vpack.c.b16 %v5795, %v5795
    %v5812 = vpack.c.b16 %v5796, %v5796
    %v5813 = vpack.c.b16 %v5797, %v5797
    %v5814 = vpack.c.b16 %v5798, %v5798
    %v5828 = vsel %vm4701, %v5741, 0
    %v5831 = vand.u32 %v5811, %v4706
    %v5834 = vand.u32 %v5812, %v4706
    %v5837 = vand.u32 %v5813, %v4706
    %v5840 = vand.u32 %v5814, %v4706
    %5842 = vmatprep.subr.bf16.mxu0 %v5800
    %5843 = vmatpush1.bf16.msra.mxu0 %v5799
    %5844 = vmatprep.subr.bf16.mxu0 %v5804
    %5845 = vmatpush1.bf16.msra.mxu0 %v5803
    %5846 = vmatprep.subr.bf16.mxu0 %v5808
    %5847 = vmatpush1.bf16.msra.mxu0 %v5807
    %5848 = vmatprep.subr.bf16.mxu0 %v5834
    %5849 = vmatpush1.bf16.msra.mxu0 %v5831
    %5850 = vmatprep.subr.bf16.mxu0 0
    %5851 = vmatpush1.bf16.msra.mxu0 0
    %5852 = vmatprep.subr.bf16.mxu0 0
    %5853 = vmatpush1.bf16.msra.mxu0 0
    %5854 = vmatprep.subr.bf16.mxu0 0
    %5855 = vmatpush1.bf16.msra.mxu0 0
    %5856 = vmatprep.subr.bf16.mxu0 0
    %5857 = vmatpush1.bf16.msra.mxu0 0
    %5858 = vmatprep.subr.bf16.mxu0 0
    %5859 = vmatpush1.bf16.msra.mxu0 0
    %5860 = vmatprep.subr.bf16.mxu0 0
    %5861 = vmatpush1.bf16.msra.mxu0 0
    %5862 = vmatprep.subr.bf16.mxu0 0
    %5863 = vmatpush1.bf16.msra.mxu0 0
    %5864 = vmatprep.subr.bf16.mxu0 0
    %5865 = vmatpush1.bf16.msra.mxu0 0
    %5866 = vmatprep.subr.bf16.mxu0 0
    %5867 = vmatpush1.bf16.msra.mxu0 0
    %5868 = vmatprep.subr.bf16.mxu0 0
    %5869 = vmatpush1.bf16.msra.mxu0 0
    %5870 = vmatprep.subr.bf16.mxu0 0
    %5871 = vmatpush1.bf16.msra.mxu0 0
    %5872 = vmatprep.subr.bf16.mxu0 0
    %5873 = vmatpush1.bf16.msra.mxu0 0
    %5874 = vmatprep.mubr.bf16.mxu0 0
    %5875 = vmatmul.mubr.bf16.gmra.mrb[0].mxu0 %v5828
    %v5876 = vpop.f32.mrb[0].mxu0
    %v5877 = vadd.f32 0.0, %v5876
    %v5878 = vpop.f32.mrb[0].mxu0
    %v5879 = vadd.f32 0.0, %v5878
    %v5880 = vpop.f32.mrb[0].mxu0
    %v5881 = vpop.f32.mrb[0].mxu0
    %5882 = vdwg.mxu0
    %5883 = vmatprep.subr.bf16.mxu0 %v5802
    %5884 = vmatpush1.bf16.msra.mxu0 %v5801
    %5885 = vmatprep.subr.bf16.mxu0 %v5806
    %5886 = vmatpush1.bf16.msra.mxu0 %v5805
    %5887 = vmatprep.subr.bf16.mxu0 %v5810
    %5888 = vmatpush1.bf16.msra.mxu0 %v5809
    %5889 = vmatprep.subr.bf16.mxu0 %v5840
    %5890 = vmatpush1.bf16.msra.mxu0 %v5837
    %5891 = vmatprep.subr.bf16.mxu0 0
    %5892 = vmatpush1.bf16.msra.mxu0 0
    %5893 = vmatprep.subr.bf16.mxu0 0
    %5894 = vmatpush1.bf16.msra.mxu0 0
    %5895 = vmatprep.subr.bf16.mxu0 0
    %5896 = vmatpush1.bf16.msra.mxu0 0
    %5897 = vmatprep.subr.bf16.mxu0 0
    %5898 = vmatpush1.bf16.msra.mxu0 0
    %5899 = vmatprep.subr.bf16.mxu0 0
    %5900 = vmatpush1.bf16.msra.mxu0 0
    %5901 = vmatprep.subr.bf16.mxu0 0
    %5902 = vmatpush1.bf16.msra.mxu0 0
    %5903 = vmatprep.subr.bf16.mxu0 0
    %5904 = vmatpush1.bf16.msra.mxu0 0
    %5905 = vmatprep.subr.bf16.mxu0 0
    %5906 = vmatpush1.bf16.msra.mxu0 0
    %5907 = vmatprep.subr.bf16.mxu0 0
    %5908 = vmatpush1.bf16.msra.mxu0 0
    %5909 = vmatprep.subr.bf16.mxu0 0
    %5910 = vmatpush1.bf16.msra.mxu0 0
    %5911 = vmatprep.subr.bf16.mxu0 0
    %5912 = vmatpush1.bf16.msra.mxu0 0
    %5913 = vmatprep.subr.bf16.mxu0 0
    %5914 = vmatpush1.bf16.msra.mxu0 0
    %5915 = vmatprep.mubr.bf16.mxu0 0
    %5916 = vmatmul.mubr.bf16.gmra.mrb[0].mxu0 %v5828
    %v5917 = vpop.f32.mrb[0].mxu0
    %v5918 = vadd.f32 0.0, %v5917
    %v5919 = vpop.f32.mrb[0].mxu0
    %v5920 = vadd.f32 0.0, %v5919
    %v5921 = vpop.f32.mrb[0].mxu0
    %v5922 = vpop.f32.mrb[0].mxu0
    %5923 = vdwg.mxu0
    %v5924 = vadd.f32 %v5732, %v5877
    %v5925 = vadd.f32 %v5733, %v5879
    %v5926 = vadd.f32 %v5734, %v5918
    %v5927 = vadd.f32 %v5735, %v5920
    %v5928 = vrot.slane %v3344, 7
    %v5930 = vrot.slane %v4586, 6
    %v5932 = vsel %vm4594, %v5928, %v5930
    %v5933 = vpack.c.bf16 %v5932, %v5932
    %s5934 = scalar_lea.vmem %s8, 784
    %v5935 = vld [vmem:[%s5934] sm:$0xff]
    %v5936 = vld [vmem:[%s5934 + $0x8] sm:$0xff]
    %v5937 = vld [vmem:[%s5934 + $0x10] sm:$0xff]
    %v5938 = vld [vmem:[%s5934 + $0x18] sm:$0xff]
    %v5939 = vld [vmem:[%s5934 + $0x20] sm:$0xff]
    %v5940 = vld [vmem:[%s5934 + $0x28] sm:$0xff]
    %v5941 = vld [vmem:[%s5934 + $0x30] sm:$0xff]
    %v5942 = vld [vmem:[%s5934 + $0x38] sm:$0xff]
    %v5943 = vld [vmem:[%s5934 + $0x40] sm:$0xff]
    %v5944 = vld [vmem:[%s5934 + $0x48] sm:$0xff]
    %v5945 = vld [vmem:[%s5934 + $0x50] sm:$0xff]
    %v5946 = vld [vmem:[%s5934 + $0x58] sm:$0xff]
    %v5947 = vld [vmem:[%s5934 + $0x60] sm:$0x11]
    %v5948 = vld [vmem:[%s5934 + $0x68] sm:$0x11]
    %v5963 = vunpack.c.l.b16 %v5935
    %v5964 = vunpack.c.h.b16 %v5935
    %v5965 = vunpack.c.l.b16 %v5936
    %v5966 = vunpack.c.h.b16 %v5936
    %v5967 = vunpack.c.l.b16 %v5937
    %v5968 = vunpack.c.h.b16 %v5937
    %v5969 = vunpack.c.l.b16 %v5938
    %v5970 = vunpack.c.h.b16 %v5938
    %v5971 = vunpack.c.l.b16 %v5939
    %v5972 = vunpack.c.h.b16 %v5939
    %v5973 = vunpack.c.l.b16 %v5940
    %v5974 = vunpack.c.h.b16 %v5940
    %v5975 = vunpack.c.l.b16 %v5941
    %v5976 = vunpack.c.h.b16 %v5941
    %v5977 = vunpack.c.l.b16 %v5942
    %v5978 = vunpack.c.h.b16 %v5942
    %v5979 = vunpack.c.l.b16 %v5943
    %v5980 = vunpack.c.h.b16 %v5943
    %v5981 = vunpack.c.l.b16 %v5944
    %v5982 = vunpack.c.h.b16 %v5944
    %v5983 = vunpack.c.l.b16 %v5945
    %v5984 = vunpack.c.h.b16 %v5945
    %v5985 = vunpack.c.l.b16 %v5946
    %v5986 = vunpack.c.h.b16 %v5946
    %v5987 = vunpack.c.l.b16 %v5947
    %v5988 = vunpack.c.h.b16 %v5947
    %v5989 = vunpack.c.l.b16 %v5948
    %v5990 = vunpack.c.h.b16 %v5948
    %v5991 = vpack.c.b16 %v5967, %v5963
    %v5992 = vpack.c.b16 %v5968, %v5964
    %v5993 = vpack.c.b16 %v5969, %v5965
    %v5994 = vpack.c.b16 %v5970, %v5966
    %v5995 = vpack.c.b16 %v5975, %v5971
    %v5996 = vpack.c.b16 %v5976, %v5972
    %v5997 = vpack.c.b16 %v5977, %v5973
    %v5998 = vpack.c.b16 %v5978, %v5974
    %v5999 = vpack.c.b16 %v5983, %v5979
    %v6000 = vpack.c.b16 %v5984, %v5980
    %v6001 = vpack.c.b16 %v5985, %v5981
    %v6002 = vpack.c.b16 %v5986, %v5982
    %v6003 = vpack.c.b16 %v5987, %v5987
    %v6004 = vpack.c.b16 %v5988, %v5988
    %v6005 = vpack.c.b16 %v5989, %v5989
    %v6006 = vpack.c.b16 %v5990, %v5990
    %v6020 = vsel %vm4701, %v5933, 0
    %v6023 = vand.u32 %v6003, %v4706
    %v6026 = vand.u32 %v6004, %v4706
    %v6029 = vand.u32 %v6005, %v4706
    %v6032 = vand.u32 %v6006, %v4706
    %6034 = vmatprep.subr.bf16.mxu0 %v5992
    %6035 = vmatpush1.bf16.msra.mxu0 %v5991
    %6036 = vmatprep.subr.bf16.mxu0 %v5996
    %6037 = vmatpush1.bf16.msra.mxu0 %v5995
    %6038 = vmatprep.subr.bf16.mxu0 %v6000
    %6039 = vmatpush1.bf16.msra.mxu0 %v5999
    %6040 = vmatprep.subr.bf16.mxu0 %v6026
    %6041 = vmatpush1.bf16.msra.mxu0 %v6023
    %6042 = vmatprep.subr.bf16.mxu0 0
    %6043 = vmatpush1.bf16.msra.mxu0 0
    %6044 = vmatprep.subr.bf16.mxu0 0
    %6045 = vmatpush1.bf16.msra.mxu0 0
    %6046 = vmatprep.subr.bf16.mxu0 0
    %6047 = vmatpush1.bf16.msra.mxu0 0
    %6048 = vmatprep.subr.bf16.mxu0 0
    %6049 = vmatpush1.bf16.msra.mxu0 0
    %6050 = vmatprep.subr.bf16.mxu0 0
    %6051 = vmatpush1.bf16.msra.mxu0 0
    %6052 = vmatprep.subr.bf16.mxu0 0
    %6053 = vmatpush1.bf16.msra.mxu0 0
    %6054 = vmatprep.subr.bf16.mxu0 0
    %6055 = vmatpush1.bf16.msra.mxu0 0
    %6056 = vmatprep.subr.bf16.mxu0 0
    %6057 = vmatpush1.bf16.msra.mxu0 0
    %6058 = vmatprep.subr.bf16.mxu0 0
    %6059 = vmatpush1.bf16.msra.mxu0 0
    %6060 = vmatprep.subr.bf16.mxu0 0
    %6061 = vmatpush1.bf16.msra.mxu0 0
    %6062 = vmatprep.subr.bf16.mxu0 0
    %6063 = vmatpush1.bf16.msra.mxu0 0
    %6064 = vmatprep.subr.bf16.mxu0 0
    %6065 = vmatpush1.bf16.msra.mxu0 0
    %6066 = vmatprep.mubr.bf16.mxu0 0
    %6067 = vmatmul.mubr.bf16.gmra.mrb[0].mxu0 %v6020
    %v6068 = vpop.f32.mrb[0].mxu0
    %v6069 = vadd.f32 0.0, %v6068
    %v6070 = vpop.f32.mrb[0].mxu0
    %v6071 = vadd.f32 0.0, %v6070
    %v6072 = vpop.f32.mrb[0].mxu0
    %v6073 = vpop.f32.mrb[0].mxu0
    %6074 = vdwg.mxu0
    %6075 = vmatprep.subr.bf16.mxu0 %v5994
    %6076 = vmatpush1.bf16.msra.mxu0 %v5993
    %6077 = vmatprep.subr.bf16.mxu0 %v5998
    %6078 = vmatpush1.bf16.msra.mxu0 %v5997
    %6079 = vmatprep.subr.bf16.mxu0 %v6002
    %6080 = vmatpush1.bf16.msra.mxu0 %v6001
    %6081 = vmatprep.subr.bf16.mxu0 %v6032
    %6082 = vmatpush1.bf16.msra.mxu0 %v6029
    %6083 = vmatprep.subr.bf16.mxu0 0
    %6084 = vmatpush1.bf16.msra.mxu0 0
    %6085 = vmatprep.subr.bf16.mxu0 0
    %6086 = vmatpush1.bf16.msra.mxu0 0
    %6087 = vmatprep.subr.bf16.mxu0 0
    %6088 = vmatpush1.bf16.msra.mxu0 0
    %6089 = vmatprep.subr.bf16.mxu0 0
    %6090 = vmatpush1.bf16.msra.mxu0 0
    %6091 = vmatprep.subr.bf16.mxu0 0
    %6092 = vmatpush1.bf16.msra.mxu0 0
    %6093 = vmatprep.subr.bf16.mxu0 0
    %6094 = vmatpush1.bf16.msra.mxu0 0
    %6095 = vmatprep.subr.bf16.mxu0 0
    %6096 = vmatpush1.bf16.msra.mxu0 0
    %6097 = vmatprep.subr.bf16.mxu0 0
    %6098 = vmatpush1.bf16.msra.mxu0 0
    %6099 = vmatprep.subr.bf16.mxu0 0
    %6100 = vmatpush1.bf16.msra.mxu0 0
    %6101 = vmatprep.subr.bf16.mxu0 0
    %6102 = vmatpush1.bf16.msra.mxu0 0
    %6103 = vmatprep.subr.bf16.mxu0 0
    %6104 = vmatpush1.bf16.msra.mxu0 0
    %6105 = vmatprep.subr.bf16.mxu0 0
    %6106 = vmatpush1.bf16.msra.mxu0 0
    %6107 = vmatprep.mubr.bf16.mxu0 0
    %6108 = vmatmul.mubr.bf16.gmra.mrb[0].mxu0 %v6020
    %v6109 = vpop.f32.mrb[0].mxu0
    %v6110 = vadd.f32 0.0, %v6109
    %v6111 = vpop.f32.mrb[0].mxu0
    %v6112 = vadd.f32 0.0, %v6111
    %v6113 = vpop.f32.mrb[0].mxu0
    %v6114 = vpop.f32.mrb[0].mxu0
    %6115 = vdwg.mxu0
    %v6116 = vadd.f32 %v5924, %v6069
    %v6117 = vadd.f32 %v5925, %v6071
    %v6118 = vadd.f32 %v5926, %v6110
    %v6119 = vadd.f32 %v5927, %v6112
    %v6120 = vld [vmem:[%s9] sm:$0xf]
    %v6122 = vlaneseq
    %v6123 = vshrl.u32 %v6122, 7
    %v6124 = vsub.s32 0, %v6123
    %v6125 = vrot.slane %v6120, %v6124
    %v6126 = vlaneseq
    %v6127 = vshrl.u32 %v6126, 7
    %v6128 = vsub.s32 1, %v6127
    %v6129 = vrot.slane %v6120, %v6128
    %v6130 = vlaneseq
    %v6131 = vshrl.u32 %v6130, 7
    %v6132 = vsub.s32 2, %v6131
    %v6133 = vrot.slane %v6120, %v6132
    %v6134 = vlaneseq
    %v6135 = vshrl.u32 %v6134, 7
    %v6136 = vsub.s32 3, %v6135
    %v6137 = vrot.slane %v6120, %v6136
    %v6142 = vadd.f32 %v6116, %v6125
    %v6143 = vadd.f32 %v6117, %v6129
    %v6144 = vadd.f32 %v6118, %v6133
    %v6145 = vadd.f32 %v6119, %v6137
    %v6146 = vmax.f32 %v6142, 0.0
    %v6147 = vmax.f32 %v6143, 0.0
    %v6148 = vmax.f32 %v6144, 0.0
    %v6149 = vmax.f32 %v6145, 0.0
    %v6150 = vpack.c.bf16 %v6146, %v6146
    %v6151 = vpack.c.bf16 %v6147, %v6147
    %v6152 = vpack.c.bf16 %v6148, %v6148
    %v6153 = vpack.c.bf16 %v6149, %v6149
    %v6154 = vld [vmem:[%s10] sm:$0xf]
    %v6155 = vld [vmem:[%s10 + $0x4] sm:$0xf]
    %v6156 = vld [vmem:[%s10 + $0x8] sm:$0xf]
    %v6157 = vld [vmem:[%s10 + $0xc] sm:$0xf]
    %v6158 = vld [vmem:[%s10 + $0x10] sm:$0xf]
    %v6159 = vld [vmem:[%s10 + $0x14] sm:$0xf]
    %v6160 = vld [vmem:[%s10 + $0x18] sm:$0xf]
    %v6161 = vld [vmem:[%s10 + $0x1c] sm:$0xf]
    %v6162 = vld [vmem:[%s10 + $0x20] sm:$0xf]
    %v6163 = vld [vmem:[%s10 + $0x24] sm:$0xf]
    %v6164 = vld [vmem:[%s10 + $0x28] sm:$0xf]
    %v6165 = vld [vmem:[%s10 + $0x2c] sm:$0xf]
    %v6166 = vld [vmem:[%s10 + $0x30] sm:$0xf]
    %v6167 = vld [vmem:[%s10 + $0x34] sm:$0xf]
    %v6168 = vld [vmem:[%s10 + $0x38] sm:$0xf]
    %v6169 = vld [vmem:[%s10 + $0x3c] sm:$0xf]
    %v6170 = vld [vmem:[%s10 + $0x40] sm:$0xf]
    %v6171 = vld [vmem:[%s10 + $0x44] sm:$0xf]
    %v6172 = vld [vmem:[%s10 + $0x48] sm:$0xf]
    %v6173 = vld [vmem:[%s10 + $0x4c] sm:$0xf]
    %v6174 = vld [vmem:[%s10 + $0x50] sm:$0xf]
    %v6175 = vld [vmem:[%s10 + $0x54] sm:$0xf]
    %v6176 = vld [vmem:[%s10 + $0x58] sm:$0xf]
    %v6177 = vld [vmem:[%s10 + $0x5c] sm:$0xf]
    %v6178 = vld [vmem:[%s10 + $0x60] sm:$0xf]
    %v6179 = vld [vmem:[%s10 + $0x64] sm:$0xf]
    %v6180 = vld [vmem:[%s10 + $0x68] sm:$0xf]
    %v6181 = vld [vmem:[%s10 + $0x6c] sm:$0xf]
    %v6182 = vld [vmem:[%s10 + $0x70] sm:$0xf]
    %v6183 = vld [vmem:[%s10 + $0x74] sm:$0xf]
    %v6184 = vld [vmem:[%s10 + $0x78] sm:$0xf]
    %v6185 = vld [vmem:[%s10 + $0x7c] sm:$0xf]
    %v6186 = vld [vmem:[%s10 + $0x80] sm:$0xf]
    %v6187 = vld [vmem:[%s10 + $0x84] sm:$0xf]
    %v6188 = vld [vmem:[%s10 + $0x88] sm:$0xf]
    %v6189 = vld [vmem:[%s10 + $0x8c] sm:$0xf]
    %v6190 = vld [vmem:[%s10 + $0x90] sm:$0xf]
    %v6191 = vld [vmem:[%s10 + $0x94] sm:$0xf]
    %v6192 = vld [vmem:[%s10 + $0x98] sm:$0xf]
    %v6193 = vld [vmem:[%s10 + $0x9c] sm:$0xf]
    %v6194 = vld [vmem:[%s10 + $0xa0] sm:$0xf]
    %v6195 = vld [vmem:[%s10 + $0xa4] sm:$0xf]
    %v6196 = vld [vmem:[%s10 + $0xa8] sm:$0xf]
    %v6197 = vld [vmem:[%s10 + $0xac] sm:$0xf]
    %v6198 = vld [vmem:[%s10 + $0xb0] sm:$0xf]
    %v6199 = vld [vmem:[%s10 + $0xb4] sm:$0xf]
    %v6200 = vld [vmem:[%s10 + $0xb8] sm:$0xf]
    %v6201 = vld [vmem:[%s10 + $0xbc] sm:$0xf]
    %v6202 = vld [vmem:[%s10 + $0xc0] sm:$0xf]
    %v6203 = vld [vmem:[%s11] sm:$0x1]
    %v6205 = vlaneseq
    %v6206 = vshrl.u32 %v6205, 7
    %v6207 = vsub.s32 0, %v6206
    %v6208 = vrot.slane %v6203, %v6207
    %v6259 = vunpack.c.l.b16 %v6154
    %v6260 = vunpack.c.l.b16 %v6155
    %v6261 = vunpack.c.l.b16 %v6156
    %v6262 = vunpack.c.l.b16 %v6157
    %v6263 = vunpack.c.l.b16 %v6158
    %v6264 = vunpack.c.l.b16 %v6159
    %v6265 = vunpack.c.l.b16 %v6160
    %v6266 = vunpack.c.l.b16 %v6161
    %v6267 = vunpack.c.l.b16 %v6162
    %v6268 = vunpack.c.l.b16 %v6163
    %v6269 = vunpack.c.l.b16 %v6164
    %v6270 = vunpack.c.l.b16 %v6165
    %v6271 = vunpack.c.l.b16 %v6166
    %v6272 = vunpack.c.l.b16 %v6167
    %v6273 = vunpack.c.l.b16 %v6168
    %v6274 = vunpack.c.l.b16 %v6169
    %v6275 = vunpack.c.l.b16 %v6170
    %v6276 = vunpack.c.l.b16 %v6171
    %v6277 = vunpack.c.l.b16 %v6172
    %v6278 = vunpack.c.l.b16 %v6173
    %v6279 = vunpack.c.l.b16 %v6174
    %v6280 = vunpack.c.l.b16 %v6175
    %v6281 = vunpack.c.l.b16 %v6176
    %v6282 = vunpack.c.l.b16 %v6177
    %v6283 = vunpack.c.l.b16 %v6178
    %v6284 = vunpack.c.l.b16 %v6179
    %v6285 = vunpack.c.l.b16 %v6180
    %v6286 = vunpack.c.l.b16 %v6181
    %v6287 = vunpack.c.l.b16 %v6182
    %v6288 = vunpack.c.l.b16 %v6183
    %v6289 = vunpack.c.l.b16 %v6184
    %v6290 = vunpack.c.l.b16 %v6185
    %v6291 = vunpack.c.l.b16 %v6186
    %v6292 = vunpack.c.l.b16 %v6187
    %v6293 = vunpack.c.l.b16 %v6188
    %v6294 = vunpack.c.l.b16 %v6189
    %v6295 = vunpack.c.l.b16 %v6190
    %v6296 = vunpack.c.l.b16 %v6191
    %v6297 = vunpack.c.l.b16 %v6192
    %v6298 = vunpack.c.l.b16 %v6193
    %v6299 = vunpack.c.l.b16 %v6194
    %v6300 = vunpack.c.l.b16 %v6195
    %v6301 = vunpack.c.l.b16 %v6196
    %v6302 = vunpack.c.l.b16 %v6197
    %v6303 = vunpack.c.l.b16 %v6198
    %v6304 = vunpack.c.l.b16 %v6199
    %v6305 = vunpack.c.l.b16 %v6200
    %v6306 = vunpack.c.l.b16 %v6201
    %v6307 = vunpack.c.l.b16 %v6202
    %v6308 = vpack.c.b16 %v6260, %v6259
    %v6309 = vpack.c.b16 %v6262, %v6261
    %v6310 = vpack.c.b16 %v6264, %v6263
    %v6311 = vpack.c.b16 %v6266, %v6265
    %v6312 = vpack.c.b16 %v6268, %v6267
    %v6313 = vpack.c.b16 %v6270, %v6269
    %v6314 = vpack.c.b16 %v6272, %v6271
    %v6315 = vpack.c.b16 %v6274, %v6273
    %v6316 = vpack.c.b16 %v6276, %v6275
    %v6317 = vpack.c.b16 %v6278, %v6277
    %v6318 = vpack.c.b16 %v6280, %v6279
    %v6319 = vpack.c.b16 %v6282, %v6281
    %v6320 = vpack.c.b16 %v6284, %v6283
    %v6321 = vpack.c.b16 %v6286, %v6285
    %v6322 = vpack.c.b16 %v6288, %v6287
    %v6323 = vpack.c.b16 %v6290, %v6289
    %v6324 = vpack.c.b16 %v6292, %v6291
    %v6325 = vpack.c.b16 %v6294, %v6293
    %v6326 = vpack.c.b16 %v6296, %v6295
    %v6327 = vpack.c.b16 %v6298, %v6297
    %v6328 = vpack.c.b16 %v6300, %v6299
    %v6329 = vpack.c.b16 %v6302, %v6301
    %v6330 = vpack.c.b16 %v6304, %v6303
    %v6331 = vpack.c.b16 %v6306, %v6305
    %v6332 = vpack.c.b16 %v6307, %v6307
    %vm6357 = vcmask 64512
    %v6359 = vsel %vm6357, %v6153, 0
    %v6362 = vsel %vm67, %v6332, 0
    %6364 = vmatprep.subr.bf16.mxu0 0
    %6365 = vmatpush1.bf16.msra.mxu0 %v6308
    %6366 = vmatprep.subr.bf16.mxu0 0
    %6367 = vmatpush1.bf16.msra.mxu0 %v6309
    %6368 = vmatprep.subr.bf16.mxu0 0
    %6369 = vmatpush1.bf16.msra.mxu0 %v6310
    %6370 = vmatprep.subr.bf16.mxu0 0
    %6371 = vmatpush1.bf16.msra.mxu0 %v6311
    %6372 = vmatprep.subr.bf16.mxu0 0
    %6373 = vmatpush1.bf16.msra.mxu0 %v6312
    %6374 = vmatprep.subr.bf16.mxu0 0
    %6375 = vmatpush1.bf16.msra.mxu0 %v6313
    %6376 = vmatprep.subr.bf16.mxu0 0
    %6377 = vmatpush1.bf16.msra.mxu0 %v6314
    %6378 = vmatprep.subr.bf16.mxu0 0
    %6379 = vmatpush1.bf16.msra.mxu0 %v6315
    %6380 = vmatprep.subr.bf16.mxu0 0
    %6381 = vmatpush1.bf16.msra.mxu0 %v6316
    %6382 = vmatprep.subr.bf16.mxu0 0
    %6383 = vmatpush1.bf16.msra.mxu0 %v6317
    %6384 = vmatprep.subr.bf16.mxu0 0
    %6385 = vmatpush1.bf16.msra.mxu0 %v6318
    %6386 = vmatprep.subr.bf16.mxu0 0
    %6387 = vmatpush1.bf16.msra.mxu0 %v6319
    %6388 = vmatprep.subr.bf16.mxu0 0
    %6389 = vmatpush1.bf16.msra.mxu0 %v6320
    %6390 = vmatprep.subr.bf16.mxu0 0
    %6391 = vmatpush1.bf16.msra.mxu0 %v6321
    %6392 = vmatprep.subr.bf16.mxu0 0
    %6393 = vmatpush1.bf16.msra.mxu0 %v6322
    %6394 = vmatprep.subr.bf16.mxu0 0
    %6395 = vmatpush1.bf16.msra.mxu0 %v6323
    %6396 = vmatprep.mubr.bf16.mxu0 %v6151
    %6397 = vmatmul.mubr.bf16.gmra.mrb[0].mxu0 %v6150
    %v6398 = vpop.f32.mrb[0].mxu0
    %v6399 = vadd.f32 %v6208, %v6398
    %v6400 = vpop.f32.mrb[0].mxu0
    %v6401 = vpop.f32.mrb[0].mxu0
    %v6402 = vpop.f32.mrb[0].mxu0
    %6403 = vdwg.mxu0
    %6404 = vmatprep.subr.bf16.mxu0 0
    %6405 = vmatpush1.bf16.msra.mxu0 %v6324
    %6406 = vmatprep.subr.bf16.mxu0 0
    %6407 = vmatpush1.bf16.msra.mxu0 %v6325
    %6408 = vmatprep.subr.bf16.mxu0 0
    %6409 = vmatpush1.bf16.msra.mxu0 %v6326
    %6410 = vmatprep.subr.bf16.mxu0 0
    %6411 = vmatpush1.bf16.msra.mxu0 %v6327
    %6412 = vmatprep.subr.bf16.mxu0 0
    %6413 = vmatpush1.bf16.msra.mxu0 %v6328
    %6414 = vmatprep.subr.bf16.mxu0 0
    %6415 = vmatpush1.bf16.msra.mxu0 %v6329
    %6416 = vmatprep.subr.bf16.mxu0 0
    %6417 = vmatpush1.bf16.msra.mxu0 %v6330
    %6418 = vmatprep.subr.bf16.mxu0 0
    %6419 = vmatpush1.bf16.msra.mxu0 %v6331
    %6420 = vmatprep.subr.bf16.mxu0 0
    %6421 = vmatpush1.bf16.msra.mxu0 %v6362
    %6422 = vmatprep.subr.bf16.mxu0 0
    %6423 = vmatpush1.bf16.msra.mxu0 0
    %6424 = vmatprep.subr.bf16.mxu0 0
    %6425 = vmatpush1.bf16.msra.mxu0 0
    %6426 = vmatprep.subr.bf16.mxu0 0
    %6427 = vmatpush1.bf16.msra.mxu0 0
    %6428 = vmatprep.subr.bf16.mxu0 0
    %6429 = vmatpush1.bf16.msra.mxu0 0
    %6430 = vmatprep.subr.bf16.mxu0 0
    %6431 = vmatpush1.bf16.msra.mxu0 0
    %6432 = vmatprep.subr.bf16.mxu0 0
    %6433 = vmatpush1.bf16.msra.mxu0 0
    %6434 = vmatprep.subr.bf16.mxu0 0
    %6435 = vmatpush1.bf16.msra.mxu0 0
    %6436 = vmatprep.mubr.bf16.mxu0 %v6359
    %6437 = vmatmul.mubr.bf16.gmra.mrb[0].mxu0 %v6152
    %v6438 = vpop.f32.mrb[0].mxu0
    %v6439 = vadd.f32 %v6399, %v6438
    %v6440 = vpop.f32.mrb[0].mxu0
    %v6441 = vpop.f32.mrb[0].mxu0
    %v6442 = vpop.f32.mrb[0].mxu0
    %6443 = vdwg.mxu0
    %v6444 = vmax.f32 %v6439, 0.0
    %vm6445 = vcmask 254976
    %6446 = vst.msk [vmem:[#allocation2] sm:$0x3] %vm6445, %v6444
    // Predicated region
    $region50: #{cnn_encoder_forward.1} parent=1 // pred_check
      _
    $region51: #{cnn_encoder_forward.1} parent=1 // pred_check_branch
      %6448 = sbr.rel (0) target = $region53
    $region52: #{cnn_encoder_forward.1} parent=1 // pred_region
      %s6450 = ssub.s32 32, 32
      %6451 = vsyncadd [#allocation3], %s6450
      %s6453 = sshll.u32 [#allocation2], 4
      %s6454 = int_to_ptr.vmem [resolvable:$true] %s6453
      %6456 = dma.vmem_to_hbm [thread:$0]  %s6454, 32, %s12, [#allocation3]
    $region53: #{cnn_encoder_forward.1} parent=1 // pred_fallthru
      _
    // Predicated region
    $region54: #{cnn_encoder_forward.1} parent=1 // pred_check
      _
    $region55: #{cnn_encoder_forward.1} parent=1 // pred_check_branch
      %6458 = sbr.rel (0) target = $region57
    $region56: #{cnn_encoder_forward.1} parent=1 // pred_region
      %6459 = dma.done [#allocation3], 32
    $region57: #{cnn_encoder_forward.1} parent=1 // pred_fallthru
      _
    %6460 = vsyncpa [#allocation3], 1

</llo_original>
